<compile_context>
chip_gen: v7x
topology: tpu7x:2x2x1
jax: 0.10.0
libtpu: 0.0.40
codegen_flags: <defaults>
</compile_context>

<pallas_src>
import functools

import jax
import jax.numpy as jnp
from jax.experimental import pallas as pl
from jax.experimental.pallas import tpu as pltpu

PALLAS_MIN_M = 64      # below this many rows a padded Pallas launch is pure overhead
PALLAS_MIN_N = 32      # skinny-N heads (8 / 1 channels) go through XLA dot
VMEM_LIMIT = 32 * 1024 * 1024   # safe on v5e/v6e (128 MiB phys) and v7x (64 MiB phys)


def _round_up(x, m):
    return (x + m - 1) // m * m


def _mm_geom(K, N):
    """Shape-adaptive padding / tile sizes for the matmul kernel (deterministic)."""
    if K <= 1024:
        Kp = _round_up(K, 128)
        TK = Kp                       # single K step -> no accumulator round trip
    else:
        Kp = _round_up(K, 512)
        TK = 512                      # grow TK (not TN) for long-K streams
    if N <= 256:
        Np = _round_up(N, 128)
        TN = Np
    else:
        Np = _round_up(N, 256)
        TN = 256                      # >=2 j-blocks on wide layers (megacore sharding)
    return Kp, TK, Np, TN


def _apply_act(y, act):
    if act == "none":
        return y
    if act == "relu":
        return jnp.maximum(y, 0.0)
    if act == "leaky_relu":
        return jnp.where(y >= 0, y, 0.01 * y)   # nn.LeakyReLU default slope
    if act == "sigmoid":
        return jax.nn.sigmoid(y)
    if act == "tanh":
        return jnp.tanh(y)
    raise ValueError(act)


# ---------------- Pallas kernels ----------------

def _mm_kernel_single(a_ref, w_ref, b_ref, o_ref, *, act):
    # whole-K block: no scratch accumulator needed
    y = jnp.dot(a_ref[...], w_ref[...], preferred_element_type=jnp.float32)
    o_ref[...] = _apply_act(y + b_ref[...], act)


def _mm_kernel_multi(a_ref, w_ref, b_ref, o_ref, acc_ref, *, act):
    @pl.when(pl.program_id(2) == 0)
    def _():
        acc_ref[...] = jnp.zeros_like(acc_ref)

    acc_ref[...] += jnp.dot(a_ref[...], w_ref[...],
                            preferred_element_type=jnp.float32)

    @pl.when(pl.program_id(2) == pl.num_programs(2) - 1)
    def _():
        o_ref[...] = _apply_act(acc_ref[...] + b_ref[...], act)


@functools.lru_cache(maxsize=None)
def _get_matmul(Mp, Kp, Np, TM, TK, TN, act):
    nk = Kp // TK
    if nk == 1:
        grid = (Mp // TM, Np // TN)
        kernel = functools.partial(_mm_kernel_single, act=act)
        in_specs = [
            pl.BlockSpec((TM, Kp), lambda i, j: (i, 0)),
            pl.BlockSpec((Kp, TN), lambda i, j: (0, j)),
            pl.BlockSpec((1, TN), lambda i, j: (0, j)),
        ]
        out_specs = pl.BlockSpec((TM, TN), lambda i, j: (i, j))
        scratch = []
        sem = ("parallel", "parallel")
    else:
        grid = (Mp // TM, Np // TN, nk)
        kernel = functools.partial(_mm_kernel_multi, act=act)
        in_specs = [
            pl.BlockSpec((TM, TK), lambda i, j, k: (i, k)),
            pl.BlockSpec((TK, TN), lambda i, j, k: (k, j)),
            pl.BlockSpec((1, TN), lambda i, j, k: (0, j)),
        ]
        out_specs = pl.BlockSpec((TM, TN), lambda i, j, k: (i, j))
        scratch = [pltpu.VMEM((TM, TN), jnp.float32)]
        sem = ("parallel", "parallel", "arbitrary")
    return pl.pallas_call(
        kernel,
        out_shape=jax.ShapeDtypeStruct((Mp, Np), jnp.float32),
        grid_spec=pltpu.PrefetchScalarGridSpec(
            num_scalar_prefetch=0,
            grid=grid,
            in_specs=in_specs,
            out_specs=out_specs,
            scratch_shapes=scratch,
        ),
        compiler_params=pltpu.CompilerParams(
            dimension_semantics=sem,
            vmem_limit_bytes=VMEM_LIMIT),
    )


def _affine_kernel(x_ref, s_ref, t_ref, o_ref, *, act):
    o_ref[...] = _apply_act(x_ref[...] * s_ref[...] + t_ref[...], act)


@functools.lru_cache(maxsize=None)
def _get_affine(Mp, Cp, TMr, act):
    return pl.pallas_call(
        functools.partial(_affine_kernel, act=act),
        out_shape=jax.ShapeDtypeStruct((Mp, Cp), jnp.float32),
        grid=(Mp // TMr,),
        in_specs=[
            pl.BlockSpec((TMr, Cp), lambda i: (i, 0)),
            pl.BlockSpec((1, Cp), lambda i: (0, 0)),
            pl.BlockSpec((1, Cp), lambda i: (0, 0)),
        ],
        out_specs=pl.BlockSpec((TMr, Cp), lambda i: (i, 0)),
        compiler_params=pltpu.CompilerParams(
            dimension_semantics=("parallel",),
            vmem_limit_bytes=VMEM_LIMIT),
    )


# ---------------- matmul dispatch (Pallas for real work, XLA dot for tiny ops) ----------

def _apply_matmul(a, w_flat, b, w_p, b_p, act):
    """a:[M,K] @ w:[K,N] + b, fused activation.

    Uses the Pallas MXU kernel (bf16 operands, f32 accumulate, pre-padded weights)
    whenever the problem is big enough; otherwise plain jnp.dot (per perf review:
    M or N below ~32 are pure overhead in a 128-padded Pallas launch)."""
    M, K = a.shape
    N = w_flat.shape[1]
    if w_p is None or M < PALLAS_MIN_M:
        y = jnp.dot(a.astype(jnp.float32), w_flat.astype(jnp.float32),
                    preferred_element_type=jnp.float32) + b[None, :]
        return _apply_act(y, act)

    Kp, Np = w_p.shape
    _, TK, _, TN = _mm_geom(K, N)
    if M <= 256:
        Mp = _round_up(M, 128)
        TM = Mp
    else:
        Mp = _round_up(M, 256)
        TM = 256
    a_b = a.astype(jnp.bfloat16)
    if Mp != M or Kp != K:
        a_b = jnp.pad(a_b, ((0, Mp - M), (0, Kp - K)))
    out = _get_matmul(Mp, Kp, Np, TM, TK, TN, act)(a_b, w_p, b_p)
    if Mp != M or Np != N:
        out = out[:M, :N]
    return out


def linear(a, prep, act="none"):
    return _apply_matmul(a, prep["w"], prep["b"],
                         prep.get("w_p"), prep.get("b_p"), act)


def affine_act(x, scale, shift, act="none"):
    """Per-channel x*scale+shift (+activation) on a [M,C] slab."""
    M, C = x.shape
    if M < PALLAS_MIN_M:
        return _apply_act(x * scale[None, :] + shift[None, :], act)
    Cp = _round_up(C, 128)
    ROWS = 1024                      # large row blocks: the op is HBM-bound
    if M <= ROWS:
        Mp = _round_up(M, 8)
        TMr = Mp
    else:
        Mp = _round_up(M, ROWS)
        TMr = ROWS
    x_p = jnp.pad(x.astype(jnp.float32), ((0, Mp - M), (0, Cp - C)))
    s_p = jnp.pad(scale.astype(jnp.float32), (0, Cp - C)).reshape(1, Cp)
    t_p = jnp.pad(shift.astype(jnp.float32), (0, Cp - C)).reshape(1, Cp)
    out = _get_affine(Mp, Cp, TMr, act)(x_p, s_p, t_p)
    return out[:M, :C]


# ---------------- NN building blocks (im2col glue + Pallas hot path) ----------------

def _im2col(x, kh, kw, stride, padding, dilation):
    """x:[B,H,W,Ci] -> patches [B,oh,ow,kh*kw*Ci] (row order: kh, kw, Ci)."""
    B, H, W, Ci = x.shape
    xp = jnp.pad(x, ((0, 0), (padding, padding), (padding, padding), (0, 0)))
    Hp, Wp = H + 2 * padding, W + 2 * padding
    oh = (Hp - dilation * (kh - 1) - 1) // stride + 1
    ow = (Wp - dilation * (kw - 1) - 1) // stride + 1
    cols = []
    for i in range(kh):
        for j in range(kw):
            r0, c0 = i * dilation, j * dilation
            sl = xp[:, r0:r0 + (oh - 1) * stride + 1:stride,
                    c0:c0 + (ow - 1) * stride + 1:stride, :]
            cols.append(sl)
    patches = jnp.stack(cols, axis=3).reshape(B, oh, ow, kh * kw * Ci)
    return patches, oh, ow


def conv2d(x, prep, stride=1, padding=0, dilation=1, act="none"):
    """x: [B,H,W,Cin] -> [B,OH,OW,Cout] via im2col + fused Pallas matmul."""
    # TODO(synk): im2col materializes a kh*kw-expanded activation matrix; a windowed
    # Pallas conv kernel would save that traffic (patches are at least kept in bf16).
    w4 = prep["w4"]
    kh, kw, Ci, Co = w4.shape
    B = x.shape[0]
    patches, oh, ow = _im2col(x, kh, kw, stride, padding, dilation)
    a = patches.reshape(B * oh * ow, kh * kw * Ci)
    y = _apply_matmul(a, w4.reshape(kh * kw * Ci, Co), prep["b"],
                      prep.get("w_p"), prep.get("b_p"), act)
    return y.reshape(B, oh, ow, Co)


def classifier_forward(x, prep, dilations):
    """Classifier_Module: 4 dilated 3x3 convs summed == ONE matmul with the 4 im2col
    patch matrices concatenated along K and the 4 weights concatenated along K."""
    w5 = prep["w5"]                               # [4, kh, kw, Ci, Co]
    nb, kh, kw, Ci, Co = w5.shape
    B = x.shape[0]
    cols = []
    oh = ow = None
    for d in dilations:
        p, oh, ow = _im2col(x, kh, kw, stride=1, padding=d, dilation=d)
        cols.append(p)
    a = jnp.concatenate(cols, axis=-1).reshape(B * oh * ow, nb * kh * kw * Ci)
    y = _apply_matmul(a, w5.reshape(nb * kh * kw * Ci, Co), prep["b"],
                      prep.get("w_p"), prep.get("b_p"), "none")
    return y.reshape(B, oh, ow, Co)


def bn_act(x, gamma, beta, act="leaky_relu", eps=1e-5):
    """BatchNorm2d in training mode (batch stats) + activation (affine via Pallas)."""
    B, H, W, C = x.shape
    flat = x.reshape(B * H * W, C)
    mean = jnp.mean(flat, axis=0)
    var = jnp.mean((flat - mean) ** 2, axis=0)    # biased variance, like PyTorch BN
    scale = gamma / jnp.sqrt(var + eps)
    shift = beta - mean * scale
    return affine_act(flat, scale, shift, act).reshape(B, H, W, C)


def bilinear_ac(x, out_h, out_w):
    """Bilinear resize, align_corners=True (matches nn.Upsample(..., align_corners=True))."""
    B, H, W, C = x.shape

    def coords(out_n, in_n):
        if out_n == 1 or in_n == 1:
            i0 = jnp.zeros((out_n,), jnp.int32)
            return i0, i0, jnp.zeros((out_n,), jnp.float32)
        src = jnp.arange(out_n, dtype=jnp.float32) * (in_n - 1) / (out_n - 1)
        i0 = jnp.clip(jnp.floor(src).astype(jnp.int32), 0, in_n - 2)
        w = src - i0.astype(jnp.float32)
        return i0, i0 + 1, w

    y0, y1, wy = coords(out_h, H)
    x0, x1, wx = coords(out_w, W)
    rows = (x[:, y0, :, :] * (1 - wy)[None, :, None, None]
            + x[:, y1, :, :] * wy[None, :, None, None])
    out = (rows[:, :, x0, :] * (1 - wx)[None, None, :, None]
           + rows[:, :, x1, :] * wx[None, None, :, None])
    return out


def up(x, scale):
    B, H, W, C = x.shape
    return bilinear_ac(x, int(H * scale), int(W * scale))


def dropout(x, key, p=0.3):
    keep = jax.random.bernoulli(key, 1.0 - p, x.shape)
    return jnp.where(keep, x / (1.0 - p), 0.0)


# ---------------- parameter initialization (deterministic, synthetic) ----------------

def _prep_pallas(w_flat, b):
    """Pre-pad (and pre-cast to bf16) weights/bias once at init for the Pallas path."""
    K, N = w_flat.shape
    if N < PALLAS_MIN_N:
        return {}
    Kp, _, Np, _ = _mm_geom(K, N)
    w_p = jnp.zeros((Kp, Np), jnp.bfloat16).at[:K, :N].set(w_flat.astype(jnp.bfloat16))
    b_p = jnp.zeros((1, Np), jnp.float32).at[0, :N].set(b.astype(jnp.float32))
    return {"w_p": w_p, "b_p": b_p}


class ParamGen:
    def __init__(self, key):
        self._key = key

    def take(self):
        self._key, k = jax.random.split(self._key)
        return k

    def conv(self, kh, kw, ci, co, std=0.05):
        w4 = std * jax.random.normal(self.take(), (kh, kw, ci, co), jnp.float32)
        b = jnp.zeros((co,), jnp.float32)
        prep = {"w4": w4, "b": b}
        prep.update(_prep_pallas(w4.reshape(kh * kw * ci, co), b))
        return prep

    def linear(self, ci, co, std=0.05):
        w = std * jax.random.normal(self.take(), (ci, co), jnp.float32)
        b = jnp.zeros((co,), jnp.float32)
        prep = {"w": w, "b": b}
        prep.update(_prep_pallas(w, b))
        return prep

    def classifier(self, ci, co, n_branch=4, std=0.01):
        # Classifier_Module initializes weights ~ N(0, 0.01); the 4 branch biases
        # sum into one bias vector because the branch outputs are summed.
        w5 = std * jax.random.normal(self.take(), (n_branch, 3, 3, ci, co), jnp.float32)
        b = jnp.zeros((co,), jnp.float32)
        prep = {"w5": w5, "b": b}
        prep.update(_prep_pallas(w5.reshape(n_branch * 9 * ci, co), b))
        return prep


def rcab_params(pg, nf, reduction=16):
    red = nf // reduction
    return {"c1": pg.conv(3, 3, nf, nf), "c2": pg.conv(3, 3, nf, nf),
            "ca1": pg.linear(nf, red), "ca2": pg.linear(red, nf)}


def init_params(channel=8, latent_dim=4, enc_channels=32, img_hw=64):
    pg = ParamGen(jax.random.PRNGKey(0))
    P = {}
    c = enc_channels
    P["enc"] = {
        "l1": pg.conv(4, 4, 3, c), "bn1": (jnp.ones(c), jnp.zeros(c)),
        "l2": pg.conv(4, 4, c, 2 * c), "bn2": (jnp.ones(2 * c), jnp.zeros(2 * c)),
        "l3": pg.conv(4, 4, 2 * c, 4 * c), "bn3": (jnp.ones(4 * c), jnp.zeros(4 * c)),
        "l4": pg.conv(4, 4, 4 * c, 8 * c), "bn4": (jnp.ones(8 * c), jnp.zeros(8 * c)),
        "l5": pg.conv(4, 4, 8 * c, 8 * c),
    }
    feat = img_hw // 32
    # TODO(synk): original Encoder_x hard-codes fc in_features for 256/352/480-px inputs;
    # here the FCs are sized for the actual (small) test resolution.
    P["enc"]["fc1"] = pg.linear(8 * c * feat * feat, latent_dim)
    P["enc"]["fc2"] = pg.linear(8 * c * feat * feat, latent_dim)
    # TODO(synk): B2_ResNet is not defined in the reference source; substituted with a
    # synthetic strided-conv pyramid producing the same channel counts (256/512/1024/2048)
    # and strides (4/8/16/32), with separate `_1` / `_2` second-branch weights.
    P["bb"] = {
        "x1": pg.conv(1, 1, 3, 256), "x2": pg.conv(1, 1, 256, 512),
        "x3_1": pg.conv(1, 1, 512, 1024), "x4_1": pg.conv(1, 1, 1024, 2048),
        "x3_2": pg.conv(1, 1, 512, 1024), "x4_2": pg.conv(1, 1, 1024, 2048),
    }
    ch = channel
    P["dec"] = {
        "conv1": pg.classifier(256, ch), "conv2": pg.classifier(512, ch),
        "conv3": pg.classifier(1024, ch), "conv4": pg.classifier(2048, ch),
        "conv43": pg.classifier(2 * ch, ch), "conv432": pg.classifier(3 * ch, ch),
        "layer6": pg.classifier(4 * ch, 1),
        "noise_conv": pg.conv(1, 1, ch + latent_dim, ch),
        "racb_43": rcab_params(pg, 2 * ch),
        "racb_432": rcab_params(pg, 3 * ch),
        "racb_4321": rcab_params(pg, 4 * ch),
    }
    return P


# ---------------- module forward passes ----------------

DIL = (3, 6, 12, 18)
DIL6 = (6, 12, 18, 24)


def calayer_forward(x, p):
    y = jnp.mean(x, axis=(1, 2))                 # AdaptiveAvgPool2d(1)
    y = linear(y, p["ca1"], act="relu")          # 1x1 conv == linear on [B,C]
    y = linear(y, p["ca2"], act="sigmoid")
    return x * y[:, None, None, :]


def rcab_forward(x, p):
    res = conv2d(x, p["c1"], stride=1, padding=1, act="relu")
    res = conv2d(res, p["c2"], stride=1, padding=1)
    res = calayer_forward(res, p)
    return res + x


def encoder_forward(x, p):
    o = conv2d(x, p["l1"], stride=2, padding=1); o = bn_act(o, *p["bn1"])
    o = conv2d(o, p["l2"], stride=2, padding=1); o = bn_act(o, *p["bn2"])
    o = conv2d(o, p["l3"], stride=2, padding=1); o = bn_act(o, *p["bn3"])
    o = conv2d(o, p["l4"], stride=2, padding=1); o = bn_act(o, *p["bn4"])
    o = conv2d(o, p["l5"], stride=2, padding=1); o = bn_act(o, *p["bn4"])  # bn4 reused (as in reference)
    B = o.shape[0]
    flat = jnp.transpose(o, (0, 3, 1, 2)).reshape(B, -1)  # NCHW flatten order like .view()
    mu = linear(flat, p["fc1"])
    logvar = linear(flat, p["fc2"])
    return mu, logvar


def decoder_forward(x1, x2, x3, x4, z, p, key):
    k1, k2, k3, k4 = jax.random.split(key, 4)
    conv1_feat = dropout(classifier_forward(x1, p["conv1"], DIL), k1)
    conv2_feat = dropout(classifier_forward(x2, p["conv2"], DIL), k2)
    conv3_feat = dropout(classifier_forward(x3, p["conv3"], DIL), k3)
    conv4_feat = dropout(classifier_forward(x4, p["conv4"], DIL), k4)
    conv4_feat = jnp.concatenate([conv4_feat, z], axis=-1)
    conv4_feat = conv2d(conv4_feat, p["noise_conv"], stride=1, padding=0)
    conv4_feat = up(conv4_feat, 2)
    conv43 = jnp.concatenate([conv4_feat, conv3_feat], axis=-1)
    conv43 = rcab_forward(conv43, p["racb_43"])
    conv43 = classifier_forward(conv43, p["conv43"], DIL)
    conv43 = up(conv43, 2)
    conv432 = jnp.concatenate([up(conv4_feat, 2), conv43, conv2_feat], axis=-1)
    conv432 = rcab_forward(conv432, p["racb_432"])
    conv432 = classifier_forward(conv432, p["conv432"], DIL)
    conv432 = up(conv432, 2)
    conv4321 = jnp.concatenate(
        [up(conv4_feat, 4), up(conv43, 2), conv432, conv1_feat], axis=-1)
    conv4321 = rcab_forward(conv4321, p["racb_4321"])
    sal_pred = classifier_forward(conv4321, p["layer6"], DIL6)
    return sal_pred


def endecoder_forward(x, z, params, key):
    bb, dec = params["bb"], params["dec"]
    x1 = conv2d(x, bb["x1"], stride=4, padding=0, act="relu")
    x2 = conv2d(x1, bb["x2"], stride=2, padding=0, act="relu")
    x3 = conv2d(x2, bb["x3_1"], stride=2, padding=0, act="relu")
    x4 = conv2d(x3, bb["x4_1"], stride=2, padding=0, act="relu")
    B, h4, w4, _ = x4.shape
    # tile(): unsqueeze + tile over a size-1 dim == broadcast to x4 spatial dims
    zt = jnp.broadcast_to(z[:, None, None, :], (B, h4, w4, z.shape[1]))
    k1, k2 = jax.random.split(key)
    s1 = decoder_forward(x1, x2, x3, x4, zt, dec, k1)
    att = jax.nn.sigmoid(up(s1, 0.5))
    # TODO(synk): HA (holistic attention) module is not defined in the reference source;
    # substituted with a plain attention multiply.
    x2_2 = x2 * att
    x3_2 = conv2d(x2_2, bb["x3_2"], stride=2, padding=0, act="relu")
    x4_2 = conv2d(x3_2, bb["x4_2"], stride=2, padding=0, act="relu")
    s2 = decoder_forward(x1, x2_2, x3_2, x4_2, zt, dec, k2)
    return up(s1, 4), up(s2, 4)


def generator_forward(x_nchw, params, key, training=True):
    x = jnp.transpose(x_nchw, (0, 2, 3, 1)).astype(jnp.float32)  # NCHW -> NHWC
    mux, logvarx = encoder_forward(x, params["enc"])
    k_eps, k_dec = jax.random.split(key)
    std = jnp.exp(0.5 * logvarx)          # reparametrize() in the reference
    eps = jax.random.normal(k_eps, std.shape, jnp.float32)
    z = eps * std + mux
    if training:
        # KL( Independent(N(0, exp(1)),1) || Independent(N(mux, exp(logvarx)),1) ),
        # mean over batch.  NOTE: the PyTorch reference itself uses exp(logvar) as a
        # *scale* in the distribution but exp(0.5*logvar) in reparametrize(); we
        # mirror that inconsistency faithfully.
        sigma_p = jnp.exp(1.0)
        sigma_q = jnp.exp(logvarx)
        kl_el = (jnp.log(sigma_q / sigma_p)
                 + (sigma_p ** 2 + mux ** 2) / (2.0 * sigma_q ** 2) - 0.5)
        latent_loss = jnp.mean(jnp.sum(kl_el, axis=1))
        pred_init, pred_ref = endecoder_forward(x, z, params, k_dec)
        return (jnp.transpose(pred_init, (0, 3, 1, 2)),
                jnp.transpose(pred_ref, (0, 3, 1, 2)),
                latent_loss)
    else:
        _, pred = endecoder_forward(x, z, params, k_dec)
        return jnp.transpose(pred, (0, 3, 1, 2))


generator_forward_jit = jax.jit(generator_forward, static_argnames=("training",))


if __name__ == "__main__":
    channel, latent_dim = 8, 4
    B, H, W = 2, 64, 64
    params = init_params(channel=channel, latent_dim=latent_dim,
                         enc_channels=32, img_hw=H)
    key = jax.random.PRNGKey(0)
    kx, krun = jax.random.split(key)
    x = jax.random.normal(kx, (B, 3, H, W), jnp.float32)     # NCHW input like PyTorch
    pred_init, pred_ref, latent_loss = generator_forward_jit(
        x, params, krun, training=True)
    jax.block_until_ready((pred_init, pred_ref, latent_loss))
    assert pred_init.shape == (B, 1, H, W), pred_init.shape
    assert pred_ref.shape == (B, 1, H, W), pred_ref.shape
    assert bool(jnp.all(jnp.isfinite(pred_init)))
    assert bool(jnp.all(jnp.isfinite(pred_ref)))
    assert bool(jnp.isfinite(latent_loss))
    print("KERNEL_OK")
</pallas_src>

<mosaic_0001>
module attributes {stable_mosaic.version = 11 : i64} {
  func.func @_mm_kernel_single(%arg0: i32, %arg1: i32, %arg2: memref<256x128xbf16, #tpu.memory_space<vmem>>, %arg3: memref<128x256xbf16, #tpu.memory_space<vmem>>, %arg4: memref<1x256xf32, #tpu.memory_space<vmem>>, %arg5: memref<256x256xf32, #tpu.memory_space<vmem>>) attributes {dimension_semantics = [#tpu.dimension_semantics<parallel>, #tpu.dimension_semantics<parallel>], iteration_bounds = array<i64: 2, 1>, scalar_prefetch = 0 : i64, scratch_operands = 0 : i64, tpu.core_type = #tpu.core_type<tc>, window_params = [{transform_indices = @transform_0, window_bounds = array<i64: 256, 128>}, {transform_indices = @transform_1, window_bounds = array<i64: 128, 256>}, {transform_indices = @transform_2, window_bounds = array<i64: 1, 256>}, {transform_indices = @transform_3, window_bounds = array<i64: 256, 256>}]} {
    %c0 = arith.constant 0 : index
    %c0_0 = arith.constant 0 : index
    %0 = vector.load %arg2[%c0, %c0_0] : memref<256x128xbf16, #tpu.memory_space<vmem>>, vector<256x128xbf16>
    %c0_1 = arith.constant 0 : index
    %c0_2 = arith.constant 0 : index
    %1 = vector.load %arg3[%c0_1, %c0_2] : memref<128x256xbf16, #tpu.memory_space<vmem>>, vector<128x256xbf16>
    %cst = arith.constant dense<0.000000e+00> : vector<256x256xf32>
    %2 = tpu.matmul %0, %1, %cst {dimension_numbers = #tpu.dot_dimension_numbers<[1], [0], [0], [1], [0, 0, 1, 1], [], []>} : vector<256x128xbf16>, vector<128x256xbf16>, vector<256x256xf32> -> vector<256x256xf32>
    %c0_3 = arith.constant 0 : index
    %c0_4 = arith.constant 0 : index
    %3 = vector.load %arg4[%c0_3, %c0_4] : memref<1x256xf32, #tpu.memory_space<vmem>>, vector<1x256xf32>
    %4 = vector.broadcast %3 : vector<1x256xf32> to vector<256x256xf32>
    %5 = arith.addf %2, %4 : vector<256x256xf32>
    %cst_5 = arith.constant 0.000000e+00 : f32
    %6 = vector.broadcast %cst_5 : f32 to vector<256x256xf32>
    %7 = arith.maximumf %5, %6 : vector<256x256xf32>
    %c0_6 = arith.constant 0 : index
    %c0_7 = arith.constant 0 : index
    %8 = vector.load %arg5[%c0_6, %c0_7] : memref<256x256xf32, #tpu.memory_space<vmem>>, vector<256x256xf32>
    tpu.vector_store %arg5[%c0_6, %c0_7], %7 {strides = array<i32>} : memref<256x256xf32, #tpu.memory_space<vmem>>, vector<256x256xf32>,
    return
  }
  func.func @transform_0(%arg0: i32, %arg1: i32) -> (i32, i32) {
    %c0_i32 = arith.constant 0 : i32
    %c0_i32_0 = arith.constant 0 : i32
    return %arg0, %c0_i32 : i32, i32
  }
  func.func @transform_1(%arg0: i32, %arg1: i32) -> (i32, i32) {
    %c0_i32 = arith.constant 0 : i32
    %c0_i32_0 = arith.constant 0 : i32
    return %c0_i32, %arg1 : i32, i32
  }
  func.func @transform_2(%arg0: i32, %arg1: i32) -> (i32, i32) {
    %c0_i32 = arith.constant 0 : i32
    %c0_i32_0 = arith.constant 0 : i32
    return %c0_i32, %arg1 : i32, i32
  }
  func.func @transform_3(%arg0: i32, %arg1: i32) -> (i32, i32) {
    %c0_i32 = arith.constant 0 : i32
    return %arg0, %arg1 : i32, i32
  }
}

module attributes {stable_mosaic.version = 11 : i64} {
  func.func @_mm_kernel_single(%arg0: i32, %arg1: i32, %arg2: memref<256x128xbf16, #tpu.memory_space<vmem>>, %arg3: memref<128x128xbf16, #tpu.memory_space<vmem>>, %arg4: memref<1x128xf32, #tpu.memory_space<vmem>>, %arg5: memref<256x128xf32, #tpu.memory_space<vmem>>) attributes {dimension_semantics = [#tpu.dimension_semantics<parallel>, #tpu.dimension_semantics<parallel>], iteration_bounds = array<i64: 8, 1>, scalar_prefetch = 0 : i64, scratch_operands = 0 : i64, tpu.core_type = #tpu.core_type<tc>, window_params = [{transform_indices = @transform_0, window_bounds = array<i64: 256, 128>}, {transform_indices = @transform_1, window_bounds = array<i64: 128, 128>}, {transform_indices = @transform_2, window_bounds = array<i64: 1, 128>}, {transform_indices = @transform_3, window_bounds = array<i64: 256, 128>}]} {
    %c0 = arith.constant 0 : index
    %c0_0 = arith.constant 0 : index
    %0 = vector.load %arg2[%c0, %c0_0] : memref<256x128xbf16, #tpu.memory_space<vmem>>, vector<256x128xbf16>
    %c0_1 = arith.constant 0 : index
    %c0_2 = arith.constant 0 : index
    %1 = vector.load %arg3[%c0_1, %c0_2] : memref<128x128xbf16, #tpu.memory_space<vmem>>, vector<128x128xbf16>
    %cst = arith.constant dense<0.000000e+00> : vector<256x128xf32>
    %2 = tpu.matmul %0, %1, %cst {dimension_numbers = #tpu.dot_dimension_numbers<[1], [0], [0], [1], [0, 0, 1, 1], [], []>} : vector<256x128xbf16>, vector<128x128xbf16>, vector<256x128xf32> -> vector<256x128xf32>
    %c0_3 = arith.constant 0 : index
    %c0_4 = arith.constant 0 : index
    %3 = vector.load %arg4[%c0_3, %c0_4] : memref<1x128xf32, #tpu.memory_space<vmem>>, vector<1x128xf32>
    %4 = vector.broadcast %3 : vector<1x128xf32> to vector<256x128xf32>
    %5 = arith.addf %2, %4 : vector<256x128xf32>
    %c0_5 = arith.constant 0 : index
    %c0_6 = arith.constant 0 : index
    %6 = vector.load %arg5[%c0_5, %c0_6] : memref<256x128xf32, #tpu.memory_space<vmem>>, vector<256x128xf32>
    tpu.vector_store %arg5[%c0_5, %c0_6], %5 {strides = array<i32>} : memref<256x128xf32, #tpu.memory_space<vmem>>, vector<256x128xf32>,
    return
  }
  func.func @transform_0(%arg0: i32, %arg1: i32) -> (i32, i32) {
    %c0_i32 = arith.constant 0 : i32
    %c0_i32_0 = arith.constant 0 : i32
    return %arg0, %c0_i32 : i32, i32
  }
  func.func @transform_1(%arg0: i32, %arg1: i32) -> (i32, i32) {
    %c0_i32 = arith.constant 0 : i32
    %c0_i32_0 = arith.constant 0 : i32
    return %c0_i32, %arg1 : i32, i32
  }
  func.func @transform_2(%arg0: i32, %arg1: i32) -> (i32, i32) {
    %c0_i32 = arith.constant 0 : i32
    %c0_i32_0 = arith.constant 0 : i32
    return %c0_i32, %arg1 : i32, i32
  }
  func.func @transform_3(%arg0: i32, %arg1: i32) -> (i32, i32) {
    %c0_i32 = arith.constant 0 : i32
    return %arg0, %arg1 : i32, i32
  }
}

module attributes {stable_mosaic.version = 11 : i64} {
  func.func @_affine_kernel(%arg0: i32, %arg1: memref<1024x128xf32, #tpu.memory_space<vmem>>, %arg2: memref<1x128xf32, #tpu.memory_space<vmem>>, %arg3: memref<1x128xf32, #tpu.memory_space<vmem>>, %arg4: memref<1024x128xf32, #tpu.memory_space<vmem>>) attributes {dimension_semantics = [#tpu.dimension_semantics<parallel>], iteration_bounds = array<i64: 2>, scalar_prefetch = 0 : i64, scratch_operands = 0 : i64, tpu.core_type = #tpu.core_type<tc>, window_params = [{transform_indices = @transform_0, window_bounds = array<i64: 1024, 128>}, {pipeline_mode = #tpu.pipeline_mode<synchronous>, transform_indices = @transform_1, window_bounds = array<i64: 1, 128>}, {pipeline_mode = #tpu.pipeline_mode<synchronous>, transform_indices = @transform_2, window_bounds = array<i64: 1, 128>}, {transform_indices = @transform_3, window_bounds = array<i64: 1024, 128>}]} {
    %c0 = arith.constant 0 : index
    %c0_0 = arith.constant 0 : index
    %0 = vector.load %arg1[%c0, %c0_0] : memref<1024x128xf32, #tpu.memory_space<vmem>>, vector<1024x128xf32>
    %c0_1 = arith.constant 0 : index
    %c0_2 = arith.constant 0 : index
    %1 = vector.load %arg2[%c0_1, %c0_2] : memref<1x128xf32, #tpu.memory_space<vmem>>, vector<1x128xf32>
    %2 = vector.broadcast %1 : vector<1x128xf32> to vector<1024x128xf32>
    %3 = arith.mulf %0, %2 : vector<1024x128xf32>
    %c0_3 = arith.constant 0 : index
    %c0_4 = arith.constant 0 : index
    %4 = vector.load %arg3[%c0_3, %c0_4] : memref<1x128xf32, #tpu.memory_space<vmem>>, vector<1x128xf32>
    %5 = vector.broadcast %4 : vector<1x128xf32> to vector<1024x128xf32>
    %6 = arith.addf %3, %5 : vector<1024x128xf32>
    %cst = arith.constant 0.000000e+00 : f32
    %7 = vector.broadcast %cst : f32 to vector<1024x128xf32>
    %8 = arith.cmpf oge, %6, %7 : vector<1024x128xf32>
    %cst_5 = arith.constant 0.00999999977 : f32
    %9 = vector.broadcast %cst_5 : f32 to vector<1024x128xf32>
    %10 = arith.mulf %9, %6 : vector<1024x128xf32>
    %11 = arith.select %8, %6, %10 : vector<1024x128xi1>, vector<1024x128xf32>
    %c0_6 = arith.constant 0 : index
    %c0_7 = arith.constant 0 : index
    %12 = vector.load %arg4[%c0_6, %c0_7] : memref<1024x128xf32, #tpu.memory_space<vmem>>, vector<1024x128xf32>
    tpu.vector_store %arg4[%c0_6, %c0_7], %11 {strides = array<i32>} : memref<1024x128xf32, #tpu.memory_space<vmem>>, vector<1024x128xf32>,
    return
  }
  func.func @transform_0(%arg0: i32) -> (i32, i32) {
    %c0_i32 = arith.constant 0 : i32
    %c0_i32_0 = arith.constant 0 : i32
    return %arg0, %c0_i32 : i32, i32
  }
  func.func @transform_1(%arg0: i32) -> (i32, i32) {
    %c0_i32 = arith.constant 0 : i32
    %c0_i32_0 = arith.constant 0 : i32
    %c0_i32_1 = arith.constant 0 : i32
    return %c0_i32, %c0_i32_0 : i32, i32
  }
  func.func @transform_2(%arg0: i32) -> (i32, i32) {
    %c0_i32 = arith.constant 0 : i32
    %c0_i32_0 = arith.constant 0 : i32
    %c0_i32_1 = arith.constant 0 : i32
    return %c0_i32, %c0_i32_0 : i32, i32
  }
  func.func @transform_3(%arg0: i32) -> (i32, i32) {
    %c0_i32 = arith.constant 0 : i32
    %c0_i32_0 = arith.constant 0 : i32
    return %arg0, %c0_i32 : i32, i32
  }
}

module attributes {stable_mosaic.version = 11 : i64} {
  func.func @_mm_kernel_single(%arg0: i32, %arg1: i32, %arg2: memref<256x512xbf16, #tpu.memory_space<vmem>>, %arg3: memref<512x128xbf16, #tpu.memory_space<vmem>>, %arg4: memref<1x128xf32, #tpu.memory_space<vmem>>, %arg5: memref<256x128xf32, #tpu.memory_space<vmem>>) attributes {dimension_semantics = [#tpu.dimension_semantics<parallel>, #tpu.dimension_semantics<parallel>], iteration_bounds = array<i64: 2, 1>, scalar_prefetch = 0 : i64, scratch_operands = 0 : i64, tpu.core_type = #tpu.core_type<tc>, window_params = [{transform_indices = @transform_0, window_bounds = array<i64: 256, 512>}, {transform_indices = @transform_1, window_bounds = array<i64: 512, 128>}, {transform_indices = @transform_2, window_bounds = array<i64: 1, 128>}, {transform_indices = @transform_3, window_bounds = array<i64: 256, 128>}]} {
    %c0 = arith.constant 0 : index
    %c0_0 = arith.constant 0 : index
    %0 = vector.load %arg2[%c0, %c0_0] : memref<256x512xbf16, #tpu.memory_space<vmem>>, vector<256x512xbf16>
    %c0_1 = arith.constant 0 : index
    %c0_2 = arith.constant 0 : index
    %1 = vector.load %arg3[%c0_1, %c0_2] : memref<512x128xbf16, #tpu.memory_space<vmem>>, vector<512x128xbf16>
    %cst = arith.constant dense<0.000000e+00> : vector<256x128xf32>
    %2 = tpu.matmul %0, %1, %cst {dimension_numbers = #tpu.dot_dimension_numbers<[1], [0], [0], [1], [0, 0, 1, 1], [], []>} : vector<256x512xbf16>, vector<512x128xbf16>, vector<256x128xf32> -> vector<256x128xf32>
    %c0_3 = arith.constant 0 : index
    %c0_4 = arith.constant 0 : index
    %3 = vector.load %arg4[%c0_3, %c0_4] : memref<1x128xf32, #tpu.memory_space<vmem>>, vector<1x128xf32>
    %4 = vector.broadcast %3 : vector<1x128xf32> to vector<256x128xf32>
    %5 = arith.addf %2, %4 : vector<256x128xf32>
    %c0_5 = arith.constant 0 : index
    %c0_6 = arith.constant 0 : index
    %6 = vector.load %arg5[%c0_5, %c0_6] : memref<256x128xf32, #tpu.memory_space<vmem>>, vector<256x128xf32>
    tpu.vector_store %arg5[%c0_5, %c0_6], %5 {strides = array<i32>} : memref<256x128xf32, #tpu.memory_space<vmem>>, vector<256x128xf32>,
    return
  }
  func.func @transform_0(%arg0: i32, %arg1: i32) -> (i32, i32) {
    %c0_i32 = arith.constant 0 : i32
    %c0_i32_0 = arith.constant 0 : i32
    return %arg0, %c0_i32 : i32, i32
  }
  func.func @transform_1(%arg0: i32, %arg1: i32) -> (i32, i32) {
    %c0_i32 = arith.constant 0 : i32
    %c0_i32_0 = arith.constant 0 : i32
    return %c0_i32, %arg1 : i32, i32
  }
  func.func @transform_2(%arg0: i32, %arg1: i32) -> (i32, i32) {
    %c0_i32 = arith.constant 0 : i32
    %c0_i32_0 = arith.constant 0 : i32
    return %c0_i32, %arg1 : i32, i32
  }
  func.func @transform_3(%arg0: i32, %arg1: i32) -> (i32, i32) {
    %c0_i32 = arith.constant 0 : i32
    return %arg0, %arg1 : i32, i32
  }
}

module attributes {stable_mosaic.version = 11 : i64} {
  func.func @_affine_kernel(%arg0: i32, %arg1: memref<512x128xf32, #tpu.memory_space<vmem>>, %arg2: memref<1x128xf32, #tpu.memory_space<vmem>>, %arg3: memref<1x128xf32, #tpu.memory_space<vmem>>, %arg4: memref<512x128xf32, #tpu.memory_space<vmem>>) attributes {dimension_semantics = [#tpu.dimension_semantics<parallel>], iteration_bounds = array<i64: 1>, scalar_prefetch = 0 : i64, scratch_operands = 0 : i64, tpu.core_type = #tpu.core_type<tc>, window_params = [{transform_indices = @transform_0, window_bounds = array<i64: 512, 128>}, {pipeline_mode = #tpu.pipeline_mode<synchronous>, transform_indices = @transform_1, window_bounds = array<i64: 1, 128>}, {pipeline_mode = #tpu.pipeline_mode<synchronous>, transform_indices = @transform_2, window_bounds = array<i64: 1, 128>}, {transform_indices = @transform_3, window_bounds = array<i64: 512, 128>}]} {
    %c0 = arith.constant 0 : index
    %c0_0 = arith.constant 0 : index
    %0 = vector.load %arg1[%c0, %c0_0] : memref<512x128xf32, #tpu.memory_space<vmem>>, vector<512x128xf32>
    %c0_1 = arith.constant 0 : index
    %c0_2 = arith.constant 0 : index
    %1 = vector.load %arg2[%c0_1, %c0_2] : memref<1x128xf32, #tpu.memory_space<vmem>>, vector<1x128xf32>
    %2 = vector.broadcast %1 : vector<1x128xf32> to vector<512x128xf32>
    %3 = arith.mulf %0, %2 : vector<512x128xf32>
    %c0_3 = arith.constant 0 : index
    %c0_4 = arith.constant 0 : index
    %4 = vector.load %arg3[%c0_3, %c0_4] : memref<1x128xf32, #tpu.memory_space<vmem>>, vector<1x128xf32>
    %5 = vector.broadcast %4 : vector<1x128xf32> to vector<512x128xf32>
    %6 = arith.addf %3, %5 : vector<512x128xf32>
    %cst = arith.constant 0.000000e+00 : f32
    %7 = vector.broadcast %cst : f32 to vector<512x128xf32>
    %8 = arith.cmpf oge, %6, %7 : vector<512x128xf32>
    %cst_5 = arith.constant 0.00999999977 : f32
    %9 = vector.broadcast %cst_5 : f32 to vector<512x128xf32>
    %10 = arith.mulf %9, %6 : vector<512x128xf32>
    %11 = arith.select %8, %6, %10 : vector<512x128xi1>, vector<512x128xf32>
    %c0_6 = arith.constant 0 : index
    %c0_7 = arith.constant 0 : index
    %12 = vector.load %arg4[%c0_6, %c0_7] : memref<512x128xf32, #tpu.memory_space<vmem>>, vector<512x128xf32>
    tpu.vector_store %arg4[%c0_6, %c0_7], %11 {strides = array<i32>} : memref<512x128xf32, #tpu.memory_space<vmem>>, vector<512x128xf32>,
    return
  }
  func.func @transform_0(%arg0: i32) -> (i32, i32) {
    %c0_i32 = arith.constant 0 : i32
    %c0_i32_0 = arith.constant 0 : i32
    return %arg0, %c0_i32 : i32, i32
  }
  func.func @transform_1(%arg0: i32) -> (i32, i32) {
    %c0_i32 = arith.constant 0 : i32
    %c0_i32_0 = arith.constant 0 : i32
    %c0_i32_1 = arith.constant 0 : i32
    return %c0_i32, %c0_i32_0 : i32, i32
  }
  func.func @transform_2(%arg0: i32) -> (i32, i32) {
    %c0_i32 = arith.constant 0 : i32
    %c0_i32_0 = arith.constant 0 : i32
    %c0_i32_1 = arith.constant 0 : i32
    return %c0_i32, %c0_i32_0 : i32, i32
  }
  func.func @transform_3(%arg0: i32) -> (i32, i32) {
    %c0_i32 = arith.constant 0 : i32
    %c0_i32_0 = arith.constant 0 : i32
    return %arg0, %c0_i32 : i32, i32
  }
}

module attributes {stable_mosaic.version = 11 : i64} {
  func.func @_mm_kernel_single(%arg0: i32, %arg1: i32, %arg2: memref<128x1024xbf16, #tpu.memory_space<vmem>>, %arg3: memref<1024x128xbf16, #tpu.memory_space<vmem>>, %arg4: memref<1x128xf32, #tpu.memory_space<vmem>>, %arg5: memref<128x128xf32, #tpu.memory_space<vmem>>) attributes {dimension_semantics = [#tpu.dimension_semantics<parallel>, #tpu.dimension_semantics<parallel>], iteration_bounds = array<i64: 1, 1>, scalar_prefetch = 0 : i64, scratch_operands = 0 : i64, tpu.core_type = #tpu.core_type<tc>, window_params = [{transform_indices = @transform_0, window_bounds = array<i64: 128, 1024>}, {transform_indices = @transform_1, window_bounds = array<i64: 1024, 128>}, {transform_indices = @transform_2, window_bounds = array<i64: 1, 128>}, {transform_indices = @transform_3, window_bounds = array<i64: 128, 128>}]} {
    %c0 = arith.constant 0 : index
    %c0_0 = arith.constant 0 : index
    %0 = vector.load %arg2[%c0, %c0_0] : memref<128x1024xbf16, #tpu.memory_space<vmem>>, vector<128x1024xbf16>
    %c0_1 = arith.constant 0 : index
    %c0_2 = arith.constant 0 : index
    %1 = vector.load %arg3[%c0_1, %c0_2] : memref<1024x128xbf16, #tpu.memory_space<vmem>>, vector<1024x128xbf16>
    %cst = arith.constant dense<0.000000e+00> : vector<128x128xf32>
    %2 = tpu.matmul %0, %1, %cst {dimension_numbers = #tpu.dot_dimension_numbers<[1], [0], [0], [1], [0, 0, 1, 1], [], []>} : vector<128x1024xbf16>, vector<1024x128xbf16>, vector<128x128xf32> -> vector<128x128xf32>
    %c0_3 = arith.constant 0 : index
    %c0_4 = arith.constant 0 : index
    %3 = vector.load %arg4[%c0_3, %c0_4] : memref<1x128xf32, #tpu.memory_space<vmem>>, vector<1x128xf32>
    %4 = vector.broadcast %3 : vector<1x128xf32> to vector<128x128xf32>
    %5 = arith.addf %2, %4 : vector<128x128xf32>
    %c0_5 = arith.constant 0 : index
    %c0_6 = arith.constant 0 : index
    %6 = vector.load %arg5[%c0_5, %c0_6] : memref<128x128xf32, #tpu.memory_space<vmem>>, vector<128x128xf32>
    tpu.vector_store %arg5[%c0_5, %c0_6], %5 {strides = array<i32>} : memref<128x128xf32, #tpu.memory_space<vmem>>, vector<128x128xf32>,
    return
  }
  func.func @transform_0(%arg0: i32, %arg1: i32) -> (i32, i32) {
    %c0_i32 = arith.constant 0 : i32
    %c0_i32_0 = arith.constant 0 : i32
    return %arg0, %c0_i32 : i32, i32
  }
  func.func @transform_1(%arg0: i32, %arg1: i32) -> (i32, i32) {
    %c0_i32 = arith.constant 0 : i32
    %c0_i32_0 = arith.constant 0 : i32
    return %c0_i32, %arg1 : i32, i32
  }
  func.func @transform_2(%arg0: i32, %arg1: i32) -> (i32, i32) {
    %c0_i32 = arith.constant 0 : i32
    %c0_i32_0 = arith.constant 0 : i32
    return %c0_i32, %arg1 : i32, i32
  }
  func.func @transform_3(%arg0: i32, %arg1: i32) -> (i32, i32) {
    %c0_i32 = arith.constant 0 : i32
    return %arg0, %arg1 : i32, i32
  }
}

module attributes {stable_mosaic.version = 11 : i64} {
  func.func @_affine_kernel(%arg0: i32, %arg1: memref<128x128xf32, #tpu.memory_space<vmem>>, %arg2: memref<1x128xf32, #tpu.memory_space<vmem>>, %arg3: memref<1x128xf32, #tpu.memory_space<vmem>>, %arg4: memref<128x128xf32, #tpu.memory_space<vmem>>) attributes {dimension_semantics = [#tpu.dimension_semantics<parallel>], iteration_bounds = array<i64: 1>, scalar_prefetch = 0 : i64, scratch_operands = 0 : i64, tpu.core_type = #tpu.core_type<tc>, window_params = [{transform_indices = @transform_0, window_bounds = array<i64: 128, 128>}, {pipeline_mode = #tpu.pipeline_mode<synchronous>, transform_indices = @transform_1, window_bounds = array<i64: 1, 128>}, {pipeline_mode = #tpu.pipeline_mode<synchronous>, transform_indices = @transform_2, window_bounds = array<i64: 1, 128>}, {transform_indices = @transform_3, window_bounds = array<i64: 128, 128>}]} {
    %c0 = arith.constant 0 : index
    %c0_0 = arith.constant 0 : index
    %0 = vector.load %arg1[%c0, %c0_0] : memref<128x128xf32, #tpu.memory_space<vmem>>, vector<128x128xf32>
    %c0_1 = arith.constant 0 : index
    %c0_2 = arith.constant 0 : index
    %1 = vector.load %arg2[%c0_1, %c0_2] : memref<1x128xf32, #tpu.memory_space<vmem>>, vector<1x128xf32>
    %2 = vector.broadcast %1 : vector<1x128xf32> to vector<128x128xf32>
    %3 = arith.mulf %0, %2 : vector<128x128xf32>
    %c0_3 = arith.constant 0 : index
    %c0_4 = arith.constant 0 : index
    %4 = vector.load %arg3[%c0_3, %c0_4] : memref<1x128xf32, #tpu.memory_space<vmem>>, vector<1x128xf32>
    %5 = vector.broadcast %4 : vector<1x128xf32> to vector<128x128xf32>
    %6 = arith.addf %3, %5 : vector<128x128xf32>
    %cst = arith.constant 0.000000e+00 : f32
    %7 = vector.broadcast %cst : f32 to vector<128x128xf32>
    %8 = arith.cmpf oge, %6, %7 : vector<128x128xf32>
    %cst_5 = arith.constant 0.00999999977 : f32
    %9 = vector.broadcast %cst_5 : f32 to vector<128x128xf32>
    %10 = arith.mulf %9, %6 : vector<128x128xf32>
    %11 = arith.select %8, %6, %10 : vector<128x128xi1>, vector<128x128xf32>
    %c0_6 = arith.constant 0 : index
    %c0_7 = arith.constant 0 : index
    %12 = vector.load %arg4[%c0_6, %c0_7] : memref<128x128xf32, #tpu.memory_space<vmem>>, vector<128x128xf32>
    tpu.vector_store %arg4[%c0_6, %c0_7], %11 {strides = array<i32>} : memref<128x128xf32, #tpu.memory_space<vmem>>, vector<128x128xf32>,
    return
  }
  func.func @transform_0(%arg0: i32) -> (i32, i32) {
    %c0_i32 = arith.constant 0 : i32
    %c0_i32_0 = arith.constant 0 : i32
    return %arg0, %c0_i32 : i32, i32
  }
  func.func @transform_1(%arg0: i32) -> (i32, i32) {
    %c0_i32 = arith.constant 0 : i32
    %c0_i32_0 = arith.constant 0 : i32
    %c0_i32_1 = arith.constant 0 : i32
    return %c0_i32, %c0_i32_0 : i32, i32
  }
  func.func @transform_2(%arg0: i32) -> (i32, i32) {
    %c0_i32 = arith.constant 0 : i32
    %c0_i32_0 = arith.constant 0 : i32
    %c0_i32_1 = arith.constant 0 : i32
    return %c0_i32, %c0_i32_0 : i32, i32
  }
  func.func @transform_3(%arg0: i32) -> (i32, i32) {
    %c0_i32 = arith.constant 0 : i32
    %c0_i32_0 = arith.constant 0 : i32
    return %arg0, %c0_i32 : i32, i32
  }
}

module attributes {stable_mosaic.version = 11 : i64} {
  func.func @_mm_kernel_single(%arg0: i32, %arg1: i32, %arg2: memref<128x256xbf16, #tpu.memory_space<vmem>>, %arg3: memref<256x256xbf16, #tpu.memory_space<vmem>>, %arg4: memref<1x256xf32, #tpu.memory_space<vmem>>, %arg5: memref<128x256xf32, #tpu.memory_space<vmem>>) attributes {dimension_semantics = [#tpu.dimension_semantics<parallel>, #tpu.dimension_semantics<parallel>], iteration_bounds = array<i64: 1, 2>, scalar_prefetch = 0 : i64, scratch_operands = 0 : i64, tpu.core_type = #tpu.core_type<tc>, window_params = [{transform_indices = @transform_0, window_bounds = array<i64: 128, 256>}, {transform_indices = @transform_1, window_bounds = array<i64: 256, 256>}, {transform_indices = @transform_2, window_bounds = array<i64: 1, 256>}, {transform_indices = @transform_3, window_bounds = array<i64: 128, 256>}]} {
    %c0 = arith.constant 0 : index
    %c0_0 = arith.constant 0 : index
    %0 = vector.load %arg2[%c0, %c0_0] : memref<128x256xbf16, #tpu.memory_space<vmem>>, vector<128x256xbf16>
    %c0_1 = arith.constant 0 : index
    %c0_2 = arith.constant 0 : index
    %1 = vector.load %arg3[%c0_1, %c0_2] : memref<256x256xbf16, #tpu.memory_space<vmem>>, vector<256x256xbf16>
    %cst = arith.constant dense<0.000000e+00> : vector<128x256xf32>
    %2 = tpu.matmul %0, %1, %cst {dimension_numbers = #tpu.dot_dimension_numbers<[1], [0], [0], [1], [0, 0, 1, 1], [], []>} : vector<128x256xbf16>, vector<256x256xbf16>, vector<128x256xf32> -> vector<128x256xf32>
    %c0_3 = arith.constant 0 : index
    %c0_4 = arith.constant 0 : index
    %3 = vector.load %arg4[%c0_3, %c0_4] : memref<1x256xf32, #tpu.memory_space<vmem>>, vector<1x256xf32>
    %4 = vector.broadcast %3 : vector<1x256xf32> to vector<128x256xf32>
    %5 = arith.addf %2, %4 : vector<128x256xf32>
    %cst_5 = arith.constant 0.000000e+00 : f32
    %6 = vector.broadcast %cst_5 : f32 to vector<128x256xf32>
    %7 = arith.maximumf %5, %6 : vector<128x256xf32>
    %c0_6 = arith.constant 0 : index
    %c0_7 = arith.constant 0 : index
    %8 = vector.load %arg5[%c0_6, %c0_7] : memref<128x256xf32, #tpu.memory_space<vmem>>, vector<128x256xf32>
    tpu.vector_store %arg5[%c0_6, %c0_7], %7 {strides = array<i32>} : memref<128x256xf32, #tpu.memory_space<vmem>>, vector<128x256xf32>,
    return
  }
  func.func @transform_0(%arg0: i32, %arg1: i32) -> (i32, i32) {
    %c0_i32 = arith.constant 0 : i32
    %c0_i32_0 = arith.constant 0 : i32
    return %arg0, %c0_i32 : i32, i32
  }
  func.func @transform_1(%arg0: i32, %arg1: i32) -> (i32, i32) {
    %c0_i32 = arith.constant 0 : i32
    %c0_i32_0 = arith.constant 0 : i32
    return %c0_i32, %arg1 : i32, i32
  }
  func.func @transform_2(%arg0: i32, %arg1: i32) -> (i32, i32) {
    %c0_i32 = arith.constant 0 : i32
    %c0_i32_0 = arith.constant 0 : i32
    return %c0_i32, %arg1 : i32, i32
  }
  func.func @transform_3(%arg0: i32, %arg1: i32) -> (i32, i32) {
    %c0_i32 = arith.constant 0 : i32
    return %arg0, %arg1 : i32, i32
  }
}

module attributes {stable_mosaic.version = 11 : i64} {
  func.func @_mm_kernel_single(%arg0: i32, %arg1: i32, %arg2: memref<256x384xbf16, #tpu.memory_space<vmem>>, %arg3: memref<384x128xbf16, #tpu.memory_space<vmem>>, %arg4: memref<1x128xf32, #tpu.memory_space<vmem>>, %arg5: memref<256x128xf32, #tpu.memory_space<vmem>>) attributes {dimension_semantics = [#tpu.dimension_semantics<parallel>, #tpu.dimension_semantics<parallel>], iteration_bounds = array<i64: 2, 1>, scalar_prefetch = 0 : i64, scratch_operands = 0 : i64, tpu.core_type = #tpu.core_type<tc>, window_params = [{transform_indices = @transform_0, window_bounds = array<i64: 256, 384>}, {transform_indices = @transform_1, window_bounds = array<i64: 384, 128>}, {transform_indices = @transform_2, window_bounds = array<i64: 1, 128>}, {transform_indices = @transform_3, window_bounds = array<i64: 256, 128>}]} {
    %c0 = arith.constant 0 : index
    %c0_0 = arith.constant 0 : index
    %0 = vector.load %arg2[%c0, %c0_0] : memref<256x384xbf16, #tpu.memory_space<vmem>>, vector<256x384xbf16>
    %c0_1 = arith.constant 0 : index
    %c0_2 = arith.constant 0 : index
    %1 = vector.load %arg3[%c0_1, %c0_2] : memref<384x128xbf16, #tpu.memory_space<vmem>>, vector<384x128xbf16>
    %cst = arith.constant dense<0.000000e+00> : vector<256x128xf32>
    %2 = tpu.matmul %0, %1, %cst {dimension_numbers = #tpu.dot_dimension_numbers<[1], [0], [0], [1], [0, 0, 1, 1], [], []>} : vector<256x384xbf16>, vector<384x128xbf16>, vector<256x128xf32> -> vector<256x128xf32>
    %c0_3 = arith.constant 0 : index
    %c0_4 = arith.constant 0 : index
    %3 = vector.load %arg4[%c0_3, %c0_4] : memref<1x128xf32, #tpu.memory_space<vmem>>, vector<1x128xf32>
    %4 = vector.broadcast %3 : vector<1x128xf32> to vector<256x128xf32>
    %5 = arith.addf %2, %4 : vector<256x128xf32>
    %cst_5 = arith.constant 0.000000e+00 : f32
    %6 = vector.broadcast %cst_5 : f32 to vector<256x128xf32>
    %7 = arith.maximumf %5, %6 : vector<256x128xf32>
    %c0_6 = arith.constant 0 : index
    %c0_7 = arith.constant 0 : index
    %8 = vector.load %arg5[%c0_6, %c0_7] : memref<256x128xf32, #tpu.memory_space<vmem>>, vector<256x128xf32>
    tpu.vector_store %arg5[%c0_6, %c0_7], %7 {strides = array<i32>} : memref<256x128xf32, #tpu.memory_space<vmem>>, vector<256x128xf32>,
    return
  }
  func.func @transform_0(%arg0: i32, %arg1: i32) -> (i32, i32) {
    %c0_i32 = arith.constant 0 : i32
    %c0_i32_0 = arith.constant 0 : i32
    return %arg0, %c0_i32 : i32, i32
  }
  func.func @transform_1(%arg0: i32, %arg1: i32) -> (i32, i32) {
    %c0_i32 = arith.constant 0 : i32
    %c0_i32_0 = arith.constant 0 : i32
    return %c0_i32, %arg1 : i32, i32
  }
  func.func @transform_2(%arg0: i32, %arg1: i32) -> (i32, i32) {
    %c0_i32 = arith.constant 0 : i32
    %c0_i32_0 = arith.constant 0 : i32
    return %c0_i32, %arg1 : i32, i32
  }
  func.func @transform_3(%arg0: i32, %arg1: i32) -> (i32, i32) {
    %c0_i32 = arith.constant 0 : i32
    return %arg0, %arg1 : i32, i32
  }
}

module attributes {stable_mosaic.version = 11 : i64} {
  func.func @_mm_kernel_single(%arg0: i32, %arg1: i32, %arg2: memref<256x384xbf16, #tpu.memory_space<vmem>>, %arg3: memref<384x128xbf16, #tpu.memory_space<vmem>>, %arg4: memref<1x128xf32, #tpu.memory_space<vmem>>, %arg5: memref<256x128xf32, #tpu.memory_space<vmem>>) attributes {dimension_semantics = [#tpu.dimension_semantics<parallel>, #tpu.dimension_semantics<parallel>], iteration_bounds = array<i64: 2, 1>, scalar_prefetch = 0 : i64, scratch_operands = 0 : i64, tpu.core_type = #tpu.core_type<tc>, window_params = [{transform_indices = @transform_0, window_bounds = array<i64: 256, 384>}, {transform_indices = @transform_1, window_bounds = array<i64: 384, 128>}, {transform_indices = @transform_2, window_bounds = array<i64: 1, 128>}, {transform_indices = @transform_3, window_bounds = array<i64: 256, 128>}]} {
    %c0 = arith.constant 0 : index
    %c0_0 = arith.constant 0 : index
    %0 = vector.load %arg2[%c0, %c0_0] : memref<256x384xbf16, #tpu.memory_space<vmem>>, vector<256x384xbf16>
    %c0_1 = arith.constant 0 : index
    %c0_2 = arith.constant 0 : index
    %1 = vector.load %arg3[%c0_1, %c0_2] : memref<384x128xbf16, #tpu.memory_space<vmem>>, vector<384x128xbf16>
    %cst = arith.constant dense<0.000000e+00> : vector<256x128xf32>
    %2 = tpu.matmul %0, %1, %cst {dimension_numbers = #tpu.dot_dimension_numbers<[1], [0], [0], [1], [0, 0, 1, 1], [], []>} : vector<256x384xbf16>, vector<384x128xbf16>, vector<256x128xf32> -> vector<256x128xf32>
    %c0_3 = arith.constant 0 : index
    %c0_4 = arith.constant 0 : index
    %3 = vector.load %arg4[%c0_3, %c0_4] : memref<1x128xf32, #tpu.memory_space<vmem>>, vector<1x128xf32>
    %4 = vector.broadcast %3 : vector<1x128xf32> to vector<256x128xf32>
    %5 = arith.addf %2, %4 : vector<256x128xf32>
    %c0_5 = arith.constant 0 : index
    %c0_6 = arith.constant 0 : index
    %6 = vector.load %arg5[%c0_5, %c0_6] : memref<256x128xf32, #tpu.memory_space<vmem>>, vector<256x128xf32>
    tpu.vector_store %arg5[%c0_5, %c0_6], %5 {strides = array<i32>} : memref<256x128xf32, #tpu.memory_space<vmem>>, vector<256x128xf32>,
    return
  }
  func.func @transform_0(%arg0: i32, %arg1: i32) -> (i32, i32) {
    %c0_i32 = arith.constant 0 : i32
    %c0_i32_0 = arith.constant 0 : i32
    return %arg0, %c0_i32 : i32, i32
  }
  func.func @transform_1(%arg0: i32, %arg1: i32) -> (i32, i32) {
    %c0_i32 = arith.constant 0 : i32
    %c0_i32_0 = arith.constant 0 : i32
    return %c0_i32, %arg1 : i32, i32
  }
  func.func @transform_2(%arg0: i32, %arg1: i32) -> (i32, i32) {
    %c0_i32 = arith.constant 0 : i32
    %c0_i32_0 = arith.constant 0 : i32
    return %c0_i32, %arg1 : i32, i32
  }
  func.func @transform_3(%arg0: i32, %arg1: i32) -> (i32, i32) {
    %c0_i32 = arith.constant 0 : i32
    return %arg0, %arg1 : i32, i32
  }
}

</mosaic_0001>

<llo_original>
// kernel: generator_forward.14
$region0: #{generator_forward.14}
  #allocation0 [shape = 'u32[]', space=smem, size = 0x4, offset = 0x4, fixed_abs, tag = 'smem constant byte address 0x4 - core index']
  #allocation1 [shape = 'u32[144,128]{1,0:T(1,128)}', space=vmem, size = 0x12000, scoped, tag = 'internal scratch']
  %s0 = inlined_call_operand.vmem [shape: bf16[512,128], index: 0, kind: input, shape index: {}]
  %s1 = inlined_call_operand.hbm [shape: bf16[128,256], index: 1, kind: input, shape index: {}]
  %s2 = inlined_call_operand.hbm [shape: f32[1,256], index: 2, kind: input, shape index: {}]
  %s3 = inlined_call_operand.vmem [shape: f32[512,256], index: 3, kind: output, shape index: {}]
  %s4 = sld [smem:[#allocation0]]
  $region53: #{generator_forward.14} parent=0
    _
  %s6 = ssub.s32 1, %s4
  %s7 = scalar_select 0, %s6, %s4
  $region1: #{generator_forward.14} parent=0
    #allocation2 [shape = 'u8[65536]{0}', space=vmem, size = 0x10000, scoped, tag = 'input window, operand 1, single buffered']
    #allocation3 [shape = 's32[2]{0}', space=sflag, size = 0x8, scoped, tag = 'scoped memory for generator_forward.14']
    #allocation4 [shape = 'u8[1024]{0}', space=vmem, size = 0x400, scoped, tag = 'input window, operand 2, single buffered']
    #allocation5 [shape = 's32[1]{0}', space=sflag, size = 0x4, scoped, tag = 'scoped memory for generator_forward.14']
    %8 = vsyncpa [#allocation3], 0
    %9 = vsyncpa [#allocation5], 0
    loop: start=0, step=1, limit=4
    $region2: #{generator_forward.14} parent=1 // loop_pre_header
      _
    $region3: #{generator_forward.14} parent=1 // loop_header
      %s11 = sphi 0, %s15
      %p12 = scmp.ge.s32.totalorder %s11, 4
      %s18 = sphi 0, %s30
      %s19 = sphi 0, %s26
      %s20 = sphi 0, %s18
      %s21 = sphi 0, %s19
      %s22 = sphi 0, %s20
      %s23 = sphi 0, %s21
      %s33 = sphi 0, %s35
      %s36 = sphi 0, %s33
      %s37 = sphi 0, %s36
      %s53 = sphi 0, %s37
      %s59 = sphi 0, %s61
      %s62 = sphi 0, %s59
      %s63 = sphi 0, %s62
      %s79 = sphi 0, %s63
      %s85 = sphi 0, %s87
      %s88 = sphi 0, %s85
      %s89 = sphi 0, %s88
      %s105 = sphi 0, %s89
      %s113 = sphi 0, %s115
      %s116 = sphi 0, %s113
      %s117 = sphi 0, %s116
      %s133 = sphi 0, %s117
    $region4: #{generator_forward.14} parent=1 // loop_header_branch
      %14 = sbr.rel (%p12) target = $region8
    $region5: #{generator_forward.14} parent=1 // loop_body
      %s16 = ssub.s32 %s11, 1
      %s17 = ssub.s32 %s11, 2
      %s24 = sadd.s32 1, %s19
      %p25 = scmp.ge.s32.totalorder %s24, 1
      %s26 = scalar_select %p25, 0, %s24
      %s27 = sadd.s32 1, %s18
      %s28 = scalar_select %p25, %s27, %s18
      %p29 = scmp.ge.s32.totalorder %s28, 2
      %s30 = scalar_select %p29, 0, %s28
      %s31 = ssub.s32 %s18, %s30
      %p32 = scmp.eq.s32.totalorder %s31, 0
      %s34 = sadd.s32 %s33, 1
      %s35 = scalar_select %p32, %s33, %s34
      %p38 = pneg %p32
      %p39 = scmp.eq.s32.totalorder %s11, 1
      %p40 = por %p38, %p39
      %p41 = scmp.ne.s32.totalorder %s33, %s36
      %p42 = scmp.eq.s32.totalorder %s11, 0
      %p43 = por %p41, %p42
      %p44 = scmp.ne.s32.totalorder %s33, %s36
      %p45 = scmp.eq.s32.totalorder %s16, 1
      %p46 = por %p44, %p45
      %p47 = scmp.ne.s32.totalorder %s36, %s37
      %p48 = scmp.eq.s32.totalorder %s16, 0
      %p49 = por %p47, %p48
      %p50 = scmp.ne.s32.totalorder %s36, %s37
      %p51 = scmp.eq.s32.totalorder %s17, 1
      %p52 = por %p50, %p51
      %p54 = scmp.ne.s32.totalorder %s37, %s53
      %p55 = scmp.eq.s32.totalorder %s17, 0
      %p56 = por %p54, %p55
      %s57 = ssub.s32 %s19, %s26
      %p58 = scmp.eq.s32.totalorder %s57, 0
      %s60 = sadd.s32 %s59, 1
      %s61 = scalar_select %p58, %s59, %s60
      %p64 = pneg %p58
      %p65 = scmp.eq.s32.totalorder %s11, 1
      %p66 = por %p64, %p65
      %p67 = scmp.ne.s32.totalorder %s59, %s62
      %p68 = scmp.eq.s32.totalorder %s11, 0
      %p69 = por %p67, %p68
      %p70 = scmp.ne.s32.totalorder %s59, %s62
      %p71 = scmp.eq.s32.totalorder %s16, 1
      %p72 = por %p70, %p71
      %p73 = scmp.ne.s32.totalorder %s62, %s63
      %p74 = scmp.eq.s32.totalorder %s16, 0
      %p75 = por %p73, %p74
      %p76 = scmp.ne.s32.totalorder %s62, %s63
      %p77 = scmp.eq.s32.totalorder %s17, 1
      %p78 = por %p76, %p77
      %p80 = scmp.ne.s32.totalorder %s63, %s79
      %p81 = scmp.eq.s32.totalorder %s17, 0
      %p82 = por %p80, %p81
      %s83 = ssub.s32 %s19, %s26
      %p84 = scmp.eq.s32.totalorder %s83, 0
      %s86 = sadd.s32 %s85, 1
      %s87 = scalar_select %p84, %s85, %s86
      %p90 = pneg %p84
      %p91 = scmp.eq.s32.totalorder %s11, 1
      %p92 = por %p90, %p91
      %p93 = scmp.ne.s32.totalorder %s85, %s88
      %p94 = scmp.eq.s32.totalorder %s11, 0
      %p95 = por %p93, %p94
      %p96 = scmp.ne.s32.totalorder %s85, %s88
      %p97 = scmp.eq.s32.totalorder %s16, 1
      %p98 = por %p96, %p97
      %p99 = scmp.ne.s32.totalorder %s88, %s89
      %p100 = scmp.eq.s32.totalorder %s16, 0
      %p101 = por %p99, %p100
      %p102 = scmp.ne.s32.totalorder %s88, %s89
      %p103 = scmp.eq.s32.totalorder %s17, 1
      %p104 = por %p102, %p103
      %p106 = scmp.ne.s32.totalorder %s89, %s105
      %p107 = scmp.eq.s32.totalorder %s17, 0
      %p108 = por %p106, %p107
      %s109 = ssub.s32 %s18, %s30
      %s110 = ssub.s32 %s19, %s26
      %s111 = sor.u32 %s109, %s110
      %p112 = scmp.eq.s32.totalorder %s111, 0
      %s114 = sadd.s32 %s113, 1
      %s115 = scalar_select %p112, %s113, %s114
      %p118 = pneg %p112
      %p119 = scmp.eq.s32.totalorder %s11, 1
      %p120 = por %p118, %p119
      %p121 = scmp.ne.s32.totalorder %s113, %s116
      %p122 = scmp.eq.s32.totalorder %s11, 0
      %p123 = por %p121, %p122
      %p124 = scmp.ne.s32.totalorder %s113, %s116
      %p125 = scmp.eq.s32.totalorder %s16, 1
      %p126 = por %p124, %p125
      %p127 = scmp.ne.s32.totalorder %s116, %s117
      %p128 = scmp.eq.s32.totalorder %s16, 0
      %p129 = por %p127, %p128
      %p130 = scmp.ne.s32.totalorder %s116, %s117
      %p131 = scmp.eq.s32.totalorder %s17, 1
      %p132 = por %p130, %p131
      %p134 = scmp.ne.s32.totalorder %s117, %s133
      %p135 = scmp.eq.s32.totalorder %s17, 0
      %p136 = por %p134, %p135
      %p137 = scmp.le.s32.totalorder 1, %s11
      %p138 = scmp.lt.s32.totalorder %s11, 3
      %p139 = pnand %p137, %p138
      %p140 = pneg %p139
      // Predicated region
      $region9: #{generator_forward.14} parent=5 // pred_check
        _
      $region10: #{generator_forward.14} parent=5 // pred_check_branch
        %142 = sbr.rel (%p139) target = $region12
      $region11: #{generator_forward.14} parent=5 // pred_region
        %s143 = ssub.s32 %s11, 1
        // Predicated region
        $region13: #{generator_forward.14} parent=11 // pred_check
          %p144 = pneg %p75
        $region14: #{generator_forward.14} parent=11 // pred_check_branch
          %146 = sbr.rel (%p144) target = $region16
        $region15: #{generator_forward.14} parent=11 // pred_region
          %s147 = smul.u32 2, %s21
          %s149 = ssub.s32 2048, 2048
          %150 = vsyncadd [#allocation3], %s149
          %s151 = smul.addr %s147, 64
          %s152 = scalar_lea.hbm %s1, %s151
          %s153 = sshll.u32 [#allocation2], 4
          %s154 = int_to_ptr.vmem [resolvable:$true] %s153
          %159 = dma.hbm_to_vmem [thread:$0]  %s152, 2048, %s154, [#allocation3], 128, 128, 8
        $region16: #{generator_forward.14} parent=11 // pred_fallthru
          _
        // Predicated region
        $region17: #{generator_forward.14} parent=11 // pred_check
          %p160 = pneg %p101
        $region18: #{generator_forward.14} parent=11 // pred_check_branch
          %162 = sbr.rel (%p160) target = $region20
        $region19: #{generator_forward.14} parent=11 // pred_region
          %s163 = smul.u32 2, %s21
          %s165 = ssub.s32 32, 32
          %166 = vsyncadd [#allocation5], %s165
          %s167 = smul.addr %s163, 16
          %s168 = scalar_lea.hbm %s2, %s167
          %s170 = sshll.u32 [#allocation4], 4
          %s171 = int_to_ptr.vmem [resolvable:$true] %s170
          %173 = dma.hbm_to_vmem [thread:$0]  %s168, 32, %s171, [#allocation5]
        $region20: #{generator_forward.14} parent=11 // pred_fallthru
          _
      $region12: #{generator_forward.14} parent=5 // pred_fallthru
        _
      %p174 = scmp.lt.s32.totalorder %s11, 2
      // Predicated region
      $region21: #{generator_forward.14} parent=5 // pred_check
        %p175 = pneg %p174
      $region22: #{generator_forward.14} parent=5 // pred_check_branch
        %177 = sbr.rel (%p175) target = $region24
      $region23: #{generator_forward.14} parent=5 // pred_region
        // Predicated region
        $region25: #{generator_forward.14} parent=23 // pred_check
          %p178 = pneg %p43
        $region26: #{generator_forward.14} parent=23 // pred_check_branch
          %180 = sbr.rel (%p178) target = $region28
        $region27: #{generator_forward.14} parent=23 // pred_region
          %s181 = smul.u32 32, %s18
          %p182 = scmp.lt.s32.totalorder %s181, 63
          %s183 = scalar_select %p182, %s181, 63
          %s184 = smul.addr %s183, 4
          %s185 = scalar_lea.vmem %s0, %s184
          %s186 = smul.u32 32, %s18
        $region28: #{generator_forward.14} parent=23 // pred_fallthru
          _
      $region24: #{generator_forward.14} parent=5 // pred_fallthru
        _
      %p187 = scmp.le.s32.totalorder 1, %s11
      %p188 = scmp.lt.s32.totalorder %s11, 3
      %p189 = pnand %p187, %p188
      %p190 = pneg %p189
      // Predicated region
      $region29: #{generator_forward.14} parent=5 // pred_check
        _
      $region30: #{generator_forward.14} parent=5 // pred_check_branch
        %192 = sbr.rel (%p189) target = $region32
      $region31: #{generator_forward.14} parent=5 // pred_region
        %s193 = ssub.s32 %s11, 1
        // Predicated region
        $region33: #{generator_forward.14} parent=31 // pred_check
          %p194 = pneg %p75
        $region34: #{generator_forward.14} parent=31 // pred_check_branch
          %196 = sbr.rel (%p194) target = $region36
        $region35: #{generator_forward.14} parent=31 // pred_region
          %197 = dma.done [#allocation3], 2048
        $region36: #{generator_forward.14} parent=31 // pred_fallthru
          _
        // Predicated region
        $region37: #{generator_forward.14} parent=31 // pred_check
          %p198 = pneg %p101
        $region38: #{generator_forward.14} parent=31 // pred_check_branch
          %200 = sbr.rel (%p198) target = $region40
        $region39: #{generator_forward.14} parent=31 // pred_region
          %201 = dma.done [#allocation5], 32
        $region40: #{generator_forward.14} parent=31 // pred_fallthru
          _
        %s202 = smul.u32 32, %s20
        %p203 = scmp.lt.s32.totalorder %s202, 63
        %s204 = scalar_select %p203, %s202, 63
        %s205 = smul.addr %s204, 4
        %s206 = scalar_lea.vmem %s0, %s205
        %p207 = pneg %p49
        %p208 = pneg %p46
        %p209 = pneg %p75
        %p210 = pneg %p72
        %p211 = pneg %p101
        %p212 = pneg %p98
        %p213 = pneg %p129
        %p214 = pneg %p126
        %s215 = smul.u32 32, %s20
        %s216 = smul.u32 2, %s21
        %p217 = scmp.lt.s32.totalorder %s215, 63
        %s218 = scalar_select %p217, %s215, 63
        %p219 = scmp.lt.s32.totalorder %s216, 1
        %s220 = scalar_select %p219, %s216, 1
        %s221 = smul.addr %s218, 2
        %s222 = sadd.s32 %s220, %s221
        %s223 = smul.addr %s222, 8
        %s224 = scalar_lea.vmem %s3, %s223
        %s225 = smul.u32 32, %s20
        %p226 = scmp.lt.s32.totalorder %s225, 63
        %s227 = scalar_select %p226, %s225, 63
        %s228 = smul.addr %s227, 4
        %s229 = scalar_lea.vmem %s0, %s228
        %s230 = smul.u32 32, %s20
        %s231 = smul.u32 2, %s21
        %s232 = smul.u32 2, %s21
        %s233 = smul.u32 32, %s20
        %s234 = smul.u32 2, %s21
        %p235 = scmp.lt.s32.totalorder %s233, 63
        %s236 = scalar_select %p235, %s233, 63
        %p237 = scmp.lt.s32.totalorder %s234, 1
        %s238 = scalar_select %p237, %s234, 1
        %s239 = smul.addr %s236, 2
        %s240 = sadd.s32 %s238, %s239
        %s241 = smul.addr %s240, 8
        %s242 = scalar_lea.vmem %s3, %s241
        %s243 = smul.u32 32, %s20
        %s244 = smul.u32 2, %s21
        %v246 = vld [vmem:[%s229] sm:$0xf]
        %v247 = vld [vmem:[%s229 + $0x4] sm:$0xf]
        %v248 = vld [vmem:[%s229 + $0x8] sm:$0xf]
        %v249 = vld [vmem:[%s229 + $0xc] sm:$0xf]
        %v250 = vld [vmem:[%s229 + $0x10] sm:$0xf]
        %v251 = vld [vmem:[%s229 + $0x14] sm:$0xf]
        %v252 = vld [vmem:[%s229 + $0x18] sm:$0xf]
        %v253 = vld [vmem:[%s229 + $0x1c] sm:$0xf]
        %v254 = vld [vmem:[%s229 + $0x20] sm:$0xf]
        %v255 = vld [vmem:[%s229 + $0x24] sm:$0xf]
        %v256 = vld [vmem:[%s229 + $0x28] sm:$0xf]
        %v257 = vld [vmem:[%s229 + $0x2c] sm:$0xf]
        %v258 = vld [vmem:[%s229 + $0x30] sm:$0xf]
        %v259 = vld [vmem:[%s229 + $0x34] sm:$0xf]
        %v260 = vld [vmem:[%s229 + $0x38] sm:$0xf]
        %v261 = vld [vmem:[%s229 + $0x3c] sm:$0xf]
        %v262 = vld [vmem:[%s229 + $0x40] sm:$0xf]
        %v263 = vld [vmem:[%s229 + $0x44] sm:$0xf]
        %v264 = vld [vmem:[%s229 + $0x48] sm:$0xf]
        %v265 = vld [vmem:[%s229 + $0x4c] sm:$0xf]
        %v266 = vld [vmem:[%s229 + $0x50] sm:$0xf]
        %v267 = vld [vmem:[%s229 + $0x54] sm:$0xf]
        %v268 = vld [vmem:[%s229 + $0x58] sm:$0xf]
        %v269 = vld [vmem:[%s229 + $0x5c] sm:$0xf]
        %v270 = vld [vmem:[%s229 + $0x60] sm:$0xf]
        %v271 = vld [vmem:[%s229 + $0x64] sm:$0xf]
        %v272 = vld [vmem:[%s229 + $0x68] sm:$0xf]
        %v273 = vld [vmem:[%s229 + $0x6c] sm:$0xf]
        %v274 = vld [vmem:[%s229 + $0x70] sm:$0xf]
        %v275 = vld [vmem:[%s229 + $0x74] sm:$0xf]
        %v276 = vld [vmem:[%s229 + $0x78] sm:$0xf]
        %v277 = vld [vmem:[%s229 + $0x7c] sm:$0xf]
        %v278 = vld [vmem:[#allocation2] sm:$0xff]
        %v279 = vld [vmem:[#allocation2 + $0x8] sm:$0xff]
        %v280 = vld [vmem:[#allocation2 + $0x10] sm:$0xff]
        %v281 = vld [vmem:[#allocation2 + $0x18] sm:$0xff]
        %v282 = vld [vmem:[#allocation2 + $0x20] sm:$0xff]
        %v283 = vld [vmem:[#allocation2 + $0x28] sm:$0xff]
        %v284 = vld [vmem:[#allocation2 + $0x30] sm:$0xff]
        %v285 = vld [vmem:[#allocation2 + $0x38] sm:$0xff]
        %v286 = vld [vmem:[#allocation2 + $0x40] sm:$0xff]
        %v287 = vld [vmem:[#allocation2 + $0x48] sm:$0xff]
        %v288 = vld [vmem:[#allocation2 + $0x50] sm:$0xff]
        %v289 = vld [vmem:[#allocation2 + $0x58] sm:$0xff]
        %v290 = vld [vmem:[#allocation2 + $0x60] sm:$0xff]
        %v291 = vld [vmem:[#allocation2 + $0x68] sm:$0xff]
        %v292 = vld [vmem:[#allocation2 + $0x70] sm:$0xff]
        %v293 = vld [vmem:[#allocation2 + $0x78] sm:$0xff]
        %v294 = vld [vmem:[#allocation4] sm:$0x3]
        %v296 = vlaneseq
        %v297 = vshrl.u32 %v296, 7
        %v298 = vsub.s32 0, %v297
        %v299 = vrot.slane %v294, %v298
        %v300 = vlaneseq
        %v301 = vshrl.u32 %v300, 7
        %v302 = vsub.s32 1, %v301
        %v303 = vrot.slane %v294, %v302
        %v338 = vunpack.c.l.b16 %v246
        %v339 = vunpack.c.l.b16 %v247
        %v340 = vunpack.c.l.b16 %v248
        %v341 = vunpack.c.l.b16 %v249
        %v342 = vunpack.c.l.b16 %v250
        %v343 = vunpack.c.l.b16 %v251
        %v344 = vunpack.c.l.b16 %v252
        %v345 = vunpack.c.l.b16 %v253
        %v346 = vunpack.c.l.b16 %v254
        %v347 = vunpack.c.l.b16 %v255
        %v348 = vunpack.c.l.b16 %v256
        %v349 = vunpack.c.l.b16 %v257
        %v350 = vunpack.c.l.b16 %v258
        %v351 = vunpack.c.l.b16 %v259
        %v352 = vunpack.c.l.b16 %v260
        %v353 = vunpack.c.l.b16 %v261
        %v354 = vunpack.c.l.b16 %v262
        %v355 = vunpack.c.l.b16 %v263
        %v356 = vunpack.c.l.b16 %v264
        %v357 = vunpack.c.l.b16 %v265
        %v358 = vunpack.c.l.b16 %v266
        %v359 = vunpack.c.l.b16 %v267
        %v360 = vunpack.c.l.b16 %v268
        %v361 = vunpack.c.l.b16 %v269
        %v362 = vunpack.c.l.b16 %v270
        %v363 = vunpack.c.l.b16 %v271
        %v364 = vunpack.c.l.b16 %v272
        %v365 = vunpack.c.l.b16 %v273
        %v366 = vunpack.c.l.b16 %v274
        %v367 = vunpack.c.l.b16 %v275
        %v368 = vunpack.c.l.b16 %v276
        %v369 = vunpack.c.l.b16 %v277
        %v370 = vpack.c.b16 %v339, %v338
        %v371 = vpack.c.b16 %v341, %v340
        %v372 = vpack.c.b16 %v343, %v342
        %v373 = vpack.c.b16 %v345, %v344
        %v374 = vpack.c.b16 %v347, %v346
        %v375 = vpack.c.b16 %v349, %v348
        %v376 = vpack.c.b16 %v351, %v350
        %v377 = vpack.c.b16 %v353, %v352
        %v378 = vpack.c.b16 %v355, %v354
        %v379 = vpack.c.b16 %v357, %v356
        %v380 = vpack.c.b16 %v359, %v358
        %v381 = vpack.c.b16 %v361, %v360
        %v382 = vpack.c.b16 %v363, %v362
        %v383 = vpack.c.b16 %v365, %v364
        %v384 = vpack.c.b16 %v367, %v366
        %v385 = vpack.c.b16 %v369, %v368
        %v418 = vunpack.c.l.b16 %v278
        %v419 = vunpack.c.h.b16 %v278
        %v420 = vunpack.c.l.b16 %v279
        %v421 = vunpack.c.h.b16 %v279
        %v422 = vunpack.c.l.b16 %v280
        %v423 = vunpack.c.h.b16 %v280
        %v424 = vunpack.c.l.b16 %v281
        %v425 = vunpack.c.h.b16 %v281
        %v426 = vunpack.c.l.b16 %v282
        %v427 = vunpack.c.h.b16 %v282
        %v428 = vunpack.c.l.b16 %v283
        %v429 = vunpack.c.h.b16 %v283
        %v430 = vunpack.c.l.b16 %v284
        %v431 = vunpack.c.h.b16 %v284
        %v432 = vunpack.c.l.b16 %v285
        %v433 = vunpack.c.h.b16 %v285
        %v434 = vunpack.c.l.b16 %v286
        %v435 = vunpack.c.h.b16 %v286
        %v436 = vunpack.c.l.b16 %v287
        %v437 = vunpack.c.h.b16 %v287
        %v438 = vunpack.c.l.b16 %v288
        %v439 = vunpack.c.h.b16 %v288
        %v440 = vunpack.c.l.b16 %v289
        %v441 = vunpack.c.h.b16 %v289
        %v442 = vunpack.c.l.b16 %v290
        %v443 = vunpack.c.h.b16 %v290
        %v444 = vunpack.c.l.b16 %v291
        %v445 = vunpack.c.h.b16 %v291
        %v446 = vunpack.c.l.b16 %v292
        %v447 = vunpack.c.h.b16 %v292
        %v448 = vunpack.c.l.b16 %v293
        %v449 = vunpack.c.h.b16 %v293
        %v450 = vpack.c.b16 %v420, %v418
        %v451 = vpack.c.b16 %v421, %v419
        %v452 = vpack.c.b16 %v424, %v422
        %v453 = vpack.c.b16 %v425, %v423
        %v454 = vpack.c.b16 %v428, %v426
        %v455 = vpack.c.b16 %v429, %v427
        %v456 = vpack.c.b16 %v432, %v430
        %v457 = vpack.c.b16 %v433, %v431
        %v458 = vpack.c.b16 %v436, %v434
        %v459 = vpack.c.b16 %v437, %v435
        %v460 = vpack.c.b16 %v440, %v438
        %v461 = vpack.c.b16 %v441, %v439
        %v462 = vpack.c.b16 %v444, %v442
        %v463 = vpack.c.b16 %v445, %v443
        %v464 = vpack.c.b16 %v448, %v446
        %v465 = vpack.c.b16 %v449, %v447
        %482 = vmatprep.subr.bf16.mxu0 %v451
        %483 = vmatpush1.bf16.msra.mxu0 %v450
        %484 = vmatprep.subr.bf16.mxu0 %v453
        %485 = vmatpush1.bf16.msra.mxu0 %v452
        %486 = vmatprep.subr.bf16.mxu0 %v455
        %487 = vmatpush1.bf16.msra.mxu0 %v454
        %488 = vmatprep.subr.bf16.mxu0 %v457
        %489 = vmatpush1.bf16.msra.mxu0 %v456
        %490 = vmatprep.subr.bf16.mxu0 %v459
        %491 = vmatpush1.bf16.msra.mxu0 %v458
        %492 = vmatprep.subr.bf16.mxu0 %v461
        %493 = vmatpush1.bf16.msra.mxu0 %v460
        %494 = vmatprep.subr.bf16.mxu0 %v463
        %495 = vmatpush1.bf16.msra.mxu0 %v462
        %496 = vmatprep.subr.bf16.mxu0 %v465
        %497 = vmatpush1.bf16.msra.mxu0 %v464
        %498 = vmatprep.subr.bf16.mxu0 0
        %499 = vmatpush1.bf16.msra.mxu0 0
        %500 = vmatprep.subr.bf16.mxu0 0
        %501 = vmatpush1.bf16.msra.mxu0 0
        %502 = vmatprep.subr.bf16.mxu0 0
        %503 = vmatpush1.bf16.msra.mxu0 0
        %504 = vmatprep.subr.bf16.mxu0 0
        %505 = vmatpush1.bf16.msra.mxu0 0
        %506 = vmatprep.subr.bf16.mxu0 0
        %507 = vmatpush1.bf16.msra.mxu0 0
        %508 = vmatprep.subr.bf16.mxu0 0
        %509 = vmatpush1.bf16.msra.mxu0 0
        %510 = vmatprep.subr.bf16.mxu0 0
        %511 = vmatpush1.bf16.msra.mxu0 0
        %512 = vmatprep.subr.bf16.mxu0 0
        %513 = vmatpush1.bf16.msra.mxu0 0
        %514 = vmatprep.mubr.bf16.mxu0 0
        %515 = vmatmul.mubr.bf16.gmra.mrb[0].mxu0 %v370
        %v516 = vpop.f32.mrb[0].mxu0
        %v517 = vadd.f32 %v299, %v516
        %v518 = vpop.f32.mrb[0].mxu0
        %v519 = vadd.f32 %v303, %v518
        %v520 = vpop.f32.mrb[0].mxu0
        %v521 = vadd.f32 %v299, %v520
        %v522 = vpop.f32.mrb[0].mxu0
        %v523 = vadd.f32 %v303, %v522
        %524 = vmatprep.mubr.bf16.mxu0 0
        %525 = vmatmul.mubr.bf16.gmra.mrb[0].mxu0 %v371
        %v526 = vpop.f32.mrb[0].mxu0
        %v527 = vadd.f32 %v299, %v526
        %v528 = vpop.f32.mrb[0].mxu0
        %v529 = vadd.f32 %v303, %v528
        %v530 = vpop.f32.mrb[0].mxu0
        %v531 = vadd.f32 %v299, %v530
        %v532 = vpop.f32.mrb[0].mxu0
        %v533 = vadd.f32 %v303, %v532
        %534 = vmatprep.mubr.bf16.mxu0 0
        %535 = vmatmul.mubr.bf16.gmra.mrb[0].mxu0 %v372
        %v536 = vpop.f32.mrb[0].mxu0
        %v537 = vadd.f32 %v299, %v536
        %v538 = vpop.f32.mrb[0].mxu0
        %v539 = vadd.f32 %v303, %v538
        %v540 = vpop.f32.mrb[0].mxu0
        %v541 = vadd.f32 %v299, %v540
        %v542 = vpop.f32.mrb[0].mxu0
        %v543 = vadd.f32 %v303, %v542
        %544 = vmatprep.mubr.bf16.mxu0 0
        %545 = vmatmul.mubr.bf16.gmra.mrb[0].mxu0 %v373
        %v546 = vpop.f32.mrb[0].mxu0
        %v547 = vadd.f32 %v299, %v546
        %v548 = vpop.f32.mrb[0].mxu0
        %v549 = vadd.f32 %v303, %v548
        %v550 = vpop.f32.mrb[0].mxu0
        %v551 = vadd.f32 %v299, %v550
        %v552 = vpop.f32.mrb[0].mxu0
        %v553 = vadd.f32 %v303, %v552
        %554 = vmatprep.mubr.bf16.mxu0 0
        %555 = vmatmul.mubr.bf16.gmra.mrb[0].mxu0 %v374
        %v556 = vpop.f32.mrb[0].mxu0
        %v557 = vadd.f32 %v299, %v556
        %v558 = vpop.f32.mrb[0].mxu0
        %v559 = vadd.f32 %v303, %v558
        %v560 = vpop.f32.mrb[0].mxu0
        %v561 = vadd.f32 %v299, %v560
        %v562 = vpop.f32.mrb[0].mxu0
        %v563 = vadd.f32 %v303, %v562
        %564 = vmatprep.mubr.bf16.mxu0 0
        %565 = vmatmul.mubr.bf16.gmra.mrb[0].mxu0 %v375
        %v566 = vpop.f32.mrb[0].mxu0
        %v567 = vadd.f32 %v299, %v566
        %v568 = vpop.f32.mrb[0].mxu0
        %v569 = vadd.f32 %v303, %v568
        %v570 = vpop.f32.mrb[0].mxu0
        %v571 = vadd.f32 %v299, %v570
        %v572 = vpop.f32.mrb[0].mxu0
        %v573 = vadd.f32 %v303, %v572
        %574 = vmatprep.mubr.bf16.mxu0 0
        %575 = vmatmul.mubr.bf16.gmra.mrb[0].mxu0 %v376
        %v576 = vpop.f32.mrb[0].mxu0
        %v577 = vadd.f32 %v299, %v576
        %v578 = vpop.f32.mrb[0].mxu0
        %v579 = vadd.f32 %v303, %v578
        %v580 = vpop.f32.mrb[0].mxu0
        %v581 = vadd.f32 %v299, %v580
        %v582 = vpop.f32.mrb[0].mxu0
        %v583 = vadd.f32 %v303, %v582
        %584 = vmatprep.mubr.bf16.mxu0 0
        %585 = vmatmul.mubr.bf16.gmra.mrb[0].mxu0 %v377
        %v586 = vpop.f32.mrb[0].mxu0
        %v587 = vadd.f32 %v299, %v586
        %v588 = vpop.f32.mrb[0].mxu0
        %v589 = vadd.f32 %v303, %v588
        %v590 = vpop.f32.mrb[0].mxu0
        %v591 = vadd.f32 %v299, %v590
        %v592 = vpop.f32.mrb[0].mxu0
        %v593 = vadd.f32 %v303, %v592
        %594 = vmatprep.mubr.bf16.mxu0 0
        %595 = vmatmul.mubr.bf16.gmra.mrb[0].mxu0 %v378
        %v596 = vpop.f32.mrb[0].mxu0
        %v597 = vadd.f32 %v299, %v596
        %v598 = vpop.f32.mrb[0].mxu0
        %v599 = vadd.f32 %v303, %v598
        %v600 = vpop.f32.mrb[0].mxu0
        %v601 = vadd.f32 %v299, %v600
        %v602 = vpop.f32.mrb[0].mxu0
        %v603 = vadd.f32 %v303, %v602
        %604 = vmatprep.mubr.bf16.mxu0 0
        %605 = vmatmul.mubr.bf16.gmra.mrb[0].mxu0 %v379
        %v606 = vpop.f32.mrb[0].mxu0
        %v607 = vadd.f32 %v299, %v606
        %v608 = vpop.f32.mrb[0].mxu0
        %v609 = vadd.f32 %v303, %v608
        %v610 = vpop.f32.mrb[0].mxu0
        %v611 = vadd.f32 %v299, %v610
        %v612 = vpop.f32.mrb[0].mxu0
        %v613 = vadd.f32 %v303, %v612
        %614 = vmatprep.mubr.bf16.mxu0 0
        %615 = vmatmul.mubr.bf16.gmra.mrb[0].mxu0 %v380
        %v616 = vpop.f32.mrb[0].mxu0
        %v617 = vadd.f32 %v299, %v616
        %v618 = vpop.f32.mrb[0].mxu0
        %v619 = vadd.f32 %v303, %v618
        %v620 = vpop.f32.mrb[0].mxu0
        %v621 = vadd.f32 %v299, %v620
        %v622 = vpop.f32.mrb[0].mxu0
        %v623 = vadd.f32 %v303, %v622
        %624 = vmatprep.mubr.bf16.mxu0 0
        %625 = vmatmul.mubr.bf16.gmra.mrb[0].mxu0 %v381
        %v626 = vpop.f32.mrb[0].mxu0
        %v627 = vadd.f32 %v299, %v626
        %v628 = vpop.f32.mrb[0].mxu0
        %v629 = vadd.f32 %v303, %v628
        %v630 = vpop.f32.mrb[0].mxu0
        %v631 = vadd.f32 %v299, %v630
        %v632 = vpop.f32.mrb[0].mxu0
        %v633 = vadd.f32 %v303, %v632
        %634 = vmatprep.mubr.bf16.mxu0 0
        %635 = vmatmul.mubr.bf16.gmra.mrb[0].mxu0 %v382
        %v636 = vpop.f32.mrb[0].mxu0
        %v637 = vadd.f32 %v299, %v636
        %v638 = vpop.f32.mrb[0].mxu0
        %v639 = vadd.f32 %v303, %v638
        %v640 = vpop.f32.mrb[0].mxu0
        %v641 = vadd.f32 %v299, %v640
        %v642 = vpop.f32.mrb[0].mxu0
        %v643 = vadd.f32 %v303, %v642
        %644 = vmatprep.mubr.bf16.mxu0 0
        %645 = vmatmul.mubr.bf16.gmra.mrb[0].mxu0 %v383
        %v646 = vpop.f32.mrb[0].mxu0
        %v647 = vadd.f32 %v299, %v646
        %v648 = vpop.f32.mrb[0].mxu0
        %v649 = vadd.f32 %v303, %v648
        %v650 = vpop.f32.mrb[0].mxu0
        %v651 = vadd.f32 %v299, %v650
        %v652 = vpop.f32.mrb[0].mxu0
        %v653 = vadd.f32 %v303, %v652
        %654 = vmatprep.mubr.bf16.mxu0 0
        %655 = vmatmul.mubr.bf16.gmra.mrb[0].mxu0 %v384
        %v656 = vpop.f32.mrb[0].mxu0
        %v657 = vadd.f32 %v299, %v656
        %v658 = vpop.f32.mrb[0].mxu0
        %v659 = vadd.f32 %v303, %v658
        %v660 = vpop.f32.mrb[0].mxu0
        %v661 = vadd.f32 %v299, %v660
        %v662 = vpop.f32.mrb[0].mxu0
        %v663 = vadd.f32 %v303, %v662
        %664 = vmatprep.mubr.bf16.mxu0 0
        %665 = vmatmul.mubr.bf16.gmra.mrb[0].mxu0 %v385
        %v666 = vpop.f32.mrb[0].mxu0
        %v667 = vadd.f32 %v299, %v666
        %v668 = vpop.f32.mrb[0].mxu0
        %v669 = vadd.f32 %v303, %v668
        %v670 = vpop.f32.mrb[0].mxu0
        %v671 = vadd.f32 %v299, %v670
        %v672 = vpop.f32.mrb[0].mxu0
        %v673 = vadd.f32 %v303, %v672
        %674 = vdwg.mxu0
        %v675 = vmax.f32 %v517, 0.0
        %v676 = vmax.f32 %v519, 0.0
        %v677 = vmax.f32 %v521, 0.0
        %v678 = vmax.f32 %v523, 0.0
        %v679 = vmax.f32 %v527, 0.0
        %v680 = vmax.f32 %v529, 0.0
        %v681 = vmax.f32 %v531, 0.0
        %v682 = vmax.f32 %v533, 0.0
        %v683 = vmax.f32 %v537, 0.0
        %v684 = vmax.f32 %v539, 0.0
        %v685 = vmax.f32 %v541, 0.0
        %v686 = vmax.f32 %v543, 0.0
        %v687 = vmax.f32 %v547, 0.0
        %v688 = vmax.f32 %v549, 0.0
        %v689 = vmax.f32 %v551, 0.0
        %v690 = vmax.f32 %v553, 0.0
        %v691 = vmax.f32 %v557, 0.0
        %v692 = vmax.f32 %v559, 0.0
        %v693 = vmax.f32 %v561, 0.0
        %v694 = vmax.f32 %v563, 0.0
        %v695 = vmax.f32 %v567, 0.0
        %v696 = vmax.f32 %v569, 0.0
        %v697 = vmax.f32 %v571, 0.0
        %v698 = vmax.f32 %v573, 0.0
        %v699 = vmax.f32 %v577, 0.0
        %v700 = vmax.f32 %v579, 0.0
        %v701 = vmax.f32 %v581, 0.0
        %v702 = vmax.f32 %v583, 0.0
        %v703 = vmax.f32 %v587, 0.0
        %v704 = vmax.f32 %v589, 0.0
        %v705 = vmax.f32 %v591, 0.0
        %v706 = vmax.f32 %v593, 0.0
        %v707 = vmax.f32 %v597, 0.0
        %v708 = vmax.f32 %v599, 0.0
        %v709 = vmax.f32 %v601, 0.0
        %v710 = vmax.f32 %v603, 0.0
        %v711 = vmax.f32 %v607, 0.0
        %v712 = vmax.f32 %v609, 0.0
        %v713 = vmax.f32 %v611, 0.0
        %v714 = vmax.f32 %v613, 0.0
        %v715 = vmax.f32 %v617, 0.0
        %v716 = vmax.f32 %v619, 0.0
        %v717 = vmax.f32 %v621, 0.0
        %v718 = vmax.f32 %v623, 0.0
        %v719 = vmax.f32 %v627, 0.0
        %v720 = vmax.f32 %v629, 0.0
        %v721 = vmax.f32 %v631, 0.0
        %v722 = vmax.f32 %v633, 0.0
        %v723 = vmax.f32 %v637, 0.0
        %v724 = vmax.f32 %v639, 0.0
        %v725 = vmax.f32 %v641, 0.0
        %v726 = vmax.f32 %v643, 0.0
        %v727 = vmax.f32 %v647, 0.0
        %v728 = vmax.f32 %v649, 0.0
        %v729 = vmax.f32 %v651, 0.0
        %v730 = vmax.f32 %v653, 0.0
        %v731 = vmax.f32 %v657, 0.0
        %v732 = vmax.f32 %v659, 0.0
        %v733 = vmax.f32 %v661, 0.0
        %v734 = vmax.f32 %v663, 0.0
        %v735 = vmax.f32 %v667, 0.0
        %v736 = vmax.f32 %v669, 0.0
        %v737 = vmax.f32 %v671, 0.0
        %v738 = vmax.f32 %v673, 0.0
        %739 = vst [vmem:[%s242] sm:$0xff] %v675
        %740 = vst [vmem:[%s242 + $0x8] sm:$0xff] %v676
        %741 = vst [vmem:[%s242 + $0x10] sm:$0xff] %v677
        %742 = vst [vmem:[%s242 + $0x18] sm:$0xff] %v678
        %743 = vst [vmem:[%s242 + $0x20] sm:$0xff] %v679
        %744 = vst [vmem:[%s242 + $0x28] sm:$0xff] %v680
        %745 = vst [vmem:[%s242 + $0x30] sm:$0xff] %v681
        %746 = vst [vmem:[%s242 + $0x38] sm:$0xff] %v682
        %747 = vst [vmem:[%s242 + $0x40] sm:$0xff] %v683
        %748 = vst [vmem:[%s242 + $0x48] sm:$0xff] %v684
        %749 = vst [vmem:[%s242 + $0x50] sm:$0xff] %v685
        %750 = vst [vmem:[%s242 + $0x58] sm:$0xff] %v686
        %751 = vst [vmem:[%s242 + $0x60] sm:$0xff] %v687
        %752 = vst [vmem:[%s242 + $0x68] sm:$0xff] %v688
        %753 = vst [vmem:[%s242 + $0x70] sm:$0xff] %v689
        %754 = vst [vmem:[%s242 + $0x78] sm:$0xff] %v690
        %755 = vst [vmem:[%s242 + $0x80] sm:$0xff] %v691
        %756 = vst [vmem:[%s242 + $0x88] sm:$0xff] %v692
        %757 = vst [vmem:[%s242 + $0x90] sm:$0xff] %v693
        %758 = vst [vmem:[%s242 + $0x98] sm:$0xff] %v694
        %759 = vst [vmem:[%s242 + $0xa0] sm:$0xff] %v695
        %760 = vst [vmem:[%s242 + $0xa8] sm:$0xff] %v696
        %761 = vst [vmem:[%s242 + $0xb0] sm:$0xff] %v697
        %762 = vst [vmem:[%s242 + $0xb8] sm:$0xff] %v698
        %763 = vst [vmem:[%s242 + $0xc0] sm:$0xff] %v699
        %764 = vst [vmem:[%s242 + $0xc8] sm:$0xff] %v700
        %765 = vst [vmem:[%s242 + $0xd0] sm:$0xff] %v701
        %766 = vst [vmem:[%s242 + $0xd8] sm:$0xff] %v702
        %767 = vst [vmem:[%s242 + $0xe0] sm:$0xff] %v703
        %768 = vst [vmem:[%s242 + $0xe8] sm:$0xff] %v704
        %769 = vst [vmem:[%s242 + $0xf0] sm:$0xff] %v705
        %770 = vst [vmem:[%s242 + $0xf8] sm:$0xff] %v706
        %771 = vst [vmem:[%s242 + $0x100] sm:$0xff] %v707
        %772 = vst [vmem:[%s242 + $0x108] sm:$0xff] %v708
        %773 = vst [vmem:[%s242 + $0x110] sm:$0xff] %v709
        %774 = vst [vmem:[%s242 + $0x118] sm:$0xff] %v710
        %775 = vst [vmem:[%s242 + $0x120] sm:$0xff] %v711
        %776 = vst [vmem:[%s242 + $0x128] sm:$0xff] %v712
        %777 = vst [vmem:[%s242 + $0x130] sm:$0xff] %v713
        %778 = vst [vmem:[%s242 + $0x138] sm:$0xff] %v714
        %779 = vst [vmem:[%s242 + $0x140] sm:$0xff] %v715
        %780 = vst [vmem:[%s242 + $0x148] sm:$0xff] %v716
        %781 = vst [vmem:[%s242 + $0x150] sm:$0xff] %v717
        %782 = vst [vmem:[%s242 + $0x158] sm:$0xff] %v718
        %783 = vst [vmem:[%s242 + $0x160] sm:$0xff] %v719
        %784 = vst [vmem:[%s242 + $0x168] sm:$0xff] %v720
        %785 = vst [vmem:[%s242 + $0x170] sm:$0xff] %v721
        %786 = vst [vmem:[%s242 + $0x178] sm:$0xff] %v722
        %787 = vst [vmem:[%s242 + $0x180] sm:$0xff] %v723
        %788 = vst [vmem:[%s242 + $0x188] sm:$0xff] %v724
        %789 = vst [vmem:[%s242 + $0x190] sm:$0xff] %v725
        %790 = vst [vmem:[%s242 + $0x198] sm:$0xff] %v726
        %791 = vst [vmem:[%s242 + $0x1a0] sm:$0xff] %v727
        %792 = vst [vmem:[%s242 + $0x1a8] sm:$0xff] %v728
        %793 = vst [vmem:[%s242 + $0x1b0] sm:$0xff] %v729
        %794 = vst [vmem:[%s242 + $0x1b8] sm:$0xff] %v730
        %795 = vst [vmem:[%s242 + $0x1c0] sm:$0xff] %v731
        %796 = vst [vmem:[%s242 + $0x1c8] sm:$0xff] %v732
        %797 = vst [vmem:[%s242 + $0x1d0] sm:$0xff] %v733
        %798 = vst [vmem:[%s242 + $0x1d8] sm:$0xff] %v734
        %799 = vst [vmem:[%s242 + $0x1e0] sm:$0xff] %v735
        %800 = vst [vmem:[%s242 + $0x1e8] sm:$0xff] %v736
        %801 = vst [vmem:[%s242 + $0x1f0] sm:$0xff] %v737
        %802 = vst [vmem:[%s242 + $0x1f8] sm:$0xff] %v738
        %s803 = smul.u32 32, %s20
        %s804 = smul.u32 2, %s21
        %p805 = scmp.lt.s32.totalorder %s803, 63
        %s806 = scalar_select %p805, %s803, 63
        %p807 = scmp.lt.s32.totalorder %s804, 1
        %s808 = scalar_select %p807, %s804, 1
        %s809 = smul.addr %s806, 2
        %s810 = sadd.s32 %s808, %s809
        %s811 = smul.addr %s810, 8
        %s812 = scalar_lea.vmem %s3, %s811
        // Predicated region
        $region41: #{generator_forward.14} parent=31 // pred_check
          %p813 = pneg %p126
        $region42: #{generator_forward.14} parent=31 // pred_check_branch
          %815 = sbr.rel (%p813) target = $region44
        $region43: #{generator_forward.14} parent=31 // pred_region
          %s816 = smul.u32 32, %s20
          %s817 = smul.u32 2, %s21
        $region44: #{generator_forward.14} parent=31 // pred_fallthru
          _
      $region32: #{generator_forward.14} parent=5 // pred_fallthru
        _
      %p818 = scmp.le.s32.totalorder 2, %s11
      // Predicated region
      $region45: #{generator_forward.14} parent=5 // pred_check
        %p819 = pneg %p818
      $region46: #{generator_forward.14} parent=5 // pred_check_branch
        %821 = sbr.rel (%p819) target = $region48
      $region47: #{generator_forward.14} parent=5 // pred_region
        %s822 = ssub.s32 %s11, 2
        // Predicated region
        $region49: #{generator_forward.14} parent=47 // pred_check
          %p823 = pneg %p132
        $region50: #{generator_forward.14} parent=47 // pred_check_branch
          %825 = sbr.rel (%p823) target = $region52
        $region51: #{generator_forward.14} parent=47 // pred_region
          %s826 = smul.u32 32, %s22
          %s827 = smul.u32 2, %s23
          %p828 = scmp.lt.s32.totalorder %s826, 63
          %s829 = scalar_select %p828, %s826, 63
          %p830 = scmp.lt.s32.totalorder %s827, 1
          %s831 = scalar_select %p830, %s827, 1
          %s832 = smul.addr %s829, 2
          %s833 = sadd.s32 %s831, %s832
          %s834 = smul.addr %s833, 8
          %s835 = scalar_lea.vmem %s3, %s834
        $region52: #{generator_forward.14} parent=47 // pred_fallthru
          _
      $region48: #{generator_forward.14} parent=5 // pred_fallthru
        _
    $region6: #{generator_forward.14} parent=1 // loop_footer
      %s15 = sadd.s32 1, %s11
    $region7: #{generator_forward.14} parent=1 // loop_footer_branch
      %10 = sbr.rel target = $region3
    $region8: #{generator_forward.14} parent=1 // loop_exit
      _
    %836 = vsyncpa [#allocation3], 1
    %s837 = scalar_lea.sflag [#allocation3], 1
    %838 = vsyncpa %s837, 1
    %839 = vsyncpa [#allocation5], 1

// kernel: generator_forward.16
$region0: #{generator_forward.16}
  #allocation0 [shape = 'u32[]', space=smem, size = 0x4, offset = 0x4, fixed_abs, tag = 'smem constant byte address 0x4 - core index']
  #allocation1 [shape = 'u32[144,128]{1,0:T(1,128)}', space=vmem, size = 0x12000, scoped, tag = 'internal scratch']
  %s0 = inlined_call_operand.vmem [shape: bf16[2048,128], index: 0, kind: input, shape index: {}]
  %s1 = inlined_call_operand.vmem [shape: bf16[128,128], index: 1, kind: input, shape index: {}]
  %s2 = inlined_call_operand.vmem [shape: f32[1,128], index: 2, kind: input, shape index: {}]
  %s3 = inlined_call_operand.vmem [shape: f32[2048,128], index: 3, kind: output, shape index: {}]
  %s4 = sld [smem:[#allocation0]]
  $region45: #{generator_forward.16} parent=0
    _
  %s6 = ssub.s32 1, %s4
  %s7 = scalar_select 0, %s6, %s4
  loop: start=0, step=1, limit=10
  $region2: #{generator_forward.16} parent=0 // loop_pre_header
    _
  $region3: #{generator_forward.16} parent=0 // loop_header
    %s9 = sphi 0, %s13
    %p10 = scmp.ge.s32.totalorder %s9, 10
    %s16 = sphi 0, %s28
    %s17 = sphi 0, %s24
    %s18 = sphi 0, %s16
    %s19 = sphi 0, %s17
    %s20 = sphi 0, %s18
    %s21 = sphi 0, %s19
    %s31 = sphi 0, %s33
    %s34 = sphi 0, %s31
    %s35 = sphi 0, %s34
    %s51 = sphi 0, %s35
    %s57 = sphi 0, %s59
    %s60 = sphi 0, %s57
    %s61 = sphi 0, %s60
    %s77 = sphi 0, %s61
    %s83 = sphi 0, %s85
    %s86 = sphi 0, %s83
    %s87 = sphi 0, %s86
    %s103 = sphi 0, %s87
    %s111 = sphi 0, %s113
    %s114 = sphi 0, %s111
    %s115 = sphi 0, %s114
    %s131 = sphi 0, %s115
  $region4: #{generator_forward.16} parent=0 // loop_header_branch
    %12 = sbr.rel (%p10) target = $region8
  $region5: #{generator_forward.16} parent=0 // loop_body
    %s14 = ssub.s32 %s9, 1
    %s15 = ssub.s32 %s9, 2
    %s22 = sadd.s32 1, %s17
    %p23 = scmp.ge.s32.totalorder %s22, 1
    %s24 = scalar_select %p23, 0, %s22
    %s25 = sadd.s32 1, %s16
    %s26 = scalar_select %p23, %s25, %s16
    %p27 = scmp.ge.s32.totalorder %s26, 8
    %s28 = scalar_select %p27, 0, %s26
    %s29 = ssub.s32 %s16, %s28
    %p30 = scmp.eq.s32.totalorder %s29, 0
    %s32 = sadd.s32 %s31, 1
    %s33 = scalar_select %p30, %s31, %s32
    %p36 = pneg %p30
    %p37 = scmp.eq.s32.totalorder %s9, 7
    %p38 = por %p36, %p37
    %p39 = scmp.ne.s32.totalorder %s31, %s34
    %p40 = scmp.eq.s32.totalorder %s9, 0
    %p41 = por %p39, %p40
    %p42 = scmp.ne.s32.totalorder %s31, %s34
    %p43 = scmp.eq.s32.totalorder %s14, 7
    %p44 = por %p42, %p43
    %p45 = scmp.ne.s32.totalorder %s34, %s35
    %p46 = scmp.eq.s32.totalorder %s14, 0
    %p47 = por %p45, %p46
    %p48 = scmp.ne.s32.totalorder %s34, %s35
    %p49 = scmp.eq.s32.totalorder %s15, 7
    %p50 = por %p48, %p49
    %p52 = scmp.ne.s32.totalorder %s35, %s51
    %p53 = scmp.eq.s32.totalorder %s15, 0
    %p54 = por %p52, %p53
    %s55 = ssub.s32 %s17, %s24
    %p56 = scmp.eq.s32.totalorder %s55, 0
    %s58 = sadd.s32 %s57, 1
    %s59 = scalar_select %p56, %s57, %s58
    %p62 = pneg %p56
    %p63 = scmp.eq.s32.totalorder %s9, 7
    %p64 = por %p62, %p63
    %p65 = scmp.ne.s32.totalorder %s57, %s60
    %p66 = scmp.eq.s32.totalorder %s9, 0
    %p67 = por %p65, %p66
    %p68 = scmp.ne.s32.totalorder %s57, %s60
    %p69 = scmp.eq.s32.totalorder %s14, 7
    %p70 = por %p68, %p69
    %p71 = scmp.ne.s32.totalorder %s60, %s61
    %p72 = scmp.eq.s32.totalorder %s14, 0
    %p73 = por %p71, %p72
    %p74 = scmp.ne.s32.totalorder %s60, %s61
    %p75 = scmp.eq.s32.totalorder %s15, 7
    %p76 = por %p74, %p75
    %p78 = scmp.ne.s32.totalorder %s61, %s77
    %p79 = scmp.eq.s32.totalorder %s15, 0
    %p80 = por %p78, %p79
    %s81 = ssub.s32 %s17, %s24
    %p82 = scmp.eq.s32.totalorder %s81, 0
    %s84 = sadd.s32 %s83, 1
    %s85 = scalar_select %p82, %s83, %s84
    %p88 = pneg %p82
    %p89 = scmp.eq.s32.totalorder %s9, 7
    %p90 = por %p88, %p89
    %p91 = scmp.ne.s32.totalorder %s83, %s86
    %p92 = scmp.eq.s32.totalorder %s9, 0
    %p93 = por %p91, %p92
    %p94 = scmp.ne.s32.totalorder %s83, %s86
    %p95 = scmp.eq.s32.totalorder %s14, 7
    %p96 = por %p94, %p95
    %p97 = scmp.ne.s32.totalorder %s86, %s87
    %p98 = scmp.eq.s32.totalorder %s14, 0
    %p99 = por %p97, %p98
    %p100 = scmp.ne.s32.totalorder %s86, %s87
    %p101 = scmp.eq.s32.totalorder %s15, 7
    %p102 = por %p100, %p101
    %p104 = scmp.ne.s32.totalorder %s87, %s103
    %p105 = scmp.eq.s32.totalorder %s15, 0
    %p106 = por %p104, %p105
    %s107 = ssub.s32 %s16, %s28
    %s108 = ssub.s32 %s17, %s24
    %s109 = sor.u32 %s107, %s108
    %p110 = scmp.eq.s32.totalorder %s109, 0
    %s112 = sadd.s32 %s111, 1
    %s113 = scalar_select %p110, %s111, %s112
    %p116 = pneg %p110
    %p117 = scmp.eq.s32.totalorder %s9, 7
    %p118 = por %p116, %p117
    %p119 = scmp.ne.s32.totalorder %s111, %s114
    %p120 = scmp.eq.s32.totalorder %s9, 0
    %p121 = por %p119, %p120
    %p122 = scmp.ne.s32.totalorder %s111, %s114
    %p123 = scmp.eq.s32.totalorder %s14, 7
    %p124 = por %p122, %p123
    %p125 = scmp.ne.s32.totalorder %s114, %s115
    %p126 = scmp.eq.s32.totalorder %s14, 0
    %p127 = por %p125, %p126
    %p128 = scmp.ne.s32.totalorder %s114, %s115
    %p129 = scmp.eq.s32.totalorder %s15, 7
    %p130 = por %p128, %p129
    %p132 = scmp.ne.s32.totalorder %s115, %s131
    %p133 = scmp.eq.s32.totalorder %s15, 0
    %p134 = por %p132, %p133
    %p135 = scmp.le.s32.totalorder 1, %s9
    %p136 = scmp.lt.s32.totalorder %s9, 9
    %p137 = pnand %p135, %p136
    %p138 = pneg %p137
    // Predicated region
    $region9: #{generator_forward.16} parent=5 // pred_check
      _
    $region10: #{generator_forward.16} parent=5 // pred_check_branch
      %140 = sbr.rel (%p137) target = $region12
    $region11: #{generator_forward.16} parent=5 // pred_region
      %s141 = ssub.s32 %s9, 1
      // Predicated region
      $region13: #{generator_forward.16} parent=11 // pred_check
        %p142 = pneg %p73
      $region14: #{generator_forward.16} parent=11 // pred_check_branch
        %144 = sbr.rel (%p142) target = $region16
      $region15: #{generator_forward.16} parent=11 // pred_region
        %p145 = scmp.lt.s32.totalorder %s19, 0
        %s146 = scalar_select %p145, %s19, 0
        %s147 = smul.addr %s146, 4
        %s148 = scalar_lea.vmem %s1, %s147
      $region16: #{generator_forward.16} parent=11 // pred_fallthru
        _
      // Predicated region
      $region17: #{generator_forward.16} parent=11 // pred_check
        %p149 = pneg %p99
      $region18: #{generator_forward.16} parent=11 // pred_check_branch
        %151 = sbr.rel (%p149) target = $region20
      $region19: #{generator_forward.16} parent=11 // pred_region
        %p152 = scmp.lt.s32.totalorder %s19, 0
        %s153 = scalar_select %p152, %s19, 0
        %s154 = scalar_lea.vmem %s2, %s153
      $region20: #{generator_forward.16} parent=11 // pred_fallthru
        _
    $region12: #{generator_forward.16} parent=5 // pred_fallthru
      _
    %p155 = scmp.lt.s32.totalorder %s9, 8
    // Predicated region
    $region21: #{generator_forward.16} parent=5 // pred_check
      %p156 = pneg %p155
    $region22: #{generator_forward.16} parent=5 // pred_check_branch
      %158 = sbr.rel (%p156) target = $region24
    $region23: #{generator_forward.16} parent=5 // pred_region
      // Predicated region
      $region25: #{generator_forward.16} parent=23 // pred_check
        %p159 = pneg %p41
      $region26: #{generator_forward.16} parent=23 // pred_check_branch
        %161 = sbr.rel (%p159) target = $region28
      $region27: #{generator_forward.16} parent=23 // pred_region
        %s162 = smul.u32 32, %s16
        %p163 = scmp.lt.s32.totalorder %s162, 255
        %s164 = scalar_select %p163, %s162, 255
        %s165 = smul.addr %s164, 4
        %s166 = scalar_lea.vmem %s0, %s165
        %s167 = smul.u32 32, %s16
      $region28: #{generator_forward.16} parent=23 // pred_fallthru
        _
    $region24: #{generator_forward.16} parent=5 // pred_fallthru
      _
    %p168 = scmp.le.s32.totalorder 1, %s9
    %p169 = scmp.lt.s32.totalorder %s9, 9
    %p170 = pnand %p168, %p169
    %p171 = pneg %p170
    // Predicated region
    $region29: #{generator_forward.16} parent=5 // pred_check
      _
    $region30: #{generator_forward.16} parent=5 // pred_check_branch
      %173 = sbr.rel (%p170) target = $region32
    $region31: #{generator_forward.16} parent=5 // pred_region
      %s174 = ssub.s32 %s9, 1
      %s175 = smul.u32 32, %s18
      %p176 = scmp.lt.s32.totalorder %s175, 255
      %s177 = scalar_select %p176, %s175, 255
      %s178 = smul.addr %s177, 4
      %s179 = scalar_lea.vmem %s0, %s178
      %p180 = pneg %p47
      %p181 = pneg %p44
      %p182 = scmp.lt.s32.totalorder %s19, 0
      %s183 = scalar_select %p182, %s19, 0
      %s184 = smul.addr %s183, 4
      %s185 = scalar_lea.vmem %s1, %s184
      %p186 = pneg %p73
      %p187 = pneg %p70
      %p188 = scmp.lt.s32.totalorder %s19, 0
      %s189 = scalar_select %p188, %s19, 0
      %s190 = scalar_lea.vmem %s2, %s189
      %p191 = pneg %p99
      %p192 = pneg %p96
      %p193 = pneg %p127
      %p194 = pneg %p124
      %s195 = smul.u32 32, %s18
      %p196 = scmp.lt.s32.totalorder %s195, 255
      %s197 = scalar_select %p196, %s195, 255
      %p198 = scmp.lt.s32.totalorder %s19, 0
      %s199 = scalar_select %p198, %s19, 0
      %s200 = sadd.s32 %s199, %s197
      %s201 = smul.addr %s200, 8
      %s202 = scalar_lea.vmem %s3, %s201
      %s203 = smul.u32 32, %s18
      %p204 = scmp.lt.s32.totalorder %s203, 255
      %s205 = scalar_select %p204, %s203, 255
      %s206 = smul.addr %s205, 4
      %s207 = scalar_lea.vmem %s0, %s206
      %s208 = smul.u32 32, %s18
      %p209 = scmp.lt.s32.totalorder %s19, 0
      %s210 = scalar_select %p209, %s19, 0
      %s211 = smul.addr %s210, 4
      %s212 = scalar_lea.vmem %s1, %s211
      %p213 = scmp.lt.s32.totalorder %s19, 0
      %s214 = scalar_select %p213, %s19, 0
      %s215 = scalar_lea.vmem %s2, %s214
      %s216 = smul.u32 32, %s18
      %p217 = scmp.lt.s32.totalorder %s216, 255
      %s218 = scalar_select %p217, %s216, 255
      %p219 = scmp.lt.s32.totalorder %s19, 0
      %s220 = scalar_select %p219, %s19, 0
      %s221 = sadd.s32 %s220, %s218
      %s222 = smul.addr %s221, 8
      %s223 = scalar_lea.vmem %s3, %s222
      %s224 = smul.u32 32, %s18
      %v226 = vld [vmem:[%s207] sm:$0xf]
      %v227 = vld [vmem:[%s207 + $0x4] sm:$0xf]
      %v228 = vld [vmem:[%s207 + $0x8] sm:$0xf]
      %v229 = vld [vmem:[%s207 + $0xc] sm:$0xf]
      %v230 = vld [vmem:[%s207 + $0x10] sm:$0xf]
      %v231 = vld [vmem:[%s207 + $0x14] sm:$0xf]
      %v232 = vld [vmem:[%s207 + $0x18] sm:$0xf]
      %v233 = vld [vmem:[%s207 + $0x1c] sm:$0xf]
      %v234 = vld [vmem:[%s207 + $0x20] sm:$0xf]
      %v235 = vld [vmem:[%s207 + $0x24] sm:$0xf]
      %v236 = vld [vmem:[%s207 + $0x28] sm:$0xf]
      %v237 = vld [vmem:[%s207 + $0x2c] sm:$0xf]
      %v238 = vld [vmem:[%s207 + $0x30] sm:$0xf]
      %v239 = vld [vmem:[%s207 + $0x34] sm:$0xf]
      %v240 = vld [vmem:[%s207 + $0x38] sm:$0xf]
      %v241 = vld [vmem:[%s207 + $0x3c] sm:$0xf]
      %v242 = vld [vmem:[%s207 + $0x40] sm:$0xf]
      %v243 = vld [vmem:[%s207 + $0x44] sm:$0xf]
      %v244 = vld [vmem:[%s207 + $0x48] sm:$0xf]
      %v245 = vld [vmem:[%s207 + $0x4c] sm:$0xf]
      %v246 = vld [vmem:[%s207 + $0x50] sm:$0xf]
      %v247 = vld [vmem:[%s207 + $0x54] sm:$0xf]
      %v248 = vld [vmem:[%s207 + $0x58] sm:$0xf]
      %v249 = vld [vmem:[%s207 + $0x5c] sm:$0xf]
      %v250 = vld [vmem:[%s207 + $0x60] sm:$0xf]
      %v251 = vld [vmem:[%s207 + $0x64] sm:$0xf]
      %v252 = vld [vmem:[%s207 + $0x68] sm:$0xf]
      %v253 = vld [vmem:[%s207 + $0x6c] sm:$0xf]
      %v254 = vld [vmem:[%s207 + $0x70] sm:$0xf]
      %v255 = vld [vmem:[%s207 + $0x74] sm:$0xf]
      %v256 = vld [vmem:[%s207 + $0x78] sm:$0xf]
      %v257 = vld [vmem:[%s207 + $0x7c] sm:$0xf]
      %v258 = vld [vmem:[%s212] sm:$0xf]
      %v259 = vld [vmem:[%s212 + $0x4] sm:$0xf]
      %v260 = vld [vmem:[%s212 + $0x8] sm:$0xf]
      %v261 = vld [vmem:[%s212 + $0xc] sm:$0xf]
      %v262 = vld [vmem:[%s212 + $0x10] sm:$0xf]
      %v263 = vld [vmem:[%s212 + $0x14] sm:$0xf]
      %v264 = vld [vmem:[%s212 + $0x18] sm:$0xf]
      %v265 = vld [vmem:[%s212 + $0x1c] sm:$0xf]
      %v266 = vld [vmem:[%s212 + $0x20] sm:$0xf]
      %v267 = vld [vmem:[%s212 + $0x24] sm:$0xf]
      %v268 = vld [vmem:[%s212 + $0x28] sm:$0xf]
      %v269 = vld [vmem:[%s212 + $0x2c] sm:$0xf]
      %v270 = vld [vmem:[%s212 + $0x30] sm:$0xf]
      %v271 = vld [vmem:[%s212 + $0x34] sm:$0xf]
      %v272 = vld [vmem:[%s212 + $0x38] sm:$0xf]
      %v273 = vld [vmem:[%s212 + $0x3c] sm:$0xf]
      %v274 = vld [vmem:[%s215] sm:$0x1]
      %v276 = vlaneseq
      %v277 = vshrl.u32 %v276, 7
      %v278 = vsub.s32 0, %v277
      %v279 = vrot.slane %v274, %v278
      %v313 = vunpack.c.l.b16 %v226
      %v314 = vunpack.c.l.b16 %v227
      %v315 = vunpack.c.l.b16 %v228
      %v316 = vunpack.c.l.b16 %v229
      %v317 = vunpack.c.l.b16 %v230
      %v318 = vunpack.c.l.b16 %v231
      %v319 = vunpack.c.l.b16 %v232
      %v320 = vunpack.c.l.b16 %v233
      %v321 = vunpack.c.l.b16 %v234
      %v322 = vunpack.c.l.b16 %v235
      %v323 = vunpack.c.l.b16 %v236
      %v324 = vunpack.c.l.b16 %v237
      %v325 = vunpack.c.l.b16 %v238
      %v326 = vunpack.c.l.b16 %v239
      %v327 = vunpack.c.l.b16 %v240
      %v328 = vunpack.c.l.b16 %v241
      %v329 = vunpack.c.l.b16 %v242
      %v330 = vunpack.c.l.b16 %v243
      %v331 = vunpack.c.l.b16 %v244
      %v332 = vunpack.c.l.b16 %v245
      %v333 = vunpack.c.l.b16 %v246
      %v334 = vunpack.c.l.b16 %v247
      %v335 = vunpack.c.l.b16 %v248
      %v336 = vunpack.c.l.b16 %v249
      %v337 = vunpack.c.l.b16 %v250
      %v338 = vunpack.c.l.b16 %v251
      %v339 = vunpack.c.l.b16 %v252
      %v340 = vunpack.c.l.b16 %v253
      %v341 = vunpack.c.l.b16 %v254
      %v342 = vunpack.c.l.b16 %v255
      %v343 = vunpack.c.l.b16 %v256
      %v344 = vunpack.c.l.b16 %v257
      %v345 = vpack.c.b16 %v314, %v313
      %v346 = vpack.c.b16 %v316, %v315
      %v347 = vpack.c.b16 %v318, %v317
      %v348 = vpack.c.b16 %v320, %v319
      %v349 = vpack.c.b16 %v322, %v321
      %v350 = vpack.c.b16 %v324, %v323
      %v351 = vpack.c.b16 %v326, %v325
      %v352 = vpack.c.b16 %v328, %v327
      %v353 = vpack.c.b16 %v330, %v329
      %v354 = vpack.c.b16 %v332, %v331
      %v355 = vpack.c.b16 %v334, %v333
      %v356 = vpack.c.b16 %v336, %v335
      %v357 = vpack.c.b16 %v338, %v337
      %v358 = vpack.c.b16 %v340, %v339
      %v359 = vpack.c.b16 %v342, %v341
      %v360 = vpack.c.b16 %v344, %v343
      %v393 = vunpack.c.l.b16 %v258
      %v394 = vunpack.c.l.b16 %v259
      %v395 = vunpack.c.l.b16 %v260
      %v396 = vunpack.c.l.b16 %v261
      %v397 = vunpack.c.l.b16 %v262
      %v398 = vunpack.c.l.b16 %v263
      %v399 = vunpack.c.l.b16 %v264
      %v400 = vunpack.c.l.b16 %v265
      %v401 = vunpack.c.l.b16 %v266
      %v402 = vunpack.c.l.b16 %v267
      %v403 = vunpack.c.l.b16 %v268
      %v404 = vunpack.c.l.b16 %v269
      %v405 = vunpack.c.l.b16 %v270
      %v406 = vunpack.c.l.b16 %v271
      %v407 = vunpack.c.l.b16 %v272
      %v408 = vunpack.c.l.b16 %v273
      %v409 = vpack.c.b16 %v394, %v393
      %v410 = vpack.c.b16 %v396, %v395
      %v411 = vpack.c.b16 %v398, %v397
      %v412 = vpack.c.b16 %v400, %v399
      %v413 = vpack.c.b16 %v402, %v401
      %v414 = vpack.c.b16 %v404, %v403
      %v415 = vpack.c.b16 %v406, %v405
      %v416 = vpack.c.b16 %v408, %v407
      %425 = vmatprep.subr.bf16.mxu0 0
      %426 = vmatpush1.bf16.msra.mxu0 %v409
      %427 = vmatprep.subr.bf16.mxu0 0
      %428 = vmatpush1.bf16.msra.mxu0 %v410
      %429 = vmatprep.subr.bf16.mxu0 0
      %430 = vmatpush1.bf16.msra.mxu0 %v411
      %431 = vmatprep.subr.bf16.mxu0 0
      %432 = vmatpush1.bf16.msra.mxu0 %v412
      %433 = vmatprep.subr.bf16.mxu0 0
      %434 = vmatpush1.bf16.msra.mxu0 %v413
      %435 = vmatprep.subr.bf16.mxu0 0
      %436 = vmatpush1.bf16.msra.mxu0 %v414
      %437 = vmatprep.subr.bf16.mxu0 0
      %438 = vmatpush1.bf16.msra.mxu0 %v415
      %439 = vmatprep.subr.bf16.mxu0 0
      %440 = vmatpush1.bf16.msra.mxu0 %v416
      %441 = vmatprep.subr.bf16.mxu0 0
      %442 = vmatpush1.bf16.msra.mxu0 0
      %443 = vmatprep.subr.bf16.mxu0 0
      %444 = vmatpush1.bf16.msra.mxu0 0
      %445 = vmatprep.subr.bf16.mxu0 0
      %446 = vmatpush1.bf16.msra.mxu0 0
      %447 = vmatprep.subr.bf16.mxu0 0
      %448 = vmatpush1.bf16.msra.mxu0 0
      %449 = vmatprep.subr.bf16.mxu0 0
      %450 = vmatpush1.bf16.msra.mxu0 0
      %451 = vmatprep.subr.bf16.mxu0 0
      %452 = vmatpush1.bf16.msra.mxu0 0
      %453 = vmatprep.subr.bf16.mxu0 0
      %454 = vmatpush1.bf16.msra.mxu0 0
      %455 = vmatprep.subr.bf16.mxu0 0
      %456 = vmatpush1.bf16.msra.mxu0 0
      %457 = vmatprep.mubr.bf16.mxu0 0
      %458 = vmatmul.mubr.bf16.gmra.mrb[0].mxu0 %v345
      %v459 = vpop.f32.mrb[0].mxu0
      %v460 = vadd.f32 %v279, %v459
      %v461 = vpop.f32.mrb[0].mxu0
      %v462 = vpop.f32.mrb[0].mxu0
      %v463 = vadd.f32 %v279, %v462
      %v464 = vpop.f32.mrb[0].mxu0
      %465 = vmatprep.mubr.bf16.mxu0 0
      %466 = vmatmul.mubr.bf16.gmra.mrb[0].mxu0 %v346
      %v467 = vpop.f32.mrb[0].mxu0
      %v468 = vadd.f32 %v279, %v467
      %v469 = vpop.f32.mrb[0].mxu0
      %v470 = vpop.f32.mrb[0].mxu0
      %v471 = vadd.f32 %v279, %v470
      %v472 = vpop.f32.mrb[0].mxu0
      %473 = vmatprep.mubr.bf16.mxu0 0
      %474 = vmatmul.mubr.bf16.gmra.mrb[0].mxu0 %v347
      %v475 = vpop.f32.mrb[0].mxu0
      %v476 = vadd.f32 %v279, %v475
      %v477 = vpop.f32.mrb[0].mxu0
      %v478 = vpop.f32.mrb[0].mxu0
      %v479 = vadd.f32 %v279, %v478
      %v480 = vpop.f32.mrb[0].mxu0
      %481 = vmatprep.mubr.bf16.mxu0 0
      %482 = vmatmul.mubr.bf16.gmra.mrb[0].mxu0 %v348
      %v483 = vpop.f32.mrb[0].mxu0
      %v484 = vadd.f32 %v279, %v483
      %v485 = vpop.f32.mrb[0].mxu0
      %v486 = vpop.f32.mrb[0].mxu0
      %v487 = vadd.f32 %v279, %v486
      %v488 = vpop.f32.mrb[0].mxu0
      %489 = vmatprep.mubr.bf16.mxu0 0
      %490 = vmatmul.mubr.bf16.gmra.mrb[0].mxu0 %v349
      %v491 = vpop.f32.mrb[0].mxu0
      %v492 = vadd.f32 %v279, %v491
      %v493 = vpop.f32.mrb[0].mxu0
      %v494 = vpop.f32.mrb[0].mxu0
      %v495 = vadd.f32 %v279, %v494
      %v496 = vpop.f32.mrb[0].mxu0
      %497 = vmatprep.mubr.bf16.mxu0 0
      %498 = vmatmul.mubr.bf16.gmra.mrb[0].mxu0 %v350
      %v499 = vpop.f32.mrb[0].mxu0
      %v500 = vadd.f32 %v279, %v499
      %v501 = vpop.f32.mrb[0].mxu0
      %v502 = vpop.f32.mrb[0].mxu0
      %v503 = vadd.f32 %v279, %v502
      %v504 = vpop.f32.mrb[0].mxu0
      %505 = vmatprep.mubr.bf16.mxu0 0
      %506 = vmatmul.mubr.bf16.gmra.mrb[0].mxu0 %v351
      %v507 = vpop.f32.mrb[0].mxu0
      %v508 = vadd.f32 %v279, %v507
      %v509 = vpop.f32.mrb[0].mxu0
      %v510 = vpop.f32.mrb[0].mxu0
      %v511 = vadd.f32 %v279, %v510
      %v512 = vpop.f32.mrb[0].mxu0
      %513 = vmatprep.mubr.bf16.mxu0 0
      %514 = vmatmul.mubr.bf16.gmra.mrb[0].mxu0 %v352
      %v515 = vpop.f32.mrb[0].mxu0
      %v516 = vadd.f32 %v279, %v515
      %v517 = vpop.f32.mrb[0].mxu0
      %v518 = vpop.f32.mrb[0].mxu0
      %v519 = vadd.f32 %v279, %v518
      %v520 = vpop.f32.mrb[0].mxu0
      %521 = vmatprep.mubr.bf16.mxu0 0
      %522 = vmatmul.mubr.bf16.gmra.mrb[0].mxu0 %v353
      %v523 = vpop.f32.mrb[0].mxu0
      %v524 = vadd.f32 %v279, %v523
      %v525 = vpop.f32.mrb[0].mxu0
      %v526 = vpop.f32.mrb[0].mxu0
      %v527 = vadd.f32 %v279, %v526
      %v528 = vpop.f32.mrb[0].mxu0
      %529 = vmatprep.mubr.bf16.mxu0 0
      %530 = vmatmul.mubr.bf16.gmra.mrb[0].mxu0 %v354
      %v531 = vpop.f32.mrb[0].mxu0
      %v532 = vadd.f32 %v279, %v531
      %v533 = vpop.f32.mrb[0].mxu0
      %v534 = vpop.f32.mrb[0].mxu0
      %v535 = vadd.f32 %v279, %v534
      %v536 = vpop.f32.mrb[0].mxu0
      %537 = vmatprep.mubr.bf16.mxu0 0
      %538 = vmatmul.mubr.bf16.gmra.mrb[0].mxu0 %v355
      %v539 = vpop.f32.mrb[0].mxu0
      %v540 = vadd.f32 %v279, %v539
      %v541 = vpop.f32.mrb[0].mxu0
      %v542 = vpop.f32.mrb[0].mxu0
      %v543 = vadd.f32 %v279, %v542
      %v544 = vpop.f32.mrb[0].mxu0
      %545 = vmatprep.mubr.bf16.mxu0 0
      %546 = vmatmul.mubr.bf16.gmra.mrb[0].mxu0 %v356
      %v547 = vpop.f32.mrb[0].mxu0
      %v548 = vadd.f32 %v279, %v547
      %v549 = vpop.f32.mrb[0].mxu0
      %v550 = vpop.f32.mrb[0].mxu0
      %v551 = vadd.f32 %v279, %v550
      %v552 = vpop.f32.mrb[0].mxu0
      %553 = vmatprep.mubr.bf16.mxu0 0
      %554 = vmatmul.mubr.bf16.gmra.mrb[0].mxu0 %v357
      %v555 = vpop.f32.mrb[0].mxu0
      %v556 = vadd.f32 %v279, %v555
      %v557 = vpop.f32.mrb[0].mxu0
      %v558 = vpop.f32.mrb[0].mxu0
      %v559 = vadd.f32 %v279, %v558
      %v560 = vpop.f32.mrb[0].mxu0
      %561 = vmatprep.mubr.bf16.mxu0 0
      %562 = vmatmul.mubr.bf16.gmra.mrb[0].mxu0 %v358
      %v563 = vpop.f32.mrb[0].mxu0
      %v564 = vadd.f32 %v279, %v563
      %v565 = vpop.f32.mrb[0].mxu0
      %v566 = vpop.f32.mrb[0].mxu0
      %v567 = vadd.f32 %v279, %v566
      %v568 = vpop.f32.mrb[0].mxu0
      %569 = vmatprep.mubr.bf16.mxu0 0
      %570 = vmatmul.mubr.bf16.gmra.mrb[0].mxu0 %v359
      %v571 = vpop.f32.mrb[0].mxu0
      %v572 = vadd.f32 %v279, %v571
      %v573 = vpop.f32.mrb[0].mxu0
      %v574 = vpop.f32.mrb[0].mxu0
      %v575 = vadd.f32 %v279, %v574
      %v576 = vpop.f32.mrb[0].mxu0
      %577 = vmatprep.mubr.bf16.mxu0 0
      %578 = vmatmul.mubr.bf16.gmra.mrb[0].mxu0 %v360
      %v579 = vpop.f32.mrb[0].mxu0
      %v580 = vadd.f32 %v279, %v579
      %v581 = vpop.f32.mrb[0].mxu0
      %v582 = vpop.f32.mrb[0].mxu0
      %v583 = vadd.f32 %v279, %v582
      %v584 = vpop.f32.mrb[0].mxu0
      %585 = vdwg.mxu0
      %586 = vst [vmem:[%s223] sm:$0xff] %v460
      %587 = vst [vmem:[%s223 + $0x8] sm:$0xff] %v463
      %588 = vst [vmem:[%s223 + $0x10] sm:$0xff] %v468
      %589 = vst [vmem:[%s223 + $0x18] sm:$0xff] %v471
      %590 = vst [vmem:[%s223 + $0x20] sm:$0xff] %v476
      %591 = vst [vmem:[%s223 + $0x28] sm:$0xff] %v479
      %592 = vst [vmem:[%s223 + $0x30] sm:$0xff] %v484
      %593 = vst [vmem:[%s223 + $0x38] sm:$0xff] %v487
      %594 = vst [vmem:[%s223 + $0x40] sm:$0xff] %v492
      %595 = vst [vmem:[%s223 + $0x48] sm:$0xff] %v495
      %596 = vst [vmem:[%s223 + $0x50] sm:$0xff] %v500
      %597 = vst [vmem:[%s223 + $0x58] sm:$0xff] %v503
      %598 = vst [vmem:[%s223 + $0x60] sm:$0xff] %v508
      %599 = vst [vmem:[%s223 + $0x68] sm:$0xff] %v511
      %600 = vst [vmem:[%s223 + $0x70] sm:$0xff] %v516
      %601 = vst [vmem:[%s223 + $0x78] sm:$0xff] %v519
      %602 = vst [vmem:[%s223 + $0x80] sm:$0xff] %v524
      %603 = vst [vmem:[%s223 + $0x88] sm:$0xff] %v527
      %604 = vst [vmem:[%s223 + $0x90] sm:$0xff] %v532
      %605 = vst [vmem:[%s223 + $0x98] sm:$0xff] %v535
      %606 = vst [vmem:[%s223 + $0xa0] sm:$0xff] %v540
      %607 = vst [vmem:[%s223 + $0xa8] sm:$0xff] %v543
      %608 = vst [vmem:[%s223 + $0xb0] sm:$0xff] %v548
      %609 = vst [vmem:[%s223 + $0xb8] sm:$0xff] %v551
      %610 = vst [vmem:[%s223 + $0xc0] sm:$0xff] %v556
      %611 = vst [vmem:[%s223 + $0xc8] sm:$0xff] %v559
      %612 = vst [vmem:[%s223 + $0xd0] sm:$0xff] %v564
      %613 = vst [vmem:[%s223 + $0xd8] sm:$0xff] %v567
      %614 = vst [vmem:[%s223 + $0xe0] sm:$0xff] %v572
      %615 = vst [vmem:[%s223 + $0xe8] sm:$0xff] %v575
      %616 = vst [vmem:[%s223 + $0xf0] sm:$0xff] %v580
      %617 = vst [vmem:[%s223 + $0xf8] sm:$0xff] %v583
      %s618 = smul.u32 32, %s18
      %p619 = scmp.lt.s32.totalorder %s618, 255
      %s620 = scalar_select %p619, %s618, 255
      %p621 = scmp.lt.s32.totalorder %s19, 0
      %s622 = scalar_select %p621, %s19, 0
      %s623 = sadd.s32 %s622, %s620
      %s624 = smul.addr %s623, 8
      %s625 = scalar_lea.vmem %s3, %s624
      // Predicated region
      $region33: #{generator_forward.16} parent=31 // pred_check
        %p626 = pneg %p124
      $region34: #{generator_forward.16} parent=31 // pred_check_branch
        %628 = sbr.rel (%p626) target = $region36
      $region35: #{generator_forward.16} parent=31 // pred_region
        %s629 = smul.u32 32, %s18
      $region36: #{generator_forward.16} parent=31 // pred_fallthru
        _
    $region32: #{generator_forward.16} parent=5 // pred_fallthru
      _
    %p630 = scmp.le.s32.totalorder 2, %s9
    // Predicated region
    $region37: #{generator_forward.16} parent=5 // pred_check
      %p631 = pneg %p630
    $region38: #{generator_forward.16} parent=5 // pred_check_branch
      %633 = sbr.rel (%p631) target = $region40
    $region39: #{generator_forward.16} parent=5 // pred_region
      %s634 = ssub.s32 %s9, 2
      // Predicated region
      $region41: #{generator_forward.16} parent=39 // pred_check
        %p635 = pneg %p130
      $region42: #{generator_forward.16} parent=39 // pred_check_branch
        %637 = sbr.rel (%p635) target = $region44
      $region43: #{generator_forward.16} parent=39 // pred_region
        %s638 = smul.u32 32, %s20
        %p639 = scmp.lt.s32.totalorder %s638, 255
        %s640 = scalar_select %p639, %s638, 255
        %p641 = scmp.lt.s32.totalorder %s21, 0
        %s642 = scalar_select %p641, %s21, 0
        %s643 = sadd.s32 %s642, %s640
        %s644 = smul.addr %s643, 8
        %s645 = scalar_lea.vmem %s3, %s644
      $region44: #{generator_forward.16} parent=39 // pred_fallthru
        _
    $region40: #{generator_forward.16} parent=5 // pred_fallthru
      _
  $region6: #{generator_forward.16} parent=0 // loop_footer
    %s13 = sadd.s32 1, %s9
  $region7: #{generator_forward.16} parent=0 // loop_footer_branch
    %8 = sbr.rel target = $region3
  $region8: #{generator_forward.16} parent=0 // loop_exit
    _

// kernel: generator_forward.17
$region0: #{generator_forward.17}
  #allocation0 [shape = 'u32[]', space=smem, size = 0x4, offset = 0x4, fixed_abs, tag = 'smem constant byte address 0x4 - core index']
  #allocation1 [shape = 'u32[144,128]{1,0:T(1,128)}', space=vmem, size = 0x12000, scoped, tag = 'internal scratch']
  %s0 = inlined_call_operand.vmem [shape: f32[2048,128], index: 0, kind: input, shape index: {}]
  %s1 = inlined_call_operand.vmem [shape: f32[1,128], index: 1, kind: input, shape index: {}]
  %s2 = inlined_call_operand.vmem [shape: f32[1,128], index: 2, kind: input, shape index: {}]
  %s3 = inlined_call_operand.vmem [shape: f32[2048,128], index: 3, kind: output, shape index: {}]
  %s4 = sld [smem:[#allocation0]]
  $region45: #{generator_forward.17} parent=0
    _
  %s6 = ssub.s32 1, %s4
  %s7 = scalar_select 0, %s6, %s4
  loop: start=0, step=1, limit=4
  $region2: #{generator_forward.17} parent=0 // loop_pre_header
    _
  $region3: #{generator_forward.17} parent=0 // loop_header
    %s9 = sphi 0, %s13
    %p10 = scmp.ge.s32.totalorder %s9, 4
    %s19 = sphi 0, %s21
    %s22 = sphi 0, %s19
    %s23 = sphi 0, %s22
    %s39 = sphi 0, %s23
    %s43 = sphi 0, %s43
    %s45 = sphi 0, %s43
    %s46 = sphi 0, %s45
    %s60 = sphi 0, %s46
    %s64 = sphi 0, %s64
    %s66 = sphi 0, %s64
    %s67 = sphi 0, %s66
    %s81 = sphi 0, %s67
    %s87 = sphi 0, %s89
    %s90 = sphi 0, %s87
    %s91 = sphi 0, %s90
    %s107 = sphi 0, %s91
  $region4: #{generator_forward.17} parent=0 // loop_header_branch
    %12 = sbr.rel (%p10) target = $region8
  $region5: #{generator_forward.17} parent=0 // loop_body
    %s14 = ssub.s32 %s9, 1
    %s15 = ssub.s32 %s9, 2
    %s16 = sadd.s32 %s9, 1
    %s17 = ssub.s32 %s9, %s16
    %p18 = scmp.eq.s32.totalorder %s17, 0
    %s20 = sadd.s32 %s19, 1
    %s21 = scalar_select %p18, %s19, %s20
    %p24 = pneg %p18
    %p25 = scmp.eq.s32.totalorder %s9, 1
    %p26 = por %p24, %p25
    %p27 = scmp.ne.s32.totalorder %s19, %s22
    %p28 = scmp.eq.s32.totalorder %s9, 0
    %p29 = por %p27, %p28
    %p30 = scmp.ne.s32.totalorder %s19, %s22
    %p31 = scmp.eq.s32.totalorder %s14, 1
    %p32 = por %p30, %p31
    %p33 = scmp.ne.s32.totalorder %s22, %s23
    %p34 = scmp.eq.s32.totalorder %s14, 0
    %p35 = por %p33, %p34
    %p36 = scmp.ne.s32.totalorder %s22, %s23
    %p37 = scmp.eq.s32.totalorder %s15, 1
    %p38 = por %p36, %p37
    %p40 = scmp.ne.s32.totalorder %s23, %s39
    %p41 = scmp.eq.s32.totalorder %s15, 0
    %p42 = por %p40, %p41
    %s44 = sadd.s32 %s43, 1
    %p47 = scmp.eq.s32.totalorder %s9, 1
    %p48 = scmp.ne.s32.totalorder %s43, %s45
    %p49 = scmp.eq.s32.totalorder %s9, 0
    %p50 = por %p48, %p49
    %p51 = scmp.ne.s32.totalorder %s43, %s45
    %p52 = scmp.eq.s32.totalorder %s14, 1
    %p53 = por %p51, %p52
    %p54 = scmp.ne.s32.totalorder %s45, %s46
    %p55 = scmp.eq.s32.totalorder %s14, 0
    %p56 = por %p54, %p55
    %p57 = scmp.ne.s32.totalorder %s45, %s46
    %p58 = scmp.eq.s32.totalorder %s15, 1
    %p59 = por %p57, %p58
    %p61 = scmp.ne.s32.totalorder %s46, %s60
    %p62 = scmp.eq.s32.totalorder %s15, 0
    %p63 = por %p61, %p62
    %s65 = sadd.s32 %s64, 1
    %p68 = scmp.eq.s32.totalorder %s9, 1
    %p69 = scmp.ne.s32.totalorder %s64, %s66
    %p70 = scmp.eq.s32.totalorder %s9, 0
    %p71 = por %p69, %p70
    %p72 = scmp.ne.s32.totalorder %s64, %s66
    %p73 = scmp.eq.s32.totalorder %s14, 1
    %p74 = por %p72, %p73
    %p75 = scmp.ne.s32.totalorder %s66, %s67
    %p76 = scmp.eq.s32.totalorder %s14, 0
    %p77 = por %p75, %p76
    %p78 = scmp.ne.s32.totalorder %s66, %s67
    %p79 = scmp.eq.s32.totalorder %s15, 1
    %p80 = por %p78, %p79
    %p82 = scmp.ne.s32.totalorder %s67, %s81
    %p83 = scmp.eq.s32.totalorder %s15, 0
    %p84 = por %p82, %p83
    %s85 = ssub.s32 %s9, %s16
    %p86 = scmp.eq.s32.totalorder %s85, 0
    %s88 = sadd.s32 %s87, 1
    %s89 = scalar_select %p86, %s87, %s88
    %p92 = pneg %p86
    %p93 = scmp.eq.s32.totalorder %s9, 1
    %p94 = por %p92, %p93
    %p95 = scmp.ne.s32.totalorder %s87, %s90
    %p96 = scmp.eq.s32.totalorder %s9, 0
    %p97 = por %p95, %p96
    %p98 = scmp.ne.s32.totalorder %s87, %s90
    %p99 = scmp.eq.s32.totalorder %s14, 1
    %p100 = por %p98, %p99
    %p101 = scmp.ne.s32.totalorder %s90, %s91
    %p102 = scmp.eq.s32.totalorder %s14, 0
    %p103 = por %p101, %p102
    %p104 = scmp.ne.s32.totalorder %s90, %s91
    %p105 = scmp.eq.s32.totalorder %s15, 1
    %p106 = por %p104, %p105
    %p108 = scmp.ne.s32.totalorder %s91, %s107
    %p109 = scmp.eq.s32.totalorder %s15, 0
    %p110 = por %p108, %p109
    %p111 = scmp.le.s32.totalorder 1, %s9
    %p112 = scmp.lt.s32.totalorder %s9, 3
    %p113 = pnand %p111, %p112
    %p114 = pneg %p113
    // Predicated region
    $region9: #{generator_forward.17} parent=5 // pred_check
      _
    $region10: #{generator_forward.17} parent=5 // pred_check_branch
      %116 = sbr.rel (%p113) target = $region12
    $region11: #{generator_forward.17} parent=5 // pred_region
      %s117 = ssub.s32 %s9, 1
      // Predicated region
      $region13: #{generator_forward.17} parent=11 // pred_check
        %p118 = pneg %p56
      $region14: #{generator_forward.17} parent=11 // pred_check_branch
        %120 = sbr.rel (%p118) target = $region16
      $region15: #{generator_forward.17} parent=11 // pred_region
        _
      $region16: #{generator_forward.17} parent=11 // pred_fallthru
        _
      // Predicated region
      $region17: #{generator_forward.17} parent=11 // pred_check
        %p121 = pneg %p77
      $region18: #{generator_forward.17} parent=11 // pred_check_branch
        %123 = sbr.rel (%p121) target = $region20
      $region19: #{generator_forward.17} parent=11 // pred_region
        _
      $region20: #{generator_forward.17} parent=11 // pred_fallthru
        _
    $region12: #{generator_forward.17} parent=5 // pred_fallthru
      _
    %p124 = scmp.lt.s32.totalorder %s9, 2
    // Predicated region
    $region21: #{generator_forward.17} parent=5 // pred_check
      %p125 = pneg %p124
    $region22: #{generator_forward.17} parent=5 // pred_check_branch
      %127 = sbr.rel (%p125) target = $region24
    $region23: #{generator_forward.17} parent=5 // pred_region
      // Predicated region
      $region25: #{generator_forward.17} parent=23 // pred_check
        %p128 = pneg %p29
      $region26: #{generator_forward.17} parent=23 // pred_check_branch
        %130 = sbr.rel (%p128) target = $region28
      $region27: #{generator_forward.17} parent=23 // pred_region
        %s131 = smul.u32 128, %s9
        %p132 = scmp.lt.s32.totalorder %s131, 255
        %s133 = scalar_select %p132, %s131, 255
        %s134 = smul.addr %s133, 8
        %s135 = scalar_lea.vmem %s0, %s134
        %s136 = smul.u32 128, %s9
      $region28: #{generator_forward.17} parent=23 // pred_fallthru
        _
    $region24: #{generator_forward.17} parent=5 // pred_fallthru
      _
    %p137 = scmp.le.s32.totalorder 1, %s9
    %p138 = scmp.lt.s32.totalorder %s9, 3
    %p139 = pnand %p137, %p138
    %p140 = pneg %p139
    // Predicated region
    $region29: #{generator_forward.17} parent=5 // pred_check
      _
    $region30: #{generator_forward.17} parent=5 // pred_check_branch
      %142 = sbr.rel (%p139) target = $region32
    $region31: #{generator_forward.17} parent=5 // pred_region
      %s143 = ssub.s32 %s9, 1
      %s144 = smul.u32 128, %s14
      %p145 = scmp.lt.s32.totalorder %s144, 255
      %s146 = scalar_select %p145, %s144, 255
      %s147 = smul.addr %s146, 8
      %s148 = scalar_lea.vmem %s0, %s147
      %p149 = pneg %p35
      %p150 = pneg %p32
      %p151 = pneg %p56
      %p152 = pneg %p53
      %p153 = pneg %p77
      %p154 = pneg %p74
      %p155 = pneg %p103
      %p156 = pneg %p100
      %s157 = smul.u32 128, %s14
      %p158 = scmp.lt.s32.totalorder %s157, 255
      %s159 = scalar_select %p158, %s157, 255
      %s160 = smul.addr %s159, 8
      %s161 = scalar_lea.vmem %s3, %s160
      %s162 = smul.u32 128, %s14
      %p163 = scmp.lt.s32.totalorder %s162, 255
      %s164 = scalar_select %p163, %s162, 255
      %s165 = smul.addr %s164, 8
      %s166 = scalar_lea.vmem %s0, %s165
      %s167 = smul.u32 128, %s14
      %s168 = smul.u32 128, %s14
      %p169 = scmp.lt.s32.totalorder %s168, 255
      %s170 = scalar_select %p169, %s168, 255
      %s171 = smul.addr %s170, 8
      %s172 = scalar_lea.vmem %s3, %s171
      %s173 = smul.u32 128, %s14
      %v174 = vld [vmem:[%s166] sm:$0xff]
      %v175 = vld [vmem:[%s166 + $0x8] sm:$0xff]
      %v176 = vld [vmem:[%s166 + $0x10] sm:$0xff]
      %v177 = vld [vmem:[%s166 + $0x18] sm:$0xff]
      %v178 = vld [vmem:[%s166 + $0x20] sm:$0xff]
      %v179 = vld [vmem:[%s166 + $0x28] sm:$0xff]
      %v180 = vld [vmem:[%s166 + $0x30] sm:$0xff]
      %v181 = vld [vmem:[%s166 + $0x38] sm:$0xff]
      %v182 = vld [vmem:[%s166 + $0x40] sm:$0xff]
      %v183 = vld [vmem:[%s166 + $0x48] sm:$0xff]
      %v184 = vld [vmem:[%s166 + $0x50] sm:$0xff]
      %v185 = vld [vmem:[%s166 + $0x58] sm:$0xff]
      %v186 = vld [vmem:[%s166 + $0x60] sm:$0xff]
      %v187 = vld [vmem:[%s166 + $0x68] sm:$0xff]
      %v188 = vld [vmem:[%s166 + $0x70] sm:$0xff]
      %v189 = vld [vmem:[%s166 + $0x78] sm:$0xff]
      %v190 = vld [vmem:[%s166 + $0x80] sm:$0xff]
      %v191 = vld [vmem:[%s166 + $0x88] sm:$0xff]
      %v192 = vld [vmem:[%s166 + $0x90] sm:$0xff]
      %v193 = vld [vmem:[%s166 + $0x98] sm:$0xff]
      %v194 = vld [vmem:[%s166 + $0xa0] sm:$0xff]
      %v195 = vld [vmem:[%s166 + $0xa8] sm:$0xff]
      %v196 = vld [vmem:[%s166 + $0xb0] sm:$0xff]
      %v197 = vld [vmem:[%s166 + $0xb8] sm:$0xff]
      %v198 = vld [vmem:[%s166 + $0xc0] sm:$0xff]
      %v199 = vld [vmem:[%s166 + $0xc8] sm:$0xff]
      %v200 = vld [vmem:[%s166 + $0xd0] sm:$0xff]
      %v201 = vld [vmem:[%s166 + $0xd8] sm:$0xff]
      %v202 = vld [vmem:[%s166 + $0xe0] sm:$0xff]
      %v203 = vld [vmem:[%s166 + $0xe8] sm:$0xff]
      %v204 = vld [vmem:[%s166 + $0xf0] sm:$0xff]
      %v205 = vld [vmem:[%s166 + $0xf8] sm:$0xff]
      %v206 = vld [vmem:[%s166 + $0x100] sm:$0xff]
      %v207 = vld [vmem:[%s166 + $0x108] sm:$0xff]
      %v208 = vld [vmem:[%s166 + $0x110] sm:$0xff]
      %v209 = vld [vmem:[%s166 + $0x118] sm:$0xff]
      %v210 = vld [vmem:[%s166 + $0x120] sm:$0xff]
      %v211 = vld [vmem:[%s166 + $0x128] sm:$0xff]
      %v212 = vld [vmem:[%s166 + $0x130] sm:$0xff]
      %v213 = vld [vmem:[%s166 + $0x138] sm:$0xff]
      %v214 = vld [vmem:[%s166 + $0x140] sm:$0xff]
      %v215 = vld [vmem:[%s166 + $0x148] sm:$0xff]
      %v216 = vld [vmem:[%s166 + $0x150] sm:$0xff]
      %v217 = vld [vmem:[%s166 + $0x158] sm:$0xff]
      %v218 = vld [vmem:[%s166 + $0x160] sm:$0xff]
      %v219 = vld [vmem:[%s166 + $0x168] sm:$0xff]
      %v220 = vld [vmem:[%s166 + $0x170] sm:$0xff]
      %v221 = vld [vmem:[%s166 + $0x178] sm:$0xff]
      %v222 = vld [vmem:[%s166 + $0x180] sm:$0xff]
      %v223 = vld [vmem:[%s166 + $0x188] sm:$0xff]
      %v224 = vld [vmem:[%s166 + $0x190] sm:$0xff]
      %v225 = vld [vmem:[%s166 + $0x198] sm:$0xff]
      %v226 = vld [vmem:[%s166 + $0x1a0] sm:$0xff]
      %v227 = vld [vmem:[%s166 + $0x1a8] sm:$0xff]
      %v228 = vld [vmem:[%s166 + $0x1b0] sm:$0xff]
      %v229 = vld [vmem:[%s166 + $0x1b8] sm:$0xff]
      %v230 = vld [vmem:[%s166 + $0x1c0] sm:$0xff]
      %v231 = vld [vmem:[%s166 + $0x1c8] sm:$0xff]
      %v232 = vld [vmem:[%s166 + $0x1d0] sm:$0xff]
      %v233 = vld [vmem:[%s166 + $0x1d8] sm:$0xff]
      %v234 = vld [vmem:[%s166 + $0x1e0] sm:$0xff]
      %v235 = vld [vmem:[%s166 + $0x1e8] sm:$0xff]
      %v236 = vld [vmem:[%s166 + $0x1f0] sm:$0xff]
      %v237 = vld [vmem:[%s166 + $0x1f8] sm:$0xff]
      %v238 = vld [vmem:[%s166 + $0x200] sm:$0xff]
      %v239 = vld [vmem:[%s166 + $0x208] sm:$0xff]
      %v240 = vld [vmem:[%s166 + $0x210] sm:$0xff]
      %v241 = vld [vmem:[%s166 + $0x218] sm:$0xff]
      %v242 = vld [vmem:[%s166 + $0x220] sm:$0xff]
      %v243 = vld [vmem:[%s166 + $0x228] sm:$0xff]
      %v244 = vld [vmem:[%s166 + $0x230] sm:$0xff]
      %v245 = vld [vmem:[%s166 + $0x238] sm:$0xff]
      %v246 = vld [vmem:[%s166 + $0x240] sm:$0xff]
      %v247 = vld [vmem:[%s166 + $0x248] sm:$0xff]
      %v248 = vld [vmem:[%s166 + $0x250] sm:$0xff]
      %v249 = vld [vmem:[%s166 + $0x258] sm:$0xff]
      %v250 = vld [vmem:[%s166 + $0x260] sm:$0xff]
      %v251 = vld [vmem:[%s166 + $0x268] sm:$0xff]
      %v252 = vld [vmem:[%s166 + $0x270] sm:$0xff]
      %v253 = vld [vmem:[%s166 + $0x278] sm:$0xff]
      %v254 = vld [vmem:[%s166 + $0x280] sm:$0xff]
      %v255 = vld [vmem:[%s166 + $0x288] sm:$0xff]
      %v256 = vld [vmem:[%s166 + $0x290] sm:$0xff]
      %v257 = vld [vmem:[%s166 + $0x298] sm:$0xff]
      %v258 = vld [vmem:[%s166 + $0x2a0] sm:$0xff]
      %v259 = vld [vmem:[%s166 + $0x2a8] sm:$0xff]
      %v260 = vld [vmem:[%s166 + $0x2b0] sm:$0xff]
      %v261 = vld [vmem:[%s166 + $0x2b8] sm:$0xff]
      %v262 = vld [vmem:[%s166 + $0x2c0] sm:$0xff]
      %v263 = vld [vmem:[%s166 + $0x2c8] sm:$0xff]
      %v264 = vld [vmem:[%s166 + $0x2d0] sm:$0xff]
      %v265 = vld [vmem:[%s166 + $0x2d8] sm:$0xff]
      %v266 = vld [vmem:[%s166 + $0x2e0] sm:$0xff]
      %v267 = vld [vmem:[%s166 + $0x2e8] sm:$0xff]
      %v268 = vld [vmem:[%s166 + $0x2f0] sm:$0xff]
      %v269 = vld [vmem:[%s166 + $0x2f8] sm:$0xff]
      %v270 = vld [vmem:[%s166 + $0x300] sm:$0xff]
      %v271 = vld [vmem:[%s166 + $0x308] sm:$0xff]
      %v272 = vld [vmem:[%s166 + $0x310] sm:$0xff]
      %v273 = vld [vmem:[%s166 + $0x318] sm:$0xff]
      %v274 = vld [vmem:[%s166 + $0x320] sm:$0xff]
      %v275 = vld [vmem:[%s166 + $0x328] sm:$0xff]
      %v276 = vld [vmem:[%s166 + $0x330] sm:$0xff]
      %v277 = vld [vmem:[%s166 + $0x338] sm:$0xff]
      %v278 = vld [vmem:[%s166 + $0x340] sm:$0xff]
      %v279 = vld [vmem:[%s166 + $0x348] sm:$0xff]
      %v280 = vld [vmem:[%s166 + $0x350] sm:$0xff]
      %v281 = vld [vmem:[%s166 + $0x358] sm:$0xff]
      %v282 = vld [vmem:[%s166 + $0x360] sm:$0xff]
      %v283 = vld [vmem:[%s166 + $0x368] sm:$0xff]
      %v284 = vld [vmem:[%s166 + $0x370] sm:$0xff]
      %v285 = vld [vmem:[%s166 + $0x378] sm:$0xff]
      %v286 = vld [vmem:[%s166 + $0x380] sm:$0xff]
      %v287 = vld [vmem:[%s166 + $0x388] sm:$0xff]
      %v288 = vld [vmem:[%s166 + $0x390] sm:$0xff]
      %v289 = vld [vmem:[%s166 + $0x398] sm:$0xff]
      %v290 = vld [vmem:[%s166 + $0x3a0] sm:$0xff]
      %v291 = vld [vmem:[%s166 + $0x3a8] sm:$0xff]
      %v292 = vld [vmem:[%s166 + $0x3b0] sm:$0xff]
      %v293 = vld [vmem:[%s166 + $0x3b8] sm:$0xff]
      %v294 = vld [vmem:[%s166 + $0x3c0] sm:$0xff]
      %v295 = vld [vmem:[%s166 + $0x3c8] sm:$0xff]
      %v296 = vld [vmem:[%s166 + $0x3d0] sm:$0xff]
      %v297 = vld [vmem:[%s166 + $0x3d8] sm:$0xff]
      %v298 = vld [vmem:[%s166 + $0x3e0] sm:$0xff]
      %v299 = vld [vmem:[%s166 + $0x3e8] sm:$0xff]
      %v300 = vld [vmem:[%s166 + $0x3f0] sm:$0xff]
      %v301 = vld [vmem:[%s166 + $0x3f8] sm:$0xff]
      %v302 = vld [vmem:[%s1] sm:$0x1]
      %v304 = vlaneseq
      %v305 = vshrl.u32 %v304, 7
      %v306 = vsub.s32 0, %v305
      %v307 = vrot.slane %v302, %v306
      %v309 = vmul.f32 %v174, %v307
      %v310 = vmul.f32 %v175, %v307
      %v311 = vmul.f32 %v176, %v307
      %v312 = vmul.f32 %v177, %v307
      %v313 = vmul.f32 %v178, %v307
      %v314 = vmul.f32 %v179, %v307
      %v315 = vmul.f32 %v180, %v307
      %v316 = vmul.f32 %v181, %v307
      %v317 = vmul.f32 %v182, %v307
      %v318 = vmul.f32 %v183, %v307
      %v319 = vmul.f32 %v184, %v307
      %v320 = vmul.f32 %v185, %v307
      %v321 = vmul.f32 %v186, %v307
      %v322 = vmul.f32 %v187, %v307
      %v323 = vmul.f32 %v188, %v307
      %v324 = vmul.f32 %v189, %v307
      %v325 = vmul.f32 %v190, %v307
      %v326 = vmul.f32 %v191, %v307
      %v327 = vmul.f32 %v192, %v307
      %v328 = vmul.f32 %v193, %v307
      %v329 = vmul.f32 %v194, %v307
      %v330 = vmul.f32 %v195, %v307
      %v331 = vmul.f32 %v196, %v307
      %v332 = vmul.f32 %v197, %v307
      %v333 = vmul.f32 %v198, %v307
      %v334 = vmul.f32 %v199, %v307
      %v335 = vmul.f32 %v200, %v307
      %v336 = vmul.f32 %v201, %v307
      %v337 = vmul.f32 %v202, %v307
      %v338 = vmul.f32 %v203, %v307
      %v339 = vmul.f32 %v204, %v307
      %v340 = vmul.f32 %v205, %v307
      %v341 = vmul.f32 %v206, %v307
      %v342 = vmul.f32 %v207, %v307
      %v343 = vmul.f32 %v208, %v307
      %v344 = vmul.f32 %v209, %v307
      %v345 = vmul.f32 %v210, %v307
      %v346 = vmul.f32 %v211, %v307
      %v347 = vmul.f32 %v212, %v307
      %v348 = vmul.f32 %v213, %v307
      %v349 = vmul.f32 %v214, %v307
      %v350 = vmul.f32 %v215, %v307
      %v351 = vmul.f32 %v216, %v307
      %v352 = vmul.f32 %v217, %v307
      %v353 = vmul.f32 %v218, %v307
      %v354 = vmul.f32 %v219, %v307
      %v355 = vmul.f32 %v220, %v307
      %v356 = vmul.f32 %v221, %v307
      %v357 = vmul.f32 %v222, %v307
      %v358 = vmul.f32 %v223, %v307
      %v359 = vmul.f32 %v224, %v307
      %v360 = vmul.f32 %v225, %v307
      %v361 = vmul.f32 %v226, %v307
      %v362 = vmul.f32 %v227, %v307
      %v363 = vmul.f32 %v228, %v307
      %v364 = vmul.f32 %v229, %v307
      %v365 = vmul.f32 %v230, %v307
      %v366 = vmul.f32 %v231, %v307
      %v367 = vmul.f32 %v232, %v307
      %v368 = vmul.f32 %v233, %v307
      %v369 = vmul.f32 %v234, %v307
      %v370 = vmul.f32 %v235, %v307
      %v371 = vmul.f32 %v236, %v307
      %v372 = vmul.f32 %v237, %v307
      %v373 = vmul.f32 %v238, %v307
      %v374 = vmul.f32 %v239, %v307
      %v375 = vmul.f32 %v240, %v307
      %v376 = vmul.f32 %v241, %v307
      %v377 = vmul.f32 %v242, %v307
      %v378 = vmul.f32 %v243, %v307
      %v379 = vmul.f32 %v244, %v307
      %v380 = vmul.f32 %v245, %v307
      %v381 = vmul.f32 %v246, %v307
      %v382 = vmul.f32 %v247, %v307
      %v383 = vmul.f32 %v248, %v307
      %v384 = vmul.f32 %v249, %v307
      %v385 = vmul.f32 %v250, %v307
      %v386 = vmul.f32 %v251, %v307
      %v387 = vmul.f32 %v252, %v307
      %v388 = vmul.f32 %v253, %v307
      %v389 = vmul.f32 %v254, %v307
      %v390 = vmul.f32 %v255, %v307
      %v391 = vmul.f32 %v256, %v307
      %v392 = vmul.f32 %v257, %v307
      %v393 = vmul.f32 %v258, %v307
      %v394 = vmul.f32 %v259, %v307
      %v395 = vmul.f32 %v260, %v307
      %v396 = vmul.f32 %v261, %v307
      %v397 = vmul.f32 %v262, %v307
      %v398 = vmul.f32 %v263, %v307
      %v399 = vmul.f32 %v264, %v307
      %v400 = vmul.f32 %v265, %v307
      %v401 = vmul.f32 %v266, %v307
      %v402 = vmul.f32 %v267, %v307
      %v403 = vmul.f32 %v268, %v307
      %v404 = vmul.f32 %v269, %v307
      %v405 = vmul.f32 %v270, %v307
      %v406 = vmul.f32 %v271, %v307
      %v407 = vmul.f32 %v272, %v307
      %v408 = vmul.f32 %v273, %v307
      %v409 = vmul.f32 %v274, %v307
      %v410 = vmul.f32 %v275, %v307
      %v411 = vmul.f32 %v276, %v307
      %v412 = vmul.f32 %v277, %v307
      %v413 = vmul.f32 %v278, %v307
      %v414 = vmul.f32 %v279, %v307
      %v415 = vmul.f32 %v280, %v307
      %v416 = vmul.f32 %v281, %v307
      %v417 = vmul.f32 %v282, %v307
      %v418 = vmul.f32 %v283, %v307
      %v419 = vmul.f32 %v284, %v307
      %v420 = vmul.f32 %v285, %v307
      %v421 = vmul.f32 %v286, %v307
      %v422 = vmul.f32 %v287, %v307
      %v423 = vmul.f32 %v288, %v307
      %v424 = vmul.f32 %v289, %v307
      %v425 = vmul.f32 %v290, %v307
      %v426 = vmul.f32 %v291, %v307
      %v427 = vmul.f32 %v292, %v307
      %v428 = vmul.f32 %v293, %v307
      %v429 = vmul.f32 %v294, %v307
      %v430 = vmul.f32 %v295, %v307
      %v431 = vmul.f32 %v296, %v307
      %v432 = vmul.f32 %v297, %v307
      %v433 = vmul.f32 %v298, %v307
      %v434 = vmul.f32 %v299, %v307
      %v435 = vmul.f32 %v300, %v307
      %v436 = vmul.f32 %v301, %v307
      %v437 = vld [vmem:[%s2] sm:$0x1]
      %v439 = vlaneseq
      %v440 = vshrl.u32 %v439, 7
      %v441 = vsub.s32 0, %v440
      %v442 = vrot.slane %v437, %v441
      %v444 = vadd.f32 %v309, %v442
      %v445 = vadd.f32 %v310, %v442
      %v446 = vadd.f32 %v311, %v442
      %v447 = vadd.f32 %v312, %v442
      %v448 = vadd.f32 %v313, %v442
      %v449 = vadd.f32 %v314, %v442
      %v450 = vadd.f32 %v315, %v442
      %v451 = vadd.f32 %v316, %v442
      %v452 = vadd.f32 %v317, %v442
      %v453 = vadd.f32 %v318, %v442
      %v454 = vadd.f32 %v319, %v442
      %v455 = vadd.f32 %v320, %v442
      %v456 = vadd.f32 %v321, %v442
      %v457 = vadd.f32 %v322, %v442
      %v458 = vadd.f32 %v323, %v442
      %v459 = vadd.f32 %v324, %v442
      %v460 = vadd.f32 %v325, %v442
      %v461 = vadd.f32 %v326, %v442
      %v462 = vadd.f32 %v327, %v442
      %v463 = vadd.f32 %v328, %v442
      %v464 = vadd.f32 %v329, %v442
      %v465 = vadd.f32 %v330, %v442
      %v466 = vadd.f32 %v331, %v442
      %v467 = vadd.f32 %v332, %v442
      %v468 = vadd.f32 %v333, %v442
      %v469 = vadd.f32 %v334, %v442
      %v470 = vadd.f32 %v335, %v442
      %v471 = vadd.f32 %v336, %v442
      %v472 = vadd.f32 %v337, %v442
      %v473 = vadd.f32 %v338, %v442
      %v474 = vadd.f32 %v339, %v442
      %v475 = vadd.f32 %v340, %v442
      %v476 = vadd.f32 %v341, %v442
      %v477 = vadd.f32 %v342, %v442
      %v478 = vadd.f32 %v343, %v442
      %v479 = vadd.f32 %v344, %v442
      %v480 = vadd.f32 %v345, %v442
      %v481 = vadd.f32 %v346, %v442
      %v482 = vadd.f32 %v347, %v442
      %v483 = vadd.f32 %v348, %v442
      %v484 = vadd.f32 %v349, %v442
      %v485 = vadd.f32 %v350, %v442
      %v486 = vadd.f32 %v351, %v442
      %v487 = vadd.f32 %v352, %v442
      %v488 = vadd.f32 %v353, %v442
      %v489 = vadd.f32 %v354, %v442
      %v490 = vadd.f32 %v355, %v442
      %v491 = vadd.f32 %v356, %v442
      %v492 = vadd.f32 %v357, %v442
      %v493 = vadd.f32 %v358, %v442
      %v494 = vadd.f32 %v359, %v442
      %v495 = vadd.f32 %v360, %v442
      %v496 = vadd.f32 %v361, %v442
      %v497 = vadd.f32 %v362, %v442
      %v498 = vadd.f32 %v363, %v442
      %v499 = vadd.f32 %v364, %v442
      %v500 = vadd.f32 %v365, %v442
      %v501 = vadd.f32 %v366, %v442
      %v502 = vadd.f32 %v367, %v442
      %v503 = vadd.f32 %v368, %v442
      %v504 = vadd.f32 %v369, %v442
      %v505 = vadd.f32 %v370, %v442
      %v506 = vadd.f32 %v371, %v442
      %v507 = vadd.f32 %v372, %v442
      %v508 = vadd.f32 %v373, %v442
      %v509 = vadd.f32 %v374, %v442
      %v510 = vadd.f32 %v375, %v442
      %v511 = vadd.f32 %v376, %v442
      %v512 = vadd.f32 %v377, %v442
      %v513 = vadd.f32 %v378, %v442
      %v514 = vadd.f32 %v379, %v442
      %v515 = vadd.f32 %v380, %v442
      %v516 = vadd.f32 %v381, %v442
      %v517 = vadd.f32 %v382, %v442
      %v518 = vadd.f32 %v383, %v442
      %v519 = vadd.f32 %v384, %v442
      %v520 = vadd.f32 %v385, %v442
      %v521 = vadd.f32 %v386, %v442
      %v522 = vadd.f32 %v387, %v442
      %v523 = vadd.f32 %v388, %v442
      %v524 = vadd.f32 %v389, %v442
      %v525 = vadd.f32 %v390, %v442
      %v526 = vadd.f32 %v391, %v442
      %v527 = vadd.f32 %v392, %v442
      %v528 = vadd.f32 %v393, %v442
      %v529 = vadd.f32 %v394, %v442
      %v530 = vadd.f32 %v395, %v442
      %v531 = vadd.f32 %v396, %v442
      %v532 = vadd.f32 %v397, %v442
      %v533 = vadd.f32 %v398, %v442
      %v534 = vadd.f32 %v399, %v442
      %v535 = vadd.f32 %v400, %v442
      %v536 = vadd.f32 %v401, %v442
      %v537 = vadd.f32 %v402, %v442
      %v538 = vadd.f32 %v403, %v442
      %v539 = vadd.f32 %v404, %v442
      %v540 = vadd.f32 %v405, %v442
      %v541 = vadd.f32 %v406, %v442
      %v542 = vadd.f32 %v407, %v442
      %v543 = vadd.f32 %v408, %v442
      %v544 = vadd.f32 %v409, %v442
      %v545 = vadd.f32 %v410, %v442
      %v546 = vadd.f32 %v411, %v442
      %v547 = vadd.f32 %v412, %v442
      %v548 = vadd.f32 %v413, %v442
      %v549 = vadd.f32 %v414, %v442
      %v550 = vadd.f32 %v415, %v442
      %v551 = vadd.f32 %v416, %v442
      %v552 = vadd.f32 %v417, %v442
      %v553 = vadd.f32 %v418, %v442
      %v554 = vadd.f32 %v419, %v442
      %v555 = vadd.f32 %v420, %v442
      %v556 = vadd.f32 %v421, %v442
      %v557 = vadd.f32 %v422, %v442
      %v558 = vadd.f32 %v423, %v442
      %v559 = vadd.f32 %v424, %v442
      %v560 = vadd.f32 %v425, %v442
      %v561 = vadd.f32 %v426, %v442
      %v562 = vadd.f32 %v427, %v442
      %v563 = vadd.f32 %v428, %v442
      %v564 = vadd.f32 %v429, %v442
      %v565 = vadd.f32 %v430, %v442
      %v566 = vadd.f32 %v431, %v442
      %v567 = vadd.f32 %v432, %v442
      %v568 = vadd.f32 %v433, %v442
      %v569 = vadd.f32 %v434, %v442
      %v570 = vadd.f32 %v435, %v442
      %v571 = vadd.f32 %v436, %v442
      %vm572 = vcmp.ge.f32.partialorder %v444, 0.0
      %vm573 = vcmp.ge.f32.partialorder %v445, 0.0
      %vm574 = vcmp.ge.f32.partialorder %v446, 0.0
      %vm575 = vcmp.ge.f32.partialorder %v447, 0.0
      %vm576 = vcmp.ge.f32.partialorder %v448, 0.0
      %vm577 = vcmp.ge.f32.partialorder %v449, 0.0
      %vm578 = vcmp.ge.f32.partialorder %v450, 0.0
      %vm579 = vcmp.ge.f32.partialorder %v451, 0.0
      %vm580 = vcmp.ge.f32.partialorder %v452, 0.0
      %vm581 = vcmp.ge.f32.partialorder %v453, 0.0
      %vm582 = vcmp.ge.f32.partialorder %v454, 0.0
      %vm583 = vcmp.ge.f32.partialorder %v455, 0.0
      %vm584 = vcmp.ge.f32.partialorder %v456, 0.0
      %vm585 = vcmp.ge.f32.partialorder %v457, 0.0
      %vm586 = vcmp.ge.f32.partialorder %v458, 0.0
      %vm587 = vcmp.ge.f32.partialorder %v459, 0.0
      %vm588 = vcmp.ge.f32.partialorder %v460, 0.0
      %vm589 = vcmp.ge.f32.partialorder %v461, 0.0
      %vm590 = vcmp.ge.f32.partialorder %v462, 0.0
      %vm591 = vcmp.ge.f32.partialorder %v463, 0.0
      %vm592 = vcmp.ge.f32.partialorder %v464, 0.0
      %vm593 = vcmp.ge.f32.partialorder %v465, 0.0
      %vm594 = vcmp.ge.f32.partialorder %v466, 0.0
      %vm595 = vcmp.ge.f32.partialorder %v467, 0.0
      %vm596 = vcmp.ge.f32.partialorder %v468, 0.0
      %vm597 = vcmp.ge.f32.partialorder %v469, 0.0
      %vm598 = vcmp.ge.f32.partialorder %v470, 0.0
      %vm599 = vcmp.ge.f32.partialorder %v471, 0.0
      %vm600 = vcmp.ge.f32.partialorder %v472, 0.0
      %vm601 = vcmp.ge.f32.partialorder %v473, 0.0
      %vm602 = vcmp.ge.f32.partialorder %v474, 0.0
      %vm603 = vcmp.ge.f32.partialorder %v475, 0.0
      %vm604 = vcmp.ge.f32.partialorder %v476, 0.0
      %vm605 = vcmp.ge.f32.partialorder %v477, 0.0
      %vm606 = vcmp.ge.f32.partialorder %v478, 0.0
      %vm607 = vcmp.ge.f32.partialorder %v479, 0.0
      %vm608 = vcmp.ge.f32.partialorder %v480, 0.0
      %vm609 = vcmp.ge.f32.partialorder %v481, 0.0
      %vm610 = vcmp.ge.f32.partialorder %v482, 0.0
      %vm611 = vcmp.ge.f32.partialorder %v483, 0.0
      %vm612 = vcmp.ge.f32.partialorder %v484, 0.0
      %vm613 = vcmp.ge.f32.partialorder %v485, 0.0
      %vm614 = vcmp.ge.f32.partialorder %v486, 0.0
      %vm615 = vcmp.ge.f32.partialorder %v487, 0.0
      %vm616 = vcmp.ge.f32.partialorder %v488, 0.0
      %vm617 = vcmp.ge.f32.partialorder %v489, 0.0
      %vm618 = vcmp.ge.f32.partialorder %v490, 0.0
      %vm619 = vcmp.ge.f32.partialorder %v491, 0.0
      %vm620 = vcmp.ge.f32.partialorder %v492, 0.0
      %vm621 = vcmp.ge.f32.partialorder %v493, 0.0
      %vm622 = vcmp.ge.f32.partialorder %v494, 0.0
      %vm623 = vcmp.ge.f32.partialorder %v495, 0.0
      %vm624 = vcmp.ge.f32.partialorder %v496, 0.0
      %vm625 = vcmp.ge.f32.partialorder %v497, 0.0
      %vm626 = vcmp.ge.f32.partialorder %v498, 0.0
      %vm627 = vcmp.ge.f32.partialorder %v499, 0.0
      %vm628 = vcmp.ge.f32.partialorder %v500, 0.0
      %vm629 = vcmp.ge.f32.partialorder %v501, 0.0
      %vm630 = vcmp.ge.f32.partialorder %v502, 0.0
      %vm631 = vcmp.ge.f32.partialorder %v503, 0.0
      %vm632 = vcmp.ge.f32.partialorder %v504, 0.0
      %vm633 = vcmp.ge.f32.partialorder %v505, 0.0
      %vm634 = vcmp.ge.f32.partialorder %v506, 0.0
      %vm635 = vcmp.ge.f32.partialorder %v507, 0.0
      %vm636 = vcmp.ge.f32.partialorder %v508, 0.0
      %vm637 = vcmp.ge.f32.partialorder %v509, 0.0
      %vm638 = vcmp.ge.f32.partialorder %v510, 0.0
      %vm639 = vcmp.ge.f32.partialorder %v511, 0.0
      %vm640 = vcmp.ge.f32.partialorder %v512, 0.0
      %vm641 = vcmp.ge.f32.partialorder %v513, 0.0
      %vm642 = vcmp.ge.f32.partialorder %v514, 0.0
      %vm643 = vcmp.ge.f32.partialorder %v515, 0.0
      %vm644 = vcmp.ge.f32.partialorder %v516, 0.0
      %vm645 = vcmp.ge.f32.partialorder %v517, 0.0
      %vm646 = vcmp.ge.f32.partialorder %v518, 0.0
      %vm647 = vcmp.ge.f32.partialorder %v519, 0.0
      %vm648 = vcmp.ge.f32.partialorder %v520, 0.0
      %vm649 = vcmp.ge.f32.partialorder %v521, 0.0
      %vm650 = vcmp.ge.f32.partialorder %v522, 0.0
      %vm651 = vcmp.ge.f32.partialorder %v523, 0.0
      %vm652 = vcmp.ge.f32.partialorder %v524, 0.0
      %vm653 = vcmp.ge.f32.partialorder %v525, 0.0
      %vm654 = vcmp.ge.f32.partialorder %v526, 0.0
      %vm655 = vcmp.ge.f32.partialorder %v527, 0.0
      %vm656 = vcmp.ge.f32.partialorder %v528, 0.0
      %vm657 = vcmp.ge.f32.partialorder %v529, 0.0
      %vm658 = vcmp.ge.f32.partialorder %v530, 0.0
      %vm659 = vcmp.ge.f32.partialorder %v531, 0.0
      %vm660 = vcmp.ge.f32.partialorder %v532, 0.0
      %vm661 = vcmp.ge.f32.partialorder %v533, 0.0
      %vm662 = vcmp.ge.f32.partialorder %v534, 0.0
      %vm663 = vcmp.ge.f32.partialorder %v535, 0.0
      %vm664 = vcmp.ge.f32.partialorder %v536, 0.0
      %vm665 = vcmp.ge.f32.partialorder %v537, 0.0
      %vm666 = vcmp.ge.f32.partialorder %v538, 0.0
      %vm667 = vcmp.ge.f32.partialorder %v539, 0.0
      %vm668 = vcmp.ge.f32.partialorder %v540, 0.0
      %vm669 = vcmp.ge.f32.partialorder %v541, 0.0
      %vm670 = vcmp.ge.f32.partialorder %v542, 0.0
      %vm671 = vcmp.ge.f32.partialorder %v543, 0.0
      %vm672 = vcmp.ge.f32.partialorder %v544, 0.0
      %vm673 = vcmp.ge.f32.partialorder %v545, 0.0
      %vm674 = vcmp.ge.f32.partialorder %v546, 0.0
      %vm675 = vcmp.ge.f32.partialorder %v547, 0.0
      %vm676 = vcmp.ge.f32.partialorder %v548, 0.0
      %vm677 = vcmp.ge.f32.partialorder %v549, 0.0
      %vm678 = vcmp.ge.f32.partialorder %v550, 0.0
      %vm679 = vcmp.ge.f32.partialorder %v551, 0.0
      %vm680 = vcmp.ge.f32.partialorder %v552, 0.0
      %vm681 = vcmp.ge.f32.partialorder %v553, 0.0
      %vm682 = vcmp.ge.f32.partialorder %v554, 0.0
      %vm683 = vcmp.ge.f32.partialorder %v555, 0.0
      %vm684 = vcmp.ge.f32.partialorder %v556, 0.0
      %vm685 = vcmp.ge.f32.partialorder %v557, 0.0
      %vm686 = vcmp.ge.f32.partialorder %v558, 0.0
      %vm687 = vcmp.ge.f32.partialorder %v559, 0.0
      %vm688 = vcmp.ge.f32.partialorder %v560, 0.0
      %vm689 = vcmp.ge.f32.partialorder %v561, 0.0
      %vm690 = vcmp.ge.f32.partialorder %v562, 0.0
      %vm691 = vcmp.ge.f32.partialorder %v563, 0.0
      %vm692 = vcmp.ge.f32.partialorder %v564, 0.0
      %vm693 = vcmp.ge.f32.partialorder %v565, 0.0
      %vm694 = vcmp.ge.f32.partialorder %v566, 0.0
      %vm695 = vcmp.ge.f32.partialorder %v567, 0.0
      %vm696 = vcmp.ge.f32.partialorder %v568, 0.0
      %vm697 = vcmp.ge.f32.partialorder %v569, 0.0
      %vm698 = vcmp.ge.f32.partialorder %v570, 0.0
      %vm699 = vcmp.ge.f32.partialorder %v571, 0.0
      %v700 = vmul.f32 %v444, 0.01
      %v701 = vmul.f32 %v445, 0.01
      %v702 = vmul.f32 %v446, 0.01
      %v703 = vmul.f32 %v447, 0.01
      %v704 = vmul.f32 %v448, 0.01
      %v705 = vmul.f32 %v449, 0.01
      %v706 = vmul.f32 %v450, 0.01
      %v707 = vmul.f32 %v451, 0.01
      %v708 = vmul.f32 %v452, 0.01
      %v709 = vmul.f32 %v453, 0.01
      %v710 = vmul.f32 %v454, 0.01
      %v711 = vmul.f32 %v455, 0.01
      %v712 = vmul.f32 %v456, 0.01
      %v713 = vmul.f32 %v457, 0.01
      %v714 = vmul.f32 %v458, 0.01
      %v715 = vmul.f32 %v459, 0.01
      %v716 = vmul.f32 %v460, 0.01
      %v717 = vmul.f32 %v461, 0.01
      %v718 = vmul.f32 %v462, 0.01
      %v719 = vmul.f32 %v463, 0.01
      %v720 = vmul.f32 %v464, 0.01
      %v721 = vmul.f32 %v465, 0.01
      %v722 = vmul.f32 %v466, 0.01
      %v723 = vmul.f32 %v467, 0.01
      %v724 = vmul.f32 %v468, 0.01
      %v725 = vmul.f32 %v469, 0.01
      %v726 = vmul.f32 %v470, 0.01
      %v727 = vmul.f32 %v471, 0.01
      %v728 = vmul.f32 %v472, 0.01
      %v729 = vmul.f32 %v473, 0.01
      %v730 = vmul.f32 %v474, 0.01
      %v731 = vmul.f32 %v475, 0.01
      %v732 = vmul.f32 %v476, 0.01
      %v733 = vmul.f32 %v477, 0.01
      %v734 = vmul.f32 %v478, 0.01
      %v735 = vmul.f32 %v479, 0.01
      %v736 = vmul.f32 %v480, 0.01
      %v737 = vmul.f32 %v481, 0.01
      %v738 = vmul.f32 %v482, 0.01
      %v739 = vmul.f32 %v483, 0.01
      %v740 = vmul.f32 %v484, 0.01
      %v741 = vmul.f32 %v485, 0.01
      %v742 = vmul.f32 %v486, 0.01
      %v743 = vmul.f32 %v487, 0.01
      %v744 = vmul.f32 %v488, 0.01
      %v745 = vmul.f32 %v489, 0.01
      %v746 = vmul.f32 %v490, 0.01
      %v747 = vmul.f32 %v491, 0.01
      %v748 = vmul.f32 %v492, 0.01
      %v749 = vmul.f32 %v493, 0.01
      %v750 = vmul.f32 %v494, 0.01
      %v751 = vmul.f32 %v495, 0.01
      %v752 = vmul.f32 %v496, 0.01
      %v753 = vmul.f32 %v497, 0.01
      %v754 = vmul.f32 %v498, 0.01
      %v755 = vmul.f32 %v499, 0.01
      %v756 = vmul.f32 %v500, 0.01
      %v757 = vmul.f32 %v501, 0.01
      %v758 = vmul.f32 %v502, 0.01
      %v759 = vmul.f32 %v503, 0.01
      %v760 = vmul.f32 %v504, 0.01
      %v761 = vmul.f32 %v505, 0.01
      %v762 = vmul.f32 %v506, 0.01
      %v763 = vmul.f32 %v507, 0.01
      %v764 = vmul.f32 %v508, 0.01
      %v765 = vmul.f32 %v509, 0.01
      %v766 = vmul.f32 %v510, 0.01
      %v767 = vmul.f32 %v511, 0.01
      %v768 = vmul.f32 %v512, 0.01
      %v769 = vmul.f32 %v513, 0.01
      %v770 = vmul.f32 %v514, 0.01
      %v771 = vmul.f32 %v515, 0.01
      %v772 = vmul.f32 %v516, 0.01
      %v773 = vmul.f32 %v517, 0.01
      %v774 = vmul.f32 %v518, 0.01
      %v775 = vmul.f32 %v519, 0.01
      %v776 = vmul.f32 %v520, 0.01
      %v777 = vmul.f32 %v521, 0.01
      %v778 = vmul.f32 %v522, 0.01
      %v779 = vmul.f32 %v523, 0.01
      %v780 = vmul.f32 %v524, 0.01
      %v781 = vmul.f32 %v525, 0.01
      %v782 = vmul.f32 %v526, 0.01
      %v783 = vmul.f32 %v527, 0.01
      %v784 = vmul.f32 %v528, 0.01
      %v785 = vmul.f32 %v529, 0.01
      %v786 = vmul.f32 %v530, 0.01
      %v787 = vmul.f32 %v531, 0.01
      %v788 = vmul.f32 %v532, 0.01
      %v789 = vmul.f32 %v533, 0.01
      %v790 = vmul.f32 %v534, 0.01
      %v791 = vmul.f32 %v535, 0.01
      %v792 = vmul.f32 %v536, 0.01
      %v793 = vmul.f32 %v537, 0.01
      %v794 = vmul.f32 %v538, 0.01
      %v795 = vmul.f32 %v539, 0.01
      %v796 = vmul.f32 %v540, 0.01
      %v797 = vmul.f32 %v541, 0.01
      %v798 = vmul.f32 %v542, 0.01
      %v799 = vmul.f32 %v543, 0.01
      %v800 = vmul.f32 %v544, 0.01
      %v801 = vmul.f32 %v545, 0.01
      %v802 = vmul.f32 %v546, 0.01
      %v803 = vmul.f32 %v547, 0.01
      %v804 = vmul.f32 %v548, 0.01
      %v805 = vmul.f32 %v549, 0.01
      %v806 = vmul.f32 %v550, 0.01
      %v807 = vmul.f32 %v551, 0.01
      %v808 = vmul.f32 %v552, 0.01
      %v809 = vmul.f32 %v553, 0.01
      %v810 = vmul.f32 %v554, 0.01
      %v811 = vmul.f32 %v555, 0.01
      %v812 = vmul.f32 %v556, 0.01
      %v813 = vmul.f32 %v557, 0.01
      %v814 = vmul.f32 %v558, 0.01
      %v815 = vmul.f32 %v559, 0.01
      %v816 = vmul.f32 %v560, 0.01
      %v817 = vmul.f32 %v561, 0.01
      %v818 = vmul.f32 %v562, 0.01
      %v819 = vmul.f32 %v563, 0.01
      %v820 = vmul.f32 %v564, 0.01
      %v821 = vmul.f32 %v565, 0.01
      %v822 = vmul.f32 %v566, 0.01
      %v823 = vmul.f32 %v567, 0.01
      %v824 = vmul.f32 %v568, 0.01
      %v825 = vmul.f32 %v569, 0.01
      %v826 = vmul.f32 %v570, 0.01
      %v827 = vmul.f32 %v571, 0.01
      %v828 = vsel %vm572, %v444, %v700
      %v829 = vsel %vm573, %v445, %v701
      %v830 = vsel %vm574, %v446, %v702
      %v831 = vsel %vm575, %v447, %v703
      %v832 = vsel %vm576, %v448, %v704
      %v833 = vsel %vm577, %v449, %v705
      %v834 = vsel %vm578, %v450, %v706
      %v835 = vsel %vm579, %v451, %v707
      %v836 = vsel %vm580, %v452, %v708
      %v837 = vsel %vm581, %v453, %v709
      %v838 = vsel %vm582, %v454, %v710
      %v839 = vsel %vm583, %v455, %v711
      %v840 = vsel %vm584, %v456, %v712
      %v841 = vsel %vm585, %v457, %v713
      %v842 = vsel %vm586, %v458, %v714
      %v843 = vsel %vm587, %v459, %v715
      %v844 = vsel %vm588, %v460, %v716
      %v845 = vsel %vm589, %v461, %v717
      %v846 = vsel %vm590, %v462, %v718
      %v847 = vsel %vm591, %v463, %v719
      %v848 = vsel %vm592, %v464, %v720
      %v849 = vsel %vm593, %v465, %v721
      %v850 = vsel %vm594, %v466, %v722
      %v851 = vsel %vm595, %v467, %v723
      %v852 = vsel %vm596, %v468, %v724
      %v853 = vsel %vm597, %v469, %v725
      %v854 = vsel %vm598, %v470, %v726
      %v855 = vsel %vm599, %v471, %v727
      %v856 = vsel %vm600, %v472, %v728
      %v857 = vsel %vm601, %v473, %v729
      %v858 = vsel %vm602, %v474, %v730
      %v859 = vsel %vm603, %v475, %v731
      %v860 = vsel %vm604, %v476, %v732
      %v861 = vsel %vm605, %v477, %v733
      %v862 = vsel %vm606, %v478, %v734
      %v863 = vsel %vm607, %v479, %v735
      %v864 = vsel %vm608, %v480, %v736
      %v865 = vsel %vm609, %v481, %v737
      %v866 = vsel %vm610, %v482, %v738
      %v867 = vsel %vm611, %v483, %v739
      %v868 = vsel %vm612, %v484, %v740
      %v869 = vsel %vm613, %v485, %v741
      %v870 = vsel %vm614, %v486, %v742
      %v871 = vsel %vm615, %v487, %v743
      %v872 = vsel %vm616, %v488, %v744
      %v873 = vsel %vm617, %v489, %v745
      %v874 = vsel %vm618, %v490, %v746
      %v875 = vsel %vm619, %v491, %v747
      %v876 = vsel %vm620, %v492, %v748
      %v877 = vsel %vm621, %v493, %v749
      %v878 = vsel %vm622, %v494, %v750
      %v879 = vsel %vm623, %v495, %v751
      %v880 = vsel %vm624, %v496, %v752
      %v881 = vsel %vm625, %v497, %v753
      %v882 = vsel %vm626, %v498, %v754
      %v883 = vsel %vm627, %v499, %v755
      %v884 = vsel %vm628, %v500, %v756
      %v885 = vsel %vm629, %v501, %v757
      %v886 = vsel %vm630, %v502, %v758
      %v887 = vsel %vm631, %v503, %v759
      %v888 = vsel %vm632, %v504, %v760
      %v889 = vsel %vm633, %v505, %v761
      %v890 = vsel %vm634, %v506, %v762
      %v891 = vsel %vm635, %v507, %v763
      %v892 = vsel %vm636, %v508, %v764
      %v893 = vsel %vm637, %v509, %v765
      %v894 = vsel %vm638, %v510, %v766
      %v895 = vsel %vm639, %v511, %v767
      %v896 = vsel %vm640, %v512, %v768
      %v897 = vsel %vm641, %v513, %v769
      %v898 = vsel %vm642, %v514, %v770
      %v899 = vsel %vm643, %v515, %v771
      %v900 = vsel %vm644, %v516, %v772
      %v901 = vsel %vm645, %v517, %v773
      %v902 = vsel %vm646, %v518, %v774
      %v903 = vsel %vm647, %v519, %v775
      %v904 = vsel %vm648, %v520, %v776
      %v905 = vsel %vm649, %v521, %v777
      %v906 = vsel %vm650, %v522, %v778
      %v907 = vsel %vm651, %v523, %v779
      %v908 = vsel %vm652, %v524, %v780
      %v909 = vsel %vm653, %v525, %v781
      %v910 = vsel %vm654, %v526, %v782
      %v911 = vsel %vm655, %v527, %v783
      %v912 = vsel %vm656, %v528, %v784
      %v913 = vsel %vm657, %v529, %v785
      %v914 = vsel %vm658, %v530, %v786
      %v915 = vsel %vm659, %v531, %v787
      %v916 = vsel %vm660, %v532, %v788
      %v917 = vsel %vm661, %v533, %v789
      %v918 = vsel %vm662, %v534, %v790
      %v919 = vsel %vm663, %v535, %v791
      %v920 = vsel %vm664, %v536, %v792
      %v921 = vsel %vm665, %v537, %v793
      %v922 = vsel %vm666, %v538, %v794
      %v923 = vsel %vm667, %v539, %v795
      %v924 = vsel %vm668, %v540, %v796
      %v925 = vsel %vm669, %v541, %v797
      %v926 = vsel %vm670, %v542, %v798
      %v927 = vsel %vm671, %v543, %v799
      %v928 = vsel %vm672, %v544, %v800
      %v929 = vsel %vm673, %v545, %v801
      %v930 = vsel %vm674, %v546, %v802
      %v931 = vsel %vm675, %v547, %v803
      %v932 = vsel %vm676, %v548, %v804
      %v933 = vsel %vm677, %v549, %v805
      %v934 = vsel %vm678, %v550, %v806
      %v935 = vsel %vm679, %v551, %v807
      %v936 = vsel %vm680, %v552, %v808
      %v937 = vsel %vm681, %v553, %v809
      %v938 = vsel %vm682, %v554, %v810
      %v939 = vsel %vm683, %v555, %v811
      %v940 = vsel %vm684, %v556, %v812
      %v941 = vsel %vm685, %v557, %v813
      %v942 = vsel %vm686, %v558, %v814
      %v943 = vsel %vm687, %v559, %v815
      %v944 = vsel %vm688, %v560, %v816
      %v945 = vsel %vm689, %v561, %v817
      %v946 = vsel %vm690, %v562, %v818
      %v947 = vsel %vm691, %v563, %v819
      %v948 = vsel %vm692, %v564, %v820
      %v949 = vsel %vm693, %v565, %v821
      %v950 = vsel %vm694, %v566, %v822
      %v951 = vsel %vm695, %v567, %v823
      %v952 = vsel %vm696, %v568, %v824
      %v953 = vsel %vm697, %v569, %v825
      %v954 = vsel %vm698, %v570, %v826
      %v955 = vsel %vm699, %v571, %v827
      %956 = vst [vmem:[%s172] sm:$0xff] %v828
      %957 = vst [vmem:[%s172 + $0x8] sm:$0xff] %v829
      %958 = vst [vmem:[%s172 + $0x10] sm:$0xff] %v830
      %959 = vst [vmem:[%s172 + $0x18] sm:$0xff] %v831
      %960 = vst [vmem:[%s172 + $0x20] sm:$0xff] %v832
      %961 = vst [vmem:[%s172 + $0x28] sm:$0xff] %v833
      %962 = vst [vmem:[%s172 + $0x30] sm:$0xff] %v834
      %963 = vst [vmem:[%s172 + $0x38] sm:$0xff] %v835
      %964 = vst [vmem:[%s172 + $0x40] sm:$0xff] %v836
      %965 = vst [vmem:[%s172 + $0x48] sm:$0xff] %v837
      %966 = vst [vmem:[%s172 + $0x50] sm:$0xff] %v838
      %967 = vst [vmem:[%s172 + $0x58] sm:$0xff] %v839
      %968 = vst [vmem:[%s172 + $0x60] sm:$0xff] %v840
      %969 = vst [vmem:[%s172 + $0x68] sm:$0xff] %v841
      %970 = vst [vmem:[%s172 + $0x70] sm:$0xff] %v842
      %971 = vst [vmem:[%s172 + $0x78] sm:$0xff] %v843
      %972 = vst [vmem:[%s172 + $0x80] sm:$0xff] %v844
      %973 = vst [vmem:[%s172 + $0x88] sm:$0xff] %v845
      %974 = vst [vmem:[%s172 + $0x90] sm:$0xff] %v846
      %975 = vst [vmem:[%s172 + $0x98] sm:$0xff] %v847
      %976 = vst [vmem:[%s172 + $0xa0] sm:$0xff] %v848
      %977 = vst [vmem:[%s172 + $0xa8] sm:$0xff] %v849
      %978 = vst [vmem:[%s172 + $0xb0] sm:$0xff] %v850
      %979 = vst [vmem:[%s172 + $0xb8] sm:$0xff] %v851
      %980 = vst [vmem:[%s172 + $0xc0] sm:$0xff] %v852
      %981 = vst [vmem:[%s172 + $0xc8] sm:$0xff] %v853
      %982 = vst [vmem:[%s172 + $0xd0] sm:$0xff] %v854
      %983 = vst [vmem:[%s172 + $0xd8] sm:$0xff] %v855
      %984 = vst [vmem:[%s172 + $0xe0] sm:$0xff] %v856
      %985 = vst [vmem:[%s172 + $0xe8] sm:$0xff] %v857
      %986 = vst [vmem:[%s172 + $0xf0] sm:$0xff] %v858
      %987 = vst [vmem:[%s172 + $0xf8] sm:$0xff] %v859
      %988 = vst [vmem:[%s172 + $0x100] sm:$0xff] %v860
      %989 = vst [vmem:[%s172 + $0x108] sm:$0xff] %v861
      %990 = vst [vmem:[%s172 + $0x110] sm:$0xff] %v862
      %991 = vst [vmem:[%s172 + $0x118] sm:$0xff] %v863
      %992 = vst [vmem:[%s172 + $0x120] sm:$0xff] %v864
      %993 = vst [vmem:[%s172 + $0x128] sm:$0xff] %v865
      %994 = vst [vmem:[%s172 + $0x130] sm:$0xff] %v866
      %995 = vst [vmem:[%s172 + $0x138] sm:$0xff] %v867
      %996 = vst [vmem:[%s172 + $0x140] sm:$0xff] %v868
      %997 = vst [vmem:[%s172 + $0x148] sm:$0xff] %v869
      %998 = vst [vmem:[%s172 + $0x150] sm:$0xff] %v870
      %999 = vst [vmem:[%s172 + $0x158] sm:$0xff] %v871
      %1000 = vst [vmem:[%s172 + $0x160] sm:$0xff] %v872
      %1001 = vst [vmem:[%s172 + $0x168] sm:$0xff] %v873
      %1002 = vst [vmem:[%s172 + $0x170] sm:$0xff] %v874
      %1003 = vst [vmem:[%s172 + $0x178] sm:$0xff] %v875
      %1004 = vst [vmem:[%s172 + $0x180] sm:$0xff] %v876
      %1005 = vst [vmem:[%s172 + $0x188] sm:$0xff] %v877
      %1006 = vst [vmem:[%s172 + $0x190] sm:$0xff] %v878
      %1007 = vst [vmem:[%s172 + $0x198] sm:$0xff] %v879
      %1008 = vst [vmem:[%s172 + $0x1a0] sm:$0xff] %v880
      %1009 = vst [vmem:[%s172 + $0x1a8] sm:$0xff] %v881
      %1010 = vst [vmem:[%s172 + $0x1b0] sm:$0xff] %v882
      %1011 = vst [vmem:[%s172 + $0x1b8] sm:$0xff] %v883
      %1012 = vst [vmem:[%s172 + $0x1c0] sm:$0xff] %v884
      %1013 = vst [vmem:[%s172 + $0x1c8] sm:$0xff] %v885
      %1014 = vst [vmem:[%s172 + $0x1d0] sm:$0xff] %v886
      %1015 = vst [vmem:[%s172 + $0x1d8] sm:$0xff] %v887
      %1016 = vst [vmem:[%s172 + $0x1e0] sm:$0xff] %v888
      %1017 = vst [vmem:[%s172 + $0x1e8] sm:$0xff] %v889
      %1018 = vst [vmem:[%s172 + $0x1f0] sm:$0xff] %v890
      %1019 = vst [vmem:[%s172 + $0x1f8] sm:$0xff] %v891
      %1020 = vst [vmem:[%s172 + $0x200] sm:$0xff] %v892
      %1021 = vst [vmem:[%s172 + $0x208] sm:$0xff] %v893
      %1022 = vst [vmem:[%s172 + $0x210] sm:$0xff] %v894
      %1023 = vst [vmem:[%s172 + $0x218] sm:$0xff] %v895
      %1024 = vst [vmem:[%s172 + $0x220] sm:$0xff] %v896
      %1025 = vst [vmem:[%s172 + $0x228] sm:$0xff] %v897
      %1026 = vst [vmem:[%s172 + $0x230] sm:$0xff] %v898
      %1027 = vst [vmem:[%s172 + $0x238] sm:$0xff] %v899
      %1028 = vst [vmem:[%s172 + $0x240] sm:$0xff] %v900
      %1029 = vst [vmem:[%s172 + $0x248] sm:$0xff] %v901
      %1030 = vst [vmem:[%s172 + $0x250] sm:$0xff] %v902
      %1031 = vst [vmem:[%s172 + $0x258] sm:$0xff] %v903
      %1032 = vst [vmem:[%s172 + $0x260] sm:$0xff] %v904
      %1033 = vst [vmem:[%s172 + $0x268] sm:$0xff] %v905
      %1034 = vst [vmem:[%s172 + $0x270] sm:$0xff] %v906
      %1035 = vst [vmem:[%s172 + $0x278] sm:$0xff] %v907
      %1036 = vst [vmem:[%s172 + $0x280] sm:$0xff] %v908
      %1037 = vst [vmem:[%s172 + $0x288] sm:$0xff] %v909
      %1038 = vst [vmem:[%s172 + $0x290] sm:$0xff] %v910
      %1039 = vst [vmem:[%s172 + $0x298] sm:$0xff] %v911
      %1040 = vst [vmem:[%s172 + $0x2a0] sm:$0xff] %v912
      %1041 = vst [vmem:[%s172 + $0x2a8] sm:$0xff] %v913
      %1042 = vst [vmem:[%s172 + $0x2b0] sm:$0xff] %v914
      %1043 = vst [vmem:[%s172 + $0x2b8] sm:$0xff] %v915
      %1044 = vst [vmem:[%s172 + $0x2c0] sm:$0xff] %v916
      %1045 = vst [vmem:[%s172 + $0x2c8] sm:$0xff] %v917
      %1046 = vst [vmem:[%s172 + $0x2d0] sm:$0xff] %v918
      %1047 = vst [vmem:[%s172 + $0x2d8] sm:$0xff] %v919
      %1048 = vst [vmem:[%s172 + $0x2e0] sm:$0xff] %v920
      %1049 = vst [vmem:[%s172 + $0x2e8] sm:$0xff] %v921
      %1050 = vst [vmem:[%s172 + $0x2f0] sm:$0xff] %v922
      %1051 = vst [vmem:[%s172 + $0x2f8] sm:$0xff] %v923
      %1052 = vst [vmem:[%s172 + $0x300] sm:$0xff] %v924
      %1053 = vst [vmem:[%s172 + $0x308] sm:$0xff] %v925
      %1054 = vst [vmem:[%s172 + $0x310] sm:$0xff] %v926
      %1055 = vst [vmem:[%s172 + $0x318] sm:$0xff] %v927
      %1056 = vst [vmem:[%s172 + $0x320] sm:$0xff] %v928
      %1057 = vst [vmem:[%s172 + $0x328] sm:$0xff] %v929
      %1058 = vst [vmem:[%s172 + $0x330] sm:$0xff] %v930
      %1059 = vst [vmem:[%s172 + $0x338] sm:$0xff] %v931
      %1060 = vst [vmem:[%s172 + $0x340] sm:$0xff] %v932
      %1061 = vst [vmem:[%s172 + $0x348] sm:$0xff] %v933
      %1062 = vst [vmem:[%s172 + $0x350] sm:$0xff] %v934
      %1063 = vst [vmem:[%s172 + $0x358] sm:$0xff] %v935
      %1064 = vst [vmem:[%s172 + $0x360] sm:$0xff] %v936
      %1065 = vst [vmem:[%s172 + $0x368] sm:$0xff] %v937
      %1066 = vst [vmem:[%s172 + $0x370] sm:$0xff] %v938
      %1067 = vst [vmem:[%s172 + $0x378] sm:$0xff] %v939
      %1068 = vst [vmem:[%s172 + $0x380] sm:$0xff] %v940
      %1069 = vst [vmem:[%s172 + $0x388] sm:$0xff] %v941
      %1070 = vst [vmem:[%s172 + $0x390] sm:$0xff] %v942
      %1071 = vst [vmem:[%s172 + $0x398] sm:$0xff] %v943
      %1072 = vst [vmem:[%s172 + $0x3a0] sm:$0xff] %v944
      %1073 = vst [vmem:[%s172 + $0x3a8] sm:$0xff] %v945
      %1074 = vst [vmem:[%s172 + $0x3b0] sm:$0xff] %v946
      %1075 = vst [vmem:[%s172 + $0x3b8] sm:$0xff] %v947
      %1076 = vst [vmem:[%s172 + $0x3c0] sm:$0xff] %v948
      %1077 = vst [vmem:[%s172 + $0x3c8] sm:$0xff] %v949
      %1078 = vst [vmem:[%s172 + $0x3d0] sm:$0xff] %v950
      %1079 = vst [vmem:[%s172 + $0x3d8] sm:$0xff] %v951
      %1080 = vst [vmem:[%s172 + $0x3e0] sm:$0xff] %v952
      %1081 = vst [vmem:[%s172 + $0x3e8] sm:$0xff] %v953
      %1082 = vst [vmem:[%s172 + $0x3f0] sm:$0xff] %v954
      %1083 = vst [vmem:[%s172 + $0x3f8] sm:$0xff] %v955
      %s1084 = smul.u32 128, %s14
      %p1085 = scmp.lt.s32.totalorder %s1084, 255
      %s1086 = scalar_select %p1085, %s1084, 255
      %s1087 = smul.addr %s1086, 8
      %s1088 = scalar_lea.vmem %s3, %s1087
      // Predicated region
      $region33: #{generator_forward.17} parent=31 // pred_check
        %p1089 = pneg %p100
      $region34: #{generator_forward.17} parent=31 // pred_check_branch
        %1091 = sbr.rel (%p1089) target = $region36
      $region35: #{generator_forward.17} parent=31 // pred_region
        %s1092 = smul.u32 128, %s14
      $region36: #{generator_forward.17} parent=31 // pred_fallthru
        _
    $region32: #{generator_forward.17} parent=5 // pred_fallthru
      _
    %p1093 = scmp.le.s32.totalorder 2, %s9
    // Predicated region
    $region37: #{generator_forward.17} parent=5 // pred_check
      %p1094 = pneg %p1093
    $region38: #{generator_forward.17} parent=5 // pred_check_branch
      %1096 = sbr.rel (%p1094) target = $region40
    $region39: #{generator_forward.17} parent=5 // pred_region
      %s1097 = ssub.s32 %s9, 2
      // Predicated region
      $region41: #{generator_forward.17} parent=39 // pred_check
        %p1098 = pneg %p106
      $region42: #{generator_forward.17} parent=39 // pred_check_branch
        %1100 = sbr.rel (%p1098) target = $region44
      $region43: #{generator_forward.17} parent=39 // pred_region
        %s1101 = smul.u32 128, %s15
        %p1102 = scmp.lt.s32.totalorder %s1101, 255
        %s1103 = scalar_select %p1102, %s1101, 255
        %s1104 = smul.addr %s1103, 8
        %s1105 = scalar_lea.vmem %s3, %s1104
      $region44: #{generator_forward.17} parent=39 // pred_fallthru
        _
    $region40: #{generator_forward.17} parent=5 // pred_fallthru
      _
  $region6: #{generator_forward.17} parent=0 // loop_footer
    %s13 = sadd.s32 1, %s9
  $region7: #{generator_forward.17} parent=0 // loop_footer_branch
    %8 = sbr.rel target = $region3
  $region8: #{generator_forward.17} parent=0 // loop_exit
    _

// kernel: generator_forward.18
$region0: #{generator_forward.18}
  #allocation0 [shape = 'u32[]', space=smem, size = 0x4, offset = 0x4, fixed_abs, tag = 'smem constant byte address 0x4 - core index']
  #allocation1 [shape = 'u32[144,128]{1,0:T(1,128)}', space=vmem, size = 0x12000, scoped, tag = 'internal scratch']
  %s0 = inlined_call_operand.vmem [shape: bf16[512,512], index: 0, kind: input, shape index: {}]
  %s1 = inlined_call_operand.vmem [shape: bf16[512,128], index: 1, kind: input, shape index: {}]
  %s2 = inlined_call_operand.vmem [shape: f32[1,128], index: 2, kind: input, shape index: {}]
  %s3 = inlined_call_operand.vmem [shape: f32[512,128], index: 3, kind: output, shape index: {}]
  %s4 = sld [smem:[#allocation0]]
  $region45: #{generator_forward.18} parent=0
    _
  %s6 = ssub.s32 1, %s4
  %s7 = scalar_select 0, %s6, %s4
  loop: start=0, step=1, limit=4
  $region2: #{generator_forward.18} parent=0 // loop_pre_header
    _
  $region3: #{generator_forward.18} parent=0 // loop_header
    %s9 = sphi 0, %s13
    %p10 = scmp.ge.s32.totalorder %s9, 4
    %s16 = sphi 0, %s28
    %s17 = sphi 0, %s24
    %s18 = sphi 0, %s16
    %s19 = sphi 0, %s17
    %s20 = sphi 0, %s18
    %s21 = sphi 0, %s19
    %s31 = sphi 0, %s33
    %s34 = sphi 0, %s31
    %s35 = sphi 0, %s34
    %s51 = sphi 0, %s35
    %s57 = sphi 0, %s59
    %s60 = sphi 0, %s57
    %s61 = sphi 0, %s60
    %s77 = sphi 0, %s61
    %s83 = sphi 0, %s85
    %s86 = sphi 0, %s83
    %s87 = sphi 0, %s86
    %s103 = sphi 0, %s87
    %s111 = sphi 0, %s113
    %s114 = sphi 0, %s111
    %s115 = sphi 0, %s114
    %s131 = sphi 0, %s115
  $region4: #{generator_forward.18} parent=0 // loop_header_branch
    %12 = sbr.rel (%p10) target = $region8
  $region5: #{generator_forward.18} parent=0 // loop_body
    %s14 = ssub.s32 %s9, 1
    %s15 = ssub.s32 %s9, 2
    %s22 = sadd.s32 1, %s17
    %p23 = scmp.ge.s32.totalorder %s22, 1
    %s24 = scalar_select %p23, 0, %s22
    %s25 = sadd.s32 1, %s16
    %s26 = scalar_select %p23, %s25, %s16
    %p27 = scmp.ge.s32.totalorder %s26, 2
    %s28 = scalar_select %p27, 0, %s26
    %s29 = ssub.s32 %s16, %s28
    %p30 = scmp.eq.s32.totalorder %s29, 0
    %s32 = sadd.s32 %s31, 1
    %s33 = scalar_select %p30, %s31, %s32
    %p36 = pneg %p30
    %p37 = scmp.eq.s32.totalorder %s9, 1
    %p38 = por %p36, %p37
    %p39 = scmp.ne.s32.totalorder %s31, %s34
    %p40 = scmp.eq.s32.totalorder %s9, 0
    %p41 = por %p39, %p40
    %p42 = scmp.ne.s32.totalorder %s31, %s34
    %p43 = scmp.eq.s32.totalorder %s14, 1
    %p44 = por %p42, %p43
    %p45 = scmp.ne.s32.totalorder %s34, %s35
    %p46 = scmp.eq.s32.totalorder %s14, 0
    %p47 = por %p45, %p46
    %p48 = scmp.ne.s32.totalorder %s34, %s35
    %p49 = scmp.eq.s32.totalorder %s15, 1
    %p50 = por %p48, %p49
    %p52 = scmp.ne.s32.totalorder %s35, %s51
    %p53 = scmp.eq.s32.totalorder %s15, 0
    %p54 = por %p52, %p53
    %s55 = ssub.s32 %s17, %s24
    %p56 = scmp.eq.s32.totalorder %s55, 0
    %s58 = sadd.s32 %s57, 1
    %s59 = scalar_select %p56, %s57, %s58
    %p62 = pneg %p56
    %p63 = scmp.eq.s32.totalorder %s9, 1
    %p64 = por %p62, %p63
    %p65 = scmp.ne.s32.totalorder %s57, %s60
    %p66 = scmp.eq.s32.totalorder %s9, 0
    %p67 = por %p65, %p66
    %p68 = scmp.ne.s32.totalorder %s57, %s60
    %p69 = scmp.eq.s32.totalorder %s14, 1
    %p70 = por %p68, %p69
    %p71 = scmp.ne.s32.totalorder %s60, %s61
    %p72 = scmp.eq.s32.totalorder %s14, 0
    %p73 = por %p71, %p72
    %p74 = scmp.ne.s32.totalorder %s60, %s61
    %p75 = scmp.eq.s32.totalorder %s15, 1
    %p76 = por %p74, %p75
    %p78 = scmp.ne.s32.totalorder %s61, %s77
    %p79 = scmp.eq.s32.totalorder %s15, 0
    %p80 = por %p78, %p79
    %s81 = ssub.s32 %s17, %s24
    %p82 = scmp.eq.s32.totalorder %s81, 0
    %s84 = sadd.s32 %s83, 1
    %s85 = scalar_select %p82, %s83, %s84
    %p88 = pneg %p82
    %p89 = scmp.eq.s32.totalorder %s9, 1
    %p90 = por %p88, %p89
    %p91 = scmp.ne.s32.totalorder %s83, %s86
    %p92 = scmp.eq.s32.totalorder %s9, 0
    %p93 = por %p91, %p92
    %p94 = scmp.ne.s32.totalorder %s83, %s86
    %p95 = scmp.eq.s32.totalorder %s14, 1
    %p96 = por %p94, %p95
    %p97 = scmp.ne.s32.totalorder %s86, %s87
    %p98 = scmp.eq.s32.totalorder %s14, 0
    %p99 = por %p97, %p98
    %p100 = scmp.ne.s32.totalorder %s86, %s87
    %p101 = scmp.eq.s32.totalorder %s15, 1
    %p102 = por %p100, %p101
    %p104 = scmp.ne.s32.totalorder %s87, %s103
    %p105 = scmp.eq.s32.totalorder %s15, 0
    %p106 = por %p104, %p105
    %s107 = ssub.s32 %s16, %s28
    %s108 = ssub.s32 %s17, %s24
    %s109 = sor.u32 %s107, %s108
    %p110 = scmp.eq.s32.totalorder %s109, 0
    %s112 = sadd.s32 %s111, 1
    %s113 = scalar_select %p110, %s111, %s112
    %p116 = pneg %p110
    %p117 = scmp.eq.s32.totalorder %s9, 1
    %p118 = por %p116, %p117
    %p119 = scmp.ne.s32.totalorder %s111, %s114
    %p120 = scmp.eq.s32.totalorder %s9, 0
    %p121 = por %p119, %p120
    %p122 = scmp.ne.s32.totalorder %s111, %s114
    %p123 = scmp.eq.s32.totalorder %s14, 1
    %p124 = por %p122, %p123
    %p125 = scmp.ne.s32.totalorder %s114, %s115
    %p126 = scmp.eq.s32.totalorder %s14, 0
    %p127 = por %p125, %p126
    %p128 = scmp.ne.s32.totalorder %s114, %s115
    %p129 = scmp.eq.s32.totalorder %s15, 1
    %p130 = por %p128, %p129
    %p132 = scmp.ne.s32.totalorder %s115, %s131
    %p133 = scmp.eq.s32.totalorder %s15, 0
    %p134 = por %p132, %p133
    %p135 = scmp.le.s32.totalorder 1, %s9
    %p136 = scmp.lt.s32.totalorder %s9, 3
    %p137 = pnand %p135, %p136
    %p138 = pneg %p137
    // Predicated region
    $region9: #{generator_forward.18} parent=5 // pred_check
      _
    $region10: #{generator_forward.18} parent=5 // pred_check_branch
      %140 = sbr.rel (%p137) target = $region12
    $region11: #{generator_forward.18} parent=5 // pred_region
      %s141 = ssub.s32 %s9, 1
      // Predicated region
      $region13: #{generator_forward.18} parent=11 // pred_check
        %p142 = pneg %p73
      $region14: #{generator_forward.18} parent=11 // pred_check_branch
        %144 = sbr.rel (%p142) target = $region16
      $region15: #{generator_forward.18} parent=11 // pred_region
        %p145 = scmp.lt.s32.totalorder %s19, 0
        %s146 = scalar_select %p145, %s19, 0
        %s147 = smul.addr %s146, 4
        %s148 = scalar_lea.vmem %s1, %s147
      $region16: #{generator_forward.18} parent=11 // pred_fallthru
        _
      // Predicated region
      $region17: #{generator_forward.18} parent=11 // pred_check
        %p149 = pneg %p99
      $region18: #{generator_forward.18} parent=11 // pred_check_branch
        %151 = sbr.rel (%p149) target = $region20
      $region19: #{generator_forward.18} parent=11 // pred_region
        %p152 = scmp.lt.s32.totalorder %s19, 0
        %s153 = scalar_select %p152, %s19, 0
        %s154 = scalar_lea.vmem %s2, %s153
      $region20: #{generator_forward.18} parent=11 // pred_fallthru
        _
    $region12: #{generator_forward.18} parent=5 // pred_fallthru
      _
    %p155 = scmp.lt.s32.totalorder %s9, 2
    // Predicated region
    $region21: #{generator_forward.18} parent=5 // pred_check
      %p156 = pneg %p155
    $region22: #{generator_forward.18} parent=5 // pred_check_branch
      %158 = sbr.rel (%p156) target = $region24
    $region23: #{generator_forward.18} parent=5 // pred_region
      // Predicated region
      $region25: #{generator_forward.18} parent=23 // pred_check
        %p159 = pneg %p41
      $region26: #{generator_forward.18} parent=23 // pred_check_branch
        %161 = sbr.rel (%p159) target = $region28
      $region27: #{generator_forward.18} parent=23 // pred_region
        %s162 = smul.u32 32, %s16
        %p163 = scmp.lt.s32.totalorder %s162, 63
        %s164 = scalar_select %p163, %s162, 63
        %s165 = smul.addr %s164, 4
        %s166 = smul.addr %s165, 4
        %s167 = scalar_lea.vmem %s0, %s166
        %s168 = smul.u32 32, %s16
      $region28: #{generator_forward.18} parent=23 // pred_fallthru
        _
    $region24: #{generator_forward.18} parent=5 // pred_fallthru
      _
    %p169 = scmp.le.s32.totalorder 1, %s9
    %p170 = scmp.lt.s32.totalorder %s9, 3
    %p171 = pnand %p169, %p170
    %p172 = pneg %p171
    // Predicated region
    $region29: #{generator_forward.18} parent=5 // pred_check
      _
    $region30: #{generator_forward.18} parent=5 // pred_check_branch
      %174 = sbr.rel (%p171) target = $region32
    $region31: #{generator_forward.18} parent=5 // pred_region
      %s175 = ssub.s32 %s9, 1
      %s176 = smul.u32 32, %s18
      %p177 = scmp.lt.s32.totalorder %s176, 63
      %s178 = scalar_select %p177, %s176, 63
      %s179 = smul.addr %s178, 4
      %s180 = smul.addr %s179, 4
      %s181 = scalar_lea.vmem %s0, %s180
      %p182 = pneg %p47
      %p183 = pneg %p44
      %p184 = scmp.lt.s32.totalorder %s19, 0
      %s185 = scalar_select %p184, %s19, 0
      %s186 = smul.addr %s185, 4
      %s187 = scalar_lea.vmem %s1, %s186
      %p188 = pneg %p73
      %p189 = pneg %p70
      %p190 = scmp.lt.s32.totalorder %s19, 0
      %s191 = scalar_select %p190, %s19, 0
      %s192 = scalar_lea.vmem %s2, %s191
      %p193 = pneg %p99
      %p194 = pneg %p96
      %p195 = pneg %p127
      %p196 = pneg %p124
      %s197 = smul.u32 32, %s18
      %p198 = scmp.lt.s32.totalorder %s197, 63
      %s199 = scalar_select %p198, %s197, 63
      %p200 = scmp.lt.s32.totalorder %s19, 0
      %s201 = scalar_select %p200, %s19, 0
      %s202 = sadd.s32 %s201, %s199
      %s203 = smul.addr %s202, 8
      %s204 = scalar_lea.vmem %s3, %s203
      %s205 = smul.u32 32, %s18
      %p206 = scmp.lt.s32.totalorder %s205, 63
      %s207 = scalar_select %p206, %s205, 63
      %s208 = smul.addr %s207, 4
      %s209 = smul.addr %s208, 4
      %s210 = scalar_lea.vmem %s0, %s209
      %s211 = smul.u32 32, %s18
      %p212 = scmp.lt.s32.totalorder %s19, 0
      %s213 = scalar_select %p212, %s19, 0
      %s214 = smul.addr %s213, 4
      %s215 = scalar_lea.vmem %s1, %s214
      %p216 = scmp.lt.s32.totalorder %s19, 0
      %s217 = scalar_select %p216, %s19, 0
      %s218 = scalar_lea.vmem %s2, %s217
      %s219 = smul.u32 32, %s18
      %p220 = scmp.lt.s32.totalorder %s219, 63
      %s221 = scalar_select %p220, %s219, 63
      %p222 = scmp.lt.s32.totalorder %s19, 0
      %s223 = scalar_select %p222, %s19, 0
      %s224 = sadd.s32 %s223, %s221
      %s225 = smul.addr %s224, 8
      %s226 = scalar_lea.vmem %s3, %s225
      %s227 = smul.u32 32, %s18
      %v229 = vld [vmem:[%s210] sm:$0xff]
      %v230 = vld [vmem:[%s210 + $0x8] sm:$0xff]
      %v231 = vld [vmem:[%s210 + $0x10] sm:$0xff]
      %v232 = vld [vmem:[%s210 + $0x18] sm:$0xff]
      %v233 = vld [vmem:[%s210 + $0x20] sm:$0xff]
      %v234 = vld [vmem:[%s210 + $0x28] sm:$0xff]
      %v235 = vld [vmem:[%s210 + $0x30] sm:$0xff]
      %v236 = vld [vmem:[%s210 + $0x38] sm:$0xff]
      %v237 = vld [vmem:[%s210 + $0x40] sm:$0xff]
      %v238 = vld [vmem:[%s210 + $0x48] sm:$0xff]
      %v239 = vld [vmem:[%s210 + $0x50] sm:$0xff]
      %v240 = vld [vmem:[%s210 + $0x58] sm:$0xff]
      %v241 = vld [vmem:[%s210 + $0x60] sm:$0xff]
      %v242 = vld [vmem:[%s210 + $0x68] sm:$0xff]
      %v243 = vld [vmem:[%s210 + $0x70] sm:$0xff]
      %v244 = vld [vmem:[%s210 + $0x78] sm:$0xff]
      %v245 = vld [vmem:[%s210 + $0x80] sm:$0xff]
      %v246 = vld [vmem:[%s210 + $0x88] sm:$0xff]
      %v247 = vld [vmem:[%s210 + $0x90] sm:$0xff]
      %v248 = vld [vmem:[%s210 + $0x98] sm:$0xff]
      %v249 = vld [vmem:[%s210 + $0xa0] sm:$0xff]
      %v250 = vld [vmem:[%s210 + $0xa8] sm:$0xff]
      %v251 = vld [vmem:[%s210 + $0xb0] sm:$0xff]
      %v252 = vld [vmem:[%s210 + $0xb8] sm:$0xff]
      %v253 = vld [vmem:[%s210 + $0xc0] sm:$0xff]
      %v254 = vld [vmem:[%s210 + $0xc8] sm:$0xff]
      %v255 = vld [vmem:[%s210 + $0xd0] sm:$0xff]
      %v256 = vld [vmem:[%s210 + $0xd8] sm:$0xff]
      %v257 = vld [vmem:[%s210 + $0xe0] sm:$0xff]
      %v258 = vld [vmem:[%s210 + $0xe8] sm:$0xff]
      %v259 = vld [vmem:[%s210 + $0xf0] sm:$0xff]
      %v260 = vld [vmem:[%s210 + $0xf8] sm:$0xff]
      %v261 = vld [vmem:[%s210 + $0x100] sm:$0xff]
      %v262 = vld [vmem:[%s210 + $0x108] sm:$0xff]
      %v263 = vld [vmem:[%s210 + $0x110] sm:$0xff]
      %v264 = vld [vmem:[%s210 + $0x118] sm:$0xff]
      %v265 = vld [vmem:[%s210 + $0x120] sm:$0xff]
      %v266 = vld [vmem:[%s210 + $0x128] sm:$0xff]
      %v267 = vld [vmem:[%s210 + $0x130] sm:$0xff]
      %v268 = vld [vmem:[%s210 + $0x138] sm:$0xff]
      %v269 = vld [vmem:[%s210 + $0x140] sm:$0xff]
      %v270 = vld [vmem:[%s210 + $0x148] sm:$0xff]
      %v271 = vld [vmem:[%s210 + $0x150] sm:$0xff]
      %v272 = vld [vmem:[%s210 + $0x158] sm:$0xff]
      %v273 = vld [vmem:[%s210 + $0x160] sm:$0xff]
      %v274 = vld [vmem:[%s210 + $0x168] sm:$0xff]
      %v275 = vld [vmem:[%s210 + $0x170] sm:$0xff]
      %v276 = vld [vmem:[%s210 + $0x178] sm:$0xff]
      %v277 = vld [vmem:[%s210 + $0x180] sm:$0xff]
      %v278 = vld [vmem:[%s210 + $0x188] sm:$0xff]
      %v279 = vld [vmem:[%s210 + $0x190] sm:$0xff]
      %v280 = vld [vmem:[%s210 + $0x198] sm:$0xff]
      %v281 = vld [vmem:[%s210 + $0x1a0] sm:$0xff]
      %v282 = vld [vmem:[%s210 + $0x1a8] sm:$0xff]
      %v283 = vld [vmem:[%s210 + $0x1b0] sm:$0xff]
      %v284 = vld [vmem:[%s210 + $0x1b8] sm:$0xff]
      %v285 = vld [vmem:[%s210 + $0x1c0] sm:$0xff]
      %v286 = vld [vmem:[%s210 + $0x1c8] sm:$0xff]
      %v287 = vld [vmem:[%s210 + $0x1d0] sm:$0xff]
      %v288 = vld [vmem:[%s210 + $0x1d8] sm:$0xff]
      %v289 = vld [vmem:[%s210 + $0x1e0] sm:$0xff]
      %v290 = vld [vmem:[%s210 + $0x1e8] sm:$0xff]
      %v291 = vld [vmem:[%s210 + $0x1f0] sm:$0xff]
      %v292 = vld [vmem:[%s210 + $0x1f8] sm:$0xff]
      %v293 = vld [vmem:[%s215] sm:$0xf]
      %v294 = vld [vmem:[%s215 + $0x4] sm:$0xf]
      %v295 = vld [vmem:[%s215 + $0x8] sm:$0xf]
      %v296 = vld [vmem:[%s215 + $0xc] sm:$0xf]
      %v297 = vld [vmem:[%s215 + $0x10] sm:$0xf]
      %v298 = vld [vmem:[%s215 + $0x14] sm:$0xf]
      %v299 = vld [vmem:[%s215 + $0x18] sm:$0xf]
      %v300 = vld [vmem:[%s215 + $0x1c] sm:$0xf]
      %v301 = vld [vmem:[%s215 + $0x20] sm:$0xf]
      %v302 = vld [vmem:[%s215 + $0x24] sm:$0xf]
      %v303 = vld [vmem:[%s215 + $0x28] sm:$0xf]
      %v304 = vld [vmem:[%s215 + $0x2c] sm:$0xf]
      %v305 = vld [vmem:[%s215 + $0x30] sm:$0xf]
      %v306 = vld [vmem:[%s215 + $0x34] sm:$0xf]
      %v307 = vld [vmem:[%s215 + $0x38] sm:$0xf]
      %v308 = vld [vmem:[%s215 + $0x3c] sm:$0xf]
      %v309 = vld [vmem:[%s215 + $0x40] sm:$0xf]
      %v310 = vld [vmem:[%s215 + $0x44] sm:$0xf]
      %v311 = vld [vmem:[%s215 + $0x48] sm:$0xf]
      %v312 = vld [vmem:[%s215 + $0x4c] sm:$0xf]
      %v313 = vld [vmem:[%s215 + $0x50] sm:$0xf]
      %v314 = vld [vmem:[%s215 + $0x54] sm:$0xf]
      %v315 = vld [vmem:[%s215 + $0x58] sm:$0xf]
      %v316 = vld [vmem:[%s215 + $0x5c] sm:$0xf]
      %v317 = vld [vmem:[%s215 + $0x60] sm:$0xf]
      %v318 = vld [vmem:[%s215 + $0x64] sm:$0xf]
      %v319 = vld [vmem:[%s215 + $0x68] sm:$0xf]
      %v320 = vld [vmem:[%s215 + $0x6c] sm:$0xf]
      %v321 = vld [vmem:[%s215 + $0x70] sm:$0xf]
      %v322 = vld [vmem:[%s215 + $0x74] sm:$0xf]
      %v323 = vld [vmem:[%s215 + $0x78] sm:$0xf]
      %v324 = vld [vmem:[%s215 + $0x7c] sm:$0xf]
      %v325 = vld [vmem:[%s215 + $0x80] sm:$0xf]
      %v326 = vld [vmem:[%s215 + $0x84] sm:$0xf]
      %v327 = vld [vmem:[%s215 + $0x88] sm:$0xf]
      %v328 = vld [vmem:[%s215 + $0x8c] sm:$0xf]
      %v329 = vld [vmem:[%s215 + $0x90] sm:$0xf]
      %v330 = vld [vmem:[%s215 + $0x94] sm:$0xf]
      %v331 = vld [vmem:[%s215 + $0x98] sm:$0xf]
      %v332 = vld [vmem:[%s215 + $0x9c] sm:$0xf]
      %v333 = vld [vmem:[%s215 + $0xa0] sm:$0xf]
      %v334 = vld [vmem:[%s215 + $0xa4] sm:$0xf]
      %v335 = vld [vmem:[%s215 + $0xa8] sm:$0xf]
      %v336 = vld [vmem:[%s215 + $0xac] sm:$0xf]
      %v337 = vld [vmem:[%s215 + $0xb0] sm:$0xf]
      %v338 = vld [vmem:[%s215 + $0xb4] sm:$0xf]
      %v339 = vld [vmem:[%s215 + $0xb8] sm:$0xf]
      %v340 = vld [vmem:[%s215 + $0xbc] sm:$0xf]
      %v341 = vld [vmem:[%s215 + $0xc0] sm:$0xf]
      %v342 = vld [vmem:[%s215 + $0xc4] sm:$0xf]
      %v343 = vld [vmem:[%s215 + $0xc8] sm:$0xf]
      %v344 = vld [vmem:[%s215 + $0xcc] sm:$0xf]
      %v345 = vld [vmem:[%s215 + $0xd0] sm:$0xf]
      %v346 = vld [vmem:[%s215 + $0xd4] sm:$0xf]
      %v347 = vld [vmem:[%s215 + $0xd8] sm:$0xf]
      %v348 = vld [vmem:[%s215 + $0xdc] sm:$0xf]
      %v349 = vld [vmem:[%s215 + $0xe0] sm:$0xf]
      %v350 = vld [vmem:[%s215 + $0xe4] sm:$0xf]
      %v351 = vld [vmem:[%s215 + $0xe8] sm:$0xf]
      %v352 = vld [vmem:[%s215 + $0xec] sm:$0xf]
      %v353 = vld [vmem:[%s215 + $0xf0] sm:$0xf]
      %v354 = vld [vmem:[%s215 + $0xf4] sm:$0xf]
      %v355 = vld [vmem:[%s215 + $0xf8] sm:$0xf]
      %v356 = vld [vmem:[%s215 + $0xfc] sm:$0xf]
      %v357 = vld [vmem:[%s218] sm:$0x1]
      %v359 = vlaneseq
      %v360 = vshrl.u32 %v359, 7
      %v361 = vsub.s32 0, %v360
      %v362 = vrot.slane %v357, %v361
      %v428 = vunpack.c.l.b16 %v229
      %v429 = vunpack.c.h.b16 %v229
      %v430 = vunpack.c.l.b16 %v230
      %v431 = vunpack.c.h.b16 %v230
      %v432 = vunpack.c.l.b16 %v231
      %v433 = vunpack.c.h.b16 %v231
      %v434 = vunpack.c.l.b16 %v232
      %v435 = vunpack.c.h.b16 %v232
      %v436 = vunpack.c.l.b16 %v233
      %v437 = vunpack.c.h.b16 %v233
      %v438 = vunpack.c.l.b16 %v234
      %v439 = vunpack.c.h.b16 %v234
      %v440 = vunpack.c.l.b16 %v235
      %v441 = vunpack.c.h.b16 %v235
      %v442 = vunpack.c.l.b16 %v236
      %v443 = vunpack.c.h.b16 %v236
      %v444 = vunpack.c.l.b16 %v237
      %v445 = vunpack.c.h.b16 %v237
      %v446 = vunpack.c.l.b16 %v238
      %v447 = vunpack.c.h.b16 %v238
      %v448 = vunpack.c.l.b16 %v239
      %v449 = vunpack.c.h.b16 %v239
      %v450 = vunpack.c.l.b16 %v240
      %v451 = vunpack.c.h.b16 %v240
      %v452 = vunpack.c.l.b16 %v241
      %v453 = vunpack.c.h.b16 %v241
      %v454 = vunpack.c.l.b16 %v242
      %v455 = vunpack.c.h.b16 %v242
      %v456 = vunpack.c.l.b16 %v243
      %v457 = vunpack.c.h.b16 %v243
      %v458 = vunpack.c.l.b16 %v244
      %v459 = vunpack.c.h.b16 %v244
      %v460 = vunpack.c.l.b16 %v245
      %v461 = vunpack.c.h.b16 %v245
      %v462 = vunpack.c.l.b16 %v246
      %v463 = vunpack.c.h.b16 %v246
      %v464 = vunpack.c.l.b16 %v247
      %v465 = vunpack.c.h.b16 %v247
      %v466 = vunpack.c.l.b16 %v248
      %v467 = vunpack.c.h.b16 %v248
      %v468 = vunpack.c.l.b16 %v249
      %v469 = vunpack.c.h.b16 %v249
      %v470 = vunpack.c.l.b16 %v250
      %v471 = vunpack.c.h.b16 %v250
      %v472 = vunpack.c.l.b16 %v251
      %v473 = vunpack.c.h.b16 %v251
      %v474 = vunpack.c.l.b16 %v252
      %v475 = vunpack.c.h.b16 %v252
      %v476 = vunpack.c.l.b16 %v253
      %v477 = vunpack.c.h.b16 %v253
      %v478 = vunpack.c.l.b16 %v254
      %v479 = vunpack.c.h.b16 %v254
      %v480 = vunpack.c.l.b16 %v255
      %v481 = vunpack.c.h.b16 %v255
      %v482 = vunpack.c.l.b16 %v256
      %v483 = vunpack.c.h.b16 %v256
      %v484 = vunpack.c.l.b16 %v257
      %v485 = vunpack.c.h.b16 %v257
      %v486 = vunpack.c.l.b16 %v258
      %v487 = vunpack.c.h.b16 %v258
      %v488 = vunpack.c.l.b16 %v259
      %v489 = vunpack.c.h.b16 %v259
      %v490 = vunpack.c.l.b16 %v260
      %v491 = vunpack.c.h.b16 %v260
      %v492 = vunpack.c.l.b16 %v261
      %v493 = vunpack.c.h.b16 %v261
      %v494 = vunpack.c.l.b16 %v262
      %v495 = vunpack.c.h.b16 %v262
      %v496 = vunpack.c.l.b16 %v263
      %v497 = vunpack.c.h.b16 %v263
      %v498 = vunpack.c.l.b16 %v264
      %v499 = vunpack.c.h.b16 %v264
      %v500 = vunpack.c.l.b16 %v265
      %v501 = vunpack.c.h.b16 %v265
      %v502 = vunpack.c.l.b16 %v266
      %v503 = vunpack.c.h.b16 %v266
      %v504 = vunpack.c.l.b16 %v267
      %v505 = vunpack.c.h.b16 %v267
      %v506 = vunpack.c.l.b16 %v268
      %v507 = vunpack.c.h.b16 %v268
      %v508 = vunpack.c.l.b16 %v269
      %v509 = vunpack.c.h.b16 %v269
      %v510 = vunpack.c.l.b16 %v270
      %v511 = vunpack.c.h.b16 %v270
      %v512 = vunpack.c.l.b16 %v271
      %v513 = vunpack.c.h.b16 %v271
      %v514 = vunpack.c.l.b16 %v272
      %v515 = vunpack.c.h.b16 %v272
      %v516 = vunpack.c.l.b16 %v273
      %v517 = vunpack.c.h.b16 %v273
      %v518 = vunpack.c.l.b16 %v274
      %v519 = vunpack.c.h.b16 %v274
      %v520 = vunpack.c.l.b16 %v275
      %v521 = vunpack.c.h.b16 %v275
      %v522 = vunpack.c.l.b16 %v276
      %v523 = vunpack.c.h.b16 %v276
      %v524 = vunpack.c.l.b16 %v277
      %v525 = vunpack.c.h.b16 %v277
      %v526 = vunpack.c.l.b16 %v278
      %v527 = vunpack.c.h.b16 %v278
      %v528 = vunpack.c.l.b16 %v279
      %v529 = vunpack.c.h.b16 %v279
      %v530 = vunpack.c.l.b16 %v280
      %v531 = vunpack.c.h.b16 %v280
      %v532 = vunpack.c.l.b16 %v281
      %v533 = vunpack.c.h.b16 %v281
      %v534 = vunpack.c.l.b16 %v282
      %v535 = vunpack.c.h.b16 %v282
      %v536 = vunpack.c.l.b16 %v283
      %v537 = vunpack.c.h.b16 %v283
      %v538 = vunpack.c.l.b16 %v284
      %v539 = vunpack.c.h.b16 %v284
      %v540 = vunpack.c.l.b16 %v285
      %v541 = vunpack.c.h.b16 %v285
      %v542 = vunpack.c.l.b16 %v286
      %v543 = vunpack.c.h.b16 %v286
      %v544 = vunpack.c.l.b16 %v287
      %v545 = vunpack.c.h.b16 %v287
      %v546 = vunpack.c.l.b16 %v288
      %v547 = vunpack.c.h.b16 %v288
      %v548 = vunpack.c.l.b16 %v289
      %v549 = vunpack.c.h.b16 %v289
      %v550 = vunpack.c.l.b16 %v290
      %v551 = vunpack.c.h.b16 %v290
      %v552 = vunpack.c.l.b16 %v291
      %v553 = vunpack.c.h.b16 %v291
      %v554 = vunpack.c.l.b16 %v292
      %v555 = vunpack.c.h.b16 %v292
      %v556 = vpack.c.b16 %v432, %v428
      %v557 = vpack.c.b16 %v433, %v429
      %v558 = vpack.c.b16 %v434, %v430
      %v559 = vpack.c.b16 %v435, %v431
      %v560 = vpack.c.b16 %v440, %v436
      %v561 = vpack.c.b16 %v441, %v437
      %v562 = vpack.c.b16 %v442, %v438
      %v563 = vpack.c.b16 %v443, %v439
      %v564 = vpack.c.b16 %v448, %v444
      %v565 = vpack.c.b16 %v449, %v445
      %v566 = vpack.c.b16 %v450, %v446
      %v567 = vpack.c.b16 %v451, %v447
      %v568 = vpack.c.b16 %v456, %v452
      %v569 = vpack.c.b16 %v457, %v453
      %v570 = vpack.c.b16 %v458, %v454
      %v571 = vpack.c.b16 %v459, %v455
      %v572 = vpack.c.b16 %v464, %v460
      %v573 = vpack.c.b16 %v465, %v461
      %v574 = vpack.c.b16 %v466, %v462
      %v575 = vpack.c.b16 %v467, %v463
      %v576 = vpack.c.b16 %v472, %v468
      %v577 = vpack.c.b16 %v473, %v469
      %v578 = vpack.c.b16 %v474, %v470
      %v579 = vpack.c.b16 %v475, %v471
      %v580 = vpack.c.b16 %v480, %v476
      %v581 = vpack.c.b16 %v481, %v477
      %v582 = vpack.c.b16 %v482, %v478
      %v583 = vpack.c.b16 %v483, %v479
      %v584 = vpack.c.b16 %v488, %v484
      %v585 = vpack.c.b16 %v489, %v485
      %v586 = vpack.c.b16 %v490, %v486
      %v587 = vpack.c.b16 %v491, %v487
      %v588 = vpack.c.b16 %v496, %v492
      %v589 = vpack.c.b16 %v497, %v493
      %v590 = vpack.c.b16 %v498, %v494
      %v591 = vpack.c.b16 %v499, %v495
      %v592 = vpack.c.b16 %v504, %v500
      %v593 = vpack.c.b16 %v505, %v501
      %v594 = vpack.c.b16 %v506, %v502
      %v595 = vpack.c.b16 %v507, %v503
      %v596 = vpack.c.b16 %v512, %v508
      %v597 = vpack.c.b16 %v513, %v509
      %v598 = vpack.c.b16 %v514, %v510
      %v599 = vpack.c.b16 %v515, %v511
      %v600 = vpack.c.b16 %v520, %v516
      %v601 = vpack.c.b16 %v521, %v517
      %v602 = vpack.c.b16 %v522, %v518
      %v603 = vpack.c.b16 %v523, %v519
      %v604 = vpack.c.b16 %v528, %v524
      %v605 = vpack.c.b16 %v529, %v525
      %v606 = vpack.c.b16 %v530, %v526
      %v607 = vpack.c.b16 %v531, %v527
      %v608 = vpack.c.b16 %v536, %v532
      %v609 = vpack.c.b16 %v537, %v533
      %v610 = vpack.c.b16 %v538, %v534
      %v611 = vpack.c.b16 %v539, %v535
      %v612 = vpack.c.b16 %v544, %v540
      %v613 = vpack.c.b16 %v545, %v541
      %v614 = vpack.c.b16 %v546, %v542
      %v615 = vpack.c.b16 %v547, %v543
      %v616 = vpack.c.b16 %v552, %v548
      %v617 = vpack.c.b16 %v553, %v549
      %v618 = vpack.c.b16 %v554, %v550
      %v619 = vpack.c.b16 %v555, %v551
      %v748 = vunpack.c.l.b16 %v293
      %v749 = vunpack.c.l.b16 %v294
      %v750 = vunpack.c.l.b16 %v295
      %v751 = vunpack.c.l.b16 %v296
      %v752 = vunpack.c.l.b16 %v297
      %v753 = vunpack.c.l.b16 %v298
      %v754 = vunpack.c.l.b16 %v299
      %v755 = vunpack.c.l.b16 %v300
      %v756 = vunpack.c.l.b16 %v301
      %v757 = vunpack.c.l.b16 %v302
      %v758 = vunpack.c.l.b16 %v303
      %v759 = vunpack.c.l.b16 %v304
      %v760 = vunpack.c.l.b16 %v305
      %v761 = vunpack.c.l.b16 %v306
      %v762 = vunpack.c.l.b16 %v307
      %v763 = vunpack.c.l.b16 %v308
      %v764 = vunpack.c.l.b16 %v309
      %v765 = vunpack.c.l.b16 %v310
      %v766 = vunpack.c.l.b16 %v311
      %v767 = vunpack.c.l.b16 %v312
      %v768 = vunpack.c.l.b16 %v313
      %v769 = vunpack.c.l.b16 %v314
      %v770 = vunpack.c.l.b16 %v315
      %v771 = vunpack.c.l.b16 %v316
      %v772 = vunpack.c.l.b16 %v317
      %v773 = vunpack.c.l.b16 %v318
      %v774 = vunpack.c.l.b16 %v319
      %v775 = vunpack.c.l.b16 %v320
      %v776 = vunpack.c.l.b16 %v321
      %v777 = vunpack.c.l.b16 %v322
      %v778 = vunpack.c.l.b16 %v323
      %v779 = vunpack.c.l.b16 %v324
      %v780 = vunpack.c.l.b16 %v325
      %v781 = vunpack.c.l.b16 %v326
      %v782 = vunpack.c.l.b16 %v327
      %v783 = vunpack.c.l.b16 %v328
      %v784 = vunpack.c.l.b16 %v329
      %v785 = vunpack.c.l.b16 %v330
      %v786 = vunpack.c.l.b16 %v331
      %v787 = vunpack.c.l.b16 %v332
      %v788 = vunpack.c.l.b16 %v333
      %v789 = vunpack.c.l.b16 %v334
      %v790 = vunpack.c.l.b16 %v335
      %v791 = vunpack.c.l.b16 %v336
      %v792 = vunpack.c.l.b16 %v337
      %v793 = vunpack.c.l.b16 %v338
      %v794 = vunpack.c.l.b16 %v339
      %v795 = vunpack.c.l.b16 %v340
      %v796 = vunpack.c.l.b16 %v341
      %v797 = vunpack.c.l.b16 %v342
      %v798 = vunpack.c.l.b16 %v343
      %v799 = vunpack.c.l.b16 %v344
      %v800 = vunpack.c.l.b16 %v345
      %v801 = vunpack.c.l.b16 %v346
      %v802 = vunpack.c.l.b16 %v347
      %v803 = vunpack.c.l.b16 %v348
      %v804 = vunpack.c.l.b16 %v349
      %v805 = vunpack.c.l.b16 %v350
      %v806 = vunpack.c.l.b16 %v351
      %v807 = vunpack.c.l.b16 %v352
      %v808 = vunpack.c.l.b16 %v353
      %v809 = vunpack.c.l.b16 %v354
      %v810 = vunpack.c.l.b16 %v355
      %v811 = vunpack.c.l.b16 %v356
      %v812 = vpack.c.b16 %v749, %v748
      %v813 = vpack.c.b16 %v751, %v750
      %v814 = vpack.c.b16 %v753, %v752
      %v815 = vpack.c.b16 %v755, %v754
      %v816 = vpack.c.b16 %v757, %v756
      %v817 = vpack.c.b16 %v759, %v758
      %v818 = vpack.c.b16 %v761, %v760
      %v819 = vpack.c.b16 %v763, %v762
      %v820 = vpack.c.b16 %v765, %v764
      %v821 = vpack.c.b16 %v767, %v766
      %v822 = vpack.c.b16 %v769, %v768
      %v823 = vpack.c.b16 %v771, %v770
      %v824 = vpack.c.b16 %v773, %v772
      %v825 = vpack.c.b16 %v775, %v774
      %v826 = vpack.c.b16 %v777, %v776
      %v827 = vpack.c.b16 %v779, %v778
      %v828 = vpack.c.b16 %v781, %v780
      %v829 = vpack.c.b16 %v783, %v782
      %v830 = vpack.c.b16 %v785, %v784
      %v831 = vpack.c.b16 %v787, %v786
      %v832 = vpack.c.b16 %v789, %v788
      %v833 = vpack.c.b16 %v791, %v790
      %v834 = vpack.c.b16 %v793, %v792
      %v835 = vpack.c.b16 %v795, %v794
      %v836 = vpack.c.b16 %v797, %v796
      %v837 = vpack.c.b16 %v799, %v798
      %v838 = vpack.c.b16 %v801, %v800
      %v839 = vpack.c.b16 %v803, %v802
      %v840 = vpack.c.b16 %v805, %v804
      %v841 = vpack.c.b16 %v807, %v806
      %v842 = vpack.c.b16 %v809, %v808
      %v843 = vpack.c.b16 %v811, %v810
      %876 = vmatprep.subr.bf16.mxu0 0
      %877 = vmatpush1.bf16.msra.mxu0 %v812
      %878 = vmatprep.subr.bf16.mxu0 0
      %879 = vmatpush1.bf16.msra.mxu0 %v813
      %880 = vmatprep.subr.bf16.mxu0 0
      %881 = vmatpush1.bf16.msra.mxu0 %v814
      %882 = vmatprep.subr.bf16.mxu0 0
      %883 = vmatpush1.bf16.msra.mxu0 %v815
      %884 = vmatprep.subr.bf16.mxu0 0
      %885 = vmatpush1.bf16.msra.mxu0 %v816
      %886 = vmatprep.subr.bf16.mxu0 0
      %887 = vmatpush1.bf16.msra.mxu0 %v817
      %888 = vmatprep.subr.bf16.mxu0 0
      %889 = vmatpush1.bf16.msra.mxu0 %v818
      %890 = vmatprep.subr.bf16.mxu0 0
      %891 = vmatpush1.bf16.msra.mxu0 %v819
      %892 = vmatprep.subr.bf16.mxu0 0
      %893 = vmatpush1.bf16.msra.mxu0 %v820
      %894 = vmatprep.subr.bf16.mxu0 0
      %895 = vmatpush1.bf16.msra.mxu0 %v821
      %896 = vmatprep.subr.bf16.mxu0 0
      %897 = vmatpush1.bf16.msra.mxu0 %v822
      %898 = vmatprep.subr.bf16.mxu0 0
      %899 = vmatpush1.bf16.msra.mxu0 %v823
      %900 = vmatprep.subr.bf16.mxu0 0
      %901 = vmatpush1.bf16.msra.mxu0 %v824
      %902 = vmatprep.subr.bf16.mxu0 0
      %903 = vmatpush1.bf16.msra.mxu0 %v825
      %904 = vmatprep.subr.bf16.mxu0 0
      %905 = vmatpush1.bf16.msra.mxu0 %v826
      %906 = vmatprep.subr.bf16.mxu0 0
      %907 = vmatpush1.bf16.msra.mxu0 %v827
      %908 = vmatprep.mubr.bf16.mxu0 %v557
      %909 = vmatmul.mubr.bf16.gmra.mrb[0].mxu0 %v556
      %v910 = vpop.f32.mrb[0].mxu0
      %v911 = vadd.f32 %v362, %v910
      %v912 = vpop.f32.mrb[0].mxu0
      %v913 = vpop.f32.mrb[0].mxu0
      %v914 = vadd.f32 %v362, %v913
      %v915 = vpop.f32.mrb[0].mxu0
      %916 = vmatprep.mubr.bf16.mxu0 %v561
      %917 = vmatmul.mubr.bf16.gmra.mrb[0].mxu0 %v560
      %v918 = vpop.f32.mrb[0].mxu0
      %v919 = vadd.f32 %v362, %v918
      %v920 = vpop.f32.mrb[0].mxu0
      %v921 = vpop.f32.mrb[0].mxu0
      %v922 = vadd.f32 %v362, %v921
      %v923 = vpop.f32.mrb[0].mxu0
      %924 = vmatprep.mubr.bf16.mxu0 %v565
      %925 = vmatmul.mubr.bf16.gmra.mrb[0].mxu0 %v564
      %v926 = vpop.f32.mrb[0].mxu0
      %v927 = vadd.f32 %v362, %v926
      %v928 = vpop.f32.mrb[0].mxu0
      %v929 = vpop.f32.mrb[0].mxu0
      %v930 = vadd.f32 %v362, %v929
      %v931 = vpop.f32.mrb[0].mxu0
      %932 = vmatprep.mubr.bf16.mxu0 %v569
      %933 = vmatmul.mubr.bf16.gmra.mrb[0].mxu0 %v568
      %v934 = vpop.f32.mrb[0].mxu0
      %v935 = vadd.f32 %v362, %v934
      %v936 = vpop.f32.mrb[0].mxu0
      %v937 = vpop.f32.mrb[0].mxu0
      %v938 = vadd.f32 %v362, %v937
      %v939 = vpop.f32.mrb[0].mxu0
      %940 = vmatprep.mubr.bf16.mxu0 %v573
      %941 = vmatmul.mubr.bf16.gmra.mrb[0].mxu0 %v572
      %v942 = vpop.f32.mrb[0].mxu0
      %v943 = vadd.f32 %v362, %v942
      %v944 = vpop.f32.mrb[0].mxu0
      %v945 = vpop.f32.mrb[0].mxu0
      %v946 = vadd.f32 %v362, %v945
      %v947 = vpop.f32.mrb[0].mxu0
      %948 = vmatprep.mubr.bf16.mxu0 %v577
      %949 = vmatmul.mubr.bf16.gmra.mrb[0].mxu0 %v576
      %v950 = vpop.f32.mrb[0].mxu0
      %v951 = vadd.f32 %v362, %v950
      %v952 = vpop.f32.mrb[0].mxu0
      %v953 = vpop.f32.mrb[0].mxu0
      %v954 = vadd.f32 %v362, %v953
      %v955 = vpop.f32.mrb[0].mxu0
      %956 = vmatprep.mubr.bf16.mxu0 %v581
      %957 = vmatmul.mubr.bf16.gmra.mrb[0].mxu0 %v580
      %v958 = vpop.f32.mrb[0].mxu0
      %v959 = vadd.f32 %v362, %v958
      %v960 = vpop.f32.mrb[0].mxu0
      %v961 = vpop.f32.mrb[0].mxu0
      %v962 = vadd.f32 %v362, %v961
      %v963 = vpop.f32.mrb[0].mxu0
      %964 = vmatprep.mubr.bf16.mxu0 %v585
      %965 = vmatmul.mubr.bf16.gmra.mrb[0].mxu0 %v584
      %v966 = vpop.f32.mrb[0].mxu0
      %v967 = vadd.f32 %v362, %v966
      %v968 = vpop.f32.mrb[0].mxu0
      %v969 = vpop.f32.mrb[0].mxu0
      %v970 = vadd.f32 %v362, %v969
      %v971 = vpop.f32.mrb[0].mxu0
      %972 = vmatprep.mubr.bf16.mxu0 %v589
      %973 = vmatmul.mubr.bf16.gmra.mrb[0].mxu0 %v588
      %v974 = vpop.f32.mrb[0].mxu0
      %v975 = vadd.f32 %v362, %v974
      %v976 = vpop.f32.mrb[0].mxu0
      %v977 = vpop.f32.mrb[0].mxu0
      %v978 = vadd.f32 %v362, %v977
      %v979 = vpop.f32.mrb[0].mxu0
      %980 = vmatprep.mubr.bf16.mxu0 %v593
      %981 = vmatmul.mubr.bf16.gmra.mrb[0].mxu0 %v592
      %v982 = vpop.f32.mrb[0].mxu0
      %v983 = vadd.f32 %v362, %v982
      %v984 = vpop.f32.mrb[0].mxu0
      %v985 = vpop.f32.mrb[0].mxu0
      %v986 = vadd.f32 %v362, %v985
      %v987 = vpop.f32.mrb[0].mxu0
      %988 = vmatprep.mubr.bf16.mxu0 %v597
      %989 = vmatmul.mubr.bf16.gmra.mrb[0].mxu0 %v596
      %v990 = vpop.f32.mrb[0].mxu0
      %v991 = vadd.f32 %v362, %v990
      %v992 = vpop.f32.mrb[0].mxu0
      %v993 = vpop.f32.mrb[0].mxu0
      %v994 = vadd.f32 %v362, %v993
      %v995 = vpop.f32.mrb[0].mxu0
      %996 = vmatprep.mubr.bf16.mxu0 %v601
      %997 = vmatmul.mubr.bf16.gmra.mrb[0].mxu0 %v600
      %v998 = vpop.f32.mrb[0].mxu0
      %v999 = vadd.f32 %v362, %v998
      %v1000 = vpop.f32.mrb[0].mxu0
      %v1001 = vpop.f32.mrb[0].mxu0
      %v1002 = vadd.f32 %v362, %v1001
      %v1003 = vpop.f32.mrb[0].mxu0
      %1004 = vmatprep.mubr.bf16.mxu0 %v605
      %1005 = vmatmul.mubr.bf16.gmra.mrb[0].mxu0 %v604
      %v1006 = vpop.f32.mrb[0].mxu0
      %v1007 = vadd.f32 %v362, %v1006
      %v1008 = vpop.f32.mrb[0].mxu0
      %v1009 = vpop.f32.mrb[0].mxu0
      %v1010 = vadd.f32 %v362, %v1009
      %v1011 = vpop.f32.mrb[0].mxu0
      %1012 = vmatprep.mubr.bf16.mxu0 %v609
      %1013 = vmatmul.mubr.bf16.gmra.mrb[0].mxu0 %v608
      %v1014 = vpop.f32.mrb[0].mxu0
      %v1015 = vadd.f32 %v362, %v1014
      %v1016 = vpop.f32.mrb[0].mxu0
      %v1017 = vpop.f32.mrb[0].mxu0
      %v1018 = vadd.f32 %v362, %v1017
      %v1019 = vpop.f32.mrb[0].mxu0
      %1020 = vmatprep.mubr.bf16.mxu0 %v613
      %1021 = vmatmul.mubr.bf16.gmra.mrb[0].mxu0 %v612
      %v1022 = vpop.f32.mrb[0].mxu0
      %v1023 = vadd.f32 %v362, %v1022
      %v1024 = vpop.f32.mrb[0].mxu0
      %v1025 = vpop.f32.mrb[0].mxu0
      %v1026 = vadd.f32 %v362, %v1025
      %v1027 = vpop.f32.mrb[0].mxu0
      %1028 = vmatprep.mubr.bf16.mxu0 %v617
      %1029 = vmatmul.mubr.bf16.gmra.mrb[0].mxu0 %v616
      %v1030 = vpop.f32.mrb[0].mxu0
      %v1031 = vadd.f32 %v362, %v1030
      %v1032 = vpop.f32.mrb[0].mxu0
      %v1033 = vpop.f32.mrb[0].mxu0
      %v1034 = vadd.f32 %v362, %v1033
      %v1035 = vpop.f32.mrb[0].mxu0
      %1036 = vdwg.mxu0
      %1037 = vmatprep.subr.bf16.mxu0 0
      %1038 = vmatpush1.bf16.msra.mxu0 %v828
      %1039 = vmatprep.subr.bf16.mxu0 0
      %1040 = vmatpush1.bf16.msra.mxu0 %v829
      %1041 = vmatprep.subr.bf16.mxu0 0
      %1042 = vmatpush1.bf16.msra.mxu0 %v830
      %1043 = vmatprep.subr.bf16.mxu0 0
      %1044 = vmatpush1.bf16.msra.mxu0 %v831
      %1045 = vmatprep.subr.bf16.mxu0 0
      %1046 = vmatpush1.bf16.msra.mxu0 %v832
      %1047 = vmatprep.subr.bf16.mxu0 0
      %1048 = vmatpush1.bf16.msra.mxu0 %v833
      %1049 = vmatprep.subr.bf16.mxu0 0
      %1050 = vmatpush1.bf16.msra.mxu0 %v834
      %1051 = vmatprep.subr.bf16.mxu0 0
      %1052 = vmatpush1.bf16.msra.mxu0 %v835
      %1053 = vmatprep.subr.bf16.mxu0 0
      %1054 = vmatpush1.bf16.msra.mxu0 %v836
      %1055 = vmatprep.subr.bf16.mxu0 0
      %1056 = vmatpush1.bf16.msra.mxu0 %v837
      %1057 = vmatprep.subr.bf16.mxu0 0
      %1058 = vmatpush1.bf16.msra.mxu0 %v838
      %1059 = vmatprep.subr.bf16.mxu0 0
      %1060 = vmatpush1.bf16.msra.mxu0 %v839
      %1061 = vmatprep.subr.bf16.mxu0 0
      %1062 = vmatpush1.bf16.msra.mxu0 %v840
      %1063 = vmatprep.subr.bf16.mxu0 0
      %1064 = vmatpush1.bf16.msra.mxu0 %v841
      %1065 = vmatprep.subr.bf16.mxu0 0
      %1066 = vmatpush1.bf16.msra.mxu0 %v842
      %1067 = vmatprep.subr.bf16.mxu0 0
      %1068 = vmatpush1.bf16.msra.mxu0 %v843
      %1069 = vmatprep.mubr.bf16.mxu0 %v559
      %1070 = vmatmul.mubr.bf16.gmra.mrb[0].mxu0 %v558
      %v1071 = vpop.f32.mrb[0].mxu0
      %v1072 = vadd.f32 %v911, %v1071
      %v1073 = vpop.f32.mrb[0].mxu0
      %v1074 = vpop.f32.mrb[0].mxu0
      %v1075 = vadd.f32 %v914, %v1074
      %v1076 = vpop.f32.mrb[0].mxu0
      %1077 = vmatprep.mubr.bf16.mxu0 %v563
      %1078 = vmatmul.mubr.bf16.gmra.mrb[0].mxu0 %v562
      %v1079 = vpop.f32.mrb[0].mxu0
      %v1080 = vadd.f32 %v919, %v1079
      %v1081 = vpop.f32.mrb[0].mxu0
      %v1082 = vpop.f32.mrb[0].mxu0
      %v1083 = vadd.f32 %v922, %v1082
      %v1084 = vpop.f32.mrb[0].mxu0
      %1085 = vmatprep.mubr.bf16.mxu0 %v567
      %1086 = vmatmul.mubr.bf16.gmra.mrb[0].mxu0 %v566
      %v1087 = vpop.f32.mrb[0].mxu0
      %v1088 = vadd.f32 %v927, %v1087
      %v1089 = vpop.f32.mrb[0].mxu0
      %v1090 = vpop.f32.mrb[0].mxu0
      %v1091 = vadd.f32 %v930, %v1090
      %v1092 = vpop.f32.mrb[0].mxu0
      %1093 = vmatprep.mubr.bf16.mxu0 %v571
      %1094 = vmatmul.mubr.bf16.gmra.mrb[0].mxu0 %v570
      %v1095 = vpop.f32.mrb[0].mxu0
      %v1096 = vadd.f32 %v935, %v1095
      %v1097 = vpop.f32.mrb[0].mxu0
      %v1098 = vpop.f32.mrb[0].mxu0
      %v1099 = vadd.f32 %v938, %v1098
      %v1100 = vpop.f32.mrb[0].mxu0
      %1101 = vmatprep.mubr.bf16.mxu0 %v575
      %1102 = vmatmul.mubr.bf16.gmra.mrb[0].mxu0 %v574
      %v1103 = vpop.f32.mrb[0].mxu0
      %v1104 = vadd.f32 %v943, %v1103
      %v1105 = vpop.f32.mrb[0].mxu0
      %v1106 = vpop.f32.mrb[0].mxu0
      %v1107 = vadd.f32 %v946, %v1106
      %v1108 = vpop.f32.mrb[0].mxu0
      %1109 = vmatprep.mubr.bf16.mxu0 %v579
      %1110 = vmatmul.mubr.bf16.gmra.mrb[0].mxu0 %v578
      %v1111 = vpop.f32.mrb[0].mxu0
      %v1112 = vadd.f32 %v951, %v1111
      %v1113 = vpop.f32.mrb[0].mxu0
      %v1114 = vpop.f32.mrb[0].mxu0
      %v1115 = vadd.f32 %v954, %v1114
      %v1116 = vpop.f32.mrb[0].mxu0
      %1117 = vmatprep.mubr.bf16.mxu0 %v583
      %1118 = vmatmul.mubr.bf16.gmra.mrb[0].mxu0 %v582
      %v1119 = vpop.f32.mrb[0].mxu0
      %v1120 = vadd.f32 %v959, %v1119
      %v1121 = vpop.f32.mrb[0].mxu0
      %v1122 = vpop.f32.mrb[0].mxu0
      %v1123 = vadd.f32 %v962, %v1122
      %v1124 = vpop.f32.mrb[0].mxu0
      %1125 = vmatprep.mubr.bf16.mxu0 %v587
      %1126 = vmatmul.mubr.bf16.gmra.mrb[0].mxu0 %v586
      %v1127 = vpop.f32.mrb[0].mxu0
      %v1128 = vadd.f32 %v967, %v1127
      %v1129 = vpop.f32.mrb[0].mxu0
      %v1130 = vpop.f32.mrb[0].mxu0
      %v1131 = vadd.f32 %v970, %v1130
      %v1132 = vpop.f32.mrb[0].mxu0
      %1133 = vmatprep.mubr.bf16.mxu0 %v591
      %1134 = vmatmul.mubr.bf16.gmra.mrb[0].mxu0 %v590
      %v1135 = vpop.f32.mrb[0].mxu0
      %v1136 = vadd.f32 %v975, %v1135
      %v1137 = vpop.f32.mrb[0].mxu0
      %v1138 = vpop.f32.mrb[0].mxu0
      %v1139 = vadd.f32 %v978, %v1138
      %v1140 = vpop.f32.mrb[0].mxu0
      %1141 = vmatprep.mubr.bf16.mxu0 %v595
      %1142 = vmatmul.mubr.bf16.gmra.mrb[0].mxu0 %v594
      %v1143 = vpop.f32.mrb[0].mxu0
      %v1144 = vadd.f32 %v983, %v1143
      %v1145 = vpop.f32.mrb[0].mxu0
      %v1146 = vpop.f32.mrb[0].mxu0
      %v1147 = vadd.f32 %v986, %v1146
      %v1148 = vpop.f32.mrb[0].mxu0
      %1149 = vmatprep.mubr.bf16.mxu0 %v599
      %1150 = vmatmul.mubr.bf16.gmra.mrb[0].mxu0 %v598
      %v1151 = vpop.f32.mrb[0].mxu0
      %v1152 = vadd.f32 %v991, %v1151
      %v1153 = vpop.f32.mrb[0].mxu0
      %v1154 = vpop.f32.mrb[0].mxu0
      %v1155 = vadd.f32 %v994, %v1154
      %v1156 = vpop.f32.mrb[0].mxu0
      %1157 = vmatprep.mubr.bf16.mxu0 %v603
      %1158 = vmatmul.mubr.bf16.gmra.mrb[0].mxu0 %v602
      %v1159 = vpop.f32.mrb[0].mxu0
      %v1160 = vadd.f32 %v999, %v1159
      %v1161 = vpop.f32.mrb[0].mxu0
      %v1162 = vpop.f32.mrb[0].mxu0
      %v1163 = vadd.f32 %v1002, %v1162
      %v1164 = vpop.f32.mrb[0].mxu0
      %1165 = vmatprep.mubr.bf16.mxu0 %v607
      %1166 = vmatmul.mubr.bf16.gmra.mrb[0].mxu0 %v606
      %v1167 = vpop.f32.mrb[0].mxu0
      %v1168 = vadd.f32 %v1007, %v1167
      %v1169 = vpop.f32.mrb[0].mxu0
      %v1170 = vpop.f32.mrb[0].mxu0
      %v1171 = vadd.f32 %v1010, %v1170
      %v1172 = vpop.f32.mrb[0].mxu0
      %1173 = vmatprep.mubr.bf16.mxu0 %v611
      %1174 = vmatmul.mubr.bf16.gmra.mrb[0].mxu0 %v610
      %v1175 = vpop.f32.mrb[0].mxu0
      %v1176 = vadd.f32 %v1015, %v1175
      %v1177 = vpop.f32.mrb[0].mxu0
      %v1178 = vpop.f32.mrb[0].mxu0
      %v1179 = vadd.f32 %v1018, %v1178
      %v1180 = vpop.f32.mrb[0].mxu0
      %1181 = vmatprep.mubr.bf16.mxu0 %v615
      %1182 = vmatmul.mubr.bf16.gmra.mrb[0].mxu0 %v614
      %v1183 = vpop.f32.mrb[0].mxu0
      %v1184 = vadd.f32 %v1023, %v1183
      %v1185 = vpop.f32.mrb[0].mxu0
      %v1186 = vpop.f32.mrb[0].mxu0
      %v1187 = vadd.f32 %v1026, %v1186
      %v1188 = vpop.f32.mrb[0].mxu0
      %1189 = vmatprep.mubr.bf16.mxu0 %v619
      %1190 = vmatmul.mubr.bf16.gmra.mrb[0].mxu0 %v618
      %v1191 = vpop.f32.mrb[0].mxu0
      %v1192 = vadd.f32 %v1031, %v1191
      %v1193 = vpop.f32.mrb[0].mxu0
      %v1194 = vpop.f32.mrb[0].mxu0
      %v1195 = vadd.f32 %v1034, %v1194
      %v1196 = vpop.f32.mrb[0].mxu0
      %1197 = vdwg.mxu0
      %1198 = vst [vmem:[%s226] sm:$0xff] %v1072
      %1199 = vst [vmem:[%s226 + $0x8] sm:$0xff] %v1075
      %1200 = vst [vmem:[%s226 + $0x10] sm:$0xff] %v1080
      %1201 = vst [vmem:[%s226 + $0x18] sm:$0xff] %v1083
      %1202 = vst [vmem:[%s226 + $0x20] sm:$0xff] %v1088
      %1203 = vst [vmem:[%s226 + $0x28] sm:$0xff] %v1091
      %1204 = vst [vmem:[%s226 + $0x30] sm:$0xff] %v1096
      %1205 = vst [vmem:[%s226 + $0x38] sm:$0xff] %v1099
      %1206 = vst [vmem:[%s226 + $0x40] sm:$0xff] %v1104
      %1207 = vst [vmem:[%s226 + $0x48] sm:$0xff] %v1107
      %1208 = vst [vmem:[%s226 + $0x50] sm:$0xff] %v1112
      %1209 = vst [vmem:[%s226 + $0x58] sm:$0xff] %v1115
      %1210 = vst [vmem:[%s226 + $0x60] sm:$0xff] %v1120
      %1211 = vst [vmem:[%s226 + $0x68] sm:$0xff] %v1123
      %1212 = vst [vmem:[%s226 + $0x70] sm:$0xff] %v1128
      %1213 = vst [vmem:[%s226 + $0x78] sm:$0xff] %v1131
      %1214 = vst [vmem:[%s226 + $0x80] sm:$0xff] %v1136
      %1215 = vst [vmem:[%s226 + $0x88] sm:$0xff] %v1139
      %1216 = vst [vmem:[%s226 + $0x90] sm:$0xff] %v1144
      %1217 = vst [vmem:[%s226 + $0x98] sm:$0xff] %v1147
      %1218 = vst [vmem:[%s226 + $0xa0] sm:$0xff] %v1152
      %1219 = vst [vmem:[%s226 + $0xa8] sm:$0xff] %v1155
      %1220 = vst [vmem:[%s226 + $0xb0] sm:$0xff] %v1160
      %1221 = vst [vmem:[%s226 + $0xb8] sm:$0xff] %v1163
      %1222 = vst [vmem:[%s226 + $0xc0] sm:$0xff] %v1168
      %1223 = vst [vmem:[%s226 + $0xc8] sm:$0xff] %v1171
      %1224 = vst [vmem:[%s226 + $0xd0] sm:$0xff] %v1176
      %1225 = vst [vmem:[%s226 + $0xd8] sm:$0xff] %v1179
      %1226 = vst [vmem:[%s226 + $0xe0] sm:$0xff] %v1184
      %1227 = vst [vmem:[%s226 + $0xe8] sm:$0xff] %v1187
      %1228 = vst [vmem:[%s226 + $0xf0] sm:$0xff] %v1192
      %1229 = vst [vmem:[%s226 + $0xf8] sm:$0xff] %v1195
      %s1230 = smul.u32 32, %s18
      %p1231 = scmp.lt.s32.totalorder %s1230, 63
      %s1232 = scalar_select %p1231, %s1230, 63
      %p1233 = scmp.lt.s32.totalorder %s19, 0
      %s1234 = scalar_select %p1233, %s19, 0
      %s1235 = sadd.s32 %s1234, %s1232
      %s1236 = smul.addr %s1235, 8
      %s1237 = scalar_lea.vmem %s3, %s1236
      // Predicated region
      $region33: #{generator_forward.18} parent=31 // pred_check
        %p1238 = pneg %p124
      $region34: #{generator_forward.18} parent=31 // pred_check_branch
        %1240 = sbr.rel (%p1238) target = $region36
      $region35: #{generator_forward.18} parent=31 // pred_region
        %s1241 = smul.u32 32, %s18
      $region36: #{generator_forward.18} parent=31 // pred_fallthru
        _
    $region32: #{generator_forward.18} parent=5 // pred_fallthru
      _
    %p1242 = scmp.le.s32.totalorder 2, %s9
    // Predicated region
    $region37: #{generator_forward.18} parent=5 // pred_check
      %p1243 = pneg %p1242
    $region38: #{generator_forward.18} parent=5 // pred_check_branch
      %1245 = sbr.rel (%p1243) target = $region40
    $region39: #{generator_forward.18} parent=5 // pred_region
      %s1246 = ssub.s32 %s9, 2
      // Predicated region
      $region41: #{generator_forward.18} parent=39 // pred_check
        %p1247 = pneg %p130
      $region42: #{generator_forward.18} parent=39 // pred_check_branch
        %1249 = sbr.rel (%p1247) target = $region44
      $region43: #{generator_forward.18} parent=39 // pred_region
        %s1250 = smul.u32 32, %s20
        %p1251 = scmp.lt.s32.totalorder %s1250, 63
        %s1252 = scalar_select %p1251, %s1250, 63
        %p1253 = scmp.lt.s32.totalorder %s21, 0
        %s1254 = scalar_select %p1253, %s21, 0
        %s1255 = sadd.s32 %s1254, %s1252
        %s1256 = smul.addr %s1255, 8
        %s1257 = scalar_lea.vmem %s3, %s1256
      $region44: #{generator_forward.18} parent=39 // pred_fallthru
        _
    $region40: #{generator_forward.18} parent=5 // pred_fallthru
      _
  $region6: #{generator_forward.18} parent=0 // loop_footer
    %s13 = sadd.s32 1, %s9
  $region7: #{generator_forward.18} parent=0 // loop_footer_branch
    %8 = sbr.rel target = $region3
  $region8: #{generator_forward.18} parent=0 // loop_exit
    _

// kernel: generator_forward.19
$region0: #{generator_forward.19}
  #allocation0 [shape = 'u32[]', space=smem, size = 0x4, offset = 0x4, fixed_abs, tag = 'smem constant byte address 0x4 - core index']
  #allocation1 [shape = 'u32[144,128]{1,0:T(1,128)}', space=vmem, size = 0x12000, scoped, tag = 'internal scratch']
  %s0 = inlined_call_operand.vmem [shape: f32[512,128], index: 0, kind: input, shape index: {}]
  %s1 = inlined_call_operand.vmem [shape: f32[1,128], index: 1, kind: input, shape index: {}]
  %s2 = inlined_call_operand.vmem [shape: f32[1,128], index: 2, kind: input, shape index: {}]
  %s3 = inlined_call_operand.vmem [shape: f32[512,128], index: 3, kind: output, shape index: {}]
  %s4 = sld [smem:[#allocation0]]
  $region22: #{generator_forward.19} parent=0
    _
  %s6 = ssub.s32 1, %s4
  %s7 = scalar_select 0, %s6, %s4
  // Predicated region
  $region2: #{generator_forward.19} parent=0 // pred_check
    _
  $region3: #{generator_forward.19} parent=0 // pred_check_branch
    %9 = sbr.rel (0) target = $region5
  $region4: #{generator_forward.19} parent=0 // pred_region
    _
  $region5: #{generator_forward.19} parent=0 // pred_fallthru
    _
  // Predicated region
  $region6: #{generator_forward.19} parent=0 // pred_check
    _
  $region7: #{generator_forward.19} parent=0 // pred_check_branch
    %11 = sbr.rel (0) target = $region9
  $region8: #{generator_forward.19} parent=0 // pred_region
    _
  $region9: #{generator_forward.19} parent=0 // pred_fallthru
    _
  // Predicated region
  $region10: #{generator_forward.19} parent=0 // pred_check
    _
  $region11: #{generator_forward.19} parent=0 // pred_check_branch
    %13 = sbr.rel (0) target = $region13
  $region12: #{generator_forward.19} parent=0 // pred_region
    _
  $region13: #{generator_forward.19} parent=0 // pred_fallthru
    _
  %v14 = vld [vmem:[%s0] sm:$0xff]
  %v15 = vld [vmem:[%s0 + $0x8] sm:$0xff]
  %v16 = vld [vmem:[%s0 + $0x10] sm:$0xff]
  %v17 = vld [vmem:[%s0 + $0x18] sm:$0xff]
  %v18 = vld [vmem:[%s0 + $0x20] sm:$0xff]
  %v19 = vld [vmem:[%s0 + $0x28] sm:$0xff]
  %v20 = vld [vmem:[%s0 + $0x30] sm:$0xff]
  %v21 = vld [vmem:[%s0 + $0x38] sm:$0xff]
  %v22 = vld [vmem:[%s0 + $0x40] sm:$0xff]
  %v23 = vld [vmem:[%s0 + $0x48] sm:$0xff]
  %v24 = vld [vmem:[%s0 + $0x50] sm:$0xff]
  %v25 = vld [vmem:[%s0 + $0x58] sm:$0xff]
  %v26 = vld [vmem:[%s0 + $0x60] sm:$0xff]
  %v27 = vld [vmem:[%s0 + $0x68] sm:$0xff]
  %v28 = vld [vmem:[%s0 + $0x70] sm:$0xff]
  %v29 = vld [vmem:[%s0 + $0x78] sm:$0xff]
  %v30 = vld [vmem:[%s0 + $0x80] sm:$0xff]
  %v31 = vld [vmem:[%s0 + $0x88] sm:$0xff]
  %v32 = vld [vmem:[%s0 + $0x90] sm:$0xff]
  %v33 = vld [vmem:[%s0 + $0x98] sm:$0xff]
  %v34 = vld [vmem:[%s0 + $0xa0] sm:$0xff]
  %v35 = vld [vmem:[%s0 + $0xa8] sm:$0xff]
  %v36 = vld [vmem:[%s0 + $0xb0] sm:$0xff]
  %v37 = vld [vmem:[%s0 + $0xb8] sm:$0xff]
  %v38 = vld [vmem:[%s0 + $0xc0] sm:$0xff]
  %v39 = vld [vmem:[%s0 + $0xc8] sm:$0xff]
  %v40 = vld [vmem:[%s0 + $0xd0] sm:$0xff]
  %v41 = vld [vmem:[%s0 + $0xd8] sm:$0xff]
  %v42 = vld [vmem:[%s0 + $0xe0] sm:$0xff]
  %v43 = vld [vmem:[%s0 + $0xe8] sm:$0xff]
  %v44 = vld [vmem:[%s0 + $0xf0] sm:$0xff]
  %v45 = vld [vmem:[%s0 + $0xf8] sm:$0xff]
  %v46 = vld [vmem:[%s0 + $0x100] sm:$0xff]
  %v47 = vld [vmem:[%s0 + $0x108] sm:$0xff]
  %v48 = vld [vmem:[%s0 + $0x110] sm:$0xff]
  %v49 = vld [vmem:[%s0 + $0x118] sm:$0xff]
  %v50 = vld [vmem:[%s0 + $0x120] sm:$0xff]
  %v51 = vld [vmem:[%s0 + $0x128] sm:$0xff]
  %v52 = vld [vmem:[%s0 + $0x130] sm:$0xff]
  %v53 = vld [vmem:[%s0 + $0x138] sm:$0xff]
  %v54 = vld [vmem:[%s0 + $0x140] sm:$0xff]
  %v55 = vld [vmem:[%s0 + $0x148] sm:$0xff]
  %v56 = vld [vmem:[%s0 + $0x150] sm:$0xff]
  %v57 = vld [vmem:[%s0 + $0x158] sm:$0xff]
  %v58 = vld [vmem:[%s0 + $0x160] sm:$0xff]
  %v59 = vld [vmem:[%s0 + $0x168] sm:$0xff]
  %v60 = vld [vmem:[%s0 + $0x170] sm:$0xff]
  %v61 = vld [vmem:[%s0 + $0x178] sm:$0xff]
  %v62 = vld [vmem:[%s0 + $0x180] sm:$0xff]
  %v63 = vld [vmem:[%s0 + $0x188] sm:$0xff]
  %v64 = vld [vmem:[%s0 + $0x190] sm:$0xff]
  %v65 = vld [vmem:[%s0 + $0x198] sm:$0xff]
  %v66 = vld [vmem:[%s0 + $0x1a0] sm:$0xff]
  %v67 = vld [vmem:[%s0 + $0x1a8] sm:$0xff]
  %v68 = vld [vmem:[%s0 + $0x1b0] sm:$0xff]
  %v69 = vld [vmem:[%s0 + $0x1b8] sm:$0xff]
  %v70 = vld [vmem:[%s0 + $0x1c0] sm:$0xff]
  %v71 = vld [vmem:[%s0 + $0x1c8] sm:$0xff]
  %v72 = vld [vmem:[%s0 + $0x1d0] sm:$0xff]
  %v73 = vld [vmem:[%s0 + $0x1d8] sm:$0xff]
  %v74 = vld [vmem:[%s0 + $0x1e0] sm:$0xff]
  %v75 = vld [vmem:[%s0 + $0x1e8] sm:$0xff]
  %v76 = vld [vmem:[%s0 + $0x1f0] sm:$0xff]
  %v77 = vld [vmem:[%s0 + $0x1f8] sm:$0xff]
  %v78 = vld [vmem:[%s1] sm:$0x1]
  %v80 = vlaneseq
  %v81 = vshrl.u32 %v80, 7
  %v82 = vsub.s32 0, %v81
  %v83 = vrot.slane %v78, %v82
  %v85 = vmul.f32 %v14, %v83
  %v86 = vmul.f32 %v15, %v83
  %v87 = vmul.f32 %v16, %v83
  %v88 = vmul.f32 %v17, %v83
  %v89 = vmul.f32 %v18, %v83
  %v90 = vmul.f32 %v19, %v83
  %v91 = vmul.f32 %v20, %v83
  %v92 = vmul.f32 %v21, %v83
  %v93 = vmul.f32 %v22, %v83
  %v94 = vmul.f32 %v23, %v83
  %v95 = vmul.f32 %v24, %v83
  %v96 = vmul.f32 %v25, %v83
  %v97 = vmul.f32 %v26, %v83
  %v98 = vmul.f32 %v27, %v83
  %v99 = vmul.f32 %v28, %v83
  %v100 = vmul.f32 %v29, %v83
  %v101 = vmul.f32 %v30, %v83
  %v102 = vmul.f32 %v31, %v83
  %v103 = vmul.f32 %v32, %v83
  %v104 = vmul.f32 %v33, %v83
  %v105 = vmul.f32 %v34, %v83
  %v106 = vmul.f32 %v35, %v83
  %v107 = vmul.f32 %v36, %v83
  %v108 = vmul.f32 %v37, %v83
  %v109 = vmul.f32 %v38, %v83
  %v110 = vmul.f32 %v39, %v83
  %v111 = vmul.f32 %v40, %v83
  %v112 = vmul.f32 %v41, %v83
  %v113 = vmul.f32 %v42, %v83
  %v114 = vmul.f32 %v43, %v83
  %v115 = vmul.f32 %v44, %v83
  %v116 = vmul.f32 %v45, %v83
  %v117 = vmul.f32 %v46, %v83
  %v118 = vmul.f32 %v47, %v83
  %v119 = vmul.f32 %v48, %v83
  %v120 = vmul.f32 %v49, %v83
  %v121 = vmul.f32 %v50, %v83
  %v122 = vmul.f32 %v51, %v83
  %v123 = vmul.f32 %v52, %v83
  %v124 = vmul.f32 %v53, %v83
  %v125 = vmul.f32 %v54, %v83
  %v126 = vmul.f32 %v55, %v83
  %v127 = vmul.f32 %v56, %v83
  %v128 = vmul.f32 %v57, %v83
  %v129 = vmul.f32 %v58, %v83
  %v130 = vmul.f32 %v59, %v83
  %v131 = vmul.f32 %v60, %v83
  %v132 = vmul.f32 %v61, %v83
  %v133 = vmul.f32 %v62, %v83
  %v134 = vmul.f32 %v63, %v83
  %v135 = vmul.f32 %v64, %v83
  %v136 = vmul.f32 %v65, %v83
  %v137 = vmul.f32 %v66, %v83
  %v138 = vmul.f32 %v67, %v83
  %v139 = vmul.f32 %v68, %v83
  %v140 = vmul.f32 %v69, %v83
  %v141 = vmul.f32 %v70, %v83
  %v142 = vmul.f32 %v71, %v83
  %v143 = vmul.f32 %v72, %v83
  %v144 = vmul.f32 %v73, %v83
  %v145 = vmul.f32 %v74, %v83
  %v146 = vmul.f32 %v75, %v83
  %v147 = vmul.f32 %v76, %v83
  %v148 = vmul.f32 %v77, %v83
  %v149 = vld [vmem:[%s2] sm:$0x1]
  %v151 = vlaneseq
  %v152 = vshrl.u32 %v151, 7
  %v153 = vsub.s32 0, %v152
  %v154 = vrot.slane %v149, %v153
  %v156 = vadd.f32 %v85, %v154
  %v157 = vadd.f32 %v86, %v154
  %v158 = vadd.f32 %v87, %v154
  %v159 = vadd.f32 %v88, %v154
  %v160 = vadd.f32 %v89, %v154
  %v161 = vadd.f32 %v90, %v154
  %v162 = vadd.f32 %v91, %v154
  %v163 = vadd.f32 %v92, %v154
  %v164 = vadd.f32 %v93, %v154
  %v165 = vadd.f32 %v94, %v154
  %v166 = vadd.f32 %v95, %v154
  %v167 = vadd.f32 %v96, %v154
  %v168 = vadd.f32 %v97, %v154
  %v169 = vadd.f32 %v98, %v154
  %v170 = vadd.f32 %v99, %v154
  %v171 = vadd.f32 %v100, %v154
  %v172 = vadd.f32 %v101, %v154
  %v173 = vadd.f32 %v102, %v154
  %v174 = vadd.f32 %v103, %v154
  %v175 = vadd.f32 %v104, %v154
  %v176 = vadd.f32 %v105, %v154
  %v177 = vadd.f32 %v106, %v154
  %v178 = vadd.f32 %v107, %v154
  %v179 = vadd.f32 %v108, %v154
  %v180 = vadd.f32 %v109, %v154
  %v181 = vadd.f32 %v110, %v154
  %v182 = vadd.f32 %v111, %v154
  %v183 = vadd.f32 %v112, %v154
  %v184 = vadd.f32 %v113, %v154
  %v185 = vadd.f32 %v114, %v154
  %v186 = vadd.f32 %v115, %v154
  %v187 = vadd.f32 %v116, %v154
  %v188 = vadd.f32 %v117, %v154
  %v189 = vadd.f32 %v118, %v154
  %v190 = vadd.f32 %v119, %v154
  %v191 = vadd.f32 %v120, %v154
  %v192 = vadd.f32 %v121, %v154
  %v193 = vadd.f32 %v122, %v154
  %v194 = vadd.f32 %v123, %v154
  %v195 = vadd.f32 %v124, %v154
  %v196 = vadd.f32 %v125, %v154
  %v197 = vadd.f32 %v126, %v154
  %v198 = vadd.f32 %v127, %v154
  %v199 = vadd.f32 %v128, %v154
  %v200 = vadd.f32 %v129, %v154
  %v201 = vadd.f32 %v130, %v154
  %v202 = vadd.f32 %v131, %v154
  %v203 = vadd.f32 %v132, %v154
  %v204 = vadd.f32 %v133, %v154
  %v205 = vadd.f32 %v134, %v154
  %v206 = vadd.f32 %v135, %v154
  %v207 = vadd.f32 %v136, %v154
  %v208 = vadd.f32 %v137, %v154
  %v209 = vadd.f32 %v138, %v154
  %v210 = vadd.f32 %v139, %v154
  %v211 = vadd.f32 %v140, %v154
  %v212 = vadd.f32 %v141, %v154
  %v213 = vadd.f32 %v142, %v154
  %v214 = vadd.f32 %v143, %v154
  %v215 = vadd.f32 %v144, %v154
  %v216 = vadd.f32 %v145, %v154
  %v217 = vadd.f32 %v146, %v154
  %v218 = vadd.f32 %v147, %v154
  %v219 = vadd.f32 %v148, %v154
  %vm220 = vcmp.ge.f32.partialorder %v156, 0.0
  %vm221 = vcmp.ge.f32.partialorder %v157, 0.0
  %vm222 = vcmp.ge.f32.partialorder %v158, 0.0
  %vm223 = vcmp.ge.f32.partialorder %v159, 0.0
  %vm224 = vcmp.ge.f32.partialorder %v160, 0.0
  %vm225 = vcmp.ge.f32.partialorder %v161, 0.0
  %vm226 = vcmp.ge.f32.partialorder %v162, 0.0
  %vm227 = vcmp.ge.f32.partialorder %v163, 0.0
  %vm228 = vcmp.ge.f32.partialorder %v164, 0.0
  %vm229 = vcmp.ge.f32.partialorder %v165, 0.0
  %vm230 = vcmp.ge.f32.partialorder %v166, 0.0
  %vm231 = vcmp.ge.f32.partialorder %v167, 0.0
  %vm232 = vcmp.ge.f32.partialorder %v168, 0.0
  %vm233 = vcmp.ge.f32.partialorder %v169, 0.0
  %vm234 = vcmp.ge.f32.partialorder %v170, 0.0
  %vm235 = vcmp.ge.f32.partialorder %v171, 0.0
  %vm236 = vcmp.ge.f32.partialorder %v172, 0.0
  %vm237 = vcmp.ge.f32.partialorder %v173, 0.0
  %vm238 = vcmp.ge.f32.partialorder %v174, 0.0
  %vm239 = vcmp.ge.f32.partialorder %v175, 0.0
  %vm240 = vcmp.ge.f32.partialorder %v176, 0.0
  %vm241 = vcmp.ge.f32.partialorder %v177, 0.0
  %vm242 = vcmp.ge.f32.partialorder %v178, 0.0
  %vm243 = vcmp.ge.f32.partialorder %v179, 0.0
  %vm244 = vcmp.ge.f32.partialorder %v180, 0.0
  %vm245 = vcmp.ge.f32.partialorder %v181, 0.0
  %vm246 = vcmp.ge.f32.partialorder %v182, 0.0
  %vm247 = vcmp.ge.f32.partialorder %v183, 0.0
  %vm248 = vcmp.ge.f32.partialorder %v184, 0.0
  %vm249 = vcmp.ge.f32.partialorder %v185, 0.0
  %vm250 = vcmp.ge.f32.partialorder %v186, 0.0
  %vm251 = vcmp.ge.f32.partialorder %v187, 0.0
  %vm252 = vcmp.ge.f32.partialorder %v188, 0.0
  %vm253 = vcmp.ge.f32.partialorder %v189, 0.0
  %vm254 = vcmp.ge.f32.partialorder %v190, 0.0
  %vm255 = vcmp.ge.f32.partialorder %v191, 0.0
  %vm256 = vcmp.ge.f32.partialorder %v192, 0.0
  %vm257 = vcmp.ge.f32.partialorder %v193, 0.0
  %vm258 = vcmp.ge.f32.partialorder %v194, 0.0
  %vm259 = vcmp.ge.f32.partialorder %v195, 0.0
  %vm260 = vcmp.ge.f32.partialorder %v196, 0.0
  %vm261 = vcmp.ge.f32.partialorder %v197, 0.0
  %vm262 = vcmp.ge.f32.partialorder %v198, 0.0
  %vm263 = vcmp.ge.f32.partialorder %v199, 0.0
  %vm264 = vcmp.ge.f32.partialorder %v200, 0.0
  %vm265 = vcmp.ge.f32.partialorder %v201, 0.0
  %vm266 = vcmp.ge.f32.partialorder %v202, 0.0
  %vm267 = vcmp.ge.f32.partialorder %v203, 0.0
  %vm268 = vcmp.ge.f32.partialorder %v204, 0.0
  %vm269 = vcmp.ge.f32.partialorder %v205, 0.0
  %vm270 = vcmp.ge.f32.partialorder %v206, 0.0
  %vm271 = vcmp.ge.f32.partialorder %v207, 0.0
  %vm272 = vcmp.ge.f32.partialorder %v208, 0.0
  %vm273 = vcmp.ge.f32.partialorder %v209, 0.0
  %vm274 = vcmp.ge.f32.partialorder %v210, 0.0
  %vm275 = vcmp.ge.f32.partialorder %v211, 0.0
  %vm276 = vcmp.ge.f32.partialorder %v212, 0.0
  %vm277 = vcmp.ge.f32.partialorder %v213, 0.0
  %vm278 = vcmp.ge.f32.partialorder %v214, 0.0
  %vm279 = vcmp.ge.f32.partialorder %v215, 0.0
  %vm280 = vcmp.ge.f32.partialorder %v216, 0.0
  %vm281 = vcmp.ge.f32.partialorder %v217, 0.0
  %vm282 = vcmp.ge.f32.partialorder %v218, 0.0
  %vm283 = vcmp.ge.f32.partialorder %v219, 0.0
  %v284 = vmul.f32 %v156, 0.01
  %v285 = vmul.f32 %v157, 0.01
  %v286 = vmul.f32 %v158, 0.01
  %v287 = vmul.f32 %v159, 0.01
  %v288 = vmul.f32 %v160, 0.01
  %v289 = vmul.f32 %v161, 0.01
  %v290 = vmul.f32 %v162, 0.01
  %v291 = vmul.f32 %v163, 0.01
  %v292 = vmul.f32 %v164, 0.01
  %v293 = vmul.f32 %v165, 0.01
  %v294 = vmul.f32 %v166, 0.01
  %v295 = vmul.f32 %v167, 0.01
  %v296 = vmul.f32 %v168, 0.01
  %v297 = vmul.f32 %v169, 0.01
  %v298 = vmul.f32 %v170, 0.01
  %v299 = vmul.f32 %v171, 0.01
  %v300 = vmul.f32 %v172, 0.01
  %v301 = vmul.f32 %v173, 0.01
  %v302 = vmul.f32 %v174, 0.01
  %v303 = vmul.f32 %v175, 0.01
  %v304 = vmul.f32 %v176, 0.01
  %v305 = vmul.f32 %v177, 0.01
  %v306 = vmul.f32 %v178, 0.01
  %v307 = vmul.f32 %v179, 0.01
  %v308 = vmul.f32 %v180, 0.01
  %v309 = vmul.f32 %v181, 0.01
  %v310 = vmul.f32 %v182, 0.01
  %v311 = vmul.f32 %v183, 0.01
  %v312 = vmul.f32 %v184, 0.01
  %v313 = vmul.f32 %v185, 0.01
  %v314 = vmul.f32 %v186, 0.01
  %v315 = vmul.f32 %v187, 0.01
  %v316 = vmul.f32 %v188, 0.01
  %v317 = vmul.f32 %v189, 0.01
  %v318 = vmul.f32 %v190, 0.01
  %v319 = vmul.f32 %v191, 0.01
  %v320 = vmul.f32 %v192, 0.01
  %v321 = vmul.f32 %v193, 0.01
  %v322 = vmul.f32 %v194, 0.01
  %v323 = vmul.f32 %v195, 0.01
  %v324 = vmul.f32 %v196, 0.01
  %v325 = vmul.f32 %v197, 0.01
  %v326 = vmul.f32 %v198, 0.01
  %v327 = vmul.f32 %v199, 0.01
  %v328 = vmul.f32 %v200, 0.01
  %v329 = vmul.f32 %v201, 0.01
  %v330 = vmul.f32 %v202, 0.01
  %v331 = vmul.f32 %v203, 0.01
  %v332 = vmul.f32 %v204, 0.01
  %v333 = vmul.f32 %v205, 0.01
  %v334 = vmul.f32 %v206, 0.01
  %v335 = vmul.f32 %v207, 0.01
  %v336 = vmul.f32 %v208, 0.01
  %v337 = vmul.f32 %v209, 0.01
  %v338 = vmul.f32 %v210, 0.01
  %v339 = vmul.f32 %v211, 0.01
  %v340 = vmul.f32 %v212, 0.01
  %v341 = vmul.f32 %v213, 0.01
  %v342 = vmul.f32 %v214, 0.01
  %v343 = vmul.f32 %v215, 0.01
  %v344 = vmul.f32 %v216, 0.01
  %v345 = vmul.f32 %v217, 0.01
  %v346 = vmul.f32 %v218, 0.01
  %v347 = vmul.f32 %v219, 0.01
  %v348 = vsel %vm220, %v156, %v284
  %v349 = vsel %vm221, %v157, %v285
  %v350 = vsel %vm222, %v158, %v286
  %v351 = vsel %vm223, %v159, %v287
  %v352 = vsel %vm224, %v160, %v288
  %v353 = vsel %vm225, %v161, %v289
  %v354 = vsel %vm226, %v162, %v290
  %v355 = vsel %vm227, %v163, %v291
  %v356 = vsel %vm228, %v164, %v292
  %v357 = vsel %vm229, %v165, %v293
  %v358 = vsel %vm230, %v166, %v294
  %v359 = vsel %vm231, %v167, %v295
  %v360 = vsel %vm232, %v168, %v296
  %v361 = vsel %vm233, %v169, %v297
  %v362 = vsel %vm234, %v170, %v298
  %v363 = vsel %vm235, %v171, %v299
  %v364 = vsel %vm236, %v172, %v300
  %v365 = vsel %vm237, %v173, %v301
  %v366 = vsel %vm238, %v174, %v302
  %v367 = vsel %vm239, %v175, %v303
  %v368 = vsel %vm240, %v176, %v304
  %v369 = vsel %vm241, %v177, %v305
  %v370 = vsel %vm242, %v178, %v306
  %v371 = vsel %vm243, %v179, %v307
  %v372 = vsel %vm244, %v180, %v308
  %v373 = vsel %vm245, %v181, %v309
  %v374 = vsel %vm246, %v182, %v310
  %v375 = vsel %vm247, %v183, %v311
  %v376 = vsel %vm248, %v184, %v312
  %v377 = vsel %vm249, %v185, %v313
  %v378 = vsel %vm250, %v186, %v314
  %v379 = vsel %vm251, %v187, %v315
  %v380 = vsel %vm252, %v188, %v316
  %v381 = vsel %vm253, %v189, %v317
  %v382 = vsel %vm254, %v190, %v318
  %v383 = vsel %vm255, %v191, %v319
  %v384 = vsel %vm256, %v192, %v320
  %v385 = vsel %vm257, %v193, %v321
  %v386 = vsel %vm258, %v194, %v322
  %v387 = vsel %vm259, %v195, %v323
  %v388 = vsel %vm260, %v196, %v324
  %v389 = vsel %vm261, %v197, %v325
  %v390 = vsel %vm262, %v198, %v326
  %v391 = vsel %vm263, %v199, %v327
  %v392 = vsel %vm264, %v200, %v328
  %v393 = vsel %vm265, %v201, %v329
  %v394 = vsel %vm266, %v202, %v330
  %v395 = vsel %vm267, %v203, %v331
  %v396 = vsel %vm268, %v204, %v332
  %v397 = vsel %vm269, %v205, %v333
  %v398 = vsel %vm270, %v206, %v334
  %v399 = vsel %vm271, %v207, %v335
  %v400 = vsel %vm272, %v208, %v336
  %v401 = vsel %vm273, %v209, %v337
  %v402 = vsel %vm274, %v210, %v338
  %v403 = vsel %vm275, %v211, %v339
  %v404 = vsel %vm276, %v212, %v340
  %v405 = vsel %vm277, %v213, %v341
  %v406 = vsel %vm278, %v214, %v342
  %v407 = vsel %vm279, %v215, %v343
  %v408 = vsel %vm280, %v216, %v344
  %v409 = vsel %vm281, %v217, %v345
  %v410 = vsel %vm282, %v218, %v346
  %v411 = vsel %vm283, %v219, %v347
  %412 = vst [vmem:[%s3] sm:$0xff] %v348
  %413 = vst [vmem:[%s3 + $0x8] sm:$0xff] %v349
  %414 = vst [vmem:[%s3 + $0x10] sm:$0xff] %v350
  %415 = vst [vmem:[%s3 + $0x18] sm:$0xff] %v351
  %416 = vst [vmem:[%s3 + $0x20] sm:$0xff] %v352
  %417 = vst [vmem:[%s3 + $0x28] sm:$0xff] %v353
  %418 = vst [vmem:[%s3 + $0x30] sm:$0xff] %v354
  %419 = vst [vmem:[%s3 + $0x38] sm:$0xff] %v355
  %420 = vst [vmem:[%s3 + $0x40] sm:$0xff] %v356
  %421 = vst [vmem:[%s3 + $0x48] sm:$0xff] %v357
  %422 = vst [vmem:[%s3 + $0x50] sm:$0xff] %v358
  %423 = vst [vmem:[%s3 + $0x58] sm:$0xff] %v359
  %424 = vst [vmem:[%s3 + $0x60] sm:$0xff] %v360
  %425 = vst [vmem:[%s3 + $0x68] sm:$0xff] %v361
  %426 = vst [vmem:[%s3 + $0x70] sm:$0xff] %v362
  %427 = vst [vmem:[%s3 + $0x78] sm:$0xff] %v363
  %428 = vst [vmem:[%s3 + $0x80] sm:$0xff] %v364
  %429 = vst [vmem:[%s3 + $0x88] sm:$0xff] %v365
  %430 = vst [vmem:[%s3 + $0x90] sm:$0xff] %v366
  %431 = vst [vmem:[%s3 + $0x98] sm:$0xff] %v367
  %432 = vst [vmem:[%s3 + $0xa0] sm:$0xff] %v368
  %433 = vst [vmem:[%s3 + $0xa8] sm:$0xff] %v369
  %434 = vst [vmem:[%s3 + $0xb0] sm:$0xff] %v370
  %435 = vst [vmem:[%s3 + $0xb8] sm:$0xff] %v371
  %436 = vst [vmem:[%s3 + $0xc0] sm:$0xff] %v372
  %437 = vst [vmem:[%s3 + $0xc8] sm:$0xff] %v373
  %438 = vst [vmem:[%s3 + $0xd0] sm:$0xff] %v374
  %439 = vst [vmem:[%s3 + $0xd8] sm:$0xff] %v375
  %440 = vst [vmem:[%s3 + $0xe0] sm:$0xff] %v376
  %441 = vst [vmem:[%s3 + $0xe8] sm:$0xff] %v377
  %442 = vst [vmem:[%s3 + $0xf0] sm:$0xff] %v378
  %443 = vst [vmem:[%s3 + $0xf8] sm:$0xff] %v379
  %444 = vst [vmem:[%s3 + $0x100] sm:$0xff] %v380
  %445 = vst [vmem:[%s3 + $0x108] sm:$0xff] %v381
  %446 = vst [vmem:[%s3 + $0x110] sm:$0xff] %v382
  %447 = vst [vmem:[%s3 + $0x118] sm:$0xff] %v383
  %448 = vst [vmem:[%s3 + $0x120] sm:$0xff] %v384
  %449 = vst [vmem:[%s3 + $0x128] sm:$0xff] %v385
  %450 = vst [vmem:[%s3 + $0x130] sm:$0xff] %v386
  %451 = vst [vmem:[%s3 + $0x138] sm:$0xff] %v387
  %452 = vst [vmem:[%s3 + $0x140] sm:$0xff] %v388
  %453 = vst [vmem:[%s3 + $0x148] sm:$0xff] %v389
  %454 = vst [vmem:[%s3 + $0x150] sm:$0xff] %v390
  %455 = vst [vmem:[%s3 + $0x158] sm:$0xff] %v391
  %456 = vst [vmem:[%s3 + $0x160] sm:$0xff] %v392
  %457 = vst [vmem:[%s3 + $0x168] sm:$0xff] %v393
  %458 = vst [vmem:[%s3 + $0x170] sm:$0xff] %v394
  %459 = vst [vmem:[%s3 + $0x178] sm:$0xff] %v395
  %460 = vst [vmem:[%s3 + $0x180] sm:$0xff] %v396
  %461 = vst [vmem:[%s3 + $0x188] sm:$0xff] %v397
  %462 = vst [vmem:[%s3 + $0x190] sm:$0xff] %v398
  %463 = vst [vmem:[%s3 + $0x198] sm:$0xff] %v399
  %464 = vst [vmem:[%s3 + $0x1a0] sm:$0xff] %v400
  %465 = vst [vmem:[%s3 + $0x1a8] sm:$0xff] %v401
  %466 = vst [vmem:[%s3 + $0x1b0] sm:$0xff] %v402
  %467 = vst [vmem:[%s3 + $0x1b8] sm:$0xff] %v403
  %468 = vst [vmem:[%s3 + $0x1c0] sm:$0xff] %v404
  %469 = vst [vmem:[%s3 + $0x1c8] sm:$0xff] %v405
  %470 = vst [vmem:[%s3 + $0x1d0] sm:$0xff] %v406
  %471 = vst [vmem:[%s3 + $0x1d8] sm:$0xff] %v407
  %472 = vst [vmem:[%s3 + $0x1e0] sm:$0xff] %v408
  %473 = vst [vmem:[%s3 + $0x1e8] sm:$0xff] %v409
  %474 = vst [vmem:[%s3 + $0x1f0] sm:$0xff] %v410
  %475 = vst [vmem:[%s3 + $0x1f8] sm:$0xff] %v411
  // Predicated region
  $region14: #{generator_forward.19} parent=0 // pred_check
    _
  $region15: #{generator_forward.19} parent=0 // pred_check_branch
    %477 = sbr.rel (0) target = $region17
  $region16: #{generator_forward.19} parent=0 // pred_region
    _
  $region17: #{generator_forward.19} parent=0 // pred_fallthru
    _
  // Predicated region
  $region18: #{generator_forward.19} parent=0 // pred_check
    _
  $region19: #{generator_forward.19} parent=0 // pred_check_branch
    %479 = sbr.rel (0) target = $region21
  $region20: #{generator_forward.19} parent=0 // pred_region
    _
  $region21: #{generator_forward.19} parent=0 // pred_fallthru
    _

// kernel: generator_forward.20
$region0: #{generator_forward.20}
  #allocation0 [shape = 'u32[]', space=smem, size = 0x4, offset = 0x4, fixed_abs, tag = 'smem constant byte address 0x4 - core index']
  #allocation1 [shape = 'u32[144,128]{1,0:T(1,128)}', space=vmem, size = 0x12000, scoped, tag = 'internal scratch']
  %s0 = inlined_call_operand.vmem [shape: bf16[128,1024], index: 0, kind: input, shape index: {}]
  %s1 = inlined_call_operand.vmem [shape: bf16[1024,128], index: 1, kind: input, shape index: {}]
  %s2 = inlined_call_operand.vmem [shape: f32[1,128], index: 2, kind: input, shape index: {}]
  %s3 = inlined_call_operand.vmem [shape: f32[128,128], index: 3, kind: output, shape index: {}]
  %s4 = sld [smem:[#allocation0]]
  $region22: #{generator_forward.20} parent=0
    _
  %s6 = ssub.s32 1, %s4
  %s7 = scalar_select 0, %s6, %s4
  // Predicated region
  $region2: #{generator_forward.20} parent=0 // pred_check
    _
  $region3: #{generator_forward.20} parent=0 // pred_check_branch
    %9 = sbr.rel (0) target = $region5
  $region4: #{generator_forward.20} parent=0 // pred_region
    _
  $region5: #{generator_forward.20} parent=0 // pred_fallthru
    _
  // Predicated region
  $region6: #{generator_forward.20} parent=0 // pred_check
    _
  $region7: #{generator_forward.20} parent=0 // pred_check_branch
    %11 = sbr.rel (0) target = $region9
  $region8: #{generator_forward.20} parent=0 // pred_region
    _
  $region9: #{generator_forward.20} parent=0 // pred_fallthru
    _
  // Predicated region
  $region10: #{generator_forward.20} parent=0 // pred_check
    _
  $region11: #{generator_forward.20} parent=0 // pred_check_branch
    %13 = sbr.rel (0) target = $region13
  $region12: #{generator_forward.20} parent=0 // pred_region
    _
  $region13: #{generator_forward.20} parent=0 // pred_fallthru
    _
  %v15 = vld [vmem:[%s0] sm:$0xff]
  %v16 = vld [vmem:[%s0 + $0x8] sm:$0xff]
  %v17 = vld [vmem:[%s0 + $0x10] sm:$0xff]
  %v18 = vld [vmem:[%s0 + $0x18] sm:$0xff]
  %v19 = vld [vmem:[%s0 + $0x20] sm:$0xff]
  %v20 = vld [vmem:[%s0 + $0x28] sm:$0xff]
  %v21 = vld [vmem:[%s0 + $0x30] sm:$0xff]
  %v22 = vld [vmem:[%s0 + $0x38] sm:$0xff]
  %v23 = vld [vmem:[%s0 + $0x40] sm:$0xff]
  %v24 = vld [vmem:[%s0 + $0x48] sm:$0xff]
  %v25 = vld [vmem:[%s0 + $0x50] sm:$0xff]
  %v26 = vld [vmem:[%s0 + $0x58] sm:$0xff]
  %v27 = vld [vmem:[%s0 + $0x60] sm:$0xff]
  %v28 = vld [vmem:[%s0 + $0x68] sm:$0xff]
  %v29 = vld [vmem:[%s0 + $0x70] sm:$0xff]
  %v30 = vld [vmem:[%s0 + $0x78] sm:$0xff]
  %v31 = vld [vmem:[%s0 + $0x80] sm:$0xff]
  %v32 = vld [vmem:[%s0 + $0x88] sm:$0xff]
  %v33 = vld [vmem:[%s0 + $0x90] sm:$0xff]
  %v34 = vld [vmem:[%s0 + $0x98] sm:$0xff]
  %v35 = vld [vmem:[%s0 + $0xa0] sm:$0xff]
  %v36 = vld [vmem:[%s0 + $0xa8] sm:$0xff]
  %v37 = vld [vmem:[%s0 + $0xb0] sm:$0xff]
  %v38 = vld [vmem:[%s0 + $0xb8] sm:$0xff]
  %v39 = vld [vmem:[%s0 + $0xc0] sm:$0xff]
  %v40 = vld [vmem:[%s0 + $0xc8] sm:$0xff]
  %v41 = vld [vmem:[%s0 + $0xd0] sm:$0xff]
  %v42 = vld [vmem:[%s0 + $0xd8] sm:$0xff]
  %v43 = vld [vmem:[%s0 + $0xe0] sm:$0xff]
  %v44 = vld [vmem:[%s0 + $0xe8] sm:$0xff]
  %v45 = vld [vmem:[%s0 + $0xf0] sm:$0xff]
  %v46 = vld [vmem:[%s0 + $0xf8] sm:$0xff]
  %v47 = vld [vmem:[%s0 + $0x100] sm:$0xff]
  %v48 = vld [vmem:[%s0 + $0x108] sm:$0xff]
  %v49 = vld [vmem:[%s0 + $0x110] sm:$0xff]
  %v50 = vld [vmem:[%s0 + $0x118] sm:$0xff]
  %v51 = vld [vmem:[%s0 + $0x120] sm:$0xff]
  %v52 = vld [vmem:[%s0 + $0x128] sm:$0xff]
  %v53 = vld [vmem:[%s0 + $0x130] sm:$0xff]
  %v54 = vld [vmem:[%s0 + $0x138] sm:$0xff]
  %v55 = vld [vmem:[%s0 + $0x140] sm:$0xff]
  %v56 = vld [vmem:[%s0 + $0x148] sm:$0xff]
  %v57 = vld [vmem:[%s0 + $0x150] sm:$0xff]
  %v58 = vld [vmem:[%s0 + $0x158] sm:$0xff]
  %v59 = vld [vmem:[%s0 + $0x160] sm:$0xff]
  %v60 = vld [vmem:[%s0 + $0x168] sm:$0xff]
  %v61 = vld [vmem:[%s0 + $0x170] sm:$0xff]
  %v62 = vld [vmem:[%s0 + $0x178] sm:$0xff]
  %v63 = vld [vmem:[%s0 + $0x180] sm:$0xff]
  %v64 = vld [vmem:[%s0 + $0x188] sm:$0xff]
  %v65 = vld [vmem:[%s0 + $0x190] sm:$0xff]
  %v66 = vld [vmem:[%s0 + $0x198] sm:$0xff]
  %v67 = vld [vmem:[%s0 + $0x1a0] sm:$0xff]
  %v68 = vld [vmem:[%s0 + $0x1a8] sm:$0xff]
  %v69 = vld [vmem:[%s0 + $0x1b0] sm:$0xff]
  %v70 = vld [vmem:[%s0 + $0x1b8] sm:$0xff]
  %v71 = vld [vmem:[%s0 + $0x1c0] sm:$0xff]
  %v72 = vld [vmem:[%s0 + $0x1c8] sm:$0xff]
  %v73 = vld [vmem:[%s0 + $0x1d0] sm:$0xff]
  %v74 = vld [vmem:[%s0 + $0x1d8] sm:$0xff]
  %v75 = vld [vmem:[%s0 + $0x1e0] sm:$0xff]
  %v76 = vld [vmem:[%s0 + $0x1e8] sm:$0xff]
  %v77 = vld [vmem:[%s0 + $0x1f0] sm:$0xff]
  %v78 = vld [vmem:[%s0 + $0x1f8] sm:$0xff]
  %v79 = vld [vmem:[%s1] sm:$0xf]
  %v80 = vld [vmem:[%s1 + $0x4] sm:$0xf]
  %v81 = vld [vmem:[%s1 + $0x8] sm:$0xf]
  %v82 = vld [vmem:[%s1 + $0xc] sm:$0xf]
  %v83 = vld [vmem:[%s1 + $0x10] sm:$0xf]
  %v84 = vld [vmem:[%s1 + $0x14] sm:$0xf]
  %v85 = vld [vmem:[%s1 + $0x18] sm:$0xf]
  %v86 = vld [vmem:[%s1 + $0x1c] sm:$0xf]
  %v87 = vld [vmem:[%s1 + $0x20] sm:$0xf]
  %v88 = vld [vmem:[%s1 + $0x24] sm:$0xf]
  %v89 = vld [vmem:[%s1 + $0x28] sm:$0xf]
  %v90 = vld [vmem:[%s1 + $0x2c] sm:$0xf]
  %v91 = vld [vmem:[%s1 + $0x30] sm:$0xf]
  %v92 = vld [vmem:[%s1 + $0x34] sm:$0xf]
  %v93 = vld [vmem:[%s1 + $0x38] sm:$0xf]
  %v94 = vld [vmem:[%s1 + $0x3c] sm:$0xf]
  %v95 = vld [vmem:[%s1 + $0x40] sm:$0xf]
  %v96 = vld [vmem:[%s1 + $0x44] sm:$0xf]
  %v97 = vld [vmem:[%s1 + $0x48] sm:$0xf]
  %v98 = vld [vmem:[%s1 + $0x4c] sm:$0xf]
  %v99 = vld [vmem:[%s1 + $0x50] sm:$0xf]
  %v100 = vld [vmem:[%s1 + $0x54] sm:$0xf]
  %v101 = vld [vmem:[%s1 + $0x58] sm:$0xf]
  %v102 = vld [vmem:[%s1 + $0x5c] sm:$0xf]
  %v103 = vld [vmem:[%s1 + $0x60] sm:$0xf]
  %v104 = vld [vmem:[%s1 + $0x64] sm:$0xf]
  %v105 = vld [vmem:[%s1 + $0x68] sm:$0xf]
  %v106 = vld [vmem:[%s1 + $0x6c] sm:$0xf]
  %v107 = vld [vmem:[%s1 + $0x70] sm:$0xf]
  %v108 = vld [vmem:[%s1 + $0x74] sm:$0xf]
  %v109 = vld [vmem:[%s1 + $0x78] sm:$0xf]
  %v110 = vld [vmem:[%s1 + $0x7c] sm:$0xf]
  %v111 = vld [vmem:[%s1 + $0x80] sm:$0xf]
  %v112 = vld [vmem:[%s1 + $0x84] sm:$0xf]
  %v113 = vld [vmem:[%s1 + $0x88] sm:$0xf]
  %v114 = vld [vmem:[%s1 + $0x8c] sm:$0xf]
  %v115 = vld [vmem:[%s1 + $0x90] sm:$0xf]
  %v116 = vld [vmem:[%s1 + $0x94] sm:$0xf]
  %v117 = vld [vmem:[%s1 + $0x98] sm:$0xf]
  %v118 = vld [vmem:[%s1 + $0x9c] sm:$0xf]
  %v119 = vld [vmem:[%s1 + $0xa0] sm:$0xf]
  %v120 = vld [vmem:[%s1 + $0xa4] sm:$0xf]
  %v121 = vld [vmem:[%s1 + $0xa8] sm:$0xf]
  %v122 = vld [vmem:[%s1 + $0xac] sm:$0xf]
  %v123 = vld [vmem:[%s1 + $0xb0] sm:$0xf]
  %v124 = vld [vmem:[%s1 + $0xb4] sm:$0xf]
  %v125 = vld [vmem:[%s1 + $0xb8] sm:$0xf]
  %v126 = vld [vmem:[%s1 + $0xbc] sm:$0xf]
  %v127 = vld [vmem:[%s1 + $0xc0] sm:$0xf]
  %v128 = vld [vmem:[%s1 + $0xc4] sm:$0xf]
  %v129 = vld [vmem:[%s1 + $0xc8] sm:$0xf]
  %v130 = vld [vmem:[%s1 + $0xcc] sm:$0xf]
  %v131 = vld [vmem:[%s1 + $0xd0] sm:$0xf]
  %v132 = vld [vmem:[%s1 + $0xd4] sm:$0xf]
  %v133 = vld [vmem:[%s1 + $0xd8] sm:$0xf]
  %v134 = vld [vmem:[%s1 + $0xdc] sm:$0xf]
  %v135 = vld [vmem:[%s1 + $0xe0] sm:$0xf]
  %v136 = vld [vmem:[%s1 + $0xe4] sm:$0xf]
  %v137 = vld [vmem:[%s1 + $0xe8] sm:$0xf]
  %v138 = vld [vmem:[%s1 + $0xec] sm:$0xf]
  %v139 = vld [vmem:[%s1 + $0xf0] sm:$0xf]
  %v140 = vld [vmem:[%s1 + $0xf4] sm:$0xf]
  %v141 = vld [vmem:[%s1 + $0xf8] sm:$0xf]
  %v142 = vld [vmem:[%s1 + $0xfc] sm:$0xf]
  %v143 = vld [vmem:[%s1 + $0x100] sm:$0xf]
  %v144 = vld [vmem:[%s1 + $0x104] sm:$0xf]
  %v145 = vld [vmem:[%s1 + $0x108] sm:$0xf]
  %v146 = vld [vmem:[%s1 + $0x10c] sm:$0xf]
  %v147 = vld [vmem:[%s1 + $0x110] sm:$0xf]
  %v148 = vld [vmem:[%s1 + $0x114] sm:$0xf]
  %v149 = vld [vmem:[%s1 + $0x118] sm:$0xf]
  %v150 = vld [vmem:[%s1 + $0x11c] sm:$0xf]
  %v151 = vld [vmem:[%s1 + $0x120] sm:$0xf]
  %v152 = vld [vmem:[%s1 + $0x124] sm:$0xf]
  %v153 = vld [vmem:[%s1 + $0x128] sm:$0xf]
  %v154 = vld [vmem:[%s1 + $0x12c] sm:$0xf]
  %v155 = vld [vmem:[%s1 + $0x130] sm:$0xf]
  %v156 = vld [vmem:[%s1 + $0x134] sm:$0xf]
  %v157 = vld [vmem:[%s1 + $0x138] sm:$0xf]
  %v158 = vld [vmem:[%s1 + $0x13c] sm:$0xf]
  %v159 = vld [vmem:[%s1 + $0x140] sm:$0xf]
  %v160 = vld [vmem:[%s1 + $0x144] sm:$0xf]
  %v161 = vld [vmem:[%s1 + $0x148] sm:$0xf]
  %v162 = vld [vmem:[%s1 + $0x14c] sm:$0xf]
  %v163 = vld [vmem:[%s1 + $0x150] sm:$0xf]
  %v164 = vld [vmem:[%s1 + $0x154] sm:$0xf]
  %v165 = vld [vmem:[%s1 + $0x158] sm:$0xf]
  %v166 = vld [vmem:[%s1 + $0x15c] sm:$0xf]
  %v167 = vld [vmem:[%s1 + $0x160] sm:$0xf]
  %v168 = vld [vmem:[%s1 + $0x164] sm:$0xf]
  %v169 = vld [vmem:[%s1 + $0x168] sm:$0xf]
  %v170 = vld [vmem:[%s1 + $0x16c] sm:$0xf]
  %v171 = vld [vmem:[%s1 + $0x170] sm:$0xf]
  %v172 = vld [vmem:[%s1 + $0x174] sm:$0xf]
  %v173 = vld [vmem:[%s1 + $0x178] sm:$0xf]
  %v174 = vld [vmem:[%s1 + $0x17c] sm:$0xf]
  %v175 = vld [vmem:[%s1 + $0x180] sm:$0xf]
  %v176 = vld [vmem:[%s1 + $0x184] sm:$0xf]
  %v177 = vld [vmem:[%s1 + $0x188] sm:$0xf]
  %v178 = vld [vmem:[%s1 + $0x18c] sm:$0xf]
  %v179 = vld [vmem:[%s1 + $0x190] sm:$0xf]
  %v180 = vld [vmem:[%s1 + $0x194] sm:$0xf]
  %v181 = vld [vmem:[%s1 + $0x198] sm:$0xf]
  %v182 = vld [vmem:[%s1 + $0x19c] sm:$0xf]
  %v183 = vld [vmem:[%s1 + $0x1a0] sm:$0xf]
  %v184 = vld [vmem:[%s1 + $0x1a4] sm:$0xf]
  %v185 = vld [vmem:[%s1 + $0x1a8] sm:$0xf]
  %v186 = vld [vmem:[%s1 + $0x1ac] sm:$0xf]
  %v187 = vld [vmem:[%s1 + $0x1b0] sm:$0xf]
  %v188 = vld [vmem:[%s1 + $0x1b4] sm:$0xf]
  %v189 = vld [vmem:[%s1 + $0x1b8] sm:$0xf]
  %v190 = vld [vmem:[%s1 + $0x1bc] sm:$0xf]
  %v191 = vld [vmem:[%s1 + $0x1c0] sm:$0xf]
  %v192 = vld [vmem:[%s1 + $0x1c4] sm:$0xf]
  %v193 = vld [vmem:[%s1 + $0x1c8] sm:$0xf]
  %v194 = vld [vmem:[%s1 + $0x1cc] sm:$0xf]
  %v195 = vld [vmem:[%s1 + $0x1d0] sm:$0xf]
  %v196 = vld [vmem:[%s1 + $0x1d4] sm:$0xf]
  %v197 = vld [vmem:[%s1 + $0x1d8] sm:$0xf]
  %v198 = vld [vmem:[%s1 + $0x1dc] sm:$0xf]
  %v199 = vld [vmem:[%s1 + $0x1e0] sm:$0xf]
  %v200 = vld [vmem:[%s1 + $0x1e4] sm:$0xf]
  %v201 = vld [vmem:[%s1 + $0x1e8] sm:$0xf]
  %v202 = vld [vmem:[%s1 + $0x1ec] sm:$0xf]
  %v203 = vld [vmem:[%s1 + $0x1f0] sm:$0xf]
  %v204 = vld [vmem:[%s1 + $0x1f4] sm:$0xf]
  %v205 = vld [vmem:[%s1 + $0x1f8] sm:$0xf]
  %v206 = vld [vmem:[%s1 + $0x1fc] sm:$0xf]
  %v207 = vld [vmem:[%s2] sm:$0x1]
  %v209 = vlaneseq
  %v210 = vshrl.u32 %v209, 7
  %v211 = vsub.s32 0, %v210
  %v212 = vrot.slane %v207, %v211
  %v278 = vunpack.c.l.b16 %v15
  %v279 = vunpack.c.h.b16 %v15
  %v280 = vunpack.c.l.b16 %v16
  %v281 = vunpack.c.h.b16 %v16
  %v282 = vunpack.c.l.b16 %v17
  %v283 = vunpack.c.h.b16 %v17
  %v284 = vunpack.c.l.b16 %v18
  %v285 = vunpack.c.h.b16 %v18
  %v286 = vunpack.c.l.b16 %v19
  %v287 = vunpack.c.h.b16 %v19
  %v288 = vunpack.c.l.b16 %v20
  %v289 = vunpack.c.h.b16 %v20
  %v290 = vunpack.c.l.b16 %v21
  %v291 = vunpack.c.h.b16 %v21
  %v292 = vunpack.c.l.b16 %v22
  %v293 = vunpack.c.h.b16 %v22
  %v294 = vunpack.c.l.b16 %v23
  %v295 = vunpack.c.h.b16 %v23
  %v296 = vunpack.c.l.b16 %v24
  %v297 = vunpack.c.h.b16 %v24
  %v298 = vunpack.c.l.b16 %v25
  %v299 = vunpack.c.h.b16 %v25
  %v300 = vunpack.c.l.b16 %v26
  %v301 = vunpack.c.h.b16 %v26
  %v302 = vunpack.c.l.b16 %v27
  %v303 = vunpack.c.h.b16 %v27
  %v304 = vunpack.c.l.b16 %v28
  %v305 = vunpack.c.h.b16 %v28
  %v306 = vunpack.c.l.b16 %v29
  %v307 = vunpack.c.h.b16 %v29
  %v308 = vunpack.c.l.b16 %v30
  %v309 = vunpack.c.h.b16 %v30
  %v310 = vunpack.c.l.b16 %v31
  %v311 = vunpack.c.h.b16 %v31
  %v312 = vunpack.c.l.b16 %v32
  %v313 = vunpack.c.h.b16 %v32
  %v314 = vunpack.c.l.b16 %v33
  %v315 = vunpack.c.h.b16 %v33
  %v316 = vunpack.c.l.b16 %v34
  %v317 = vunpack.c.h.b16 %v34
  %v318 = vunpack.c.l.b16 %v35
  %v319 = vunpack.c.h.b16 %v35
  %v320 = vunpack.c.l.b16 %v36
  %v321 = vunpack.c.h.b16 %v36
  %v322 = vunpack.c.l.b16 %v37
  %v323 = vunpack.c.h.b16 %v37
  %v324 = vunpack.c.l.b16 %v38
  %v325 = vunpack.c.h.b16 %v38
  %v326 = vunpack.c.l.b16 %v39
  %v327 = vunpack.c.h.b16 %v39
  %v328 = vunpack.c.l.b16 %v40
  %v329 = vunpack.c.h.b16 %v40
  %v330 = vunpack.c.l.b16 %v41
  %v331 = vunpack.c.h.b16 %v41
  %v332 = vunpack.c.l.b16 %v42
  %v333 = vunpack.c.h.b16 %v42
  %v334 = vunpack.c.l.b16 %v43
  %v335 = vunpack.c.h.b16 %v43
  %v336 = vunpack.c.l.b16 %v44
  %v337 = vunpack.c.h.b16 %v44
  %v338 = vunpack.c.l.b16 %v45
  %v339 = vunpack.c.h.b16 %v45
  %v340 = vunpack.c.l.b16 %v46
  %v341 = vunpack.c.h.b16 %v46
  %v342 = vunpack.c.l.b16 %v47
  %v343 = vunpack.c.h.b16 %v47
  %v344 = vunpack.c.l.b16 %v48
  %v345 = vunpack.c.h.b16 %v48
  %v346 = vunpack.c.l.b16 %v49
  %v347 = vunpack.c.h.b16 %v49
  %v348 = vunpack.c.l.b16 %v50
  %v349 = vunpack.c.h.b16 %v50
  %v350 = vunpack.c.l.b16 %v51
  %v351 = vunpack.c.h.b16 %v51
  %v352 = vunpack.c.l.b16 %v52
  %v353 = vunpack.c.h.b16 %v52
  %v354 = vunpack.c.l.b16 %v53
  %v355 = vunpack.c.h.b16 %v53
  %v356 = vunpack.c.l.b16 %v54
  %v357 = vunpack.c.h.b16 %v54
  %v358 = vunpack.c.l.b16 %v55
  %v359 = vunpack.c.h.b16 %v55
  %v360 = vunpack.c.l.b16 %v56
  %v361 = vunpack.c.h.b16 %v56
  %v362 = vunpack.c.l.b16 %v57
  %v363 = vunpack.c.h.b16 %v57
  %v364 = vunpack.c.l.b16 %v58
  %v365 = vunpack.c.h.b16 %v58
  %v366 = vunpack.c.l.b16 %v59
  %v367 = vunpack.c.h.b16 %v59
  %v368 = vunpack.c.l.b16 %v60
  %v369 = vunpack.c.h.b16 %v60
  %v370 = vunpack.c.l.b16 %v61
  %v371 = vunpack.c.h.b16 %v61
  %v372 = vunpack.c.l.b16 %v62
  %v373 = vunpack.c.h.b16 %v62
  %v374 = vunpack.c.l.b16 %v63
  %v375 = vunpack.c.h.b16 %v63
  %v376 = vunpack.c.l.b16 %v64
  %v377 = vunpack.c.h.b16 %v64
  %v378 = vunpack.c.l.b16 %v65
  %v379 = vunpack.c.h.b16 %v65
  %v380 = vunpack.c.l.b16 %v66
  %v381 = vunpack.c.h.b16 %v66
  %v382 = vunpack.c.l.b16 %v67
  %v383 = vunpack.c.h.b16 %v67
  %v384 = vunpack.c.l.b16 %v68
  %v385 = vunpack.c.h.b16 %v68
  %v386 = vunpack.c.l.b16 %v69
  %v387 = vunpack.c.h.b16 %v69
  %v388 = vunpack.c.l.b16 %v70
  %v389 = vunpack.c.h.b16 %v70
  %v390 = vunpack.c.l.b16 %v71
  %v391 = vunpack.c.h.b16 %v71
  %v392 = vunpack.c.l.b16 %v72
  %v393 = vunpack.c.h.b16 %v72
  %v394 = vunpack.c.l.b16 %v73
  %v395 = vunpack.c.h.b16 %v73
  %v396 = vunpack.c.l.b16 %v74
  %v397 = vunpack.c.h.b16 %v74
  %v398 = vunpack.c.l.b16 %v75
  %v399 = vunpack.c.h.b16 %v75
  %v400 = vunpack.c.l.b16 %v76
  %v401 = vunpack.c.h.b16 %v76
  %v402 = vunpack.c.l.b16 %v77
  %v403 = vunpack.c.h.b16 %v77
  %v404 = vunpack.c.l.b16 %v78
  %v405 = vunpack.c.h.b16 %v78
  %v406 = vpack.c.b16 %v286, %v278
  %v407 = vpack.c.b16 %v287, %v279
  %v408 = vpack.c.b16 %v288, %v280
  %v409 = vpack.c.b16 %v289, %v281
  %v410 = vpack.c.b16 %v290, %v282
  %v411 = vpack.c.b16 %v291, %v283
  %v412 = vpack.c.b16 %v292, %v284
  %v413 = vpack.c.b16 %v293, %v285
  %v414 = vpack.c.b16 %v302, %v294
  %v415 = vpack.c.b16 %v303, %v295
  %v416 = vpack.c.b16 %v304, %v296
  %v417 = vpack.c.b16 %v305, %v297
  %v418 = vpack.c.b16 %v306, %v298
  %v419 = vpack.c.b16 %v307, %v299
  %v420 = vpack.c.b16 %v308, %v300
  %v421 = vpack.c.b16 %v309, %v301
  %v422 = vpack.c.b16 %v318, %v310
  %v423 = vpack.c.b16 %v319, %v311
  %v424 = vpack.c.b16 %v320, %v312
  %v425 = vpack.c.b16 %v321, %v313
  %v426 = vpack.c.b16 %v322, %v314
  %v427 = vpack.c.b16 %v323, %v315
  %v428 = vpack.c.b16 %v324, %v316
  %v429 = vpack.c.b16 %v325, %v317
  %v430 = vpack.c.b16 %v334, %v326
  %v431 = vpack.c.b16 %v335, %v327
  %v432 = vpack.c.b16 %v336, %v328
  %v433 = vpack.c.b16 %v337, %v329
  %v434 = vpack.c.b16 %v338, %v330
  %v435 = vpack.c.b16 %v339, %v331
  %v436 = vpack.c.b16 %v340, %v332
  %v437 = vpack.c.b16 %v341, %v333
  %v438 = vpack.c.b16 %v350, %v342
  %v439 = vpack.c.b16 %v351, %v343
  %v440 = vpack.c.b16 %v352, %v344
  %v441 = vpack.c.b16 %v353, %v345
  %v442 = vpack.c.b16 %v354, %v346
  %v443 = vpack.c.b16 %v355, %v347
  %v444 = vpack.c.b16 %v356, %v348
  %v445 = vpack.c.b16 %v357, %v349
  %v446 = vpack.c.b16 %v366, %v358
  %v447 = vpack.c.b16 %v367, %v359
  %v448 = vpack.c.b16 %v368, %v360
  %v449 = vpack.c.b16 %v369, %v361
  %v450 = vpack.c.b16 %v370, %v362
  %v451 = vpack.c.b16 %v371, %v363
  %v452 = vpack.c.b16 %v372, %v364
  %v453 = vpack.c.b16 %v373, %v365
  %v454 = vpack.c.b16 %v382, %v374
  %v455 = vpack.c.b16 %v383, %v375
  %v456 = vpack.c.b16 %v384, %v376
  %v457 = vpack.c.b16 %v385, %v377
  %v458 = vpack.c.b16 %v386, %v378
  %v459 = vpack.c.b16 %v387, %v379
  %v460 = vpack.c.b16 %v388, %v380
  %v461 = vpack.c.b16 %v389, %v381
  %v462 = vpack.c.b16 %v398, %v390
  %v463 = vpack.c.b16 %v399, %v391
  %v464 = vpack.c.b16 %v400, %v392
  %v465 = vpack.c.b16 %v401, %v393
  %v466 = vpack.c.b16 %v402, %v394
  %v467 = vpack.c.b16 %v403, %v395
  %v468 = vpack.c.b16 %v404, %v396
  %v469 = vpack.c.b16 %v405, %v397
  %v662 = vunpack.c.l.b16 %v79
  %v663 = vunpack.c.l.b16 %v80
  %v664 = vunpack.c.l.b16 %v81
  %v665 = vunpack.c.l.b16 %v82
  %v666 = vunpack.c.l.b16 %v83
  %v667 = vunpack.c.l.b16 %v84
  %v668 = vunpack.c.l.b16 %v85
  %v669 = vunpack.c.l.b16 %v86
  %v670 = vunpack.c.l.b16 %v87
  %v671 = vunpack.c.l.b16 %v88
  %v672 = vunpack.c.l.b16 %v89
  %v673 = vunpack.c.l.b16 %v90
  %v674 = vunpack.c.l.b16 %v91
  %v675 = vunpack.c.l.b16 %v92
  %v676 = vunpack.c.l.b16 %v93
  %v677 = vunpack.c.l.b16 %v94
  %v678 = vunpack.c.l.b16 %v95
  %v679 = vunpack.c.l.b16 %v96
  %v680 = vunpack.c.l.b16 %v97
  %v681 = vunpack.c.l.b16 %v98
  %v682 = vunpack.c.l.b16 %v99
  %v683 = vunpack.c.l.b16 %v100
  %v684 = vunpack.c.l.b16 %v101
  %v685 = vunpack.c.l.b16 %v102
  %v686 = vunpack.c.l.b16 %v103
  %v687 = vunpack.c.l.b16 %v104
  %v688 = vunpack.c.l.b16 %v105
  %v689 = vunpack.c.l.b16 %v106
  %v690 = vunpack.c.l.b16 %v107
  %v691 = vunpack.c.l.b16 %v108
  %v692 = vunpack.c.l.b16 %v109
  %v693 = vunpack.c.l.b16 %v110
  %v694 = vunpack.c.l.b16 %v111
  %v695 = vunpack.c.l.b16 %v112
  %v696 = vunpack.c.l.b16 %v113
  %v697 = vunpack.c.l.b16 %v114
  %v698 = vunpack.c.l.b16 %v115
  %v699 = vunpack.c.l.b16 %v116
  %v700 = vunpack.c.l.b16 %v117
  %v701 = vunpack.c.l.b16 %v118
  %v702 = vunpack.c.l.b16 %v119
  %v703 = vunpack.c.l.b16 %v120
  %v704 = vunpack.c.l.b16 %v121
  %v705 = vunpack.c.l.b16 %v122
  %v706 = vunpack.c.l.b16 %v123
  %v707 = vunpack.c.l.b16 %v124
  %v708 = vunpack.c.l.b16 %v125
  %v709 = vunpack.c.l.b16 %v126
  %v710 = vunpack.c.l.b16 %v127
  %v711 = vunpack.c.l.b16 %v128
  %v712 = vunpack.c.l.b16 %v129
  %v713 = vunpack.c.l.b16 %v130
  %v714 = vunpack.c.l.b16 %v131
  %v715 = vunpack.c.l.b16 %v132
  %v716 = vunpack.c.l.b16 %v133
  %v717 = vunpack.c.l.b16 %v134
  %v718 = vunpack.c.l.b16 %v135
  %v719 = vunpack.c.l.b16 %v136
  %v720 = vunpack.c.l.b16 %v137
  %v721 = vunpack.c.l.b16 %v138
  %v722 = vunpack.c.l.b16 %v139
  %v723 = vunpack.c.l.b16 %v140
  %v724 = vunpack.c.l.b16 %v141
  %v725 = vunpack.c.l.b16 %v142
  %v726 = vunpack.c.l.b16 %v143
  %v727 = vunpack.c.l.b16 %v144
  %v728 = vunpack.c.l.b16 %v145
  %v729 = vunpack.c.l.b16 %v146
  %v730 = vunpack.c.l.b16 %v147
  %v731 = vunpack.c.l.b16 %v148
  %v732 = vunpack.c.l.b16 %v149
  %v733 = vunpack.c.l.b16 %v150
  %v734 = vunpack.c.l.b16 %v151
  %v735 = vunpack.c.l.b16 %v152
  %v736 = vunpack.c.l.b16 %v153
  %v737 = vunpack.c.l.b16 %v154
  %v738 = vunpack.c.l.b16 %v155
  %v739 = vunpack.c.l.b16 %v156
  %v740 = vunpack.c.l.b16 %v157
  %v741 = vunpack.c.l.b16 %v158
  %v742 = vunpack.c.l.b16 %v159
  %v743 = vunpack.c.l.b16 %v160
  %v744 = vunpack.c.l.b16 %v161
  %v745 = vunpack.c.l.b16 %v162
  %v746 = vunpack.c.l.b16 %v163
  %v747 = vunpack.c.l.b16 %v164
  %v748 = vunpack.c.l.b16 %v165
  %v749 = vunpack.c.l.b16 %v166
  %v750 = vunpack.c.l.b16 %v167
  %v751 = vunpack.c.l.b16 %v168
  %v752 = vunpack.c.l.b16 %v169
  %v753 = vunpack.c.l.b16 %v170
  %v754 = vunpack.c.l.b16 %v171
  %v755 = vunpack.c.l.b16 %v172
  %v756 = vunpack.c.l.b16 %v173
  %v757 = vunpack.c.l.b16 %v174
  %v758 = vunpack.c.l.b16 %v175
  %v759 = vunpack.c.l.b16 %v176
  %v760 = vunpack.c.l.b16 %v177
  %v761 = vunpack.c.l.b16 %v178
  %v762 = vunpack.c.l.b16 %v179
  %v763 = vunpack.c.l.b16 %v180
  %v764 = vunpack.c.l.b16 %v181
  %v765 = vunpack.c.l.b16 %v182
  %v766 = vunpack.c.l.b16 %v183
  %v767 = vunpack.c.l.b16 %v184
  %v768 = vunpack.c.l.b16 %v185
  %v769 = vunpack.c.l.b16 %v186
  %v770 = vunpack.c.l.b16 %v187
  %v771 = vunpack.c.l.b16 %v188
  %v772 = vunpack.c.l.b16 %v189
  %v773 = vunpack.c.l.b16 %v190
  %v774 = vunpack.c.l.b16 %v191
  %v775 = vunpack.c.l.b16 %v192
  %v776 = vunpack.c.l.b16 %v193
  %v777 = vunpack.c.l.b16 %v194
  %v778 = vunpack.c.l.b16 %v195
  %v779 = vunpack.c.l.b16 %v196
  %v780 = vunpack.c.l.b16 %v197
  %v781 = vunpack.c.l.b16 %v198
  %v782 = vunpack.c.l.b16 %v199
  %v783 = vunpack.c.l.b16 %v200
  %v784 = vunpack.c.l.b16 %v201
  %v785 = vunpack.c.l.b16 %v202
  %v786 = vunpack.c.l.b16 %v203
  %v787 = vunpack.c.l.b16 %v204
  %v788 = vunpack.c.l.b16 %v205
  %v789 = vunpack.c.l.b16 %v206
  %v790 = vpack.c.b16 %v663, %v662
  %v791 = vpack.c.b16 %v665, %v664
  %v792 = vpack.c.b16 %v667, %v666
  %v793 = vpack.c.b16 %v669, %v668
  %v794 = vpack.c.b16 %v671, %v670
  %v795 = vpack.c.b16 %v673, %v672
  %v796 = vpack.c.b16 %v675, %v674
  %v797 = vpack.c.b16 %v677, %v676
  %v798 = vpack.c.b16 %v679, %v678
  %v799 = vpack.c.b16 %v681, %v680
  %v800 = vpack.c.b16 %v683, %v682
  %v801 = vpack.c.b16 %v685, %v684
  %v802 = vpack.c.b16 %v687, %v686
  %v803 = vpack.c.b16 %v689, %v688
  %v804 = vpack.c.b16 %v691, %v690
  %v805 = vpack.c.b16 %v693, %v692
  %v806 = vpack.c.b16 %v695, %v694
  %v807 = vpack.c.b16 %v697, %v696
  %v808 = vpack.c.b16 %v699, %v698
  %v809 = vpack.c.b16 %v701, %v700
  %v810 = vpack.c.b16 %v703, %v702
  %v811 = vpack.c.b16 %v705, %v704
  %v812 = vpack.c.b16 %v707, %v706
  %v813 = vpack.c.b16 %v709, %v708
  %v814 = vpack.c.b16 %v711, %v710
  %v815 = vpack.c.b16 %v713, %v712
  %v816 = vpack.c.b16 %v715, %v714
  %v817 = vpack.c.b16 %v717, %v716
  %v818 = vpack.c.b16 %v719, %v718
  %v819 = vpack.c.b16 %v721, %v720
  %v820 = vpack.c.b16 %v723, %v722
  %v821 = vpack.c.b16 %v725, %v724
  %v822 = vpack.c.b16 %v727, %v726
  %v823 = vpack.c.b16 %v729, %v728
  %v824 = vpack.c.b16 %v731, %v730
  %v825 = vpack.c.b16 %v733, %v732
  %v826 = vpack.c.b16 %v735, %v734
  %v827 = vpack.c.b16 %v737, %v736
  %v828 = vpack.c.b16 %v739, %v738
  %v829 = vpack.c.b16 %v741, %v740
  %v830 = vpack.c.b16 %v743, %v742
  %v831 = vpack.c.b16 %v745, %v744
  %v832 = vpack.c.b16 %v747, %v746
  %v833 = vpack.c.b16 %v749, %v748
  %v834 = vpack.c.b16 %v751, %v750
  %v835 = vpack.c.b16 %v753, %v752
  %v836 = vpack.c.b16 %v755, %v754
  %v837 = vpack.c.b16 %v757, %v756
  %v838 = vpack.c.b16 %v759, %v758
  %v839 = vpack.c.b16 %v761, %v760
  %v840 = vpack.c.b16 %v763, %v762
  %v841 = vpack.c.b16 %v765, %v764
  %v842 = vpack.c.b16 %v767, %v766
  %v843 = vpack.c.b16 %v769, %v768
  %v844 = vpack.c.b16 %v771, %v770
  %v845 = vpack.c.b16 %v773, %v772
  %v846 = vpack.c.b16 %v775, %v774
  %v847 = vpack.c.b16 %v777, %v776
  %v848 = vpack.c.b16 %v779, %v778
  %v849 = vpack.c.b16 %v781, %v780
  %v850 = vpack.c.b16 %v783, %v782
  %v851 = vpack.c.b16 %v785, %v784
  %v852 = vpack.c.b16 %v787, %v786
  %v853 = vpack.c.b16 %v789, %v788
  %918 = vmatprep.subr.bf16.mxu0 0
  %919 = vmatpush1.bf16.msra.mxu0 %v790
  %920 = vmatprep.subr.bf16.mxu0 0
  %921 = vmatpush1.bf16.msra.mxu0 %v791
  %922 = vmatprep.subr.bf16.mxu0 0
  %923 = vmatpush1.bf16.msra.mxu0 %v792
  %924 = vmatprep.subr.bf16.mxu0 0
  %925 = vmatpush1.bf16.msra.mxu0 %v793
  %926 = vmatprep.subr.bf16.mxu0 0
  %927 = vmatpush1.bf16.msra.mxu0 %v794
  %928 = vmatprep.subr.bf16.mxu0 0
  %929 = vmatpush1.bf16.msra.mxu0 %v795
  %930 = vmatprep.subr.bf16.mxu0 0
  %931 = vmatpush1.bf16.msra.mxu0 %v796
  %932 = vmatprep.subr.bf16.mxu0 0
  %933 = vmatpush1.bf16.msra.mxu0 %v797
  %934 = vmatprep.subr.bf16.mxu0 0
  %935 = vmatpush1.bf16.msra.mxu0 %v798
  %936 = vmatprep.subr.bf16.mxu0 0
  %937 = vmatpush1.bf16.msra.mxu0 %v799
  %938 = vmatprep.subr.bf16.mxu0 0
  %939 = vmatpush1.bf16.msra.mxu0 %v800
  %940 = vmatprep.subr.bf16.mxu0 0
  %941 = vmatpush1.bf16.msra.mxu0 %v801
  %942 = vmatprep.subr.bf16.mxu0 0
  %943 = vmatpush1.bf16.msra.mxu0 %v802
  %944 = vmatprep.subr.bf16.mxu0 0
  %945 = vmatpush1.bf16.msra.mxu0 %v803
  %946 = vmatprep.subr.bf16.mxu0 0
  %947 = vmatpush1.bf16.msra.mxu0 %v804
  %948 = vmatprep.subr.bf16.mxu0 0
  %949 = vmatpush1.bf16.msra.mxu0 %v805
  %950 = vmatprep.mubr.bf16.mxu0 %v407
  %951 = vmatmul.mubr.bf16.gmra.mrb[0].mxu0 %v406
  %v952 = vpop.f32.mrb[0].mxu0
  %v953 = vadd.f32 %v212, %v952
  %v954 = vpop.f32.mrb[0].mxu0
  %v955 = vpop.f32.mrb[0].mxu0
  %v956 = vadd.f32 %v212, %v955
  %v957 = vpop.f32.mrb[0].mxu0
  %958 = vmatprep.mubr.bf16.mxu0 %v415
  %959 = vmatmul.mubr.bf16.gmra.mrb[0].mxu0 %v414
  %v960 = vpop.f32.mrb[0].mxu0
  %v961 = vadd.f32 %v212, %v960
  %v962 = vpop.f32.mrb[0].mxu0
  %v963 = vpop.f32.mrb[0].mxu0
  %v964 = vadd.f32 %v212, %v963
  %v965 = vpop.f32.mrb[0].mxu0
  %966 = vmatprep.mubr.bf16.mxu0 %v423
  %967 = vmatmul.mubr.bf16.gmra.mrb[0].mxu0 %v422
  %v968 = vpop.f32.mrb[0].mxu0
  %v969 = vadd.f32 %v212, %v968
  %v970 = vpop.f32.mrb[0].mxu0
  %v971 = vpop.f32.mrb[0].mxu0
  %v972 = vadd.f32 %v212, %v971
  %v973 = vpop.f32.mrb[0].mxu0
  %974 = vmatprep.mubr.bf16.mxu0 %v431
  %975 = vmatmul.mubr.bf16.gmra.mrb[0].mxu0 %v430
  %v976 = vpop.f32.mrb[0].mxu0
  %v977 = vadd.f32 %v212, %v976
  %v978 = vpop.f32.mrb[0].mxu0
  %v979 = vpop.f32.mrb[0].mxu0
  %v980 = vadd.f32 %v212, %v979
  %v981 = vpop.f32.mrb[0].mxu0
  %982 = vmatprep.mubr.bf16.mxu0 %v439
  %983 = vmatmul.mubr.bf16.gmra.mrb[0].mxu0 %v438
  %v984 = vpop.f32.mrb[0].mxu0
  %v985 = vadd.f32 %v212, %v984
  %v986 = vpop.f32.mrb[0].mxu0
  %v987 = vpop.f32.mrb[0].mxu0
  %v988 = vadd.f32 %v212, %v987
  %v989 = vpop.f32.mrb[0].mxu0
  %990 = vmatprep.mubr.bf16.mxu0 %v447
  %991 = vmatmul.mubr.bf16.gmra.mrb[0].mxu0 %v446
  %v992 = vpop.f32.mrb[0].mxu0
  %v993 = vadd.f32 %v212, %v992
  %v994 = vpop.f32.mrb[0].mxu0
  %v995 = vpop.f32.mrb[0].mxu0
  %v996 = vadd.f32 %v212, %v995
  %v997 = vpop.f32.mrb[0].mxu0
  %998 = vmatprep.mubr.bf16.mxu0 %v455
  %999 = vmatmul.mubr.bf16.gmra.mrb[0].mxu0 %v454
  %v1000 = vpop.f32.mrb[0].mxu0
  %v1001 = vadd.f32 %v212, %v1000
  %v1002 = vpop.f32.mrb[0].mxu0
  %v1003 = vpop.f32.mrb[0].mxu0
  %v1004 = vadd.f32 %v212, %v1003
  %v1005 = vpop.f32.mrb[0].mxu0
  %1006 = vmatprep.mubr.bf16.mxu0 %v463
  %1007 = vmatmul.mubr.bf16.gmra.mrb[0].mxu0 %v462
  %v1008 = vpop.f32.mrb[0].mxu0
  %v1009 = vadd.f32 %v212, %v1008
  %v1010 = vpop.f32.mrb[0].mxu0
  %v1011 = vpop.f32.mrb[0].mxu0
  %v1012 = vadd.f32 %v212, %v1011
  %v1013 = vpop.f32.mrb[0].mxu0
  %1014 = vdwg.mxu0
  %1015 = vmatprep.subr.bf16.mxu0 0
  %1016 = vmatpush1.bf16.msra.mxu0 %v806
  %1017 = vmatprep.subr.bf16.mxu0 0
  %1018 = vmatpush1.bf16.msra.mxu0 %v807
  %1019 = vmatprep.subr.bf16.mxu0 0
  %1020 = vmatpush1.bf16.msra.mxu0 %v808
  %1021 = vmatprep.subr.bf16.mxu0 0
  %1022 = vmatpush1.bf16.msra.mxu0 %v809
  %1023 = vmatprep.subr.bf16.mxu0 0
  %1024 = vmatpush1.bf16.msra.mxu0 %v810
  %1025 = vmatprep.subr.bf16.mxu0 0
  %1026 = vmatpush1.bf16.msra.mxu0 %v811
  %1027 = vmatprep.subr.bf16.mxu0 0
  %1028 = vmatpush1.bf16.msra.mxu0 %v812
  %1029 = vmatprep.subr.bf16.mxu0 0
  %1030 = vmatpush1.bf16.msra.mxu0 %v813
  %1031 = vmatprep.subr.bf16.mxu0 0
  %1032 = vmatpush1.bf16.msra.mxu0 %v814
  %1033 = vmatprep.subr.bf16.mxu0 0
  %1034 = vmatpush1.bf16.msra.mxu0 %v815
  %1035 = vmatprep.subr.bf16.mxu0 0
  %1036 = vmatpush1.bf16.msra.mxu0 %v816
  %1037 = vmatprep.subr.bf16.mxu0 0
  %1038 = vmatpush1.bf16.msra.mxu0 %v817
  %1039 = vmatprep.subr.bf16.mxu0 0
  %1040 = vmatpush1.bf16.msra.mxu0 %v818
  %1041 = vmatprep.subr.bf16.mxu0 0
  %1042 = vmatpush1.bf16.msra.mxu0 %v819
  %1043 = vmatprep.subr.bf16.mxu0 0
  %1044 = vmatpush1.bf16.msra.mxu0 %v820
  %1045 = vmatprep.subr.bf16.mxu0 0
  %1046 = vmatpush1.bf16.msra.mxu0 %v821
  %1047 = vmatprep.mubr.bf16.mxu0 %v409
  %1048 = vmatmul.mubr.bf16.gmra.mrb[0].mxu0 %v408
  %v1049 = vpop.f32.mrb[0].mxu0
  %v1050 = vadd.f32 %v953, %v1049
  %v1051 = vpop.f32.mrb[0].mxu0
  %v1052 = vpop.f32.mrb[0].mxu0
  %v1053 = vadd.f32 %v956, %v1052
  %v1054 = vpop.f32.mrb[0].mxu0
  %1055 = vmatprep.mubr.bf16.mxu0 %v417
  %1056 = vmatmul.mubr.bf16.gmra.mrb[0].mxu0 %v416
  %v1057 = vpop.f32.mrb[0].mxu0
  %v1058 = vadd.f32 %v961, %v1057
  %v1059 = vpop.f32.mrb[0].mxu0
  %v1060 = vpop.f32.mrb[0].mxu0
  %v1061 = vadd.f32 %v964, %v1060
  %v1062 = vpop.f32.mrb[0].mxu0
  %1063 = vmatprep.mubr.bf16.mxu0 %v425
  %1064 = vmatmul.mubr.bf16.gmra.mrb[0].mxu0 %v424
  %v1065 = vpop.f32.mrb[0].mxu0
  %v1066 = vadd.f32 %v969, %v1065
  %v1067 = vpop.f32.mrb[0].mxu0
  %v1068 = vpop.f32.mrb[0].mxu0
  %v1069 = vadd.f32 %v972, %v1068
  %v1070 = vpop.f32.mrb[0].mxu0
  %1071 = vmatprep.mubr.bf16.mxu0 %v433
  %1072 = vmatmul.mubr.bf16.gmra.mrb[0].mxu0 %v432
  %v1073 = vpop.f32.mrb[0].mxu0
  %v1074 = vadd.f32 %v977, %v1073
  %v1075 = vpop.f32.mrb[0].mxu0
  %v1076 = vpop.f32.mrb[0].mxu0
  %v1077 = vadd.f32 %v980, %v1076
  %v1078 = vpop.f32.mrb[0].mxu0
  %1079 = vmatprep.mubr.bf16.mxu0 %v441
  %1080 = vmatmul.mubr.bf16.gmra.mrb[0].mxu0 %v440
  %v1081 = vpop.f32.mrb[0].mxu0
  %v1082 = vadd.f32 %v985, %v1081
  %v1083 = vpop.f32.mrb[0].mxu0
  %v1084 = vpop.f32.mrb[0].mxu0
  %v1085 = vadd.f32 %v988, %v1084
  %v1086 = vpop.f32.mrb[0].mxu0
  %1087 = vmatprep.mubr.bf16.mxu0 %v449
  %1088 = vmatmul.mubr.bf16.gmra.mrb[0].mxu0 %v448
  %v1089 = vpop.f32.mrb[0].mxu0
  %v1090 = vadd.f32 %v993, %v1089
  %v1091 = vpop.f32.mrb[0].mxu0
  %v1092 = vpop.f32.mrb[0].mxu0
  %v1093 = vadd.f32 %v996, %v1092
  %v1094 = vpop.f32.mrb[0].mxu0
  %1095 = vmatprep.mubr.bf16.mxu0 %v457
  %1096 = vmatmul.mubr.bf16.gmra.mrb[0].mxu0 %v456
  %v1097 = vpop.f32.mrb[0].mxu0
  %v1098 = vadd.f32 %v1001, %v1097
  %v1099 = vpop.f32.mrb[0].mxu0
  %v1100 = vpop.f32.mrb[0].mxu0
  %v1101 = vadd.f32 %v1004, %v1100
  %v1102 = vpop.f32.mrb[0].mxu0
  %1103 = vmatprep.mubr.bf16.mxu0 %v465
  %1104 = vmatmul.mubr.bf16.gmra.mrb[0].mxu0 %v464
  %v1105 = vpop.f32.mrb[0].mxu0
  %v1106 = vadd.f32 %v1009, %v1105
  %v1107 = vpop.f32.mrb[0].mxu0
  %v1108 = vpop.f32.mrb[0].mxu0
  %v1109 = vadd.f32 %v1012, %v1108
  %v1110 = vpop.f32.mrb[0].mxu0
  %1111 = vdwg.mxu0
  %1112 = vmatprep.subr.bf16.mxu0 0
  %1113 = vmatpush1.bf16.msra.mxu0 %v822
  %1114 = vmatprep.subr.bf16.mxu0 0
  %1115 = vmatpush1.bf16.msra.mxu0 %v823
  %1116 = vmatprep.subr.bf16.mxu0 0
  %1117 = vmatpush1.bf16.msra.mxu0 %v824
  %1118 = vmatprep.subr.bf16.mxu0 0
  %1119 = vmatpush1.bf16.msra.mxu0 %v825
  %1120 = vmatprep.subr.bf16.mxu0 0
  %1121 = vmatpush1.bf16.msra.mxu0 %v826
  %1122 = vmatprep.subr.bf16.mxu0 0
  %1123 = vmatpush1.bf16.msra.mxu0 %v827
  %1124 = vmatprep.subr.bf16.mxu0 0
  %1125 = vmatpush1.bf16.msra.mxu0 %v828
  %1126 = vmatprep.subr.bf16.mxu0 0
  %1127 = vmatpush1.bf16.msra.mxu0 %v829
  %1128 = vmatprep.subr.bf16.mxu0 0
  %1129 = vmatpush1.bf16.msra.mxu0 %v830
  %1130 = vmatprep.subr.bf16.mxu0 0
  %1131 = vmatpush1.bf16.msra.mxu0 %v831
  %1132 = vmatprep.subr.bf16.mxu0 0
  %1133 = vmatpush1.bf16.msra.mxu0 %v832
  %1134 = vmatprep.subr.bf16.mxu0 0
  %1135 = vmatpush1.bf16.msra.mxu0 %v833
  %1136 = vmatprep.subr.bf16.mxu0 0
  %1137 = vmatpush1.bf16.msra.mxu0 %v834
  %1138 = vmatprep.subr.bf16.mxu0 0
  %1139 = vmatpush1.bf16.msra.mxu0 %v835
  %1140 = vmatprep.subr.bf16.mxu0 0
  %1141 = vmatpush1.bf16.msra.mxu0 %v836
  %1142 = vmatprep.subr.bf16.mxu0 0
  %1143 = vmatpush1.bf16.msra.mxu0 %v837
  %1144 = vmatprep.mubr.bf16.mxu0 %v411
  %1145 = vmatmul.mubr.bf16.gmra.mrb[0].mxu0 %v410
  %v1146 = vpop.f32.mrb[0].mxu0
  %v1147 = vadd.f32 %v1050, %v1146
  %v1148 = vpop.f32.mrb[0].mxu0
  %v1149 = vpop.f32.mrb[0].mxu0
  %v1150 = vadd.f32 %v1053, %v1149
  %v1151 = vpop.f32.mrb[0].mxu0
  %1152 = vmatprep.mubr.bf16.mxu0 %v419
  %1153 = vmatmul.mubr.bf16.gmra.mrb[0].mxu0 %v418
  %v1154 = vpop.f32.mrb[0].mxu0
  %v1155 = vadd.f32 %v1058, %v1154
  %v1156 = vpop.f32.mrb[0].mxu0
  %v1157 = vpop.f32.mrb[0].mxu0
  %v1158 = vadd.f32 %v1061, %v1157
  %v1159 = vpop.f32.mrb[0].mxu0
  %1160 = vmatprep.mubr.bf16.mxu0 %v427
  %1161 = vmatmul.mubr.bf16.gmra.mrb[0].mxu0 %v426
  %v1162 = vpop.f32.mrb[0].mxu0
  %v1163 = vadd.f32 %v1066, %v1162
  %v1164 = vpop.f32.mrb[0].mxu0
  %v1165 = vpop.f32.mrb[0].mxu0
  %v1166 = vadd.f32 %v1069, %v1165
  %v1167 = vpop.f32.mrb[0].mxu0
  %1168 = vmatprep.mubr.bf16.mxu0 %v435
  %1169 = vmatmul.mubr.bf16.gmra.mrb[0].mxu0 %v434
  %v1170 = vpop.f32.mrb[0].mxu0
  %v1171 = vadd.f32 %v1074, %v1170
  %v1172 = vpop.f32.mrb[0].mxu0
  %v1173 = vpop.f32.mrb[0].mxu0
  %v1174 = vadd.f32 %v1077, %v1173
  %v1175 = vpop.f32.mrb[0].mxu0
  %1176 = vmatprep.mubr.bf16.mxu0 %v443
  %1177 = vmatmul.mubr.bf16.gmra.mrb[0].mxu0 %v442
  %v1178 = vpop.f32.mrb[0].mxu0
  %v1179 = vadd.f32 %v1082, %v1178
  %v1180 = vpop.f32.mrb[0].mxu0
  %v1181 = vpop.f32.mrb[0].mxu0
  %v1182 = vadd.f32 %v1085, %v1181
  %v1183 = vpop.f32.mrb[0].mxu0
  %1184 = vmatprep.mubr.bf16.mxu0 %v451
  %1185 = vmatmul.mubr.bf16.gmra.mrb[0].mxu0 %v450
  %v1186 = vpop.f32.mrb[0].mxu0
  %v1187 = vadd.f32 %v1090, %v1186
  %v1188 = vpop.f32.mrb[0].mxu0
  %v1189 = vpop.f32.mrb[0].mxu0
  %v1190 = vadd.f32 %v1093, %v1189
  %v1191 = vpop.f32.mrb[0].mxu0
  %1192 = vmatprep.mubr.bf16.mxu0 %v459
  %1193 = vmatmul.mubr.bf16.gmra.mrb[0].mxu0 %v458
  %v1194 = vpop.f32.mrb[0].mxu0
  %v1195 = vadd.f32 %v1098, %v1194
  %v1196 = vpop.f32.mrb[0].mxu0
  %v1197 = vpop.f32.mrb[0].mxu0
  %v1198 = vadd.f32 %v1101, %v1197
  %v1199 = vpop.f32.mrb[0].mxu0
  %1200 = vmatprep.mubr.bf16.mxu0 %v467
  %1201 = vmatmul.mubr.bf16.gmra.mrb[0].mxu0 %v466
  %v1202 = vpop.f32.mrb[0].mxu0
  %v1203 = vadd.f32 %v1106, %v1202
  %v1204 = vpop.f32.mrb[0].mxu0
  %v1205 = vpop.f32.mrb[0].mxu0
  %v1206 = vadd.f32 %v1109, %v1205
  %v1207 = vpop.f32.mrb[0].mxu0
  %1208 = vdwg.mxu0
  %1209 = vmatprep.subr.bf16.mxu0 0
  %1210 = vmatpush1.bf16.msra.mxu0 %v838
  %1211 = vmatprep.subr.bf16.mxu0 0
  %1212 = vmatpush1.bf16.msra.mxu0 %v839
  %1213 = vmatprep.subr.bf16.mxu0 0
  %1214 = vmatpush1.bf16.msra.mxu0 %v840
  %1215 = vmatprep.subr.bf16.mxu0 0
  %1216 = vmatpush1.bf16.msra.mxu0 %v841
  %1217 = vmatprep.subr.bf16.mxu0 0
  %1218 = vmatpush1.bf16.msra.mxu0 %v842
  %1219 = vmatprep.subr.bf16.mxu0 0
  %1220 = vmatpush1.bf16.msra.mxu0 %v843
  %1221 = vmatprep.subr.bf16.mxu0 0
  %1222 = vmatpush1.bf16.msra.mxu0 %v844
  %1223 = vmatprep.subr.bf16.mxu0 0
  %1224 = vmatpush1.bf16.msra.mxu0 %v845
  %1225 = vmatprep.subr.bf16.mxu0 0
  %1226 = vmatpush1.bf16.msra.mxu0 %v846
  %1227 = vmatprep.subr.bf16.mxu0 0
  %1228 = vmatpush1.bf16.msra.mxu0 %v847
  %1229 = vmatprep.subr.bf16.mxu0 0
  %1230 = vmatpush1.bf16.msra.mxu0 %v848
  %1231 = vmatprep.subr.bf16.mxu0 0
  %1232 = vmatpush1.bf16.msra.mxu0 %v849
  %1233 = vmatprep.subr.bf16.mxu0 0
  %1234 = vmatpush1.bf16.msra.mxu0 %v850
  %1235 = vmatprep.subr.bf16.mxu0 0
  %1236 = vmatpush1.bf16.msra.mxu0 %v851
  %1237 = vmatprep.subr.bf16.mxu0 0
  %1238 = vmatpush1.bf16.msra.mxu0 %v852
  %1239 = vmatprep.subr.bf16.mxu0 0
  %1240 = vmatpush1.bf16.msra.mxu0 %v853
  %1241 = vmatprep.mubr.bf16.mxu0 %v413
  %1242 = vmatmul.mubr.bf16.gmra.mrb[0].mxu0 %v412
  %v1243 = vpop.f32.mrb[0].mxu0
  %v1244 = vadd.f32 %v1147, %v1243
  %v1245 = vpop.f32.mrb[0].mxu0
  %v1246 = vpop.f32.mrb[0].mxu0
  %v1247 = vadd.f32 %v1150, %v1246
  %v1248 = vpop.f32.mrb[0].mxu0
  %1249 = vmatprep.mubr.bf16.mxu0 %v421
  %1250 = vmatmul.mubr.bf16.gmra.mrb[0].mxu0 %v420
  %v1251 = vpop.f32.mrb[0].mxu0
  %v1252 = vadd.f32 %v1155, %v1251
  %v1253 = vpop.f32.mrb[0].mxu0
  %v1254 = vpop.f32.mrb[0].mxu0
  %v1255 = vadd.f32 %v1158, %v1254
  %v1256 = vpop.f32.mrb[0].mxu0
  %1257 = vmatprep.mubr.bf16.mxu0 %v429
  %1258 = vmatmul.mubr.bf16.gmra.mrb[0].mxu0 %v428
  %v1259 = vpop.f32.mrb[0].mxu0
  %v1260 = vadd.f32 %v1163, %v1259
  %v1261 = vpop.f32.mrb[0].mxu0
  %v1262 = vpop.f32.mrb[0].mxu0
  %v1263 = vadd.f32 %v1166, %v1262
  %v1264 = vpop.f32.mrb[0].mxu0
  %1265 = vmatprep.mubr.bf16.mxu0 %v437
  %1266 = vmatmul.mubr.bf16.gmra.mrb[0].mxu0 %v436
  %v1267 = vpop.f32.mrb[0].mxu0
  %v1268 = vadd.f32 %v1171, %v1267
  %v1269 = vpop.f32.mrb[0].mxu0
  %v1270 = vpop.f32.mrb[0].mxu0
  %v1271 = vadd.f32 %v1174, %v1270
  %v1272 = vpop.f32.mrb[0].mxu0
  %1273 = vmatprep.mubr.bf16.mxu0 %v445
  %1274 = vmatmul.mubr.bf16.gmra.mrb[0].mxu0 %v444
  %v1275 = vpop.f32.mrb[0].mxu0
  %v1276 = vadd.f32 %v1179, %v1275
  %v1277 = vpop.f32.mrb[0].mxu0
  %v1278 = vpop.f32.mrb[0].mxu0
  %v1279 = vadd.f32 %v1182, %v1278
  %v1280 = vpop.f32.mrb[0].mxu0
  %1281 = vmatprep.mubr.bf16.mxu0 %v453
  %1282 = vmatmul.mubr.bf16.gmra.mrb[0].mxu0 %v452
  %v1283 = vpop.f32.mrb[0].mxu0
  %v1284 = vadd.f32 %v1187, %v1283
  %v1285 = vpop.f32.mrb[0].mxu0
  %v1286 = vpop.f32.mrb[0].mxu0
  %v1287 = vadd.f32 %v1190, %v1286
  %v1288 = vpop.f32.mrb[0].mxu0
  %1289 = vmatprep.mubr.bf16.mxu0 %v461
  %1290 = vmatmul.mubr.bf16.gmra.mrb[0].mxu0 %v460
  %v1291 = vpop.f32.mrb[0].mxu0
  %v1292 = vadd.f32 %v1195, %v1291
  %v1293 = vpop.f32.mrb[0].mxu0
  %v1294 = vpop.f32.mrb[0].mxu0
  %v1295 = vadd.f32 %v1198, %v1294
  %v1296 = vpop.f32.mrb[0].mxu0
  %1297 = vmatprep.mubr.bf16.mxu0 %v469
  %1298 = vmatmul.mubr.bf16.gmra.mrb[0].mxu0 %v468
  %v1299 = vpop.f32.mrb[0].mxu0
  %v1300 = vadd.f32 %v1203, %v1299
  %v1301 = vpop.f32.mrb[0].mxu0
  %v1302 = vpop.f32.mrb[0].mxu0
  %v1303 = vadd.f32 %v1206, %v1302
  %v1304 = vpop.f32.mrb[0].mxu0
  %1305 = vdwg.mxu0
  %1306 = vst [vmem:[%s3] sm:$0xff] %v1244
  %1307 = vst [vmem:[%s3 + $0x8] sm:$0xff] %v1247
  %1308 = vst [vmem:[%s3 + $0x10] sm:$0xff] %v1252
  %1309 = vst [vmem:[%s3 + $0x18] sm:$0xff] %v1255
  %1310 = vst [vmem:[%s3 + $0x20] sm:$0xff] %v1260
  %1311 = vst [vmem:[%s3 + $0x28] sm:$0xff] %v1263
  %1312 = vst [vmem:[%s3 + $0x30] sm:$0xff] %v1268
  %1313 = vst [vmem:[%s3 + $0x38] sm:$0xff] %v1271
  %1314 = vst [vmem:[%s3 + $0x40] sm:$0xff] %v1276
  %1315 = vst [vmem:[%s3 + $0x48] sm:$0xff] %v1279
  %1316 = vst [vmem:[%s3 + $0x50] sm:$0xff] %v1284
  %1317 = vst [vmem:[%s3 + $0x58] sm:$0xff] %v1287
  %1318 = vst [vmem:[%s3 + $0x60] sm:$0xff] %v1292
  %1319 = vst [vmem:[%s3 + $0x68] sm:$0xff] %v1295
  %1320 = vst [vmem:[%s3 + $0x70] sm:$0xff] %v1300
  %1321 = vst [vmem:[%s3 + $0x78] sm:$0xff] %v1303
  // Predicated region
  $region14: #{generator_forward.20} parent=0 // pred_check
    _
  $region15: #{generator_forward.20} parent=0 // pred_check_branch
    %1323 = sbr.rel (0) target = $region17
  $region16: #{generator_forward.20} parent=0 // pred_region
    _
  $region17: #{generator_forward.20} parent=0 // pred_fallthru
    _
  // Predicated region
  $region18: #{generator_forward.20} parent=0 // pred_check
    _
  $region19: #{generator_forward.20} parent=0 // pred_check_branch
    %1325 = sbr.rel (0) target = $region21
  $region20: #{generator_forward.20} parent=0 // pred_region
    _
  $region21: #{generator_forward.20} parent=0 // pred_fallthru
    _

// kernel: generator_forward.21
$region0: #{generator_forward.21}
  #allocation0 [shape = 'u32[]', space=smem, size = 0x4, offset = 0x4, fixed_abs, tag = 'smem constant byte address 0x4 - core index']
  #allocation1 [shape = 'u32[144,128]{1,0:T(1,128)}', space=vmem, size = 0x12000, scoped, tag = 'internal scratch']
  %s0 = inlined_call_operand.vmem [shape: f32[128,128], index: 0, kind: input, shape index: {}]
  %s1 = inlined_call_operand.vmem [shape: f32[1,128], index: 1, kind: input, shape index: {}]
  %s2 = inlined_call_operand.vmem [shape: f32[1,128], index: 2, kind: input, shape index: {}]
  %s3 = inlined_call_operand.vmem [shape: f32[128,128], index: 3, kind: output, shape index: {}]
  %s4 = sld [smem:[#allocation0]]
  $region22: #{generator_forward.21} parent=0
    _
  %s6 = ssub.s32 1, %s4
  %s7 = scalar_select 0, %s6, %s4
  // Predicated region
  $region2: #{generator_forward.21} parent=0 // pred_check
    _
  $region3: #{generator_forward.21} parent=0 // pred_check_branch
    %9 = sbr.rel (0) target = $region5
  $region4: #{generator_forward.21} parent=0 // pred_region
    _
  $region5: #{generator_forward.21} parent=0 // pred_fallthru
    _
  // Predicated region
  $region6: #{generator_forward.21} parent=0 // pred_check
    _
  $region7: #{generator_forward.21} parent=0 // pred_check_branch
    %11 = sbr.rel (0) target = $region9
  $region8: #{generator_forward.21} parent=0 // pred_region
    _
  $region9: #{generator_forward.21} parent=0 // pred_fallthru
    _
  // Predicated region
  $region10: #{generator_forward.21} parent=0 // pred_check
    _
  $region11: #{generator_forward.21} parent=0 // pred_check_branch
    %13 = sbr.rel (0) target = $region13
  $region12: #{generator_forward.21} parent=0 // pred_region
    _
  $region13: #{generator_forward.21} parent=0 // pred_fallthru
    _
  %v14 = vld [vmem:[%s0] sm:$0xff]
  %v15 = vld [vmem:[%s0 + $0x8] sm:$0xff]
  %v16 = vld [vmem:[%s0 + $0x10] sm:$0xff]
  %v17 = vld [vmem:[%s0 + $0x18] sm:$0xff]
  %v18 = vld [vmem:[%s0 + $0x20] sm:$0xff]
  %v19 = vld [vmem:[%s0 + $0x28] sm:$0xff]
  %v20 = vld [vmem:[%s0 + $0x30] sm:$0xff]
  %v21 = vld [vmem:[%s0 + $0x38] sm:$0xff]
  %v22 = vld [vmem:[%s0 + $0x40] sm:$0xff]
  %v23 = vld [vmem:[%s0 + $0x48] sm:$0xff]
  %v24 = vld [vmem:[%s0 + $0x50] sm:$0xff]
  %v25 = vld [vmem:[%s0 + $0x58] sm:$0xff]
  %v26 = vld [vmem:[%s0 + $0x60] sm:$0xff]
  %v27 = vld [vmem:[%s0 + $0x68] sm:$0xff]
  %v28 = vld [vmem:[%s0 + $0x70] sm:$0xff]
  %v29 = vld [vmem:[%s0 + $0x78] sm:$0xff]
  %v30 = vld [vmem:[%s1] sm:$0x1]
  %v32 = vlaneseq
  %v33 = vshrl.u32 %v32, 7
  %v34 = vsub.s32 0, %v33
  %v35 = vrot.slane %v30, %v34
  %v37 = vmul.f32 %v14, %v35
  %v38 = vmul.f32 %v15, %v35
  %v39 = vmul.f32 %v16, %v35
  %v40 = vmul.f32 %v17, %v35
  %v41 = vmul.f32 %v18, %v35
  %v42 = vmul.f32 %v19, %v35
  %v43 = vmul.f32 %v20, %v35
  %v44 = vmul.f32 %v21, %v35
  %v45 = vmul.f32 %v22, %v35
  %v46 = vmul.f32 %v23, %v35
  %v47 = vmul.f32 %v24, %v35
  %v48 = vmul.f32 %v25, %v35
  %v49 = vmul.f32 %v26, %v35
  %v50 = vmul.f32 %v27, %v35
  %v51 = vmul.f32 %v28, %v35
  %v52 = vmul.f32 %v29, %v35
  %v53 = vld [vmem:[%s2] sm:$0x1]
  %v55 = vlaneseq
  %v56 = vshrl.u32 %v55, 7
  %v57 = vsub.s32 0, %v56
  %v58 = vrot.slane %v53, %v57
  %v60 = vadd.f32 %v37, %v58
  %v61 = vadd.f32 %v38, %v58
  %v62 = vadd.f32 %v39, %v58
  %v63 = vadd.f32 %v40, %v58
  %v64 = vadd.f32 %v41, %v58
  %v65 = vadd.f32 %v42, %v58
  %v66 = vadd.f32 %v43, %v58
  %v67 = vadd.f32 %v44, %v58
  %v68 = vadd.f32 %v45, %v58
  %v69 = vadd.f32 %v46, %v58
  %v70 = vadd.f32 %v47, %v58
  %v71 = vadd.f32 %v48, %v58
  %v72 = vadd.f32 %v49, %v58
  %v73 = vadd.f32 %v50, %v58
  %v74 = vadd.f32 %v51, %v58
  %v75 = vadd.f32 %v52, %v58
  %vm76 = vcmp.ge.f32.partialorder %v60, 0.0
  %vm77 = vcmp.ge.f32.partialorder %v61, 0.0
  %vm78 = vcmp.ge.f32.partialorder %v62, 0.0
  %vm79 = vcmp.ge.f32.partialorder %v63, 0.0
  %vm80 = vcmp.ge.f32.partialorder %v64, 0.0
  %vm81 = vcmp.ge.f32.partialorder %v65, 0.0
  %vm82 = vcmp.ge.f32.partialorder %v66, 0.0
  %vm83 = vcmp.ge.f32.partialorder %v67, 0.0
  %vm84 = vcmp.ge.f32.partialorder %v68, 0.0
  %vm85 = vcmp.ge.f32.partialorder %v69, 0.0
  %vm86 = vcmp.ge.f32.partialorder %v70, 0.0
  %vm87 = vcmp.ge.f32.partialorder %v71, 0.0
  %vm88 = vcmp.ge.f32.partialorder %v72, 0.0
  %vm89 = vcmp.ge.f32.partialorder %v73, 0.0
  %vm90 = vcmp.ge.f32.partialorder %v74, 0.0
  %vm91 = vcmp.ge.f32.partialorder %v75, 0.0
  %v92 = vmul.f32 %v60, 0.01
  %v93 = vmul.f32 %v61, 0.01
  %v94 = vmul.f32 %v62, 0.01
  %v95 = vmul.f32 %v63, 0.01
  %v96 = vmul.f32 %v64, 0.01
  %v97 = vmul.f32 %v65, 0.01
  %v98 = vmul.f32 %v66, 0.01
  %v99 = vmul.f32 %v67, 0.01
  %v100 = vmul.f32 %v68, 0.01
  %v101 = vmul.f32 %v69, 0.01
  %v102 = vmul.f32 %v70, 0.01
  %v103 = vmul.f32 %v71, 0.01
  %v104 = vmul.f32 %v72, 0.01
  %v105 = vmul.f32 %v73, 0.01
  %v106 = vmul.f32 %v74, 0.01
  %v107 = vmul.f32 %v75, 0.01
  %v108 = vsel %vm76, %v60, %v92
  %v109 = vsel %vm77, %v61, %v93
  %v110 = vsel %vm78, %v62, %v94
  %v111 = vsel %vm79, %v63, %v95
  %v112 = vsel %vm80, %v64, %v96
  %v113 = vsel %vm81, %v65, %v97
  %v114 = vsel %vm82, %v66, %v98
  %v115 = vsel %vm83, %v67, %v99
  %v116 = vsel %vm84, %v68, %v100
  %v117 = vsel %vm85, %v69, %v101
  %v118 = vsel %vm86, %v70, %v102
  %v119 = vsel %vm87, %v71, %v103
  %v120 = vsel %vm88, %v72, %v104
  %v121 = vsel %vm89, %v73, %v105
  %v122 = vsel %vm90, %v74, %v106
  %v123 = vsel %vm91, %v75, %v107
  %124 = vst [vmem:[%s3] sm:$0xff] %v108
  %125 = vst [vmem:[%s3 + $0x8] sm:$0xff] %v109
  %126 = vst [vmem:[%s3 + $0x10] sm:$0xff] %v110
  %127 = vst [vmem:[%s3 + $0x18] sm:$0xff] %v111
  %128 = vst [vmem:[%s3 + $0x20] sm:$0xff] %v112
  %129 = vst [vmem:[%s3 + $0x28] sm:$0xff] %v113
  %130 = vst [vmem:[%s3 + $0x30] sm:$0xff] %v114
  %131 = vst [vmem:[%s3 + $0x38] sm:$0xff] %v115
  %132 = vst [vmem:[%s3 + $0x40] sm:$0xff] %v116
  %133 = vst [vmem:[%s3 + $0x48] sm:$0xff] %v117
  %134 = vst [vmem:[%s3 + $0x50] sm:$0xff] %v118
  %135 = vst [vmem:[%s3 + $0x58] sm:$0xff] %v119
  %136 = vst [vmem:[%s3 + $0x60] sm:$0xff] %v120
  %137 = vst [vmem:[%s3 + $0x68] sm:$0xff] %v121
  %138 = vst [vmem:[%s3 + $0x70] sm:$0xff] %v122
  %139 = vst [vmem:[%s3 + $0x78] sm:$0xff] %v123
  // Predicated region
  $region14: #{generator_forward.21} parent=0 // pred_check
    _
  $region15: #{generator_forward.21} parent=0 // pred_check_branch
    %141 = sbr.rel (0) target = $region17
  $region16: #{generator_forward.21} parent=0 // pred_region
    _
  $region17: #{generator_forward.21} parent=0 // pred_fallthru
    _
  // Predicated region
  $region18: #{generator_forward.21} parent=0 // pred_check
    _
  $region19: #{generator_forward.21} parent=0 // pred_check_branch
    %143 = sbr.rel (0) target = $region21
  $region20: #{generator_forward.21} parent=0 // pred_region
    _
  $region21: #{generator_forward.21} parent=0 // pred_fallthru
    _

// kernel: generator_forward.15
$region0: #{generator_forward.15}
  #allocation0 [shape = 'u32[]', space=smem, size = 0x4, offset = 0x4, fixed_abs, tag = 'smem constant byte address 0x4 - core index']
  #allocation1 [shape = 'u32[144,128]{1,0:T(1,128)}', space=vmem, size = 0x12000, scoped, tag = 'internal scratch']
  %s0 = inlined_call_operand.vmem [shape: bf16[128,256], index: 0, kind: input, shape index: {}]
  %s1 = inlined_call_operand.vmem [shape: bf16[256,512], index: 1, kind: input, shape index: {}]
  %s2 = inlined_call_operand.vmem [shape: f32[1,512], index: 2, kind: input, shape index: {}]
  %s3 = inlined_call_operand.vmem [shape: f32[128,512], index: 3, kind: output, shape index: {}]
  %s4 = sld [smem:[#allocation0]]
  $region102: #{generator_forward.15} parent=0
    _
  %s6 = ssub.s32 1, %s4
  %s7 = scalar_select 0, %s6, %s4
  $region1: #{generator_forward.15} parent=0
    #allocation2 [shape = 'u8[262144]{0}', space=vmem, size = 0x40000, scoped, tag = 'input window, operand 1']
    #allocation3 [shape = 'u8[262144]{0}', space=vmem, size = 0x40000, scoped, tag = 'output window, operand 0']
    loop: start=0, step=1, limit=4
    $region2: #{generator_forward.15} parent=1 // loop_pre_header
      _
    $region3: #{generator_forward.15} parent=1 // loop_header
      %s9 = sphi 0, %s13
      %p10 = scmp.ge.s32.totalorder %s9, 4
      %s16 = sphi 0, %s28
      %s17 = sphi 0, %s24
      %s18 = sphi 0, %s16
      %s19 = sphi 0, %s17
      %s20 = sphi 0, %s18
      %s21 = sphi 0, %s19
      %s31 = sphi 0, %s33
      %s34 = sphi 0, %s31
      %s35 = sphi 0, %s34
      %s51 = sphi 0, %s35
      %s57 = sphi 0, %s59
      %s60 = sphi 0, %s57
      %s61 = sphi 0, %s60
      %s77 = sphi 0, %s61
      %s83 = sphi 0, %s85
      %s86 = sphi 0, %s83
      %s87 = sphi 0, %s86
      %s103 = sphi 0, %s87
      %s111 = sphi 0, %s113
      %s114 = sphi 0, %s111
      %s115 = sphi 0, %s114
      %s131 = sphi 0, %s115
    $region4: #{generator_forward.15} parent=1 // loop_header_branch
      %12 = sbr.rel (%p10) target = $region8
    $region5: #{generator_forward.15} parent=1 // loop_body
      %s14 = ssub.s32 %s9, 1
      %s15 = ssub.s32 %s9, 2
      %s22 = sadd.s32 1, %s17
      %p23 = scmp.ge.s32.totalorder %s22, 2
      %s24 = scalar_select %p23, 0, %s22
      %s25 = sadd.s32 1, %s16
      %s26 = scalar_select %p23, %s25, %s16
      %p27 = scmp.ge.s32.totalorder %s26, 1
      %s28 = scalar_select %p27, 0, %s26
      %s29 = ssub.s32 %s16, %s28
      %p30 = scmp.eq.s32.totalorder %s29, 0
      %s32 = sadd.s32 %s31, 1
      %s33 = scalar_select %p30, %s31, %s32
      %p36 = pneg %p30
      %p37 = scmp.eq.s32.totalorder %s9, 1
      %p38 = por %p36, %p37
      %p39 = scmp.ne.s32.totalorder %s31, %s34
      %p40 = scmp.eq.s32.totalorder %s9, 0
      %p41 = por %p39, %p40
      %p42 = scmp.ne.s32.totalorder %s31, %s34
      %p43 = scmp.eq.s32.totalorder %s14, 1
      %p44 = por %p42, %p43
      %p45 = scmp.ne.s32.totalorder %s34, %s35
      %p46 = scmp.eq.s32.totalorder %s14, 0
      %p47 = por %p45, %p46
      %p48 = scmp.ne.s32.totalorder %s34, %s35
      %p49 = scmp.eq.s32.totalorder %s15, 1
      %p50 = por %p48, %p49
      %p52 = scmp.ne.s32.totalorder %s35, %s51
      %p53 = scmp.eq.s32.totalorder %s15, 0
      %p54 = por %p52, %p53
      %s55 = ssub.s32 %s17, %s24
      %p56 = scmp.eq.s32.totalorder %s55, 0
      %s58 = sadd.s32 %s57, 1
      %s59 = scalar_select %p56, %s57, %s58
      %p62 = pneg %p56
      %p63 = scmp.eq.s32.totalorder %s9, 1
      %p64 = por %p62, %p63
      %p65 = scmp.ne.s32.totalorder %s57, %s60
      %p66 = scmp.eq.s32.totalorder %s9, 0
      %p67 = por %p65, %p66
      %p68 = scmp.ne.s32.totalorder %s57, %s60
      %p69 = scmp.eq.s32.totalorder %s14, 1
      %p70 = por %p68, %p69
      %p71 = scmp.ne.s32.totalorder %s60, %s61
      %p72 = scmp.eq.s32.totalorder %s14, 0
      %p73 = por %p71, %p72
      %p74 = scmp.ne.s32.totalorder %s60, %s61
      %p75 = scmp.eq.s32.totalorder %s15, 1
      %p76 = por %p74, %p75
      %p78 = scmp.ne.s32.totalorder %s61, %s77
      %p79 = scmp.eq.s32.totalorder %s15, 0
      %p80 = por %p78, %p79
      %s81 = ssub.s32 %s17, %s24
      %p82 = scmp.eq.s32.totalorder %s81, 0
      %s84 = sadd.s32 %s83, 1
      %s85 = scalar_select %p82, %s83, %s84
      %p88 = pneg %p82
      %p89 = scmp.eq.s32.totalorder %s9, 1
      %p90 = por %p88, %p89
      %p91 = scmp.ne.s32.totalorder %s83, %s86
      %p92 = scmp.eq.s32.totalorder %s9, 0
      %p93 = por %p91, %p92
      %p94 = scmp.ne.s32.totalorder %s83, %s86
      %p95 = scmp.eq.s32.totalorder %s14, 1
      %p96 = por %p94, %p95
      %p97 = scmp.ne.s32.totalorder %s86, %s87
      %p98 = scmp.eq.s32.totalorder %s14, 0
      %p99 = por %p97, %p98
      %p100 = scmp.ne.s32.totalorder %s86, %s87
      %p101 = scmp.eq.s32.totalorder %s15, 1
      %p102 = por %p100, %p101
      %p104 = scmp.ne.s32.totalorder %s87, %s103
      %p105 = scmp.eq.s32.totalorder %s15, 0
      %p106 = por %p104, %p105
      %s107 = ssub.s32 %s16, %s28
      %s108 = ssub.s32 %s17, %s24
      %s109 = sor.u32 %s107, %s108
      %p110 = scmp.eq.s32.totalorder %s109, 0
      %s112 = sadd.s32 %s111, 1
      %s113 = scalar_select %p110, %s111, %s112
      %p116 = pneg %p110
      %p117 = scmp.eq.s32.totalorder %s9, 1
      %p118 = por %p116, %p117
      %p119 = scmp.ne.s32.totalorder %s111, %s114
      %p120 = scmp.eq.s32.totalorder %s9, 0
      %p121 = por %p119, %p120
      %p122 = scmp.ne.s32.totalorder %s111, %s114
      %p123 = scmp.eq.s32.totalorder %s14, 1
      %p124 = por %p122, %p123
      %p125 = scmp.ne.s32.totalorder %s114, %s115
      %p126 = scmp.eq.s32.totalorder %s14, 0
      %p127 = por %p125, %p126
      %p128 = scmp.ne.s32.totalorder %s114, %s115
      %p129 = scmp.eq.s32.totalorder %s15, 1
      %p130 = por %p128, %p129
      %p132 = scmp.ne.s32.totalorder %s115, %s131
      %p133 = scmp.eq.s32.totalorder %s15, 0
      %p134 = por %p132, %p133
      %p135 = scmp.le.s32.totalorder 1, %s9
      %p136 = scmp.lt.s32.totalorder %s9, 3
      %p137 = pnand %p135, %p136
      %p138 = pneg %p137
      // Predicated region
      $region9: #{generator_forward.15} parent=5 // pred_check
        _
      $region10: #{generator_forward.15} parent=5 // pred_check_branch
        %140 = sbr.rel (%p137) target = $region12
      $region11: #{generator_forward.15} parent=5 // pred_region
        %s141 = ssub.s32 %s9, 1
        // Predicated region
        $region13: #{generator_forward.15} parent=11 // pred_check
          %p142 = pneg %p47
        $region14: #{generator_forward.15} parent=11 // pred_check_branch
          %144 = sbr.rel (%p142) target = $region16
        $region15: #{generator_forward.15} parent=11 // pred_region
          %s145 = smul.u32 16, %s18
          %p146 = scmp.lt.s32.totalorder %s145, 15
          %s147 = scalar_select %p146, %s145, 15
          %s148 = smul.addr %s147, 2
          %s149 = smul.addr %s148, 4
          %s150 = scalar_lea.vmem %s0, %s149
          %s151 = smul.u32 16, %s18
        $region16: #{generator_forward.15} parent=11 // pred_fallthru
          _
      $region12: #{generator_forward.15} parent=5 // pred_fallthru
        _
      %p152 = scmp.lt.s32.totalorder %s9, 2
      // Predicated region
      $region17: #{generator_forward.15} parent=5 // pred_check
        %p153 = pneg %p152
      $region18: #{generator_forward.15} parent=5 // pred_check_branch
        %155 = sbr.rel (%p153) target = $region20
      $region19: #{generator_forward.15} parent=5 // pred_region
        // Predicated region
        $region21: #{generator_forward.15} parent=19 // pred_check
          %p156 = pneg %p67
        $region22: #{generator_forward.15} parent=19 // pred_check_branch
          %158 = sbr.rel (%p156) target = $region24
        $region23: #{generator_forward.15} parent=19 // pred_region
          %s159 = sand.u32 %s57, 1
          %s160 = sand.u32 %s57, 1
          %s161 = smul.addr %s160, 256
          %s162 = scalar_lea.vmem [#allocation2], %s161
          %s163 = smul.u32 2, %s17
          %s164 = smul.addr %s163, 4
          %s165 = scalar_lea.vmem %s1, %s164
          // Predicated region
          $region25: #{generator_forward.15} parent=23 // pred_check
            _
          $region26: #{generator_forward.15} parent=23 // pred_check_branch
            %167 = sbr.rel (0) target = $region28
          $region27: #{generator_forward.15} parent=23 // pred_region
            // Predicated region
            $region29: #{generator_forward.15} parent=27 // pred_check
              _
            $region30: #{generator_forward.15} parent=27 // pred_check_branch
              %169 = sbr.rel (0) target = $region32
            $region31: #{generator_forward.15} parent=27 // pred_region
              // Predicated region
              $region44: #{generator_forward.15} parent=31 // pred_check
                _
              $region45: #{generator_forward.15} parent=31 // pred_check_branch
                %246 = sbr.rel (0) target = $region47
              $region46: #{generator_forward.15} parent=31 // pred_region
                loop: start=0, step=1, limit=1
                $region48: #{generator_forward.15} parent=46 // loop_pre_header
                  _
                $region49: #{generator_forward.15} parent=46 // loop_header
                  %s248 = sphi 0, %s252
                  %p249 = scmp.ge.s32.totalorder %s248, 1
                  %s253 = sphi %s165, %s165
                  %s254 = sphi %s162, %s162
                $region50: #{generator_forward.15} parent=46 // loop_header_branch
                  %251 = sbr.rel (%p249) target = $region54
                $region51: #{generator_forward.15} parent=46 // loop_body
                  %v255 = vld [vmem:[%s253] sm:$0xff]
                  %256 = vst [vmem:[%s254] sm:$0xff] %v255
                  %v257 = vld [vmem:[%s253 + $0x10] sm:$0xff]
                  %258 = vst [vmem:[%s254 + $0x8] sm:$0xff] %v257
                  %v259 = vld [vmem:[%s253 + $0x20] sm:$0xff]
                  %260 = vst [vmem:[%s254 + $0x10] sm:$0xff] %v259
                  %v261 = vld [vmem:[%s253 + $0x30] sm:$0xff]
                  %262 = vst [vmem:[%s254 + $0x18] sm:$0xff] %v261
                  %v263 = vld [vmem:[%s253 + $0x40] sm:$0xff]
                  %264 = vst [vmem:[%s254 + $0x20] sm:$0xff] %v263
                  %v265 = vld [vmem:[%s253 + $0x50] sm:$0xff]
                  %266 = vst [vmem:[%s254 + $0x28] sm:$0xff] %v265
                  %v267 = vld [vmem:[%s253 + $0x60] sm:$0xff]
                  %268 = vst [vmem:[%s254 + $0x30] sm:$0xff] %v267
                  %v269 = vld [vmem:[%s253 + $0x70] sm:$0xff]
                  %270 = vst [vmem:[%s254 + $0x38] sm:$0xff] %v269
                  %v271 = vld [vmem:[%s253 + $0x80] sm:$0xff]
                  %272 = vst [vmem:[%s254 + $0x40] sm:$0xff] %v271
                  %v273 = vld [vmem:[%s253 + $0x90] sm:$0xff]
                  %274 = vst [vmem:[%s254 + $0x48] sm:$0xff] %v273
                  %v275 = vld [vmem:[%s253 + $0xa0] sm:$0xff]
                  %276 = vst [vmem:[%s254 + $0x50] sm:$0xff] %v275
                  %v277 = vld [vmem:[%s253 + $0xb0] sm:$0xff]
                  %278 = vst [vmem:[%s254 + $0x58] sm:$0xff] %v277
                  %v279 = vld [vmem:[%s253 + $0xc0] sm:$0xff]
                  %280 = vst [vmem:[%s254 + $0x60] sm:$0xff] %v279
                  %v281 = vld [vmem:[%s253 + $0xd0] sm:$0xff]
                  %282 = vst [vmem:[%s254 + $0x68] sm:$0xff] %v281
                  %v283 = vld [vmem:[%s253 + $0xe0] sm:$0xff]
                  %284 = vst [vmem:[%s254 + $0x70] sm:$0xff] %v283
                  %v285 = vld [vmem:[%s253 + $0xf0] sm:$0xff]
                  %286 = vst [vmem:[%s254 + $0x78] sm:$0xff] %v285
                  %v287 = vld [vmem:[%s253 + $0x100] sm:$0xff]
                  %288 = vst [vmem:[%s254 + $0x80] sm:$0xff] %v287
                  %v289 = vld [vmem:[%s253 + $0x110] sm:$0xff]
                  %290 = vst [vmem:[%s254 + $0x88] sm:$0xff] %v289
                  %v291 = vld [vmem:[%s253 + $0x120] sm:$0xff]
                  %292 = vst [vmem:[%s254 + $0x90] sm:$0xff] %v291
                  %v293 = vld [vmem:[%s253 + $0x130] sm:$0xff]
                  %294 = vst [vmem:[%s254 + $0x98] sm:$0xff] %v293
                  %v295 = vld [vmem:[%s253 + $0x140] sm:$0xff]
                  %296 = vst [vmem:[%s254 + $0xa0] sm:$0xff] %v295
                  %v297 = vld [vmem:[%s253 + $0x150] sm:$0xff]
                  %298 = vst [vmem:[%s254 + $0xa8] sm:$0xff] %v297
                  %v299 = vld [vmem:[%s253 + $0x160] sm:$0xff]
                  %300 = vst [vmem:[%s254 + $0xb0] sm:$0xff] %v299
                  %v301 = vld [vmem:[%s253 + $0x170] sm:$0xff]
                  %302 = vst [vmem:[%s254 + $0xb8] sm:$0xff] %v301
                  %v303 = vld [vmem:[%s253 + $0x180] sm:$0xff]
                  %304 = vst [vmem:[%s254 + $0xc0] sm:$0xff] %v303
                  %v305 = vld [vmem:[%s253 + $0x190] sm:$0xff]
                  %306 = vst [vmem:[%s254 + $0xc8] sm:$0xff] %v305
                  %v307 = vld [vmem:[%s253 + $0x1a0] sm:$0xff]
                  %308 = vst [vmem:[%s254 + $0xd0] sm:$0xff] %v307
                  %v309 = vld [vmem:[%s253 + $0x1b0] sm:$0xff]
                  %310 = vst [vmem:[%s254 + $0xd8] sm:$0xff] %v309
                  %v311 = vld [vmem:[%s253 + $0x1c0] sm:$0xff]
                  %312 = vst [vmem:[%s254 + $0xe0] sm:$0xff] %v311
                  %v313 = vld [vmem:[%s253 + $0x1d0] sm:$0xff]
                  %314 = vst [vmem:[%s254 + $0xe8] sm:$0xff] %v313
                  %v315 = vld [vmem:[%s253 + $0x1e0] sm:$0xff]
                  %316 = vst [vmem:[%s254 + $0xf0] sm:$0xff] %v315
                  %v317 = vld [vmem:[%s253 + $0x1f0] sm:$0xff]
                  %318 = vst [vmem:[%s254 + $0xf8] sm:$0xff] %v317
                $region52: #{generator_forward.15} parent=46 // loop_footer
                  %s252 = sadd.s32 1, %s248
                $region53: #{generator_forward.15} parent=46 // loop_footer_branch
                  %247 = sbr.rel target = $region49
                $region54: #{generator_forward.15} parent=46 // loop_exit
                  _
              $region47: #{generator_forward.15} parent=31 // pred_fallthru
                _
              // Predicated region
              $region55: #{generator_forward.15} parent=31 // pred_check
                _
              $region56: #{generator_forward.15} parent=31 // pred_check_branch
                %320 = sbr.rel target = $region58
              $region57: #{generator_forward.15} parent=31 // pred_region
                _
              $region58: #{generator_forward.15} parent=31 // pred_fallthru
                _
            $region32: #{generator_forward.15} parent=27 // pred_fallthru
              _
            // Predicated region
            $region33: #{generator_forward.15} parent=27 // pred_check
              _
            $region34: #{generator_forward.15} parent=27 // pred_check_branch
              %171 = sbr.rel target = $region36
            $region35: #{generator_forward.15} parent=27 // pred_region
              loop: start=0, step=1, limit=1
              $region37: #{generator_forward.15} parent=35 // loop_pre_header
                _
              $region38: #{generator_forward.15} parent=35 // loop_header
                %s174 = sphi 0, %s178
                %p175 = scmp.ge.s32.totalorder %s174, 1
                %s179 = sphi %s165, %s165
                %s180 = sphi %s162, %s162
              $region39: #{generator_forward.15} parent=35 // loop_header_branch
                %177 = sbr.rel (%p175) target = $region43
              $region40: #{generator_forward.15} parent=35 // loop_body
                %v181 = vld [vmem:[%s179] sm:$0xff]
                %182 = vst [vmem:[%s180] sm:$0xff] %v181
                %v183 = vld [vmem:[%s179 + $0x10] sm:$0xff]
                %184 = vst [vmem:[%s180 + $0x8] sm:$0xff] %v183
                %v185 = vld [vmem:[%s179 + $0x20] sm:$0xff]
                %186 = vst [vmem:[%s180 + $0x10] sm:$0xff] %v185
                %v187 = vld [vmem:[%s179 + $0x30] sm:$0xff]
                %188 = vst [vmem:[%s180 + $0x18] sm:$0xff] %v187
                %v189 = vld [vmem:[%s179 + $0x40] sm:$0xff]
                %190 = vst [vmem:[%s180 + $0x20] sm:$0xff] %v189
                %v191 = vld [vmem:[%s179 + $0x50] sm:$0xff]
                %192 = vst [vmem:[%s180 + $0x28] sm:$0xff] %v191
                %v193 = vld [vmem:[%s179 + $0x60] sm:$0xff]
                %194 = vst [vmem:[%s180 + $0x30] sm:$0xff] %v193
                %v195 = vld [vmem:[%s179 + $0x70] sm:$0xff]
                %196 = vst [vmem:[%s180 + $0x38] sm:$0xff] %v195
                %v197 = vld [vmem:[%s179 + $0x80] sm:$0xff]
                %198 = vst [vmem:[%s180 + $0x40] sm:$0xff] %v197
                %v199 = vld [vmem:[%s179 + $0x90] sm:$0xff]
                %200 = vst [vmem:[%s180 + $0x48] sm:$0xff] %v199
                %v201 = vld [vmem:[%s179 + $0xa0] sm:$0xff]
                %202 = vst [vmem:[%s180 + $0x50] sm:$0xff] %v201
                %v203 = vld [vmem:[%s179 + $0xb0] sm:$0xff]
                %204 = vst [vmem:[%s180 + $0x58] sm:$0xff] %v203
                %v205 = vld [vmem:[%s179 + $0xc0] sm:$0xff]
                %206 = vst [vmem:[%s180 + $0x60] sm:$0xff] %v205
                %v207 = vld [vmem:[%s179 + $0xd0] sm:$0xff]
                %208 = vst [vmem:[%s180 + $0x68] sm:$0xff] %v207
                %v209 = vld [vmem:[%s179 + $0xe0] sm:$0xff]
                %210 = vst [vmem:[%s180 + $0x70] sm:$0xff] %v209
                %v211 = vld [vmem:[%s179 + $0xf0] sm:$0xff]
                %212 = vst [vmem:[%s180 + $0x78] sm:$0xff] %v211
                %v213 = vld [vmem:[%s179 + $0x100] sm:$0xff]
                %214 = vst [vmem:[%s180 + $0x80] sm:$0xff] %v213
                %v215 = vld [vmem:[%s179 + $0x110] sm:$0xff]
                %216 = vst [vmem:[%s180 + $0x88] sm:$0xff] %v215
                %v217 = vld [vmem:[%s179 + $0x120] sm:$0xff]
                %218 = vst [vmem:[%s180 + $0x90] sm:$0xff] %v217
                %v219 = vld [vmem:[%s179 + $0x130] sm:$0xff]
                %220 = vst [vmem:[%s180 + $0x98] sm:$0xff] %v219
                %v221 = vld [vmem:[%s179 + $0x140] sm:$0xff]
                %222 = vst [vmem:[%s180 + $0xa0] sm:$0xff] %v221
                %v223 = vld [vmem:[%s179 + $0x150] sm:$0xff]
                %224 = vst [vmem:[%s180 + $0xa8] sm:$0xff] %v223
                %v225 = vld [vmem:[%s179 + $0x160] sm:$0xff]
                %226 = vst [vmem:[%s180 + $0xb0] sm:$0xff] %v225
                %v227 = vld [vmem:[%s179 + $0x170] sm:$0xff]
                %228 = vst [vmem:[%s180 + $0xb8] sm:$0xff] %v227
                %v229 = vld [vmem:[%s179 + $0x180] sm:$0xff]
                %230 = vst [vmem:[%s180 + $0xc0] sm:$0xff] %v229
                %v231 = vld [vmem:[%s179 + $0x190] sm:$0xff]
                %232 = vst [vmem:[%s180 + $0xc8] sm:$0xff] %v231
                %v233 = vld [vmem:[%s179 + $0x1a0] sm:$0xff]
                %234 = vst [vmem:[%s180 + $0xd0] sm:$0xff] %v233
                %v235 = vld [vmem:[%s179 + $0x1b0] sm:$0xff]
                %236 = vst [vmem:[%s180 + $0xd8] sm:$0xff] %v235
                %v237 = vld [vmem:[%s179 + $0x1c0] sm:$0xff]
                %238 = vst [vmem:[%s180 + $0xe0] sm:$0xff] %v237
                %v239 = vld [vmem:[%s179 + $0x1d0] sm:$0xff]
                %240 = vst [vmem:[%s180 + $0xe8] sm:$0xff] %v239
                %v241 = vld [vmem:[%s179 + $0x1e0] sm:$0xff]
                %242 = vst [vmem:[%s180 + $0xf0] sm:$0xff] %v241
                %v243 = vld [vmem:[%s179 + $0x1f0] sm:$0xff]
                %244 = vst [vmem:[%s180 + $0xf8] sm:$0xff] %v243
              $region41: #{generator_forward.15} parent=35 // loop_footer
                %s178 = sadd.s32 1, %s174
              $region42: #{generator_forward.15} parent=35 // loop_footer_branch
                %173 = sbr.rel target = $region38
              $region43: #{generator_forward.15} parent=35 // loop_exit
                _
            $region36: #{generator_forward.15} parent=27 // pred_fallthru
              _
          $region28: #{generator_forward.15} parent=23 // pred_fallthru
            _
          %321 = vnop
        $region24: #{generator_forward.15} parent=19 // pred_fallthru
          _
        // Predicated region
        $region59: #{generator_forward.15} parent=19 // pred_check
          %p322 = pneg %p93
        $region60: #{generator_forward.15} parent=19 // pred_check_branch
          %324 = sbr.rel (%p322) target = $region62
        $region61: #{generator_forward.15} parent=19 // pred_region
          %s325 = smul.u32 2, %s17
          %p326 = scmp.lt.s32.totalorder %s325, 3
          %s327 = scalar_select %p326, %s325, 3
          %s328 = scalar_lea.vmem %s2, %s327
          %s329 = smul.u32 2, %s17
        $region62: #{generator_forward.15} parent=19 // pred_fallthru
          _
      $region20: #{generator_forward.15} parent=5 // pred_fallthru
        _
      %p330 = scmp.le.s32.totalorder 1, %s9
      %p331 = scmp.lt.s32.totalorder %s9, 3
      %p332 = pnand %p330, %p331
      %p333 = pneg %p332
      // Predicated region
      $region63: #{generator_forward.15} parent=5 // pred_check
        _
      $region64: #{generator_forward.15} parent=5 // pred_check_branch
        %335 = sbr.rel (%p332) target = $region66
      $region65: #{generator_forward.15} parent=5 // pred_region
        %s336 = ssub.s32 %s9, 1
        %s337 = sand.u32 %s60, 1
        %s338 = sand.u32 %s60, 1
        %s339 = smul.addr %s338, 256
        %s340 = scalar_lea.vmem [#allocation2], %s339
        // Predicated region
        $region67: #{generator_forward.15} parent=65 // pred_check
          %p341 = pneg %p73
        $region68: #{generator_forward.15} parent=65 // pred_check_branch
          %343 = sbr.rel (%p341) target = $region70
        $region69: #{generator_forward.15} parent=65 // pred_region
          _
        $region70: #{generator_forward.15} parent=65 // pred_fallthru
          _
        %s344 = smul.u32 16, %s18
        %p345 = scmp.lt.s32.totalorder %s344, 15
        %s346 = scalar_select %p345, %s344, 15
        %s347 = smul.addr %s346, 2
        %s348 = smul.addr %s347, 4
        %s349 = scalar_lea.vmem %s0, %s348
        %p350 = pneg %p47
        %p351 = pneg %p44
        %s352 = sand.u32 %s60, 1
        %s353 = sand.u32 %s60, 1
        %s354 = smul.addr %s353, 256
        %s355 = scalar_lea.vmem [#allocation2], %s354
        %p356 = pneg %p73
        %p357 = pneg %p70
        %s358 = smul.u32 2, %s19
        %p359 = scmp.lt.s32.totalorder %s358, 3
        %s360 = scalar_select %p359, %s358, 3
        %s361 = scalar_lea.vmem %s2, %s360
        %p362 = pneg %p99
        %p363 = pneg %p96
        %p364 = pneg %p127
        %p365 = pneg %p124
        %s366 = sand.u32 %s114, 1
        %s367 = sand.u32 %s114, 1
        %s368 = smul.addr %s367, 256
        %s369 = scalar_lea.vmem [#allocation3], %s368
        %s370 = smul.u32 16, %s18
        %p371 = scmp.lt.s32.totalorder %s370, 15
        %s372 = scalar_select %p371, %s370, 15
        %s373 = smul.addr %s372, 2
        %s374 = smul.addr %s373, 4
        %s375 = scalar_lea.vmem %s0, %s374
        %s376 = smul.u32 16, %s18
        %s377 = smul.u32 2, %s19
        %s378 = smul.u32 2, %s19
        %p379 = scmp.lt.s32.totalorder %s378, 3
        %s380 = scalar_select %p379, %s378, 3
        %s381 = scalar_lea.vmem %s2, %s380
        %s382 = smul.u32 2, %s19
        %s383 = smul.u32 16, %s18
        %s384 = smul.u32 2, %s19
        %v385 = vld [vmem:[%s375] sm:$0xff]
        %v386 = vld [vmem:[%s375 + $0x8] sm:$0xff]
        %v387 = vld [vmem:[%s375 + $0x10] sm:$0xff]
        %v388 = vld [vmem:[%s375 + $0x18] sm:$0xff]
        %v389 = vld [vmem:[%s375 + $0x20] sm:$0xff]
        %v390 = vld [vmem:[%s375 + $0x28] sm:$0xff]
        %v391 = vld [vmem:[%s375 + $0x30] sm:$0xff]
        %v392 = vld [vmem:[%s375 + $0x38] sm:$0xff]
        %v393 = vld [vmem:[%s375 + $0x40] sm:$0xff]
        %v394 = vld [vmem:[%s375 + $0x48] sm:$0xff]
        %v395 = vld [vmem:[%s375 + $0x50] sm:$0xff]
        %v396 = vld [vmem:[%s375 + $0x58] sm:$0xff]
        %v397 = vld [vmem:[%s375 + $0x60] sm:$0xff]
        %v398 = vld [vmem:[%s375 + $0x68] sm:$0xff]
        %v399 = vld [vmem:[%s375 + $0x70] sm:$0xff]
        %v400 = vld [vmem:[%s375 + $0x78] sm:$0xff]
        %v401 = vld [vmem:[%s340] sm:$0xff]
        %v402 = vld [vmem:[%s340 + $0x8] sm:$0xff]
        %v403 = vld [vmem:[%s340 + $0x10] sm:$0xff]
        %v404 = vld [vmem:[%s340 + $0x18] sm:$0xff]
        %v405 = vld [vmem:[%s340 + $0x20] sm:$0xff]
        %v406 = vld [vmem:[%s340 + $0x28] sm:$0xff]
        %v407 = vld [vmem:[%s340 + $0x30] sm:$0xff]
        %v408 = vld [vmem:[%s340 + $0x38] sm:$0xff]
        %v409 = vld [vmem:[%s340 + $0x40] sm:$0xff]
        %v410 = vld [vmem:[%s340 + $0x48] sm:$0xff]
        %v411 = vld [vmem:[%s340 + $0x50] sm:$0xff]
        %v412 = vld [vmem:[%s340 + $0x58] sm:$0xff]
        %v413 = vld [vmem:[%s340 + $0x60] sm:$0xff]
        %v414 = vld [vmem:[%s340 + $0x68] sm:$0xff]
        %v415 = vld [vmem:[%s340 + $0x70] sm:$0xff]
        %v416 = vld [vmem:[%s340 + $0x78] sm:$0xff]
        %v417 = vld [vmem:[%s340 + $0x80] sm:$0xff]
        %v418 = vld [vmem:[%s340 + $0x88] sm:$0xff]
        %v419 = vld [vmem:[%s340 + $0x90] sm:$0xff]
        %v420 = vld [vmem:[%s340 + $0x98] sm:$0xff]
        %v421 = vld [vmem:[%s340 + $0xa0] sm:$0xff]
        %v422 = vld [vmem:[%s340 + $0xa8] sm:$0xff]
        %v423 = vld [vmem:[%s340 + $0xb0] sm:$0xff]
        %v424 = vld [vmem:[%s340 + $0xb8] sm:$0xff]
        %v425 = vld [vmem:[%s340 + $0xc0] sm:$0xff]
        %v426 = vld [vmem:[%s340 + $0xc8] sm:$0xff]
        %v427 = vld [vmem:[%s340 + $0xd0] sm:$0xff]
        %v428 = vld [vmem:[%s340 + $0xd8] sm:$0xff]
        %v429 = vld [vmem:[%s340 + $0xe0] sm:$0xff]
        %v430 = vld [vmem:[%s340 + $0xe8] sm:$0xff]
        %v431 = vld [vmem:[%s340 + $0xf0] sm:$0xff]
        %v432 = vld [vmem:[%s340 + $0xf8] sm:$0xff]
        %v433 = vld [vmem:[%s381] sm:$0x3]
        %v435 = vlaneseq
        %v436 = vshrl.u32 %v435, 7
        %v437 = vsub.s32 0, %v436
        %v438 = vrot.slane %v433, %v437
        %v439 = vlaneseq
        %v440 = vshrl.u32 %v439, 7
        %v441 = vsub.s32 1, %v440
        %v442 = vrot.slane %v433, %v441
        %v461 = vunpack.c.l.b16 %v385
        %v462 = vunpack.c.h.b16 %v385
        %v463 = vunpack.c.l.b16 %v386
        %v464 = vunpack.c.h.b16 %v386
        %v465 = vunpack.c.l.b16 %v387
        %v466 = vunpack.c.h.b16 %v387
        %v467 = vunpack.c.l.b16 %v388
        %v468 = vunpack.c.h.b16 %v388
        %v469 = vunpack.c.l.b16 %v389
        %v470 = vunpack.c.h.b16 %v389
        %v471 = vunpack.c.l.b16 %v390
        %v472 = vunpack.c.h.b16 %v390
        %v473 = vunpack.c.l.b16 %v391
        %v474 = vunpack.c.h.b16 %v391
        %v475 = vunpack.c.l.b16 %v392
        %v476 = vunpack.c.h.b16 %v392
        %v477 = vunpack.c.l.b16 %v393
        %v478 = vunpack.c.h.b16 %v393
        %v479 = vunpack.c.l.b16 %v394
        %v480 = vunpack.c.h.b16 %v394
        %v481 = vunpack.c.l.b16 %v395
        %v482 = vunpack.c.h.b16 %v395
        %v483 = vunpack.c.l.b16 %v396
        %v484 = vunpack.c.h.b16 %v396
        %v485 = vunpack.c.l.b16 %v397
        %v486 = vunpack.c.h.b16 %v397
        %v487 = vunpack.c.l.b16 %v398
        %v488 = vunpack.c.h.b16 %v398
        %v489 = vunpack.c.l.b16 %v399
        %v490 = vunpack.c.h.b16 %v399
        %v491 = vunpack.c.l.b16 %v400
        %v492 = vunpack.c.h.b16 %v400
        %v493 = vpack.c.b16 %v463, %v461
        %v494 = vpack.c.b16 %v464, %v462
        %v495 = vpack.c.b16 %v467, %v465
        %v496 = vpack.c.b16 %v468, %v466
        %v497 = vpack.c.b16 %v471, %v469
        %v498 = vpack.c.b16 %v472, %v470
        %v499 = vpack.c.b16 %v475, %v473
        %v500 = vpack.c.b16 %v476, %v474
        %v501 = vpack.c.b16 %v479, %v477
        %v502 = vpack.c.b16 %v480, %v478
        %v503 = vpack.c.b16 %v483, %v481
        %v504 = vpack.c.b16 %v484, %v482
        %v505 = vpack.c.b16 %v487, %v485
        %v506 = vpack.c.b16 %v488, %v486
        %v507 = vpack.c.b16 %v491, %v489
        %v508 = vpack.c.b16 %v492, %v490
        %v557 = vunpack.c.l.b16 %v401
        %v558 = vunpack.c.h.b16 %v401
        %v559 = vunpack.c.l.b16 %v402
        %v560 = vunpack.c.h.b16 %v402
        %v561 = vunpack.c.l.b16 %v403
        %v562 = vunpack.c.h.b16 %v403
        %v563 = vunpack.c.l.b16 %v404
        %v564 = vunpack.c.h.b16 %v404
        %v565 = vunpack.c.l.b16 %v405
        %v566 = vunpack.c.h.b16 %v405
        %v567 = vunpack.c.l.b16 %v406
        %v568 = vunpack.c.h.b16 %v406
        %v569 = vunpack.c.l.b16 %v407
        %v570 = vunpack.c.h.b16 %v407
        %v571 = vunpack.c.l.b16 %v408
        %v572 = vunpack.c.h.b16 %v408
        %v573 = vunpack.c.l.b16 %v409
        %v574 = vunpack.c.h.b16 %v409
        %v575 = vunpack.c.l.b16 %v410
        %v576 = vunpack.c.h.b16 %v410
        %v577 = vunpack.c.l.b16 %v411
        %v578 = vunpack.c.h.b16 %v411
        %v579 = vunpack.c.l.b16 %v412
        %v580 = vunpack.c.h.b16 %v412
        %v581 = vunpack.c.l.b16 %v413
        %v582 = vunpack.c.h.b16 %v413
        %v583 = vunpack.c.l.b16 %v414
        %v584 = vunpack.c.h.b16 %v414
        %v585 = vunpack.c.l.b16 %v415
        %v586 = vunpack.c.h.b16 %v415
        %v587 = vunpack.c.l.b16 %v416
        %v588 = vunpack.c.h.b16 %v416
        %v589 = vunpack.c.l.b16 %v417
        %v590 = vunpack.c.h.b16 %v417
        %v591 = vunpack.c.l.b16 %v418
        %v592 = vunpack.c.h.b16 %v418
        %v593 = vunpack.c.l.b16 %v419
        %v594 = vunpack.c.h.b16 %v419
        %v595 = vunpack.c.l.b16 %v420
        %v596 = vunpack.c.h.b16 %v420
        %v597 = vunpack.c.l.b16 %v421
        %v598 = vunpack.c.h.b16 %v421
        %v599 = vunpack.c.l.b16 %v422
        %v600 = vunpack.c.h.b16 %v422
        %v601 = vunpack.c.l.b16 %v423
        %v602 = vunpack.c.h.b16 %v423
        %v603 = vunpack.c.l.b16 %v424
        %v604 = vunpack.c.h.b16 %v424
        %v605 = vunpack.c.l.b16 %v425
        %v606 = vunpack.c.h.b16 %v425
        %v607 = vunpack.c.l.b16 %v426
        %v608 = vunpack.c.h.b16 %v426
        %v609 = vunpack.c.l.b16 %v427
        %v610 = vunpack.c.h.b16 %v427
        %v611 = vunpack.c.l.b16 %v428
        %v612 = vunpack.c.h.b16 %v428
        %v613 = vunpack.c.l.b16 %v429
        %v614 = vunpack.c.h.b16 %v429
        %v615 = vunpack.c.l.b16 %v430
        %v616 = vunpack.c.h.b16 %v430
        %v617 = vunpack.c.l.b16 %v431
        %v618 = vunpack.c.h.b16 %v431
        %v619 = vunpack.c.l.b16 %v432
        %v620 = vunpack.c.h.b16 %v432
        %v621 = vpack.c.b16 %v559, %v557
        %v622 = vpack.c.b16 %v560, %v558
        %v623 = vpack.c.b16 %v563, %v561
        %v624 = vpack.c.b16 %v564, %v562
        %v625 = vpack.c.b16 %v567, %v565
        %v626 = vpack.c.b16 %v568, %v566
        %v627 = vpack.c.b16 %v571, %v569
        %v628 = vpack.c.b16 %v572, %v570
        %v629 = vpack.c.b16 %v575, %v573
        %v630 = vpack.c.b16 %v576, %v574
        %v631 = vpack.c.b16 %v579, %v577
        %v632 = vpack.c.b16 %v580, %v578
        %v633 = vpack.c.b16 %v583, %v581
        %v634 = vpack.c.b16 %v584, %v582
        %v635 = vpack.c.b16 %v587, %v585
        %v636 = vpack.c.b16 %v588, %v586
        %v637 = vpack.c.b16 %v591, %v589
        %v638 = vpack.c.b16 %v592, %v590
        %v639 = vpack.c.b16 %v595, %v593
        %v640 = vpack.c.b16 %v596, %v594
        %v641 = vpack.c.b16 %v599, %v597
        %v642 = vpack.c.b16 %v600, %v598
        %v643 = vpack.c.b16 %v603, %v601
        %v644 = vpack.c.b16 %v604, %v602
        %v645 = vpack.c.b16 %v607, %v605
        %v646 = vpack.c.b16 %v608, %v606
        %v647 = vpack.c.b16 %v611, %v609
        %v648 = vpack.c.b16 %v612, %v610
        %v649 = vpack.c.b16 %v615, %v613
        %v650 = vpack.c.b16 %v616, %v614
        %v651 = vpack.c.b16 %v619, %v617
        %v652 = vpack.c.b16 %v620, %v618
        %685 = vmatprep.subr.bf16.mxu0 %v622
        %686 = vmatpush1.bf16.msra.mxu0 %v621
        %687 = vmatprep.subr.bf16.mxu0 %v624
        %688 = vmatpush1.bf16.msra.mxu0 %v623
        %689 = vmatprep.subr.bf16.mxu0 %v626
        %690 = vmatpush1.bf16.msra.mxu0 %v625
        %691 = vmatprep.subr.bf16.mxu0 %v628
        %692 = vmatpush1.bf16.msra.mxu0 %v627
        %693 = vmatprep.subr.bf16.mxu0 %v630
        %694 = vmatpush1.bf16.msra.mxu0 %v629
        %695 = vmatprep.subr.bf16.mxu0 %v632
        %696 = vmatpush1.bf16.msra.mxu0 %v631
        %697 = vmatprep.subr.bf16.mxu0 %v634
        %698 = vmatpush1.bf16.msra.mxu0 %v633
        %699 = vmatprep.subr.bf16.mxu0 %v636
        %700 = vmatpush1.bf16.msra.mxu0 %v635
        %701 = vmatprep.subr.bf16.mxu0 %v638
        %702 = vmatpush1.bf16.msra.mxu0 %v637
        %703 = vmatprep.subr.bf16.mxu0 %v640
        %704 = vmatpush1.bf16.msra.mxu0 %v639
        %705 = vmatprep.subr.bf16.mxu0 %v642
        %706 = vmatpush1.bf16.msra.mxu0 %v641
        %707 = vmatprep.subr.bf16.mxu0 %v644
        %708 = vmatpush1.bf16.msra.mxu0 %v643
        %709 = vmatprep.subr.bf16.mxu0 %v646
        %710 = vmatpush1.bf16.msra.mxu0 %v645
        %711 = vmatprep.subr.bf16.mxu0 %v648
        %712 = vmatpush1.bf16.msra.mxu0 %v647
        %713 = vmatprep.subr.bf16.mxu0 %v650
        %714 = vmatpush1.bf16.msra.mxu0 %v649
        %715 = vmatprep.subr.bf16.mxu0 %v652
        %716 = vmatpush1.bf16.msra.mxu0 %v651
        %717 = vmatprep.mubr.bf16.mxu0 %v494
        %718 = vmatmul.mubr.bf16.gmra.mrb[0].mxu0 %v493
        %v719 = vpop.f32.mrb[0].mxu0
        %v720 = vadd.f32 %v438, %v719
        %v721 = vpop.f32.mrb[0].mxu0
        %v722 = vadd.f32 %v442, %v721
        %v723 = vpop.f32.mrb[0].mxu0
        %v724 = vadd.f32 %v438, %v723
        %v725 = vpop.f32.mrb[0].mxu0
        %v726 = vadd.f32 %v442, %v725
        %727 = vmatprep.mubr.bf16.mxu0 %v496
        %728 = vmatmul.mubr.bf16.gmra.mrb[0].mxu0 %v495
        %v729 = vpop.f32.mrb[0].mxu0
        %v730 = vadd.f32 %v438, %v729
        %v731 = vpop.f32.mrb[0].mxu0
        %v732 = vadd.f32 %v442, %v731
        %v733 = vpop.f32.mrb[0].mxu0
        %v734 = vadd.f32 %v438, %v733
        %v735 = vpop.f32.mrb[0].mxu0
        %v736 = vadd.f32 %v442, %v735
        %737 = vmatprep.mubr.bf16.mxu0 %v498
        %738 = vmatmul.mubr.bf16.gmra.mrb[0].mxu0 %v497
        %v739 = vpop.f32.mrb[0].mxu0
        %v740 = vadd.f32 %v438, %v739
        %v741 = vpop.f32.mrb[0].mxu0
        %v742 = vadd.f32 %v442, %v741
        %v743 = vpop.f32.mrb[0].mxu0
        %v744 = vadd.f32 %v438, %v743
        %v745 = vpop.f32.mrb[0].mxu0
        %v746 = vadd.f32 %v442, %v745
        %747 = vmatprep.mubr.bf16.mxu0 %v500
        %748 = vmatmul.mubr.bf16.gmra.mrb[0].mxu0 %v499
        %v749 = vpop.f32.mrb[0].mxu0
        %v750 = vadd.f32 %v438, %v749
        %v751 = vpop.f32.mrb[0].mxu0
        %v752 = vadd.f32 %v442, %v751
        %v753 = vpop.f32.mrb[0].mxu0
        %v754 = vadd.f32 %v438, %v753
        %v755 = vpop.f32.mrb[0].mxu0
        %v756 = vadd.f32 %v442, %v755
        %757 = vmatprep.mubr.bf16.mxu0 %v502
        %758 = vmatmul.mubr.bf16.gmra.mrb[0].mxu0 %v501
        %v759 = vpop.f32.mrb[0].mxu0
        %v760 = vadd.f32 %v438, %v759
        %v761 = vpop.f32.mrb[0].mxu0
        %v762 = vadd.f32 %v442, %v761
        %v763 = vpop.f32.mrb[0].mxu0
        %v764 = vadd.f32 %v438, %v763
        %v765 = vpop.f32.mrb[0].mxu0
        %v766 = vadd.f32 %v442, %v765
        %767 = vmatprep.mubr.bf16.mxu0 %v504
        %768 = vmatmul.mubr.bf16.gmra.mrb[0].mxu0 %v503
        %v769 = vpop.f32.mrb[0].mxu0
        %v770 = vadd.f32 %v438, %v769
        %v771 = vpop.f32.mrb[0].mxu0
        %v772 = vadd.f32 %v442, %v771
        %v773 = vpop.f32.mrb[0].mxu0
        %v774 = vadd.f32 %v438, %v773
        %v775 = vpop.f32.mrb[0].mxu0
        %v776 = vadd.f32 %v442, %v775
        %777 = vmatprep.mubr.bf16.mxu0 %v506
        %778 = vmatmul.mubr.bf16.gmra.mrb[0].mxu0 %v505
        %v779 = vpop.f32.mrb[0].mxu0
        %v780 = vadd.f32 %v438, %v779
        %v781 = vpop.f32.mrb[0].mxu0
        %v782 = vadd.f32 %v442, %v781
        %v783 = vpop.f32.mrb[0].mxu0
        %v784 = vadd.f32 %v438, %v783
        %v785 = vpop.f32.mrb[0].mxu0
        %v786 = vadd.f32 %v442, %v785
        %787 = vmatprep.mubr.bf16.mxu0 %v508
        %788 = vmatmul.mubr.bf16.gmra.mrb[0].mxu0 %v507
        %v789 = vpop.f32.mrb[0].mxu0
        %v790 = vadd.f32 %v438, %v789
        %v791 = vpop.f32.mrb[0].mxu0
        %v792 = vadd.f32 %v442, %v791
        %v793 = vpop.f32.mrb[0].mxu0
        %v794 = vadd.f32 %v438, %v793
        %v795 = vpop.f32.mrb[0].mxu0
        %v796 = vadd.f32 %v442, %v795
        %797 = vdwg.mxu0
        %v798 = vmax.f32 %v720, 0.0
        %v799 = vmax.f32 %v722, 0.0
        %v800 = vmax.f32 %v724, 0.0
        %v801 = vmax.f32 %v726, 0.0
        %v802 = vmax.f32 %v730, 0.0
        %v803 = vmax.f32 %v732, 0.0
        %v804 = vmax.f32 %v734, 0.0
        %v805 = vmax.f32 %v736, 0.0
        %v806 = vmax.f32 %v740, 0.0
        %v807 = vmax.f32 %v742, 0.0
        %v808 = vmax.f32 %v744, 0.0
        %v809 = vmax.f32 %v746, 0.0
        %v810 = vmax.f32 %v750, 0.0
        %v811 = vmax.f32 %v752, 0.0
        %v812 = vmax.f32 %v754, 0.0
        %v813 = vmax.f32 %v756, 0.0
        %v814 = vmax.f32 %v760, 0.0
        %v815 = vmax.f32 %v762, 0.0
        %v816 = vmax.f32 %v764, 0.0
        %v817 = vmax.f32 %v766, 0.0
        %v818 = vmax.f32 %v770, 0.0
        %v819 = vmax.f32 %v772, 0.0
        %v820 = vmax.f32 %v774, 0.0
        %v821 = vmax.f32 %v776, 0.0
        %v822 = vmax.f32 %v780, 0.0
        %v823 = vmax.f32 %v782, 0.0
        %v824 = vmax.f32 %v784, 0.0
        %v825 = vmax.f32 %v786, 0.0
        %v826 = vmax.f32 %v790, 0.0
        %v827 = vmax.f32 %v792, 0.0
        %v828 = vmax.f32 %v794, 0.0
        %v829 = vmax.f32 %v796, 0.0
        %830 = vst [vmem:[%s369] sm:$0xff] %v798
        %831 = vst [vmem:[%s369 + $0x8] sm:$0xff] %v799
        %832 = vst [vmem:[%s369 + $0x10] sm:$0xff] %v800
        %833 = vst [vmem:[%s369 + $0x18] sm:$0xff] %v801
        %834 = vst [vmem:[%s369 + $0x20] sm:$0xff] %v802
        %835 = vst [vmem:[%s369 + $0x28] sm:$0xff] %v803
        %836 = vst [vmem:[%s369 + $0x30] sm:$0xff] %v804
        %837 = vst [vmem:[%s369 + $0x38] sm:$0xff] %v805
        %838 = vst [vmem:[%s369 + $0x40] sm:$0xff] %v806
        %839 = vst [vmem:[%s369 + $0x48] sm:$0xff] %v807
        %840 = vst [vmem:[%s369 + $0x50] sm:$0xff] %v808
        %841 = vst [vmem:[%s369 + $0x58] sm:$0xff] %v809
        %842 = vst [vmem:[%s369 + $0x60] sm:$0xff] %v810
        %843 = vst [vmem:[%s369 + $0x68] sm:$0xff] %v811
        %844 = vst [vmem:[%s369 + $0x70] sm:$0xff] %v812
        %845 = vst [vmem:[%s369 + $0x78] sm:$0xff] %v813
        %846 = vst [vmem:[%s369 + $0x80] sm:$0xff] %v814
        %847 = vst [vmem:[%s369 + $0x88] sm:$0xff] %v815
        %848 = vst [vmem:[%s369 + $0x90] sm:$0xff] %v816
        %849 = vst [vmem:[%s369 + $0x98] sm:$0xff] %v817
        %850 = vst [vmem:[%s369 + $0xa0] sm:$0xff] %v818
        %851 = vst [vmem:[%s369 + $0xa8] sm:$0xff] %v819
        %852 = vst [vmem:[%s369 + $0xb0] sm:$0xff] %v820
        %853 = vst [vmem:[%s369 + $0xb8] sm:$0xff] %v821
        %854 = vst [vmem:[%s369 + $0xc0] sm:$0xff] %v822
        %855 = vst [vmem:[%s369 + $0xc8] sm:$0xff] %v823
        %856 = vst [vmem:[%s369 + $0xd0] sm:$0xff] %v824
        %857 = vst [vmem:[%s369 + $0xd8] sm:$0xff] %v825
        %858 = vst [vmem:[%s369 + $0xe0] sm:$0xff] %v826
        %859 = vst [vmem:[%s369 + $0xe8] sm:$0xff] %v827
        %860 = vst [vmem:[%s369 + $0xf0] sm:$0xff] %v828
        %861 = vst [vmem:[%s369 + $0xf8] sm:$0xff] %v829
        %s862 = sand.u32 %s114, 1
        %s863 = sand.u32 %s114, 1
        %s864 = smul.addr %s863, 256
        %s865 = scalar_lea.vmem [#allocation3], %s864
        // Predicated region
        $region71: #{generator_forward.15} parent=65 // pred_check
          %p866 = pneg %p124
        $region72: #{generator_forward.15} parent=65 // pred_check_branch
          %868 = sbr.rel (%p866) target = $region74
        $region73: #{generator_forward.15} parent=65 // pred_region
          %s869 = smul.u32 16, %s18
          %s870 = smul.u32 2, %s19
          %s871 = smul.addr %s869, 4
          %s872 = sadd.s32 %s870, %s871
          %s873 = smul.addr %s872, 8
          %s874 = scalar_lea.vmem %s3, %s873
          // Predicated region
          $region75: #{generator_forward.15} parent=73 // pred_check
            _
          $region76: #{generator_forward.15} parent=73 // pred_check_branch
            %876 = sbr.rel (0) target = $region78
          $region77: #{generator_forward.15} parent=73 // pred_region
            // Predicated region
            $region79: #{generator_forward.15} parent=77 // pred_check
              _
            $region80: #{generator_forward.15} parent=77 // pred_check_branch
              %878 = sbr.rel (0) target = $region82
            $region81: #{generator_forward.15} parent=77 // pred_region
              loop: start=0, step=1, limit=1
              $region83: #{generator_forward.15} parent=81 // loop_pre_header
                _
              $region84: #{generator_forward.15} parent=81 // loop_header
                %s880 = sphi 0, %s884
                %p881 = scmp.ge.s32.totalorder %s880, 1
                %s885 = sphi %s865, %s865
                %s886 = sphi %s874, %s874
              $region85: #{generator_forward.15} parent=81 // loop_header_branch
                %883 = sbr.rel (%p881) target = $region89
              $region86: #{generator_forward.15} parent=81 // loop_body
                %v887 = vld [vmem:[%s885] sm:$0xff]
                %888 = vst [vmem:[%s886] sm:$0xff] %v887
                %v889 = vld [vmem:[%s885 + $0x8] sm:$0xff]
                %890 = vst [vmem:[%s886 + $0x8] sm:$0xff] %v889
                %v891 = vld [vmem:[%s885 + $0x10] sm:$0xff]
                %892 = vst [vmem:[%s886 + $0x20] sm:$0xff] %v891
                %v893 = vld [vmem:[%s885 + $0x18] sm:$0xff]
                %894 = vst [vmem:[%s886 + $0x28] sm:$0xff] %v893
                %v895 = vld [vmem:[%s885 + $0x20] sm:$0xff]
                %896 = vst [vmem:[%s886 + $0x40] sm:$0xff] %v895
                %v897 = vld [vmem:[%s885 + $0x28] sm:$0xff]
                %898 = vst [vmem:[%s886 + $0x48] sm:$0xff] %v897
                %v899 = vld [vmem:[%s885 + $0x30] sm:$0xff]
                %900 = vst [vmem:[%s886 + $0x60] sm:$0xff] %v899
                %v901 = vld [vmem:[%s885 + $0x38] sm:$0xff]
                %902 = vst [vmem:[%s886 + $0x68] sm:$0xff] %v901
                %v903 = vld [vmem:[%s885 + $0x40] sm:$0xff]
                %904 = vst [vmem:[%s886 + $0x80] sm:$0xff] %v903
                %v905 = vld [vmem:[%s885 + $0x48] sm:$0xff]
                %906 = vst [vmem:[%s886 + $0x88] sm:$0xff] %v905
                %v907 = vld [vmem:[%s885 + $0x50] sm:$0xff]
                %908 = vst [vmem:[%s886 + $0xa0] sm:$0xff] %v907
                %v909 = vld [vmem:[%s885 + $0x58] sm:$0xff]
                %910 = vst [vmem:[%s886 + $0xa8] sm:$0xff] %v909
                %v911 = vld [vmem:[%s885 + $0x60] sm:$0xff]
                %912 = vst [vmem:[%s886 + $0xc0] sm:$0xff] %v911
                %v913 = vld [vmem:[%s885 + $0x68] sm:$0xff]
                %914 = vst [vmem:[%s886 + $0xc8] sm:$0xff] %v913
                %v915 = vld [vmem:[%s885 + $0x70] sm:$0xff]
                %916 = vst [vmem:[%s886 + $0xe0] sm:$0xff] %v915
                %v917 = vld [vmem:[%s885 + $0x78] sm:$0xff]
                %918 = vst [vmem:[%s886 + $0xe8] sm:$0xff] %v917
                %v919 = vld [vmem:[%s885 + $0x80] sm:$0xff]
                %920 = vst [vmem:[%s886 + $0x100] sm:$0xff] %v919
                %v921 = vld [vmem:[%s885 + $0x88] sm:$0xff]
                %922 = vst [vmem:[%s886 + $0x108] sm:$0xff] %v921
                %v923 = vld [vmem:[%s885 + $0x90] sm:$0xff]
                %924 = vst [vmem:[%s886 + $0x120] sm:$0xff] %v923
                %v925 = vld [vmem:[%s885 + $0x98] sm:$0xff]
                %926 = vst [vmem:[%s886 + $0x128] sm:$0xff] %v925
                %v927 = vld [vmem:[%s885 + $0xa0] sm:$0xff]
                %928 = vst [vmem:[%s886 + $0x140] sm:$0xff] %v927
                %v929 = vld [vmem:[%s885 + $0xa8] sm:$0xff]
                %930 = vst [vmem:[%s886 + $0x148] sm:$0xff] %v929
                %v931 = vld [vmem:[%s885 + $0xb0] sm:$0xff]
                %932 = vst [vmem:[%s886 + $0x160] sm:$0xff] %v931
                %v933 = vld [vmem:[%s885 + $0xb8] sm:$0xff]
                %934 = vst [vmem:[%s886 + $0x168] sm:$0xff] %v933
                %v935 = vld [vmem:[%s885 + $0xc0] sm:$0xff]
                %936 = vst [vmem:[%s886 + $0x180] sm:$0xff] %v935
                %v937 = vld [vmem:[%s885 + $0xc8] sm:$0xff]
                %938 = vst [vmem:[%s886 + $0x188] sm:$0xff] %v937
                %v939 = vld [vmem:[%s885 + $0xd0] sm:$0xff]
                %940 = vst [vmem:[%s886 + $0x1a0] sm:$0xff] %v939
                %v941 = vld [vmem:[%s885 + $0xd8] sm:$0xff]
                %942 = vst [vmem:[%s886 + $0x1a8] sm:$0xff] %v941
                %v943 = vld [vmem:[%s885 + $0xe0] sm:$0xff]
                %944 = vst [vmem:[%s886 + $0x1c0] sm:$0xff] %v943
                %v945 = vld [vmem:[%s885 + $0xe8] sm:$0xff]
                %946 = vst [vmem:[%s886 + $0x1c8] sm:$0xff] %v945
                %v947 = vld [vmem:[%s885 + $0xf0] sm:$0xff]
                %948 = vst [vmem:[%s886 + $0x1e0] sm:$0xff] %v947
                %v949 = vld [vmem:[%s885 + $0xf8] sm:$0xff]
                %950 = vst [vmem:[%s886 + $0x1e8] sm:$0xff] %v949
              $region87: #{generator_forward.15} parent=81 // loop_footer
                %s884 = sadd.s32 1, %s880
              $region88: #{generator_forward.15} parent=81 // loop_footer_branch
                %879 = sbr.rel target = $region84
              $region89: #{generator_forward.15} parent=81 // loop_exit
                _
            $region82: #{generator_forward.15} parent=77 // pred_fallthru
              _
            // Predicated region
            $region90: #{generator_forward.15} parent=77 // pred_check
              _
            $region91: #{generator_forward.15} parent=77 // pred_check_branch
              %952 = sbr.rel target = $region93
            $region92: #{generator_forward.15} parent=77 // pred_region
              _
            $region93: #{generator_forward.15} parent=77 // pred_fallthru
              _
          $region78: #{generator_forward.15} parent=73 // pred_fallthru
            _
          %953 = vnop
        $region74: #{generator_forward.15} parent=65 // pred_fallthru
          _
      $region66: #{generator_forward.15} parent=5 // pred_fallthru
        _
      %p954 = scmp.le.s32.totalorder 2, %s9
      // Predicated region
      $region94: #{generator_forward.15} parent=5 // pred_check
        %p955 = pneg %p954
      $region95: #{generator_forward.15} parent=5 // pred_check_branch
        %957 = sbr.rel (%p955) target = $region97
      $region96: #{generator_forward.15} parent=5 // pred_region
        %s958 = ssub.s32 %s9, 2
        // Predicated region
        $region98: #{generator_forward.15} parent=96 // pred_check
          %p959 = pneg %p130
        $region99: #{generator_forward.15} parent=96 // pred_check_branch
          %961 = sbr.rel (%p959) target = $region101
        $region100: #{generator_forward.15} parent=96 // pred_region
          %s962 = sand.u32 %s115, 1
          %s963 = sand.u32 %s115, 1
          %s964 = smul.addr %s963, 256
          %s965 = scalar_lea.vmem [#allocation3], %s964
        $region101: #{generator_forward.15} parent=96 // pred_fallthru
          _
      $region97: #{generator_forward.15} parent=5 // pred_fallthru
        _
    $region6: #{generator_forward.15} parent=1 // loop_footer
      %s13 = sadd.s32 1, %s9
    $region7: #{generator_forward.15} parent=1 // loop_footer_branch
      %8 = sbr.rel target = $region3
    $region8: #{generator_forward.15} parent=1 // loop_exit
      _

// kernel: generator_forward.22
$region0: #{generator_forward.22}
  #allocation0 [shape = 'u32[]', space=smem, size = 0x4, offset = 0x4, fixed_abs, tag = 'smem constant byte address 0x4 - core index']
  #allocation1 [shape = 'u32[144,128]{1,0:T(1,128)}', space=vmem, size = 0x12000, scoped, tag = 'internal scratch']
  %s0 = inlined_call_operand.vmem [shape: bf16[512,384], index: 0, kind: input, shape index: {}]
  %s1 = inlined_call_operand.vmem [shape: bf16[384,128], index: 1, kind: input, shape index: {}]
  %s2 = inlined_call_operand.vmem [shape: f32[1,128], index: 2, kind: input, shape index: {}]
  %s3 = inlined_call_operand.vmem [shape: f32[512,128], index: 3, kind: output, shape index: {}]
  %s4 = sld [smem:[#allocation0]]
  $region45: #{generator_forward.22} parent=0
    _
  %s6 = ssub.s32 1, %s4
  %s7 = scalar_select 0, %s6, %s4
  loop: start=0, step=1, limit=4
  $region2: #{generator_forward.22} parent=0 // loop_pre_header
    _
  $region3: #{generator_forward.22} parent=0 // loop_header
    %s9 = sphi 0, %s13
    %p10 = scmp.ge.s32.totalorder %s9, 4
    %s16 = sphi 0, %s28
    %s17 = sphi 0, %s24
    %s18 = sphi 0, %s16
    %s19 = sphi 0, %s17
    %s20 = sphi 0, %s18
    %s21 = sphi 0, %s19
    %s31 = sphi 0, %s33
    %s34 = sphi 0, %s31
    %s35 = sphi 0, %s34
    %s51 = sphi 0, %s35
    %s57 = sphi 0, %s59
    %s60 = sphi 0, %s57
    %s61 = sphi 0, %s60
    %s77 = sphi 0, %s61
    %s83 = sphi 0, %s85
    %s86 = sphi 0, %s83
    %s87 = sphi 0, %s86
    %s103 = sphi 0, %s87
    %s111 = sphi 0, %s113
    %s114 = sphi 0, %s111
    %s115 = sphi 0, %s114
    %s131 = sphi 0, %s115
  $region4: #{generator_forward.22} parent=0 // loop_header_branch
    %12 = sbr.rel (%p10) target = $region8
  $region5: #{generator_forward.22} parent=0 // loop_body
    %s14 = ssub.s32 %s9, 1
    %s15 = ssub.s32 %s9, 2
    %s22 = sadd.s32 1, %s17
    %p23 = scmp.ge.s32.totalorder %s22, 1
    %s24 = scalar_select %p23, 0, %s22
    %s25 = sadd.s32 1, %s16
    %s26 = scalar_select %p23, %s25, %s16
    %p27 = scmp.ge.s32.totalorder %s26, 2
    %s28 = scalar_select %p27, 0, %s26
    %s29 = ssub.s32 %s16, %s28
    %p30 = scmp.eq.s32.totalorder %s29, 0
    %s32 = sadd.s32 %s31, 1
    %s33 = scalar_select %p30, %s31, %s32
    %p36 = pneg %p30
    %p37 = scmp.eq.s32.totalorder %s9, 1
    %p38 = por %p36, %p37
    %p39 = scmp.ne.s32.totalorder %s31, %s34
    %p40 = scmp.eq.s32.totalorder %s9, 0
    %p41 = por %p39, %p40
    %p42 = scmp.ne.s32.totalorder %s31, %s34
    %p43 = scmp.eq.s32.totalorder %s14, 1
    %p44 = por %p42, %p43
    %p45 = scmp.ne.s32.totalorder %s34, %s35
    %p46 = scmp.eq.s32.totalorder %s14, 0
    %p47 = por %p45, %p46
    %p48 = scmp.ne.s32.totalorder %s34, %s35
    %p49 = scmp.eq.s32.totalorder %s15, 1
    %p50 = por %p48, %p49
    %p52 = scmp.ne.s32.totalorder %s35, %s51
    %p53 = scmp.eq.s32.totalorder %s15, 0
    %p54 = por %p52, %p53
    %s55 = ssub.s32 %s17, %s24
    %p56 = scmp.eq.s32.totalorder %s55, 0
    %s58 = sadd.s32 %s57, 1
    %s59 = scalar_select %p56, %s57, %s58
    %p62 = pneg %p56
    %p63 = scmp.eq.s32.totalorder %s9, 1
    %p64 = por %p62, %p63
    %p65 = scmp.ne.s32.totalorder %s57, %s60
    %p66 = scmp.eq.s32.totalorder %s9, 0
    %p67 = por %p65, %p66
    %p68 = scmp.ne.s32.totalorder %s57, %s60
    %p69 = scmp.eq.s32.totalorder %s14, 1
    %p70 = por %p68, %p69
    %p71 = scmp.ne.s32.totalorder %s60, %s61
    %p72 = scmp.eq.s32.totalorder %s14, 0
    %p73 = por %p71, %p72
    %p74 = scmp.ne.s32.totalorder %s60, %s61
    %p75 = scmp.eq.s32.totalorder %s15, 1
    %p76 = por %p74, %p75
    %p78 = scmp.ne.s32.totalorder %s61, %s77
    %p79 = scmp.eq.s32.totalorder %s15, 0
    %p80 = por %p78, %p79
    %s81 = ssub.s32 %s17, %s24
    %p82 = scmp.eq.s32.totalorder %s81, 0
    %s84 = sadd.s32 %s83, 1
    %s85 = scalar_select %p82, %s83, %s84
    %p88 = pneg %p82
    %p89 = scmp.eq.s32.totalorder %s9, 1
    %p90 = por %p88, %p89
    %p91 = scmp.ne.s32.totalorder %s83, %s86
    %p92 = scmp.eq.s32.totalorder %s9, 0
    %p93 = por %p91, %p92
    %p94 = scmp.ne.s32.totalorder %s83, %s86
    %p95 = scmp.eq.s32.totalorder %s14, 1
    %p96 = por %p94, %p95
    %p97 = scmp.ne.s32.totalorder %s86, %s87
    %p98 = scmp.eq.s32.totalorder %s14, 0
    %p99 = por %p97, %p98
    %p100 = scmp.ne.s32.totalorder %s86, %s87
    %p101 = scmp.eq.s32.totalorder %s15, 1
    %p102 = por %p100, %p101
    %p104 = scmp.ne.s32.totalorder %s87, %s103
    %p105 = scmp.eq.s32.totalorder %s15, 0
    %p106 = por %p104, %p105
    %s107 = ssub.s32 %s16, %s28
    %s108 = ssub.s32 %s17, %s24
    %s109 = sor.u32 %s107, %s108
    %p110 = scmp.eq.s32.totalorder %s109, 0
    %s112 = sadd.s32 %s111, 1
    %s113 = scalar_select %p110, %s111, %s112
    %p116 = pneg %p110
    %p117 = scmp.eq.s32.totalorder %s9, 1
    %p118 = por %p116, %p117
    %p119 = scmp.ne.s32.totalorder %s111, %s114
    %p120 = scmp.eq.s32.totalorder %s9, 0
    %p121 = por %p119, %p120
    %p122 = scmp.ne.s32.totalorder %s111, %s114
    %p123 = scmp.eq.s32.totalorder %s14, 1
    %p124 = por %p122, %p123
    %p125 = scmp.ne.s32.totalorder %s114, %s115
    %p126 = scmp.eq.s32.totalorder %s14, 0
    %p127 = por %p125, %p126
    %p128 = scmp.ne.s32.totalorder %s114, %s115
    %p129 = scmp.eq.s32.totalorder %s15, 1
    %p130 = por %p128, %p129
    %p132 = scmp.ne.s32.totalorder %s115, %s131
    %p133 = scmp.eq.s32.totalorder %s15, 0
    %p134 = por %p132, %p133
    %p135 = scmp.le.s32.totalorder 1, %s9
    %p136 = scmp.lt.s32.totalorder %s9, 3
    %p137 = pnand %p135, %p136
    %p138 = pneg %p137
    // Predicated region
    $region9: #{generator_forward.22} parent=5 // pred_check
      _
    $region10: #{generator_forward.22} parent=5 // pred_check_branch
      %140 = sbr.rel (%p137) target = $region12
    $region11: #{generator_forward.22} parent=5 // pred_region
      %s141 = ssub.s32 %s9, 1
      // Predicated region
      $region13: #{generator_forward.22} parent=11 // pred_check
        %p142 = pneg %p73
      $region14: #{generator_forward.22} parent=11 // pred_check_branch
        %144 = sbr.rel (%p142) target = $region16
      $region15: #{generator_forward.22} parent=11 // pred_region
        %p145 = scmp.lt.s32.totalorder %s19, 0
        %s146 = scalar_select %p145, %s19, 0
        %s147 = smul.addr %s146, 4
        %s148 = scalar_lea.vmem %s1, %s147
      $region16: #{generator_forward.22} parent=11 // pred_fallthru
        _
      // Predicated region
      $region17: #{generator_forward.22} parent=11 // pred_check
        %p149 = pneg %p99
      $region18: #{generator_forward.22} parent=11 // pred_check_branch
        %151 = sbr.rel (%p149) target = $region20
      $region19: #{generator_forward.22} parent=11 // pred_region
        %p152 = scmp.lt.s32.totalorder %s19, 0
        %s153 = scalar_select %p152, %s19, 0
        %s154 = scalar_lea.vmem %s2, %s153
      $region20: #{generator_forward.22} parent=11 // pred_fallthru
        _
    $region12: #{generator_forward.22} parent=5 // pred_fallthru
      _
    %p155 = scmp.lt.s32.totalorder %s9, 2
    // Predicated region
    $region21: #{generator_forward.22} parent=5 // pred_check
      %p156 = pneg %p155
    $region22: #{generator_forward.22} parent=5 // pred_check_branch
      %158 = sbr.rel (%p156) target = $region24
    $region23: #{generator_forward.22} parent=5 // pred_region
      // Predicated region
      $region25: #{generator_forward.22} parent=23 // pred_check
        %p159 = pneg %p41
      $region26: #{generator_forward.22} parent=23 // pred_check_branch
        %161 = sbr.rel (%p159) target = $region28
      $region27: #{generator_forward.22} parent=23 // pred_region
        %s162 = smul.u32 32, %s16
        %p163 = scmp.lt.s32.totalorder %s162, 63
        %s164 = scalar_select %p163, %s162, 63
        %s165 = smul.addr %s164, 3
        %s166 = smul.addr %s165, 4
        %s167 = scalar_lea.vmem %s0, %s166
        %s168 = smul.u32 32, %s16
      $region28: #{generator_forward.22} parent=23 // pred_fallthru
        _
    $region24: #{generator_forward.22} parent=5 // pred_fallthru
      _
    %p169 = scmp.le.s32.totalorder 1, %s9
    %p170 = scmp.lt.s32.totalorder %s9, 3
    %p171 = pnand %p169, %p170
    %p172 = pneg %p171
    // Predicated region
    $region29: #{generator_forward.22} parent=5 // pred_check
      _
    $region30: #{generator_forward.22} parent=5 // pred_check_branch
      %174 = sbr.rel (%p171) target = $region32
    $region31: #{generator_forward.22} parent=5 // pred_region
      %s175 = ssub.s32 %s9, 1
      %s176 = smul.u32 32, %s18
      %p177 = scmp.lt.s32.totalorder %s176, 63
      %s178 = scalar_select %p177, %s176, 63
      %s179 = smul.addr %s178, 3
      %s180 = smul.addr %s179, 4
      %s181 = scalar_lea.vmem %s0, %s180
      %p182 = pneg %p47
      %p183 = pneg %p44
      %p184 = scmp.lt.s32.totalorder %s19, 0
      %s185 = scalar_select %p184, %s19, 0
      %s186 = smul.addr %s185, 4
      %s187 = scalar_lea.vmem %s1, %s186
      %p188 = pneg %p73
      %p189 = pneg %p70
      %p190 = scmp.lt.s32.totalorder %s19, 0
      %s191 = scalar_select %p190, %s19, 0
      %s192 = scalar_lea.vmem %s2, %s191
      %p193 = pneg %p99
      %p194 = pneg %p96
      %p195 = pneg %p127
      %p196 = pneg %p124
      %s197 = smul.u32 32, %s18
      %p198 = scmp.lt.s32.totalorder %s197, 63
      %s199 = scalar_select %p198, %s197, 63
      %p200 = scmp.lt.s32.totalorder %s19, 0
      %s201 = scalar_select %p200, %s19, 0
      %s202 = sadd.s32 %s201, %s199
      %s203 = smul.addr %s202, 8
      %s204 = scalar_lea.vmem %s3, %s203
      %s205 = smul.u32 32, %s18
      %p206 = scmp.lt.s32.totalorder %s205, 63
      %s207 = scalar_select %p206, %s205, 63
      %s208 = smul.addr %s207, 3
      %s209 = smul.addr %s208, 4
      %s210 = scalar_lea.vmem %s0, %s209
      %s211 = smul.u32 32, %s18
      %p212 = scmp.lt.s32.totalorder %s19, 0
      %s213 = scalar_select %p212, %s19, 0
      %s214 = smul.addr %s213, 4
      %s215 = scalar_lea.vmem %s1, %s214
      %p216 = scmp.lt.s32.totalorder %s19, 0
      %s217 = scalar_select %p216, %s19, 0
      %s218 = scalar_lea.vmem %s2, %s217
      %s219 = smul.u32 32, %s18
      %p220 = scmp.lt.s32.totalorder %s219, 63
      %s221 = scalar_select %p220, %s219, 63
      %p222 = scmp.lt.s32.totalorder %s19, 0
      %s223 = scalar_select %p222, %s19, 0
      %s224 = sadd.s32 %s223, %s221
      %s225 = smul.addr %s224, 8
      %s226 = scalar_lea.vmem %s3, %s225
      %s227 = smul.u32 32, %s18
      %v229 = vld [vmem:[%s210] sm:$0xff]
      %v230 = vld [vmem:[%s210 + $0x8] sm:$0xf]
      %v231 = vld [vmem:[%s210 + $0xc] sm:$0xff]
      %v232 = vld [vmem:[%s210 + $0x14] sm:$0xf]
      %v233 = vld [vmem:[%s210 + $0x18] sm:$0xff]
      %v234 = vld [vmem:[%s210 + $0x20] sm:$0xf]
      %v235 = vld [vmem:[%s210 + $0x24] sm:$0xff]
      %v236 = vld [vmem:[%s210 + $0x2c] sm:$0xf]
      %v237 = vld [vmem:[%s210 + $0x30] sm:$0xff]
      %v238 = vld [vmem:[%s210 + $0x38] sm:$0xf]
      %v239 = vld [vmem:[%s210 + $0x3c] sm:$0xff]
      %v240 = vld [vmem:[%s210 + $0x44] sm:$0xf]
      %v241 = vld [vmem:[%s210 + $0x48] sm:$0xff]
      %v242 = vld [vmem:[%s210 + $0x50] sm:$0xf]
      %v243 = vld [vmem:[%s210 + $0x54] sm:$0xff]
      %v244 = vld [vmem:[%s210 + $0x5c] sm:$0xf]
      %v245 = vld [vmem:[%s210 + $0x60] sm:$0xff]
      %v246 = vld [vmem:[%s210 + $0x68] sm:$0xf]
      %v247 = vld [vmem:[%s210 + $0x6c] sm:$0xff]
      %v248 = vld [vmem:[%s210 + $0x74] sm:$0xf]
      %v249 = vld [vmem:[%s210 + $0x78] sm:$0xff]
      %v250 = vld [vmem:[%s210 + $0x80] sm:$0xf]
      %v251 = vld [vmem:[%s210 + $0x84] sm:$0xff]
      %v252 = vld [vmem:[%s210 + $0x8c] sm:$0xf]
      %v253 = vld [vmem:[%s210 + $0x90] sm:$0xff]
      %v254 = vld [vmem:[%s210 + $0x98] sm:$0xf]
      %v255 = vld [vmem:[%s210 + $0x9c] sm:$0xff]
      %v256 = vld [vmem:[%s210 + $0xa4] sm:$0xf]
      %v257 = vld [vmem:[%s210 + $0xa8] sm:$0xff]
      %v258 = vld [vmem:[%s210 + $0xb0] sm:$0xf]
      %v259 = vld [vmem:[%s210 + $0xb4] sm:$0xff]
      %v260 = vld [vmem:[%s210 + $0xbc] sm:$0xf]
      %v261 = vld [vmem:[%s210 + $0xc0] sm:$0xff]
      %v262 = vld [vmem:[%s210 + $0xc8] sm:$0xf]
      %v263 = vld [vmem:[%s210 + $0xcc] sm:$0xff]
      %v264 = vld [vmem:[%s210 + $0xd4] sm:$0xf]
      %v265 = vld [vmem:[%s210 + $0xd8] sm:$0xff]
      %v266 = vld [vmem:[%s210 + $0xe0] sm:$0xf]
      %v267 = vld [vmem:[%s210 + $0xe4] sm:$0xff]
      %v268 = vld [vmem:[%s210 + $0xec] sm:$0xf]
      %v269 = vld [vmem:[%s210 + $0xf0] sm:$0xff]
      %v270 = vld [vmem:[%s210 + $0xf8] sm:$0xf]
      %v271 = vld [vmem:[%s210 + $0xfc] sm:$0xff]
      %v272 = vld [vmem:[%s210 + $0x104] sm:$0xf]
      %v273 = vld [vmem:[%s210 + $0x108] sm:$0xff]
      %v274 = vld [vmem:[%s210 + $0x110] sm:$0xf]
      %v275 = vld [vmem:[%s210 + $0x114] sm:$0xff]
      %v276 = vld [vmem:[%s210 + $0x11c] sm:$0xf]
      %v277 = vld [vmem:[%s210 + $0x120] sm:$0xff]
      %v278 = vld [vmem:[%s210 + $0x128] sm:$0xf]
      %v279 = vld [vmem:[%s210 + $0x12c] sm:$0xff]
      %v280 = vld [vmem:[%s210 + $0x134] sm:$0xf]
      %v281 = vld [vmem:[%s210 + $0x138] sm:$0xff]
      %v282 = vld [vmem:[%s210 + $0x140] sm:$0xf]
      %v283 = vld [vmem:[%s210 + $0x144] sm:$0xff]
      %v284 = vld [vmem:[%s210 + $0x14c] sm:$0xf]
      %v285 = vld [vmem:[%s210 + $0x150] sm:$0xff]
      %v286 = vld [vmem:[%s210 + $0x158] sm:$0xf]
      %v287 = vld [vmem:[%s210 + $0x15c] sm:$0xff]
      %v288 = vld [vmem:[%s210 + $0x164] sm:$0xf]
      %v289 = vld [vmem:[%s210 + $0x168] sm:$0xff]
      %v290 = vld [vmem:[%s210 + $0x170] sm:$0xf]
      %v291 = vld [vmem:[%s210 + $0x174] sm:$0xff]
      %v292 = vld [vmem:[%s210 + $0x17c] sm:$0xf]
      %v293 = vld [vmem:[%s215] sm:$0xf]
      %v294 = vld [vmem:[%s215 + $0x4] sm:$0xf]
      %v295 = vld [vmem:[%s215 + $0x8] sm:$0xf]
      %v296 = vld [vmem:[%s215 + $0xc] sm:$0xf]
      %v297 = vld [vmem:[%s215 + $0x10] sm:$0xf]
      %v298 = vld [vmem:[%s215 + $0x14] sm:$0xf]
      %v299 = vld [vmem:[%s215 + $0x18] sm:$0xf]
      %v300 = vld [vmem:[%s215 + $0x1c] sm:$0xf]
      %v301 = vld [vmem:[%s215 + $0x20] sm:$0xf]
      %v302 = vld [vmem:[%s215 + $0x24] sm:$0xf]
      %v303 = vld [vmem:[%s215 + $0x28] sm:$0xf]
      %v304 = vld [vmem:[%s215 + $0x2c] sm:$0xf]
      %v305 = vld [vmem:[%s215 + $0x30] sm:$0xf]
      %v306 = vld [vmem:[%s215 + $0x34] sm:$0xf]
      %v307 = vld [vmem:[%s215 + $0x38] sm:$0xf]
      %v308 = vld [vmem:[%s215 + $0x3c] sm:$0xf]
      %v309 = vld [vmem:[%s215 + $0x40] sm:$0xf]
      %v310 = vld [vmem:[%s215 + $0x44] sm:$0xf]
      %v311 = vld [vmem:[%s215 + $0x48] sm:$0xf]
      %v312 = vld [vmem:[%s215 + $0x4c] sm:$0xf]
      %v313 = vld [vmem:[%s215 + $0x50] sm:$0xf]
      %v314 = vld [vmem:[%s215 + $0x54] sm:$0xf]
      %v315 = vld [vmem:[%s215 + $0x58] sm:$0xf]
      %v316 = vld [vmem:[%s215 + $0x5c] sm:$0xf]
      %v317 = vld [vmem:[%s215 + $0x60] sm:$0xf]
      %v318 = vld [vmem:[%s215 + $0x64] sm:$0xf]
      %v319 = vld [vmem:[%s215 + $0x68] sm:$0xf]
      %v320 = vld [vmem:[%s215 + $0x6c] sm:$0xf]
      %v321 = vld [vmem:[%s215 + $0x70] sm:$0xf]
      %v322 = vld [vmem:[%s215 + $0x74] sm:$0xf]
      %v323 = vld [vmem:[%s215 + $0x78] sm:$0xf]
      %v324 = vld [vmem:[%s215 + $0x7c] sm:$0xf]
      %v325 = vld [vmem:[%s215 + $0x80] sm:$0xf]
      %v326 = vld [vmem:[%s215 + $0x84] sm:$0xf]
      %v327 = vld [vmem:[%s215 + $0x88] sm:$0xf]
      %v328 = vld [vmem:[%s215 + $0x8c] sm:$0xf]
      %v329 = vld [vmem:[%s215 + $0x90] sm:$0xf]
      %v330 = vld [vmem:[%s215 + $0x94] sm:$0xf]
      %v331 = vld [vmem:[%s215 + $0x98] sm:$0xf]
      %v332 = vld [vmem:[%s215 + $0x9c] sm:$0xf]
      %v333 = vld [vmem:[%s215 + $0xa0] sm:$0xf]
      %v334 = vld [vmem:[%s215 + $0xa4] sm:$0xf]
      %v335 = vld [vmem:[%s215 + $0xa8] sm:$0xf]
      %v336 = vld [vmem:[%s215 + $0xac] sm:$0xf]
      %v337 = vld [vmem:[%s215 + $0xb0] sm:$0xf]
      %v338 = vld [vmem:[%s215 + $0xb4] sm:$0xf]
      %v339 = vld [vmem:[%s215 + $0xb8] sm:$0xf]
      %v340 = vld [vmem:[%s215 + $0xbc] sm:$0xf]
      %v341 = vld [vmem:[%s218] sm:$0x1]
      %v343 = vlaneseq
      %v344 = vshrl.u32 %v343, 7
      %v345 = vsub.s32 0, %v344
      %v346 = vrot.slane %v341, %v345
      %v412 = vunpack.c.l.b16 %v229
      %v413 = vunpack.c.h.b16 %v229
      %v414 = vunpack.c.l.b16 %v230
      %v415 = vunpack.c.l.b16 %v231
      %v416 = vunpack.c.h.b16 %v231
      %v417 = vunpack.c.l.b16 %v232
      %v418 = vunpack.c.l.b16 %v233
      %v419 = vunpack.c.h.b16 %v233
      %v420 = vunpack.c.l.b16 %v234
      %v421 = vunpack.c.l.b16 %v235
      %v422 = vunpack.c.h.b16 %v235
      %v423 = vunpack.c.l.b16 %v236
      %v424 = vunpack.c.l.b16 %v237
      %v425 = vunpack.c.h.b16 %v237
      %v426 = vunpack.c.l.b16 %v238
      %v427 = vunpack.c.l.b16 %v239
      %v428 = vunpack.c.h.b16 %v239
      %v429 = vunpack.c.l.b16 %v240
      %v430 = vunpack.c.l.b16 %v241
      %v431 = vunpack.c.h.b16 %v241
      %v432 = vunpack.c.l.b16 %v242
      %v433 = vunpack.c.l.b16 %v243
      %v434 = vunpack.c.h.b16 %v243
      %v435 = vunpack.c.l.b16 %v244
      %v436 = vunpack.c.l.b16 %v245
      %v437 = vunpack.c.h.b16 %v245
      %v438 = vunpack.c.l.b16 %v246
      %v439 = vunpack.c.l.b16 %v247
      %v440 = vunpack.c.h.b16 %v247
      %v441 = vunpack.c.l.b16 %v248
      %v442 = vunpack.c.l.b16 %v249
      %v443 = vunpack.c.h.b16 %v249
      %v444 = vunpack.c.l.b16 %v250
      %v445 = vunpack.c.l.b16 %v251
      %v446 = vunpack.c.h.b16 %v251
      %v447 = vunpack.c.l.b16 %v252
      %v448 = vunpack.c.l.b16 %v253
      %v449 = vunpack.c.h.b16 %v253
      %v450 = vunpack.c.l.b16 %v254
      %v451 = vunpack.c.l.b16 %v255
      %v452 = vunpack.c.h.b16 %v255
      %v453 = vunpack.c.l.b16 %v256
      %v454 = vunpack.c.l.b16 %v257
      %v455 = vunpack.c.h.b16 %v257
      %v456 = vunpack.c.l.b16 %v258
      %v457 = vunpack.c.l.b16 %v259
      %v458 = vunpack.c.h.b16 %v259
      %v459 = vunpack.c.l.b16 %v260
      %v460 = vunpack.c.l.b16 %v261
      %v461 = vunpack.c.h.b16 %v261
      %v462 = vunpack.c.l.b16 %v262
      %v463 = vunpack.c.l.b16 %v263
      %v464 = vunpack.c.h.b16 %v263
      %v465 = vunpack.c.l.b16 %v264
      %v466 = vunpack.c.l.b16 %v265
      %v467 = vunpack.c.h.b16 %v265
      %v468 = vunpack.c.l.b16 %v266
      %v469 = vunpack.c.l.b16 %v267
      %v470 = vunpack.c.h.b16 %v267
      %v471 = vunpack.c.l.b16 %v268
      %v472 = vunpack.c.l.b16 %v269
      %v473 = vunpack.c.h.b16 %v269
      %v474 = vunpack.c.l.b16 %v270
      %v475 = vunpack.c.l.b16 %v271
      %v476 = vunpack.c.h.b16 %v271
      %v477 = vunpack.c.l.b16 %v272
      %v478 = vunpack.c.l.b16 %v273
      %v479 = vunpack.c.h.b16 %v273
      %v480 = vunpack.c.l.b16 %v274
      %v481 = vunpack.c.l.b16 %v275
      %v482 = vunpack.c.h.b16 %v275
      %v483 = vunpack.c.l.b16 %v276
      %v484 = vunpack.c.l.b16 %v277
      %v485 = vunpack.c.h.b16 %v277
      %v486 = vunpack.c.l.b16 %v278
      %v487 = vunpack.c.l.b16 %v279
      %v488 = vunpack.c.h.b16 %v279
      %v489 = vunpack.c.l.b16 %v280
      %v490 = vunpack.c.l.b16 %v281
      %v491 = vunpack.c.h.b16 %v281
      %v492 = vunpack.c.l.b16 %v282
      %v493 = vunpack.c.l.b16 %v283
      %v494 = vunpack.c.h.b16 %v283
      %v495 = vunpack.c.l.b16 %v284
      %v496 = vunpack.c.l.b16 %v285
      %v497 = vunpack.c.h.b16 %v285
      %v498 = vunpack.c.l.b16 %v286
      %v499 = vunpack.c.l.b16 %v287
      %v500 = vunpack.c.h.b16 %v287
      %v501 = vunpack.c.l.b16 %v288
      %v502 = vunpack.c.l.b16 %v289
      %v503 = vunpack.c.h.b16 %v289
      %v504 = vunpack.c.l.b16 %v290
      %v505 = vunpack.c.l.b16 %v291
      %v506 = vunpack.c.h.b16 %v291
      %v507 = vunpack.c.l.b16 %v292
      %v508 = vpack.c.b16 %v415, %v412
      %v509 = vpack.c.b16 %v416, %v413
      %v510 = vpack.c.b16 %v417, %v414
      %v511 = vpack.c.b16 %v421, %v418
      %v512 = vpack.c.b16 %v422, %v419
      %v513 = vpack.c.b16 %v423, %v420
      %v514 = vpack.c.b16 %v427, %v424
      %v515 = vpack.c.b16 %v428, %v425
      %v516 = vpack.c.b16 %v429, %v426
      %v517 = vpack.c.b16 %v433, %v430
      %v518 = vpack.c.b16 %v434, %v431
      %v519 = vpack.c.b16 %v435, %v432
      %v520 = vpack.c.b16 %v439, %v436
      %v521 = vpack.c.b16 %v440, %v437
      %v522 = vpack.c.b16 %v441, %v438
      %v523 = vpack.c.b16 %v445, %v442
      %v524 = vpack.c.b16 %v446, %v443
      %v525 = vpack.c.b16 %v447, %v444
      %v526 = vpack.c.b16 %v451, %v448
      %v527 = vpack.c.b16 %v452, %v449
      %v528 = vpack.c.b16 %v453, %v450
      %v529 = vpack.c.b16 %v457, %v454
      %v530 = vpack.c.b16 %v458, %v455
      %v531 = vpack.c.b16 %v459, %v456
      %v532 = vpack.c.b16 %v463, %v460
      %v533 = vpack.c.b16 %v464, %v461
      %v534 = vpack.c.b16 %v465, %v462
      %v535 = vpack.c.b16 %v469, %v466
      %v536 = vpack.c.b16 %v470, %v467
      %v537 = vpack.c.b16 %v471, %v468
      %v538 = vpack.c.b16 %v475, %v472
      %v539 = vpack.c.b16 %v476, %v473
      %v540 = vpack.c.b16 %v477, %v474
      %v541 = vpack.c.b16 %v481, %v478
      %v542 = vpack.c.b16 %v482, %v479
      %v543 = vpack.c.b16 %v483, %v480
      %v544 = vpack.c.b16 %v487, %v484
      %v545 = vpack.c.b16 %v488, %v485
      %v546 = vpack.c.b16 %v489, %v486
      %v547 = vpack.c.b16 %v493, %v490
      %v548 = vpack.c.b16 %v494, %v491
      %v549 = vpack.c.b16 %v495, %v492
      %v550 = vpack.c.b16 %v499, %v496
      %v551 = vpack.c.b16 %v500, %v497
      %v552 = vpack.c.b16 %v501, %v498
      %v553 = vpack.c.b16 %v505, %v502
      %v554 = vpack.c.b16 %v506, %v503
      %v555 = vpack.c.b16 %v507, %v504
      %v652 = vunpack.c.l.b16 %v293
      %v653 = vunpack.c.l.b16 %v294
      %v654 = vunpack.c.l.b16 %v295
      %v655 = vunpack.c.l.b16 %v296
      %v656 = vunpack.c.l.b16 %v297
      %v657 = vunpack.c.l.b16 %v298
      %v658 = vunpack.c.l.b16 %v299
      %v659 = vunpack.c.l.b16 %v300
      %v660 = vunpack.c.l.b16 %v301
      %v661 = vunpack.c.l.b16 %v302
      %v662 = vunpack.c.l.b16 %v303
      %v663 = vunpack.c.l.b16 %v304
      %v664 = vunpack.c.l.b16 %v305
      %v665 = vunpack.c.l.b16 %v306
      %v666 = vunpack.c.l.b16 %v307
      %v667 = vunpack.c.l.b16 %v308
      %v668 = vunpack.c.l.b16 %v309
      %v669 = vunpack.c.l.b16 %v310
      %v670 = vunpack.c.l.b16 %v311
      %v671 = vunpack.c.l.b16 %v312
      %v672 = vunpack.c.l.b16 %v313
      %v673 = vunpack.c.l.b16 %v314
      %v674 = vunpack.c.l.b16 %v315
      %v675 = vunpack.c.l.b16 %v316
      %v676 = vunpack.c.l.b16 %v317
      %v677 = vunpack.c.l.b16 %v318
      %v678 = vunpack.c.l.b16 %v319
      %v679 = vunpack.c.l.b16 %v320
      %v680 = vunpack.c.l.b16 %v321
      %v681 = vunpack.c.l.b16 %v322
      %v682 = vunpack.c.l.b16 %v323
      %v683 = vunpack.c.l.b16 %v324
      %v684 = vunpack.c.l.b16 %v325
      %v685 = vunpack.c.l.b16 %v326
      %v686 = vunpack.c.l.b16 %v327
      %v687 = vunpack.c.l.b16 %v328
      %v688 = vunpack.c.l.b16 %v329
      %v689 = vunpack.c.l.b16 %v330
      %v690 = vunpack.c.l.b16 %v331
      %v691 = vunpack.c.l.b16 %v332
      %v692 = vunpack.c.l.b16 %v333
      %v693 = vunpack.c.l.b16 %v334
      %v694 = vunpack.c.l.b16 %v335
      %v695 = vunpack.c.l.b16 %v336
      %v696 = vunpack.c.l.b16 %v337
      %v697 = vunpack.c.l.b16 %v338
      %v698 = vunpack.c.l.b16 %v339
      %v699 = vunpack.c.l.b16 %v340
      %v700 = vpack.c.b16 %v653, %v652
      %v701 = vpack.c.b16 %v655, %v654
      %v702 = vpack.c.b16 %v657, %v656
      %v703 = vpack.c.b16 %v659, %v658
      %v704 = vpack.c.b16 %v661, %v660
      %v705 = vpack.c.b16 %v663, %v662
      %v706 = vpack.c.b16 %v665, %v664
      %v707 = vpack.c.b16 %v667, %v666
      %v708 = vpack.c.b16 %v669, %v668
      %v709 = vpack.c.b16 %v671, %v670
      %v710 = vpack.c.b16 %v673, %v672
      %v711 = vpack.c.b16 %v675, %v674
      %v712 = vpack.c.b16 %v677, %v676
      %v713 = vpack.c.b16 %v679, %v678
      %v714 = vpack.c.b16 %v681, %v680
      %v715 = vpack.c.b16 %v683, %v682
      %v716 = vpack.c.b16 %v685, %v684
      %v717 = vpack.c.b16 %v687, %v686
      %v718 = vpack.c.b16 %v689, %v688
      %v719 = vpack.c.b16 %v691, %v690
      %v720 = vpack.c.b16 %v693, %v692
      %v721 = vpack.c.b16 %v695, %v694
      %v722 = vpack.c.b16 %v697, %v696
      %v723 = vpack.c.b16 %v699, %v698
      %748 = vmatprep.subr.bf16.mxu0 0
      %749 = vmatpush1.bf16.msra.mxu0 %v700
      %750 = vmatprep.subr.bf16.mxu0 0
      %751 = vmatpush1.bf16.msra.mxu0 %v701
      %752 = vmatprep.subr.bf16.mxu0 0
      %753 = vmatpush1.bf16.msra.mxu0 %v702
      %754 = vmatprep.subr.bf16.mxu0 0
      %755 = vmatpush1.bf16.msra.mxu0 %v703
      %756 = vmatprep.subr.bf16.mxu0 0
      %757 = vmatpush1.bf16.msra.mxu0 %v704
      %758 = vmatprep.subr.bf16.mxu0 0
      %759 = vmatpush1.bf16.msra.mxu0 %v705
      %760 = vmatprep.subr.bf16.mxu0 0
      %761 = vmatpush1.bf16.msra.mxu0 %v706
      %762 = vmatprep.subr.bf16.mxu0 0
      %763 = vmatpush1.bf16.msra.mxu0 %v707
      %764 = vmatprep.subr.bf16.mxu0 0
      %765 = vmatpush1.bf16.msra.mxu0 %v708
      %766 = vmatprep.subr.bf16.mxu0 0
      %767 = vmatpush1.bf16.msra.mxu0 %v709
      %768 = vmatprep.subr.bf16.mxu0 0
      %769 = vmatpush1.bf16.msra.mxu0 %v710
      %770 = vmatprep.subr.bf16.mxu0 0
      %771 = vmatpush1.bf16.msra.mxu0 %v711
      %772 = vmatprep.subr.bf16.mxu0 0
      %773 = vmatpush1.bf16.msra.mxu0 %v712
      %774 = vmatprep.subr.bf16.mxu0 0
      %775 = vmatpush1.bf16.msra.mxu0 %v713
      %776 = vmatprep.subr.bf16.mxu0 0
      %777 = vmatpush1.bf16.msra.mxu0 %v714
      %778 = vmatprep.subr.bf16.mxu0 0
      %779 = vmatpush1.bf16.msra.mxu0 %v715
      %780 = vmatprep.mubr.bf16.mxu0 %v509
      %781 = vmatmul.mubr.bf16.gmra.mrb[0].mxu0 %v508
      %v782 = vpop.f32.mrb[0].mxu0
      %v783 = vadd.f32 %v346, %v782
      %v784 = vpop.f32.mrb[0].mxu0
      %v785 = vpop.f32.mrb[0].mxu0
      %v786 = vadd.f32 %v346, %v785
      %v787 = vpop.f32.mrb[0].mxu0
      %788 = vmatprep.mubr.bf16.mxu0 %v512
      %789 = vmatmul.mubr.bf16.gmra.mrb[0].mxu0 %v511
      %v790 = vpop.f32.mrb[0].mxu0
      %v791 = vadd.f32 %v346, %v790
      %v792 = vpop.f32.mrb[0].mxu0
      %v793 = vpop.f32.mrb[0].mxu0
      %v794 = vadd.f32 %v346, %v793
      %v795 = vpop.f32.mrb[0].mxu0
      %796 = vmatprep.mubr.bf16.mxu0 %v515
      %797 = vmatmul.mubr.bf16.gmra.mrb[0].mxu0 %v514
      %v798 = vpop.f32.mrb[0].mxu0
      %v799 = vadd.f32 %v346, %v798
      %v800 = vpop.f32.mrb[0].mxu0
      %v801 = vpop.f32.mrb[0].mxu0
      %v802 = vadd.f32 %v346, %v801
      %v803 = vpop.f32.mrb[0].mxu0
      %804 = vmatprep.mubr.bf16.mxu0 %v518
      %805 = vmatmul.mubr.bf16.gmra.mrb[0].mxu0 %v517
      %v806 = vpop.f32.mrb[0].mxu0
      %v807 = vadd.f32 %v346, %v806
      %v808 = vpop.f32.mrb[0].mxu0
      %v809 = vpop.f32.mrb[0].mxu0
      %v810 = vadd.f32 %v346, %v809
      %v811 = vpop.f32.mrb[0].mxu0
      %812 = vmatprep.mubr.bf16.mxu0 %v521
      %813 = vmatmul.mubr.bf16.gmra.mrb[0].mxu0 %v520
      %v814 = vpop.f32.mrb[0].mxu0
      %v815 = vadd.f32 %v346, %v814
      %v816 = vpop.f32.mrb[0].mxu0
      %v817 = vpop.f32.mrb[0].mxu0
      %v818 = vadd.f32 %v346, %v817
      %v819 = vpop.f32.mrb[0].mxu0
      %820 = vmatprep.mubr.bf16.mxu0 %v524
      %821 = vmatmul.mubr.bf16.gmra.mrb[0].mxu0 %v523
      %v822 = vpop.f32.mrb[0].mxu0
      %v823 = vadd.f32 %v346, %v822
      %v824 = vpop.f32.mrb[0].mxu0
      %v825 = vpop.f32.mrb[0].mxu0
      %v826 = vadd.f32 %v346, %v825
      %v827 = vpop.f32.mrb[0].mxu0
      %828 = vmatprep.mubr.bf16.mxu0 %v527
      %829 = vmatmul.mubr.bf16.gmra.mrb[0].mxu0 %v526
      %v830 = vpop.f32.mrb[0].mxu0
      %v831 = vadd.f32 %v346, %v830
      %v832 = vpop.f32.mrb[0].mxu0
      %v833 = vpop.f32.mrb[0].mxu0
      %v834 = vadd.f32 %v346, %v833
      %v835 = vpop.f32.mrb[0].mxu0
      %836 = vmatprep.mubr.bf16.mxu0 %v530
      %837 = vmatmul.mubr.bf16.gmra.mrb[0].mxu0 %v529
      %v838 = vpop.f32.mrb[0].mxu0
      %v839 = vadd.f32 %v346, %v838
      %v840 = vpop.f32.mrb[0].mxu0
      %v841 = vpop.f32.mrb[0].mxu0
      %v842 = vadd.f32 %v346, %v841
      %v843 = vpop.f32.mrb[0].mxu0
      %844 = vmatprep.mubr.bf16.mxu0 %v533
      %845 = vmatmul.mubr.bf16.gmra.mrb[0].mxu0 %v532
      %v846 = vpop.f32.mrb[0].mxu0
      %v847 = vadd.f32 %v346, %v846
      %v848 = vpop.f32.mrb[0].mxu0
      %v849 = vpop.f32.mrb[0].mxu0
      %v850 = vadd.f32 %v346, %v849
      %v851 = vpop.f32.mrb[0].mxu0
      %852 = vmatprep.mubr.bf16.mxu0 %v536
      %853 = vmatmul.mubr.bf16.gmra.mrb[0].mxu0 %v535
      %v854 = vpop.f32.mrb[0].mxu0
      %v855 = vadd.f32 %v346, %v854
      %v856 = vpop.f32.mrb[0].mxu0
      %v857 = vpop.f32.mrb[0].mxu0
      %v858 = vadd.f32 %v346, %v857
      %v859 = vpop.f32.mrb[0].mxu0
      %860 = vmatprep.mubr.bf16.mxu0 %v539
      %861 = vmatmul.mubr.bf16.gmra.mrb[0].mxu0 %v538
      %v862 = vpop.f32.mrb[0].mxu0
      %v863 = vadd.f32 %v346, %v862
      %v864 = vpop.f32.mrb[0].mxu0
      %v865 = vpop.f32.mrb[0].mxu0
      %v866 = vadd.f32 %v346, %v865
      %v867 = vpop.f32.mrb[0].mxu0
      %868 = vmatprep.mubr.bf16.mxu0 %v542
      %869 = vmatmul.mubr.bf16.gmra.mrb[0].mxu0 %v541
      %v870 = vpop.f32.mrb[0].mxu0
      %v871 = vadd.f32 %v346, %v870
      %v872 = vpop.f32.mrb[0].mxu0
      %v873 = vpop.f32.mrb[0].mxu0
      %v874 = vadd.f32 %v346, %v873
      %v875 = vpop.f32.mrb[0].mxu0
      %876 = vmatprep.mubr.bf16.mxu0 %v545
      %877 = vmatmul.mubr.bf16.gmra.mrb[0].mxu0 %v544
      %v878 = vpop.f32.mrb[0].mxu0
      %v879 = vadd.f32 %v346, %v878
      %v880 = vpop.f32.mrb[0].mxu0
      %v881 = vpop.f32.mrb[0].mxu0
      %v882 = vadd.f32 %v346, %v881
      %v883 = vpop.f32.mrb[0].mxu0
      %884 = vmatprep.mubr.bf16.mxu0 %v548
      %885 = vmatmul.mubr.bf16.gmra.mrb[0].mxu0 %v547
      %v886 = vpop.f32.mrb[0].mxu0
      %v887 = vadd.f32 %v346, %v886
      %v888 = vpop.f32.mrb[0].mxu0
      %v889 = vpop.f32.mrb[0].mxu0
      %v890 = vadd.f32 %v346, %v889
      %v891 = vpop.f32.mrb[0].mxu0
      %892 = vmatprep.mubr.bf16.mxu0 %v551
      %893 = vmatmul.mubr.bf16.gmra.mrb[0].mxu0 %v550
      %v894 = vpop.f32.mrb[0].mxu0
      %v895 = vadd.f32 %v346, %v894
      %v896 = vpop.f32.mrb[0].mxu0
      %v897 = vpop.f32.mrb[0].mxu0
      %v898 = vadd.f32 %v346, %v897
      %v899 = vpop.f32.mrb[0].mxu0
      %900 = vmatprep.mubr.bf16.mxu0 %v554
      %901 = vmatmul.mubr.bf16.gmra.mrb[0].mxu0 %v553
      %v902 = vpop.f32.mrb[0].mxu0
      %v903 = vadd.f32 %v346, %v902
      %v904 = vpop.f32.mrb[0].mxu0
      %v905 = vpop.f32.mrb[0].mxu0
      %v906 = vadd.f32 %v346, %v905
      %v907 = vpop.f32.mrb[0].mxu0
      %908 = vdwg.mxu0
      %909 = vmatprep.subr.bf16.mxu0 0
      %910 = vmatpush1.bf16.msra.mxu0 %v716
      %911 = vmatprep.subr.bf16.mxu0 0
      %912 = vmatpush1.bf16.msra.mxu0 %v717
      %913 = vmatprep.subr.bf16.mxu0 0
      %914 = vmatpush1.bf16.msra.mxu0 %v718
      %915 = vmatprep.subr.bf16.mxu0 0
      %916 = vmatpush1.bf16.msra.mxu0 %v719
      %917 = vmatprep.subr.bf16.mxu0 0
      %918 = vmatpush1.bf16.msra.mxu0 %v720
      %919 = vmatprep.subr.bf16.mxu0 0
      %920 = vmatpush1.bf16.msra.mxu0 %v721
      %921 = vmatprep.subr.bf16.mxu0 0
      %922 = vmatpush1.bf16.msra.mxu0 %v722
      %923 = vmatprep.subr.bf16.mxu0 0
      %924 = vmatpush1.bf16.msra.mxu0 %v723
      %925 = vmatprep.subr.bf16.mxu0 0
      %926 = vmatpush1.bf16.msra.mxu0 0
      %927 = vmatprep.subr.bf16.mxu0 0
      %928 = vmatpush1.bf16.msra.mxu0 0
      %929 = vmatprep.subr.bf16.mxu0 0
      %930 = vmatpush1.bf16.msra.mxu0 0
      %931 = vmatprep.subr.bf16.mxu0 0
      %932 = vmatpush1.bf16.msra.mxu0 0
      %933 = vmatprep.subr.bf16.mxu0 0
      %934 = vmatpush1.bf16.msra.mxu0 0
      %935 = vmatprep.subr.bf16.mxu0 0
      %936 = vmatpush1.bf16.msra.mxu0 0
      %937 = vmatprep.subr.bf16.mxu0 0
      %938 = vmatpush1.bf16.msra.mxu0 0
      %939 = vmatprep.subr.bf16.mxu0 0
      %940 = vmatpush1.bf16.msra.mxu0 0
      %941 = vmatprep.mubr.bf16.mxu0 0
      %942 = vmatmul.mubr.bf16.gmra.mrb[0].mxu0 %v510
      %v943 = vpop.f32.mrb[0].mxu0
      %v944 = vadd.f32 %v783, %v943
      %v945 = vpop.f32.mrb[0].mxu0
      %v946 = vpop.f32.mrb[0].mxu0
      %v947 = vadd.f32 %v786, %v946
      %v948 = vpop.f32.mrb[0].mxu0
      %949 = vmatprep.mubr.bf16.mxu0 0
      %950 = vmatmul.mubr.bf16.gmra.mrb[0].mxu0 %v513
      %v951 = vpop.f32.mrb[0].mxu0
      %v952 = vadd.f32 %v791, %v951
      %v953 = vpop.f32.mrb[0].mxu0
      %v954 = vpop.f32.mrb[0].mxu0
      %v955 = vadd.f32 %v794, %v954
      %v956 = vpop.f32.mrb[0].mxu0
      %957 = vmatprep.mubr.bf16.mxu0 0
      %958 = vmatmul.mubr.bf16.gmra.mrb[0].mxu0 %v516
      %v959 = vpop.f32.mrb[0].mxu0
      %v960 = vadd.f32 %v799, %v959
      %v961 = vpop.f32.mrb[0].mxu0
      %v962 = vpop.f32.mrb[0].mxu0
      %v963 = vadd.f32 %v802, %v962
      %v964 = vpop.f32.mrb[0].mxu0
      %965 = vmatprep.mubr.bf16.mxu0 0
      %966 = vmatmul.mubr.bf16.gmra.mrb[0].mxu0 %v519
      %v967 = vpop.f32.mrb[0].mxu0
      %v968 = vadd.f32 %v807, %v967
      %v969 = vpop.f32.mrb[0].mxu0
      %v970 = vpop.f32.mrb[0].mxu0
      %v971 = vadd.f32 %v810, %v970
      %v972 = vpop.f32.mrb[0].mxu0
      %973 = vmatprep.mubr.bf16.mxu0 0
      %974 = vmatmul.mubr.bf16.gmra.mrb[0].mxu0 %v522
      %v975 = vpop.f32.mrb[0].mxu0
      %v976 = vadd.f32 %v815, %v975
      %v977 = vpop.f32.mrb[0].mxu0
      %v978 = vpop.f32.mrb[0].mxu0
      %v979 = vadd.f32 %v818, %v978
      %v980 = vpop.f32.mrb[0].mxu0
      %981 = vmatprep.mubr.bf16.mxu0 0
      %982 = vmatmul.mubr.bf16.gmra.mrb[0].mxu0 %v525
      %v983 = vpop.f32.mrb[0].mxu0
      %v984 = vadd.f32 %v823, %v983
      %v985 = vpop.f32.mrb[0].mxu0
      %v986 = vpop.f32.mrb[0].mxu0
      %v987 = vadd.f32 %v826, %v986
      %v988 = vpop.f32.mrb[0].mxu0
      %989 = vmatprep.mubr.bf16.mxu0 0
      %990 = vmatmul.mubr.bf16.gmra.mrb[0].mxu0 %v528
      %v991 = vpop.f32.mrb[0].mxu0
      %v992 = vadd.f32 %v831, %v991
      %v993 = vpop.f32.mrb[0].mxu0
      %v994 = vpop.f32.mrb[0].mxu0
      %v995 = vadd.f32 %v834, %v994
      %v996 = vpop.f32.mrb[0].mxu0
      %997 = vmatprep.mubr.bf16.mxu0 0
      %998 = vmatmul.mubr.bf16.gmra.mrb[0].mxu0 %v531
      %v999 = vpop.f32.mrb[0].mxu0
      %v1000 = vadd.f32 %v839, %v999
      %v1001 = vpop.f32.mrb[0].mxu0
      %v1002 = vpop.f32.mrb[0].mxu0
      %v1003 = vadd.f32 %v842, %v1002
      %v1004 = vpop.f32.mrb[0].mxu0
      %1005 = vmatprep.mubr.bf16.mxu0 0
      %1006 = vmatmul.mubr.bf16.gmra.mrb[0].mxu0 %v534
      %v1007 = vpop.f32.mrb[0].mxu0
      %v1008 = vadd.f32 %v847, %v1007
      %v1009 = vpop.f32.mrb[0].mxu0
      %v1010 = vpop.f32.mrb[0].mxu0
      %v1011 = vadd.f32 %v850, %v1010
      %v1012 = vpop.f32.mrb[0].mxu0
      %1013 = vmatprep.mubr.bf16.mxu0 0
      %1014 = vmatmul.mubr.bf16.gmra.mrb[0].mxu0 %v537
      %v1015 = vpop.f32.mrb[0].mxu0
      %v1016 = vadd.f32 %v855, %v1015
      %v1017 = vpop.f32.mrb[0].mxu0
      %v1018 = vpop.f32.mrb[0].mxu0
      %v1019 = vadd.f32 %v858, %v1018
      %v1020 = vpop.f32.mrb[0].mxu0
      %1021 = vmatprep.mubr.bf16.mxu0 0
      %1022 = vmatmul.mubr.bf16.gmra.mrb[0].mxu0 %v540
      %v1023 = vpop.f32.mrb[0].mxu0
      %v1024 = vadd.f32 %v863, %v1023
      %v1025 = vpop.f32.mrb[0].mxu0
      %v1026 = vpop.f32.mrb[0].mxu0
      %v1027 = vadd.f32 %v866, %v1026
      %v1028 = vpop.f32.mrb[0].mxu0
      %1029 = vmatprep.mubr.bf16.mxu0 0
      %1030 = vmatmul.mubr.bf16.gmra.mrb[0].mxu0 %v543
      %v1031 = vpop.f32.mrb[0].mxu0
      %v1032 = vadd.f32 %v871, %v1031
      %v1033 = vpop.f32.mrb[0].mxu0
      %v1034 = vpop.f32.mrb[0].mxu0
      %v1035 = vadd.f32 %v874, %v1034
      %v1036 = vpop.f32.mrb[0].mxu0
      %1037 = vmatprep.mubr.bf16.mxu0 0
      %1038 = vmatmul.mubr.bf16.gmra.mrb[0].mxu0 %v546
      %v1039 = vpop.f32.mrb[0].mxu0
      %v1040 = vadd.f32 %v879, %v1039
      %v1041 = vpop.f32.mrb[0].mxu0
      %v1042 = vpop.f32.mrb[0].mxu0
      %v1043 = vadd.f32 %v882, %v1042
      %v1044 = vpop.f32.mrb[0].mxu0
      %1045 = vmatprep.mubr.bf16.mxu0 0
      %1046 = vmatmul.mubr.bf16.gmra.mrb[0].mxu0 %v549
      %v1047 = vpop.f32.mrb[0].mxu0
      %v1048 = vadd.f32 %v887, %v1047
      %v1049 = vpop.f32.mrb[0].mxu0
      %v1050 = vpop.f32.mrb[0].mxu0
      %v1051 = vadd.f32 %v890, %v1050
      %v1052 = vpop.f32.mrb[0].mxu0
      %1053 = vmatprep.mubr.bf16.mxu0 0
      %1054 = vmatmul.mubr.bf16.gmra.mrb[0].mxu0 %v552
      %v1055 = vpop.f32.mrb[0].mxu0
      %v1056 = vadd.f32 %v895, %v1055
      %v1057 = vpop.f32.mrb[0].mxu0
      %v1058 = vpop.f32.mrb[0].mxu0
      %v1059 = vadd.f32 %v898, %v1058
      %v1060 = vpop.f32.mrb[0].mxu0
      %1061 = vmatprep.mubr.bf16.mxu0 0
      %1062 = vmatmul.mubr.bf16.gmra.mrb[0].mxu0 %v555
      %v1063 = vpop.f32.mrb[0].mxu0
      %v1064 = vadd.f32 %v903, %v1063
      %v1065 = vpop.f32.mrb[0].mxu0
      %v1066 = vpop.f32.mrb[0].mxu0
      %v1067 = vadd.f32 %v906, %v1066
      %v1068 = vpop.f32.mrb[0].mxu0
      %1069 = vdwg.mxu0
      %v1070 = vmax.f32 %v944, 0.0
      %v1071 = vmax.f32 %v947, 0.0
      %v1072 = vmax.f32 %v952, 0.0
      %v1073 = vmax.f32 %v955, 0.0
      %v1074 = vmax.f32 %v960, 0.0
      %v1075 = vmax.f32 %v963, 0.0
      %v1076 = vmax.f32 %v968, 0.0
      %v1077 = vmax.f32 %v971, 0.0
      %v1078 = vmax.f32 %v976, 0.0
      %v1079 = vmax.f32 %v979, 0.0
      %v1080 = vmax.f32 %v984, 0.0
      %v1081 = vmax.f32 %v987, 0.0
      %v1082 = vmax.f32 %v992, 0.0
      %v1083 = vmax.f32 %v995, 0.0
      %v1084 = vmax.f32 %v1000, 0.0
      %v1085 = vmax.f32 %v1003, 0.0
      %v1086 = vmax.f32 %v1008, 0.0
      %v1087 = vmax.f32 %v1011, 0.0
      %v1088 = vmax.f32 %v1016, 0.0
      %v1089 = vmax.f32 %v1019, 0.0
      %v1090 = vmax.f32 %v1024, 0.0
      %v1091 = vmax.f32 %v1027, 0.0
      %v1092 = vmax.f32 %v1032, 0.0
      %v1093 = vmax.f32 %v1035, 0.0
      %v1094 = vmax.f32 %v1040, 0.0
      %v1095 = vmax.f32 %v1043, 0.0
      %v1096 = vmax.f32 %v1048, 0.0
      %v1097 = vmax.f32 %v1051, 0.0
      %v1098 = vmax.f32 %v1056, 0.0
      %v1099 = vmax.f32 %v1059, 0.0
      %v1100 = vmax.f32 %v1064, 0.0
      %v1101 = vmax.f32 %v1067, 0.0
      %1102 = vst [vmem:[%s226] sm:$0xff] %v1070
      %1103 = vst [vmem:[%s226 + $0x8] sm:$0xff] %v1071
      %1104 = vst [vmem:[%s226 + $0x10] sm:$0xff] %v1072
      %1105 = vst [vmem:[%s226 + $0x18] sm:$0xff] %v1073
      %1106 = vst [vmem:[%s226 + $0x20] sm:$0xff] %v1074
      %1107 = vst [vmem:[%s226 + $0x28] sm:$0xff] %v1075
      %1108 = vst [vmem:[%s226 + $0x30] sm:$0xff] %v1076
      %1109 = vst [vmem:[%s226 + $0x38] sm:$0xff] %v1077
      %1110 = vst [vmem:[%s226 + $0x40] sm:$0xff] %v1078
      %1111 = vst [vmem:[%s226 + $0x48] sm:$0xff] %v1079
      %1112 = vst [vmem:[%s226 + $0x50] sm:$0xff] %v1080
      %1113 = vst [vmem:[%s226 + $0x58] sm:$0xff] %v1081
      %1114 = vst [vmem:[%s226 + $0x60] sm:$0xff] %v1082
      %1115 = vst [vmem:[%s226 + $0x68] sm:$0xff] %v1083
      %1116 = vst [vmem:[%s226 + $0x70] sm:$0xff] %v1084
      %1117 = vst [vmem:[%s226 + $0x78] sm:$0xff] %v1085
      %1118 = vst [vmem:[%s226 + $0x80] sm:$0xff] %v1086
      %1119 = vst [vmem:[%s226 + $0x88] sm:$0xff] %v1087
      %1120 = vst [vmem:[%s226 + $0x90] sm:$0xff] %v1088
      %1121 = vst [vmem:[%s226 + $0x98] sm:$0xff] %v1089
      %1122 = vst [vmem:[%s226 + $0xa0] sm:$0xff] %v1090
      %1123 = vst [vmem:[%s226 + $0xa8] sm:$0xff] %v1091
      %1124 = vst [vmem:[%s226 + $0xb0] sm:$0xff] %v1092
      %1125 = vst [vmem:[%s226 + $0xb8] sm:$0xff] %v1093
      %1126 = vst [vmem:[%s226 + $0xc0] sm:$0xff] %v1094
      %1127 = vst [vmem:[%s226 + $0xc8] sm:$0xff] %v1095
      %1128 = vst [vmem:[%s226 + $0xd0] sm:$0xff] %v1096
      %1129 = vst [vmem:[%s226 + $0xd8] sm:$0xff] %v1097
      %1130 = vst [vmem:[%s226 + $0xe0] sm:$0xff] %v1098
      %1131 = vst [vmem:[%s226 + $0xe8] sm:$0xff] %v1099
      %1132 = vst [vmem:[%s226 + $0xf0] sm:$0xff] %v1100
      %1133 = vst [vmem:[%s226 + $0xf8] sm:$0xff] %v1101
      %s1134 = smul.u32 32, %s18
      %p1135 = scmp.lt.s32.totalorder %s1134, 63
      %s1136 = scalar_select %p1135, %s1134, 63
      %p1137 = scmp.lt.s32.totalorder %s19, 0
      %s1138 = scalar_select %p1137, %s19, 0
      %s1139 = sadd.s32 %s1138, %s1136
      %s1140 = smul.addr %s1139, 8
      %s1141 = scalar_lea.vmem %s3, %s1140
      // Predicated region
      $region33: #{generator_forward.22} parent=31 // pred_check
        %p1142 = pneg %p124
      $region34: #{generator_forward.22} parent=31 // pred_check_branch
        %1144 = sbr.rel (%p1142) target = $region36
      $region35: #{generator_forward.22} parent=31 // pred_region
        %s1145 = smul.u32 32, %s18
      $region36: #{generator_forward.22} parent=31 // pred_fallthru
        _
    $region32: #{generator_forward.22} parent=5 // pred_fallthru
      _
    %p1146 = scmp.le.s32.totalorder 2, %s9
    // Predicated region
    $region37: #{generator_forward.22} parent=5 // pred_check
      %p1147 = pneg %p1146
    $region38: #{generator_forward.22} parent=5 // pred_check_branch
      %1149 = sbr.rel (%p1147) target = $region40
    $region39: #{generator_forward.22} parent=5 // pred_region
      %s1150 = ssub.s32 %s9, 2
      // Predicated region
      $region41: #{generator_forward.22} parent=39 // pred_check
        %p1151 = pneg %p130
      $region42: #{generator_forward.22} parent=39 // pred_check_branch
        %1153 = sbr.rel (%p1151) target = $region44
      $region43: #{generator_forward.22} parent=39 // pred_region
        %s1154 = smul.u32 32, %s20
        %p1155 = scmp.lt.s32.totalorder %s1154, 63
        %s1156 = scalar_select %p1155, %s1154, 63
        %p1157 = scmp.lt.s32.totalorder %s21, 0
        %s1158 = scalar_select %p1157, %s21, 0
        %s1159 = sadd.s32 %s1158, %s1156
        %s1160 = smul.addr %s1159, 8
        %s1161 = scalar_lea.vmem %s3, %s1160
      $region44: #{generator_forward.22} parent=39 // pred_fallthru
        _
    $region40: #{generator_forward.22} parent=5 // pred_fallthru
      _
  $region6: #{generator_forward.22} parent=0 // loop_footer
    %s13 = sadd.s32 1, %s9
  $region7: #{generator_forward.22} parent=0 // loop_footer_branch
    %8 = sbr.rel target = $region3
  $region8: #{generator_forward.22} parent=0 // loop_exit
    _

// kernel: generator_forward.23
$region0: #{generator_forward.23}
  #allocation0 [shape = 'u32[]', space=smem, size = 0x4, offset = 0x4, fixed_abs, tag = 'smem constant byte address 0x4 - core index']
  #allocation1 [shape = 'u32[144,128]{1,0:T(1,128)}', space=vmem, size = 0x12000, scoped, tag = 'internal scratch']
  %s0 = inlined_call_operand.vmem [shape: bf16[512,384], index: 0, kind: input, shape index: {}]
  %s1 = inlined_call_operand.vmem [shape: bf16[384,128], index: 1, kind: input, shape index: {}]
  %s2 = inlined_call_operand.vmem [shape: f32[1,128], index: 2, kind: input, shape index: {}]
  %s3 = inlined_call_operand.vmem [shape: f32[512,128], index: 3, kind: output, shape index: {}]
  %s4 = sld [smem:[#allocation0]]
  $region45: #{generator_forward.23} parent=0
    _
  %s6 = ssub.s32 1, %s4
  %s7 = scalar_select 0, %s6, %s4
  loop: start=0, step=1, limit=4
  $region2: #{generator_forward.23} parent=0 // loop_pre_header
    _
  $region3: #{generator_forward.23} parent=0 // loop_header
    %s9 = sphi 0, %s13
    %p10 = scmp.ge.s32.totalorder %s9, 4
    %s16 = sphi 0, %s28
    %s17 = sphi 0, %s24
    %s18 = sphi 0, %s16
    %s19 = sphi 0, %s17
    %s20 = sphi 0, %s18
    %s21 = sphi 0, %s19
    %s31 = sphi 0, %s33
    %s34 = sphi 0, %s31
    %s35 = sphi 0, %s34
    %s51 = sphi 0, %s35
    %s57 = sphi 0, %s59
    %s60 = sphi 0, %s57
    %s61 = sphi 0, %s60
    %s77 = sphi 0, %s61
    %s83 = sphi 0, %s85
    %s86 = sphi 0, %s83
    %s87 = sphi 0, %s86
    %s103 = sphi 0, %s87
    %s111 = sphi 0, %s113
    %s114 = sphi 0, %s111
    %s115 = sphi 0, %s114
    %s131 = sphi 0, %s115
  $region4: #{generator_forward.23} parent=0 // loop_header_branch
    %12 = sbr.rel (%p10) target = $region8
  $region5: #{generator_forward.23} parent=0 // loop_body
    %s14 = ssub.s32 %s9, 1
    %s15 = ssub.s32 %s9, 2
    %s22 = sadd.s32 1, %s17
    %p23 = scmp.ge.s32.totalorder %s22, 1
    %s24 = scalar_select %p23, 0, %s22
    %s25 = sadd.s32 1, %s16
    %s26 = scalar_select %p23, %s25, %s16
    %p27 = scmp.ge.s32.totalorder %s26, 2
    %s28 = scalar_select %p27, 0, %s26
    %s29 = ssub.s32 %s16, %s28
    %p30 = scmp.eq.s32.totalorder %s29, 0
    %s32 = sadd.s32 %s31, 1
    %s33 = scalar_select %p30, %s31, %s32
    %p36 = pneg %p30
    %p37 = scmp.eq.s32.totalorder %s9, 1
    %p38 = por %p36, %p37
    %p39 = scmp.ne.s32.totalorder %s31, %s34
    %p40 = scmp.eq.s32.totalorder %s9, 0
    %p41 = por %p39, %p40
    %p42 = scmp.ne.s32.totalorder %s31, %s34
    %p43 = scmp.eq.s32.totalorder %s14, 1
    %p44 = por %p42, %p43
    %p45 = scmp.ne.s32.totalorder %s34, %s35
    %p46 = scmp.eq.s32.totalorder %s14, 0
    %p47 = por %p45, %p46
    %p48 = scmp.ne.s32.totalorder %s34, %s35
    %p49 = scmp.eq.s32.totalorder %s15, 1
    %p50 = por %p48, %p49
    %p52 = scmp.ne.s32.totalorder %s35, %s51
    %p53 = scmp.eq.s32.totalorder %s15, 0
    %p54 = por %p52, %p53
    %s55 = ssub.s32 %s17, %s24
    %p56 = scmp.eq.s32.totalorder %s55, 0
    %s58 = sadd.s32 %s57, 1
    %s59 = scalar_select %p56, %s57, %s58
    %p62 = pneg %p56
    %p63 = scmp.eq.s32.totalorder %s9, 1
    %p64 = por %p62, %p63
    %p65 = scmp.ne.s32.totalorder %s57, %s60
    %p66 = scmp.eq.s32.totalorder %s9, 0
    %p67 = por %p65, %p66
    %p68 = scmp.ne.s32.totalorder %s57, %s60
    %p69 = scmp.eq.s32.totalorder %s14, 1
    %p70 = por %p68, %p69
    %p71 = scmp.ne.s32.totalorder %s60, %s61
    %p72 = scmp.eq.s32.totalorder %s14, 0
    %p73 = por %p71, %p72
    %p74 = scmp.ne.s32.totalorder %s60, %s61
    %p75 = scmp.eq.s32.totalorder %s15, 1
    %p76 = por %p74, %p75
    %p78 = scmp.ne.s32.totalorder %s61, %s77
    %p79 = scmp.eq.s32.totalorder %s15, 0
    %p80 = por %p78, %p79
    %s81 = ssub.s32 %s17, %s24
    %p82 = scmp.eq.s32.totalorder %s81, 0
    %s84 = sadd.s32 %s83, 1
    %s85 = scalar_select %p82, %s83, %s84
    %p88 = pneg %p82
    %p89 = scmp.eq.s32.totalorder %s9, 1
    %p90 = por %p88, %p89
    %p91 = scmp.ne.s32.totalorder %s83, %s86
    %p92 = scmp.eq.s32.totalorder %s9, 0
    %p93 = por %p91, %p92
    %p94 = scmp.ne.s32.totalorder %s83, %s86
    %p95 = scmp.eq.s32.totalorder %s14, 1
    %p96 = por %p94, %p95
    %p97 = scmp.ne.s32.totalorder %s86, %s87
    %p98 = scmp.eq.s32.totalorder %s14, 0
    %p99 = por %p97, %p98
    %p100 = scmp.ne.s32.totalorder %s86, %s87
    %p101 = scmp.eq.s32.totalorder %s15, 1
    %p102 = por %p100, %p101
    %p104 = scmp.ne.s32.totalorder %s87, %s103
    %p105 = scmp.eq.s32.totalorder %s15, 0
    %p106 = por %p104, %p105
    %s107 = ssub.s32 %s16, %s28
    %s108 = ssub.s32 %s17, %s24
    %s109 = sor.u32 %s107, %s108
    %p110 = scmp.eq.s32.totalorder %s109, 0
    %s112 = sadd.s32 %s111, 1
    %s113 = scalar_select %p110, %s111, %s112
    %p116 = pneg %p110
    %p117 = scmp.eq.s32.totalorder %s9, 1
    %p118 = por %p116, %p117
    %p119 = scmp.ne.s32.totalorder %s111, %s114
    %p120 = scmp.eq.s32.totalorder %s9, 0
    %p121 = por %p119, %p120
    %p122 = scmp.ne.s32.totalorder %s111, %s114
    %p123 = scmp.eq.s32.totalorder %s14, 1
    %p124 = por %p122, %p123
    %p125 = scmp.ne.s32.totalorder %s114, %s115
    %p126 = scmp.eq.s32.totalorder %s14, 0
    %p127 = por %p125, %p126
    %p128 = scmp.ne.s32.totalorder %s114, %s115
    %p129 = scmp.eq.s32.totalorder %s15, 1
    %p130 = por %p128, %p129
    %p132 = scmp.ne.s32.totalorder %s115, %s131
    %p133 = scmp.eq.s32.totalorder %s15, 0
    %p134 = por %p132, %p133
    %p135 = scmp.le.s32.totalorder 1, %s9
    %p136 = scmp.lt.s32.totalorder %s9, 3
    %p137 = pnand %p135, %p136
    %p138 = pneg %p137
    // Predicated region
    $region9: #{generator_forward.23} parent=5 // pred_check
      _
    $region10: #{generator_forward.23} parent=5 // pred_check_branch
      %140 = sbr.rel (%p137) target = $region12
    $region11: #{generator_forward.23} parent=5 // pred_region
      %s141 = ssub.s32 %s9, 1
      // Predicated region
      $region13: #{generator_forward.23} parent=11 // pred_check
        %p142 = pneg %p73
      $region14: #{generator_forward.23} parent=11 // pred_check_branch
        %144 = sbr.rel (%p142) target = $region16
      $region15: #{generator_forward.23} parent=11 // pred_region
        %p145 = scmp.lt.s32.totalorder %s19, 0
        %s146 = scalar_select %p145, %s19, 0
        %s147 = smul.addr %s146, 4
        %s148 = scalar_lea.vmem %s1, %s147
      $region16: #{generator_forward.23} parent=11 // pred_fallthru
        _
      // Predicated region
      $region17: #{generator_forward.23} parent=11 // pred_check
        %p149 = pneg %p99
      $region18: #{generator_forward.23} parent=11 // pred_check_branch
        %151 = sbr.rel (%p149) target = $region20
      $region19: #{generator_forward.23} parent=11 // pred_region
        %p152 = scmp.lt.s32.totalorder %s19, 0
        %s153 = scalar_select %p152, %s19, 0
        %s154 = scalar_lea.vmem %s2, %s153
      $region20: #{generator_forward.23} parent=11 // pred_fallthru
        _
    $region12: #{generator_forward.23} parent=5 // pred_fallthru
      _
    %p155 = scmp.lt.s32.totalorder %s9, 2
    // Predicated region
    $region21: #{generator_forward.23} parent=5 // pred_check
      %p156 = pneg %p155
    $region22: #{generator_forward.23} parent=5 // pred_check_branch
      %158 = sbr.rel (%p156) target = $region24
    $region23: #{generator_forward.23} parent=5 // pred_region
      // Predicated region
      $region25: #{generator_forward.23} parent=23 // pred_check
        %p159 = pneg %p41
      $region26: #{generator_forward.23} parent=23 // pred_check_branch
        %161 = sbr.rel (%p159) target = $region28
      $region27: #{generator_forward.23} parent=23 // pred_region
        %s162 = smul.u32 32, %s16
        %p163 = scmp.lt.s32.totalorder %s162, 63
        %s164 = scalar_select %p163, %s162, 63
        %s165 = smul.addr %s164, 3
        %s166 = smul.addr %s165, 4
        %s167 = scalar_lea.vmem %s0, %s166
        %s168 = smul.u32 32, %s16
      $region28: #{generator_forward.23} parent=23 // pred_fallthru
        _
    $region24: #{generator_forward.23} parent=5 // pred_fallthru
      _
    %p169 = scmp.le.s32.totalorder 1, %s9
    %p170 = scmp.lt.s32.totalorder %s9, 3
    %p171 = pnand %p169, %p170
    %p172 = pneg %p171
    // Predicated region
    $region29: #{generator_forward.23} parent=5 // pred_check
      _
    $region30: #{generator_forward.23} parent=5 // pred_check_branch
      %174 = sbr.rel (%p171) target = $region32
    $region31: #{generator_forward.23} parent=5 // pred_region
      %s175 = ssub.s32 %s9, 1
      %s176 = smul.u32 32, %s18
      %p177 = scmp.lt.s32.totalorder %s176, 63
      %s178 = scalar_select %p177, %s176, 63
      %s179 = smul.addr %s178, 3
      %s180 = smul.addr %s179, 4
      %s181 = scalar_lea.vmem %s0, %s180
      %p182 = pneg %p47
      %p183 = pneg %p44
      %p184 = scmp.lt.s32.totalorder %s19, 0
      %s185 = scalar_select %p184, %s19, 0
      %s186 = smul.addr %s185, 4
      %s187 = scalar_lea.vmem %s1, %s186
      %p188 = pneg %p73
      %p189 = pneg %p70
      %p190 = scmp.lt.s32.totalorder %s19, 0
      %s191 = scalar_select %p190, %s19, 0
      %s192 = scalar_lea.vmem %s2, %s191
      %p193 = pneg %p99
      %p194 = pneg %p96
      %p195 = pneg %p127
      %p196 = pneg %p124
      %s197 = smul.u32 32, %s18
      %p198 = scmp.lt.s32.totalorder %s197, 63
      %s199 = scalar_select %p198, %s197, 63
      %p200 = scmp.lt.s32.totalorder %s19, 0
      %s201 = scalar_select %p200, %s19, 0
      %s202 = sadd.s32 %s201, %s199
      %s203 = smul.addr %s202, 8
      %s204 = scalar_lea.vmem %s3, %s203
      %s205 = smul.u32 32, %s18
      %p206 = scmp.lt.s32.totalorder %s205, 63
      %s207 = scalar_select %p206, %s205, 63
      %s208 = smul.addr %s207, 3
      %s209 = smul.addr %s208, 4
      %s210 = scalar_lea.vmem %s0, %s209
      %s211 = smul.u32 32, %s18
      %p212 = scmp.lt.s32.totalorder %s19, 0
      %s213 = scalar_select %p212, %s19, 0
      %s214 = smul.addr %s213, 4
      %s215 = scalar_lea.vmem %s1, %s214
      %p216 = scmp.lt.s32.totalorder %s19, 0
      %s217 = scalar_select %p216, %s19, 0
      %s218 = scalar_lea.vmem %s2, %s217
      %s219 = smul.u32 32, %s18
      %p220 = scmp.lt.s32.totalorder %s219, 63
      %s221 = scalar_select %p220, %s219, 63
      %p222 = scmp.lt.s32.totalorder %s19, 0
      %s223 = scalar_select %p222, %s19, 0
      %s224 = sadd.s32 %s223, %s221
      %s225 = smul.addr %s224, 8
      %s226 = scalar_lea.vmem %s3, %s225
      %s227 = smul.u32 32, %s18
      %v229 = vld [vmem:[%s210] sm:$0xff]
      %v230 = vld [vmem:[%s210 + $0x8] sm:$0xf]
      %v231 = vld [vmem:[%s210 + $0xc] sm:$0xff]
      %v232 = vld [vmem:[%s210 + $0x14] sm:$0xf]
      %v233 = vld [vmem:[%s210 + $0x18] sm:$0xff]
      %v234 = vld [vmem:[%s210 + $0x20] sm:$0xf]
      %v235 = vld [vmem:[%s210 + $0x24] sm:$0xff]
      %v236 = vld [vmem:[%s210 + $0x2c] sm:$0xf]
      %v237 = vld [vmem:[%s210 + $0x30] sm:$0xff]
      %v238 = vld [vmem:[%s210 + $0x38] sm:$0xf]
      %v239 = vld [vmem:[%s210 + $0x3c] sm:$0xff]
      %v240 = vld [vmem:[%s210 + $0x44] sm:$0xf]
      %v241 = vld [vmem:[%s210 + $0x48] sm:$0xff]
      %v242 = vld [vmem:[%s210 + $0x50] sm:$0xf]
      %v243 = vld [vmem:[%s210 + $0x54] sm:$0xff]
      %v244 = vld [vmem:[%s210 + $0x5c] sm:$0xf]
      %v245 = vld [vmem:[%s210 + $0x60] sm:$0xff]
      %v246 = vld [vmem:[%s210 + $0x68] sm:$0xf]
      %v247 = vld [vmem:[%s210 + $0x6c] sm:$0xff]
      %v248 = vld [vmem:[%s210 + $0x74] sm:$0xf]
      %v249 = vld [vmem:[%s210 + $0x78] sm:$0xff]
      %v250 = vld [vmem:[%s210 + $0x80] sm:$0xf]
      %v251 = vld [vmem:[%s210 + $0x84] sm:$0xff]
      %v252 = vld [vmem:[%s210 + $0x8c] sm:$0xf]
      %v253 = vld [vmem:[%s210 + $0x90] sm:$0xff]
      %v254 = vld [vmem:[%s210 + $0x98] sm:$0xf]
      %v255 = vld [vmem:[%s210 + $0x9c] sm:$0xff]
      %v256 = vld [vmem:[%s210 + $0xa4] sm:$0xf]
      %v257 = vld [vmem:[%s210 + $0xa8] sm:$0xff]
      %v258 = vld [vmem:[%s210 + $0xb0] sm:$0xf]
      %v259 = vld [vmem:[%s210 + $0xb4] sm:$0xff]
      %v260 = vld [vmem:[%s210 + $0xbc] sm:$0xf]
      %v261 = vld [vmem:[%s210 + $0xc0] sm:$0xff]
      %v262 = vld [vmem:[%s210 + $0xc8] sm:$0xf]
      %v263 = vld [vmem:[%s210 + $0xcc] sm:$0xff]
      %v264 = vld [vmem:[%s210 + $0xd4] sm:$0xf]
      %v265 = vld [vmem:[%s210 + $0xd8] sm:$0xff]
      %v266 = vld [vmem:[%s210 + $0xe0] sm:$0xf]
      %v267 = vld [vmem:[%s210 + $0xe4] sm:$0xff]
      %v268 = vld [vmem:[%s210 + $0xec] sm:$0xf]
      %v269 = vld [vmem:[%s210 + $0xf0] sm:$0xff]
      %v270 = vld [vmem:[%s210 + $0xf8] sm:$0xf]
      %v271 = vld [vmem:[%s210 + $0xfc] sm:$0xff]
      %v272 = vld [vmem:[%s210 + $0x104] sm:$0xf]
      %v273 = vld [vmem:[%s210 + $0x108] sm:$0xff]
      %v274 = vld [vmem:[%s210 + $0x110] sm:$0xf]
      %v275 = vld [vmem:[%s210 + $0x114] sm:$0xff]
      %v276 = vld [vmem:[%s210 + $0x11c] sm:$0xf]
      %v277 = vld [vmem:[%s210 + $0x120] sm:$0xff]
      %v278 = vld [vmem:[%s210 + $0x128] sm:$0xf]
      %v279 = vld [vmem:[%s210 + $0x12c] sm:$0xff]
      %v280 = vld [vmem:[%s210 + $0x134] sm:$0xf]
      %v281 = vld [vmem:[%s210 + $0x138] sm:$0xff]
      %v282 = vld [vmem:[%s210 + $0x140] sm:$0xf]
      %v283 = vld [vmem:[%s210 + $0x144] sm:$0xff]
      %v284 = vld [vmem:[%s210 + $0x14c] sm:$0xf]
      %v285 = vld [vmem:[%s210 + $0x150] sm:$0xff]
      %v286 = vld [vmem:[%s210 + $0x158] sm:$0xf]
      %v287 = vld [vmem:[%s210 + $0x15c] sm:$0xff]
      %v288 = vld [vmem:[%s210 + $0x164] sm:$0xf]
      %v289 = vld [vmem:[%s210 + $0x168] sm:$0xff]
      %v290 = vld [vmem:[%s210 + $0x170] sm:$0xf]
      %v291 = vld [vmem:[%s210 + $0x174] sm:$0xff]
      %v292 = vld [vmem:[%s210 + $0x17c] sm:$0xf]
      %v293 = vld [vmem:[%s215] sm:$0xf]
      %v294 = vld [vmem:[%s215 + $0x4] sm:$0xf]
      %v295 = vld [vmem:[%s215 + $0x8] sm:$0xf]
      %v296 = vld [vmem:[%s215 + $0xc] sm:$0xf]
      %v297 = vld [vmem:[%s215 + $0x10] sm:$0xf]
      %v298 = vld [vmem:[%s215 + $0x14] sm:$0xf]
      %v299 = vld [vmem:[%s215 + $0x18] sm:$0xf]
      %v300 = vld [vmem:[%s215 + $0x1c] sm:$0xf]
      %v301 = vld [vmem:[%s215 + $0x20] sm:$0xf]
      %v302 = vld [vmem:[%s215 + $0x24] sm:$0xf]
      %v303 = vld [vmem:[%s215 + $0x28] sm:$0xf]
      %v304 = vld [vmem:[%s215 + $0x2c] sm:$0xf]
      %v305 = vld [vmem:[%s215 + $0x30] sm:$0xf]
      %v306 = vld [vmem:[%s215 + $0x34] sm:$0xf]
      %v307 = vld [vmem:[%s215 + $0x38] sm:$0xf]
      %v308 = vld [vmem:[%s215 + $0x3c] sm:$0xf]
      %v309 = vld [vmem:[%s215 + $0x40] sm:$0xf]
      %v310 = vld [vmem:[%s215 + $0x44] sm:$0xf]
      %v311 = vld [vmem:[%s215 + $0x48] sm:$0xf]
      %v312 = vld [vmem:[%s215 + $0x4c] sm:$0xf]
      %v313 = vld [vmem:[%s215 + $0x50] sm:$0xf]
      %v314 = vld [vmem:[%s215 + $0x54] sm:$0xf]
      %v315 = vld [vmem:[%s215 + $0x58] sm:$0xf]
      %v316 = vld [vmem:[%s215 + $0x5c] sm:$0xf]
      %v317 = vld [vmem:[%s215 + $0x60] sm:$0xf]
      %v318 = vld [vmem:[%s215 + $0x64] sm:$0xf]
      %v319 = vld [vmem:[%s215 + $0x68] sm:$0xf]
      %v320 = vld [vmem:[%s215 + $0x6c] sm:$0xf]
      %v321 = vld [vmem:[%s215 + $0x70] sm:$0xf]
      %v322 = vld [vmem:[%s215 + $0x74] sm:$0xf]
      %v323 = vld [vmem:[%s215 + $0x78] sm:$0xf]
      %v324 = vld [vmem:[%s215 + $0x7c] sm:$0xf]
      %v325 = vld [vmem:[%s215 + $0x80] sm:$0xf]
      %v326 = vld [vmem:[%s215 + $0x84] sm:$0xf]
      %v327 = vld [vmem:[%s215 + $0x88] sm:$0xf]
      %v328 = vld [vmem:[%s215 + $0x8c] sm:$0xf]
      %v329 = vld [vmem:[%s215 + $0x90] sm:$0xf]
      %v330 = vld [vmem:[%s215 + $0x94] sm:$0xf]
      %v331 = vld [vmem:[%s215 + $0x98] sm:$0xf]
      %v332 = vld [vmem:[%s215 + $0x9c] sm:$0xf]
      %v333 = vld [vmem:[%s215 + $0xa0] sm:$0xf]
      %v334 = vld [vmem:[%s215 + $0xa4] sm:$0xf]
      %v335 = vld [vmem:[%s215 + $0xa8] sm:$0xf]
      %v336 = vld [vmem:[%s215 + $0xac] sm:$0xf]
      %v337 = vld [vmem:[%s215 + $0xb0] sm:$0xf]
      %v338 = vld [vmem:[%s215 + $0xb4] sm:$0xf]
      %v339 = vld [vmem:[%s215 + $0xb8] sm:$0xf]
      %v340 = vld [vmem:[%s215 + $0xbc] sm:$0xf]
      %v341 = vld [vmem:[%s218] sm:$0x1]
      %v343 = vlaneseq
      %v344 = vshrl.u32 %v343, 7
      %v345 = vsub.s32 0, %v344
      %v346 = vrot.slane %v341, %v345
      %v412 = vunpack.c.l.b16 %v229
      %v413 = vunpack.c.h.b16 %v229
      %v414 = vunpack.c.l.b16 %v230
      %v415 = vunpack.c.l.b16 %v231
      %v416 = vunpack.c.h.b16 %v231
      %v417 = vunpack.c.l.b16 %v232
      %v418 = vunpack.c.l.b16 %v233
      %v419 = vunpack.c.h.b16 %v233
      %v420 = vunpack.c.l.b16 %v234
      %v421 = vunpack.c.l.b16 %v235
      %v422 = vunpack.c.h.b16 %v235
      %v423 = vunpack.c.l.b16 %v236
      %v424 = vunpack.c.l.b16 %v237
      %v425 = vunpack.c.h.b16 %v237
      %v426 = vunpack.c.l.b16 %v238
      %v427 = vunpack.c.l.b16 %v239
      %v428 = vunpack.c.h.b16 %v239
      %v429 = vunpack.c.l.b16 %v240
      %v430 = vunpack.c.l.b16 %v241
      %v431 = vunpack.c.h.b16 %v241
      %v432 = vunpack.c.l.b16 %v242
      %v433 = vunpack.c.l.b16 %v243
      %v434 = vunpack.c.h.b16 %v243
      %v435 = vunpack.c.l.b16 %v244
      %v436 = vunpack.c.l.b16 %v245
      %v437 = vunpack.c.h.b16 %v245
      %v438 = vunpack.c.l.b16 %v246
      %v439 = vunpack.c.l.b16 %v247
      %v440 = vunpack.c.h.b16 %v247
      %v441 = vunpack.c.l.b16 %v248
      %v442 = vunpack.c.l.b16 %v249
      %v443 = vunpack.c.h.b16 %v249
      %v444 = vunpack.c.l.b16 %v250
      %v445 = vunpack.c.l.b16 %v251
      %v446 = vunpack.c.h.b16 %v251
      %v447 = vunpack.c.l.b16 %v252
      %v448 = vunpack.c.l.b16 %v253
      %v449 = vunpack.c.h.b16 %v253
      %v450 = vunpack.c.l.b16 %v254
      %v451 = vunpack.c.l.b16 %v255
      %v452 = vunpack.c.h.b16 %v255
      %v453 = vunpack.c.l.b16 %v256
      %v454 = vunpack.c.l.b16 %v257
      %v455 = vunpack.c.h.b16 %v257
      %v456 = vunpack.c.l.b16 %v258
      %v457 = vunpack.c.l.b16 %v259
      %v458 = vunpack.c.h.b16 %v259
      %v459 = vunpack.c.l.b16 %v260
      %v460 = vunpack.c.l.b16 %v261
      %v461 = vunpack.c.h.b16 %v261
      %v462 = vunpack.c.l.b16 %v262
      %v463 = vunpack.c.l.b16 %v263
      %v464 = vunpack.c.h.b16 %v263
      %v465 = vunpack.c.l.b16 %v264
      %v466 = vunpack.c.l.b16 %v265
      %v467 = vunpack.c.h.b16 %v265
      %v468 = vunpack.c.l.b16 %v266
      %v469 = vunpack.c.l.b16 %v267
      %v470 = vunpack.c.h.b16 %v267
      %v471 = vunpack.c.l.b16 %v268
      %v472 = vunpack.c.l.b16 %v269
      %v473 = vunpack.c.h.b16 %v269
      %v474 = vunpack.c.l.b16 %v270
      %v475 = vunpack.c.l.b16 %v271
      %v476 = vunpack.c.h.b16 %v271
      %v477 = vunpack.c.l.b16 %v272
      %v478 = vunpack.c.l.b16 %v273
      %v479 = vunpack.c.h.b16 %v273
      %v480 = vunpack.c.l.b16 %v274
      %v481 = vunpack.c.l.b16 %v275
      %v482 = vunpack.c.h.b16 %v275
      %v483 = vunpack.c.l.b16 %v276
      %v484 = vunpack.c.l.b16 %v277
      %v485 = vunpack.c.h.b16 %v277
      %v486 = vunpack.c.l.b16 %v278
      %v487 = vunpack.c.l.b16 %v279
      %v488 = vunpack.c.h.b16 %v279
      %v489 = vunpack.c.l.b16 %v280
      %v490 = vunpack.c.l.b16 %v281
      %v491 = vunpack.c.h.b16 %v281
      %v492 = vunpack.c.l.b16 %v282
      %v493 = vunpack.c.l.b16 %v283
      %v494 = vunpack.c.h.b16 %v283
      %v495 = vunpack.c.l.b16 %v284
      %v496 = vunpack.c.l.b16 %v285
      %v497 = vunpack.c.h.b16 %v285
      %v498 = vunpack.c.l.b16 %v286
      %v499 = vunpack.c.l.b16 %v287
      %v500 = vunpack.c.h.b16 %v287
      %v501 = vunpack.c.l.b16 %v288
      %v502 = vunpack.c.l.b16 %v289
      %v503 = vunpack.c.h.b16 %v289
      %v504 = vunpack.c.l.b16 %v290
      %v505 = vunpack.c.l.b16 %v291
      %v506 = vunpack.c.h.b16 %v291
      %v507 = vunpack.c.l.b16 %v292
      %v508 = vpack.c.b16 %v415, %v412
      %v509 = vpack.c.b16 %v416, %v413
      %v510 = vpack.c.b16 %v417, %v414
      %v511 = vpack.c.b16 %v421, %v418
      %v512 = vpack.c.b16 %v422, %v419
      %v513 = vpack.c.b16 %v423, %v420
      %v514 = vpack.c.b16 %v427, %v424
      %v515 = vpack.c.b16 %v428, %v425
      %v516 = vpack.c.b16 %v429, %v426
      %v517 = vpack.c.b16 %v433, %v430
      %v518 = vpack.c.b16 %v434, %v431
      %v519 = vpack.c.b16 %v435, %v432
      %v520 = vpack.c.b16 %v439, %v436
      %v521 = vpack.c.b16 %v440, %v437
      %v522 = vpack.c.b16 %v441, %v438
      %v523 = vpack.c.b16 %v445, %v442
      %v524 = vpack.c.b16 %v446, %v443
      %v525 = vpack.c.b16 %v447, %v444
      %v526 = vpack.c.b16 %v451, %v448
      %v527 = vpack.c.b16 %v452, %v449
      %v528 = vpack.c.b16 %v453, %v450
      %v529 = vpack.c.b16 %v457, %v454
      %v530 = vpack.c.b16 %v458, %v455
      %v531 = vpack.c.b16 %v459, %v456
      %v532 = vpack.c.b16 %v463, %v460
      %v533 = vpack.c.b16 %v464, %v461
      %v534 = vpack.c.b16 %v465, %v462
      %v535 = vpack.c.b16 %v469, %v466
      %v536 = vpack.c.b16 %v470, %v467
      %v537 = vpack.c.b16 %v471, %v468
      %v538 = vpack.c.b16 %v475, %v472
      %v539 = vpack.c.b16 %v476, %v473
      %v540 = vpack.c.b16 %v477, %v474
      %v541 = vpack.c.b16 %v481, %v478
      %v542 = vpack.c.b16 %v482, %v479
      %v543 = vpack.c.b16 %v483, %v480
      %v544 = vpack.c.b16 %v487, %v484
      %v545 = vpack.c.b16 %v488, %v485
      %v546 = vpack.c.b16 %v489, %v486
      %v547 = vpack.c.b16 %v493, %v490
      %v548 = vpack.c.b16 %v494, %v491
      %v549 = vpack.c.b16 %v495, %v492
      %v550 = vpack.c.b16 %v499, %v496
      %v551 = vpack.c.b16 %v500, %v497
      %v552 = vpack.c.b16 %v501, %v498
      %v553 = vpack.c.b16 %v505, %v502
      %v554 = vpack.c.b16 %v506, %v503
      %v555 = vpack.c.b16 %v507, %v504
      %v652 = vunpack.c.l.b16 %v293
      %v653 = vunpack.c.l.b16 %v294
      %v654 = vunpack.c.l.b16 %v295
      %v655 = vunpack.c.l.b16 %v296
      %v656 = vunpack.c.l.b16 %v297
      %v657 = vunpack.c.l.b16 %v298
      %v658 = vunpack.c.l.b16 %v299
      %v659 = vunpack.c.l.b16 %v300
      %v660 = vunpack.c.l.b16 %v301
      %v661 = vunpack.c.l.b16 %v302
      %v662 = vunpack.c.l.b16 %v303
      %v663 = vunpack.c.l.b16 %v304
      %v664 = vunpack.c.l.b16 %v305
      %v665 = vunpack.c.l.b16 %v306
      %v666 = vunpack.c.l.b16 %v307
      %v667 = vunpack.c.l.b16 %v308
      %v668 = vunpack.c.l.b16 %v309
      %v669 = vunpack.c.l.b16 %v310
      %v670 = vunpack.c.l.b16 %v311
      %v671 = vunpack.c.l.b16 %v312
      %v672 = vunpack.c.l.b16 %v313
      %v673 = vunpack.c.l.b16 %v314
      %v674 = vunpack.c.l.b16 %v315
      %v675 = vunpack.c.l.b16 %v316
      %v676 = vunpack.c.l.b16 %v317
      %v677 = vunpack.c.l.b16 %v318
      %v678 = vunpack.c.l.b16 %v319
      %v679 = vunpack.c.l.b16 %v320
      %v680 = vunpack.c.l.b16 %v321
      %v681 = vunpack.c.l.b16 %v322
      %v682 = vunpack.c.l.b16 %v323
      %v683 = vunpack.c.l.b16 %v324
      %v684 = vunpack.c.l.b16 %v325
      %v685 = vunpack.c.l.b16 %v326
      %v686 = vunpack.c.l.b16 %v327
      %v687 = vunpack.c.l.b16 %v328
      %v688 = vunpack.c.l.b16 %v329
      %v689 = vunpack.c.l.b16 %v330
      %v690 = vunpack.c.l.b16 %v331
      %v691 = vunpack.c.l.b16 %v332
      %v692 = vunpack.c.l.b16 %v333
      %v693 = vunpack.c.l.b16 %v334
      %v694 = vunpack.c.l.b16 %v335
      %v695 = vunpack.c.l.b16 %v336
      %v696 = vunpack.c.l.b16 %v337
      %v697 = vunpack.c.l.b16 %v338
      %v698 = vunpack.c.l.b16 %v339
      %v699 = vunpack.c.l.b16 %v340
      %v700 = vpack.c.b16 %v653, %v652
      %v701 = vpack.c.b16 %v655, %v654
      %v702 = vpack.c.b16 %v657, %v656
      %v703 = vpack.c.b16 %v659, %v658
      %v704 = vpack.c.b16 %v661, %v660
      %v705 = vpack.c.b16 %v663, %v662
      %v706 = vpack.c.b16 %v665, %v664
      %v707 = vpack.c.b16 %v667, %v666
      %v708 = vpack.c.b16 %v669, %v668
      %v709 = vpack.c.b16 %v671, %v670
      %v710 = vpack.c.b16 %v673, %v672
      %v711 = vpack.c.b16 %v675, %v674
      %v712 = vpack.c.b16 %v677, %v676
      %v713 = vpack.c.b16 %v679, %v678
      %v714 = vpack.c.b16 %v681, %v680
      %v715 = vpack.c.b16 %v683, %v682
      %v716 = vpack.c.b16 %v685, %v684
      %v717 = vpack.c.b16 %v687, %v686
      %v718 = vpack.c.b16 %v689, %v688
      %v719 = vpack.c.b16 %v691, %v690
      %v720 = vpack.c.b16 %v693, %v692
      %v721 = vpack.c.b16 %v695, %v694
      %v722 = vpack.c.b16 %v697, %v696
      %v723 = vpack.c.b16 %v699, %v698
      %748 = vmatprep.subr.bf16.mxu0 0
      %749 = vmatpush1.bf16.msra.mxu0 %v700
      %750 = vmatprep.subr.bf16.mxu0 0
      %751 = vmatpush1.bf16.msra.mxu0 %v701
      %752 = vmatprep.subr.bf16.mxu0 0
      %753 = vmatpush1.bf16.msra.mxu0 %v702
      %754 = vmatprep.subr.bf16.mxu0 0
      %755 = vmatpush1.bf16.msra.mxu0 %v703
      %756 = vmatprep.subr.bf16.mxu0 0
      %757 = vmatpush1.bf16.msra.mxu0 %v704
      %758 = vmatprep.subr.bf16.mxu0 0
      %759 = vmatpush1.bf16.msra.mxu0 %v705
      %760 = vmatprep.subr.bf16.mxu0 0
      %761 = vmatpush1.bf16.msra.mxu0 %v706
      %762 = vmatprep.subr.bf16.mxu0 0
      %763 = vmatpush1.bf16.msra.mxu0 %v707
      %764 = vmatprep.subr.bf16.mxu0 0
      %765 = vmatpush1.bf16.msra.mxu0 %v708
      %766 = vmatprep.subr.bf16.mxu0 0
      %767 = vmatpush1.bf16.msra.mxu0 %v709
      %768 = vmatprep.subr.bf16.mxu0 0
      %769 = vmatpush1.bf16.msra.mxu0 %v710
      %770 = vmatprep.subr.bf16.mxu0 0
      %771 = vmatpush1.bf16.msra.mxu0 %v711
      %772 = vmatprep.subr.bf16.mxu0 0
      %773 = vmatpush1.bf16.msra.mxu0 %v712
      %774 = vmatprep.subr.bf16.mxu0 0
      %775 = vmatpush1.bf16.msra.mxu0 %v713
      %776 = vmatprep.subr.bf16.mxu0 0
      %777 = vmatpush1.bf16.msra.mxu0 %v714
      %778 = vmatprep.subr.bf16.mxu0 0
      %779 = vmatpush1.bf16.msra.mxu0 %v715
      %780 = vmatprep.mubr.bf16.mxu0 %v509
      %781 = vmatmul.mubr.bf16.gmra.mrb[0].mxu0 %v508
      %v782 = vpop.f32.mrb[0].mxu0
      %v783 = vadd.f32 %v346, %v782
      %v784 = vpop.f32.mrb[0].mxu0
      %v785 = vpop.f32.mrb[0].mxu0
      %v786 = vadd.f32 %v346, %v785
      %v787 = vpop.f32.mrb[0].mxu0
      %788 = vmatprep.mubr.bf16.mxu0 %v512
      %789 = vmatmul.mubr.bf16.gmra.mrb[0].mxu0 %v511
      %v790 = vpop.f32.mrb[0].mxu0
      %v791 = vadd.f32 %v346, %v790
      %v792 = vpop.f32.mrb[0].mxu0
      %v793 = vpop.f32.mrb[0].mxu0
      %v794 = vadd.f32 %v346, %v793
      %v795 = vpop.f32.mrb[0].mxu0
      %796 = vmatprep.mubr.bf16.mxu0 %v515
      %797 = vmatmul.mubr.bf16.gmra.mrb[0].mxu0 %v514
      %v798 = vpop.f32.mrb[0].mxu0
      %v799 = vadd.f32 %v346, %v798
      %v800 = vpop.f32.mrb[0].mxu0
      %v801 = vpop.f32.mrb[0].mxu0
      %v802 = vadd.f32 %v346, %v801
      %v803 = vpop.f32.mrb[0].mxu0
      %804 = vmatprep.mubr.bf16.mxu0 %v518
      %805 = vmatmul.mubr.bf16.gmra.mrb[0].mxu0 %v517
      %v806 = vpop.f32.mrb[0].mxu0
      %v807 = vadd.f32 %v346, %v806
      %v808 = vpop.f32.mrb[0].mxu0
      %v809 = vpop.f32.mrb[0].mxu0
      %v810 = vadd.f32 %v346, %v809
      %v811 = vpop.f32.mrb[0].mxu0
      %812 = vmatprep.mubr.bf16.mxu0 %v521
      %813 = vmatmul.mubr.bf16.gmra.mrb[0].mxu0 %v520
      %v814 = vpop.f32.mrb[0].mxu0
      %v815 = vadd.f32 %v346, %v814
      %v816 = vpop.f32.mrb[0].mxu0
      %v817 = vpop.f32.mrb[0].mxu0
      %v818 = vadd.f32 %v346, %v817
      %v819 = vpop.f32.mrb[0].mxu0
      %820 = vmatprep.mubr.bf16.mxu0 %v524
      %821 = vmatmul.mubr.bf16.gmra.mrb[0].mxu0 %v523
      %v822 = vpop.f32.mrb[0].mxu0
      %v823 = vadd.f32 %v346, %v822
      %v824 = vpop.f32.mrb[0].mxu0
      %v825 = vpop.f32.mrb[0].mxu0
      %v826 = vadd.f32 %v346, %v825
      %v827 = vpop.f32.mrb[0].mxu0
      %828 = vmatprep.mubr.bf16.mxu0 %v527
      %829 = vmatmul.mubr.bf16.gmra.mrb[0].mxu0 %v526
      %v830 = vpop.f32.mrb[0].mxu0
      %v831 = vadd.f32 %v346, %v830
      %v832 = vpop.f32.mrb[0].mxu0
      %v833 = vpop.f32.mrb[0].mxu0
      %v834 = vadd.f32 %v346, %v833
      %v835 = vpop.f32.mrb[0].mxu0
      %836 = vmatprep.mubr.bf16.mxu0 %v530
      %837 = vmatmul.mubr.bf16.gmra.mrb[0].mxu0 %v529
      %v838 = vpop.f32.mrb[0].mxu0
      %v839 = vadd.f32 %v346, %v838
      %v840 = vpop.f32.mrb[0].mxu0
      %v841 = vpop.f32.mrb[0].mxu0
      %v842 = vadd.f32 %v346, %v841
      %v843 = vpop.f32.mrb[0].mxu0
      %844 = vmatprep.mubr.bf16.mxu0 %v533
      %845 = vmatmul.mubr.bf16.gmra.mrb[0].mxu0 %v532
      %v846 = vpop.f32.mrb[0].mxu0
      %v847 = vadd.f32 %v346, %v846
      %v848 = vpop.f32.mrb[0].mxu0
      %v849 = vpop.f32.mrb[0].mxu0
      %v850 = vadd.f32 %v346, %v849
      %v851 = vpop.f32.mrb[0].mxu0
      %852 = vmatprep.mubr.bf16.mxu0 %v536
      %853 = vmatmul.mubr.bf16.gmra.mrb[0].mxu0 %v535
      %v854 = vpop.f32.mrb[0].mxu0
      %v855 = vadd.f32 %v346, %v854
      %v856 = vpop.f32.mrb[0].mxu0
      %v857 = vpop.f32.mrb[0].mxu0
      %v858 = vadd.f32 %v346, %v857
      %v859 = vpop.f32.mrb[0].mxu0
      %860 = vmatprep.mubr.bf16.mxu0 %v539
      %861 = vmatmul.mubr.bf16.gmra.mrb[0].mxu0 %v538
      %v862 = vpop.f32.mrb[0].mxu0
      %v863 = vadd.f32 %v346, %v862
      %v864 = vpop.f32.mrb[0].mxu0
      %v865 = vpop.f32.mrb[0].mxu0
      %v866 = vadd.f32 %v346, %v865
      %v867 = vpop.f32.mrb[0].mxu0
      %868 = vmatprep.mubr.bf16.mxu0 %v542
      %869 = vmatmul.mubr.bf16.gmra.mrb[0].mxu0 %v541
      %v870 = vpop.f32.mrb[0].mxu0
      %v871 = vadd.f32 %v346, %v870
      %v872 = vpop.f32.mrb[0].mxu0
      %v873 = vpop.f32.mrb[0].mxu0
      %v874 = vadd.f32 %v346, %v873
      %v875 = vpop.f32.mrb[0].mxu0
      %876 = vmatprep.mubr.bf16.mxu0 %v545
      %877 = vmatmul.mubr.bf16.gmra.mrb[0].mxu0 %v544
      %v878 = vpop.f32.mrb[0].mxu0
      %v879 = vadd.f32 %v346, %v878
      %v880 = vpop.f32.mrb[0].mxu0
      %v881 = vpop.f32.mrb[0].mxu0
      %v882 = vadd.f32 %v346, %v881
      %v883 = vpop.f32.mrb[0].mxu0
      %884 = vmatprep.mubr.bf16.mxu0 %v548
      %885 = vmatmul.mubr.bf16.gmra.mrb[0].mxu0 %v547
      %v886 = vpop.f32.mrb[0].mxu0
      %v887 = vadd.f32 %v346, %v886
      %v888 = vpop.f32.mrb[0].mxu0
      %v889 = vpop.f32.mrb[0].mxu0
      %v890 = vadd.f32 %v346, %v889
      %v891 = vpop.f32.mrb[0].mxu0
      %892 = vmatprep.mubr.bf16.mxu0 %v551
      %893 = vmatmul.mubr.bf16.gmra.mrb[0].mxu0 %v550
      %v894 = vpop.f32.mrb[0].mxu0
      %v895 = vadd.f32 %v346, %v894
      %v896 = vpop.f32.mrb[0].mxu0
      %v897 = vpop.f32.mrb[0].mxu0
      %v898 = vadd.f32 %v346, %v897
      %v899 = vpop.f32.mrb[0].mxu0
      %900 = vmatprep.mubr.bf16.mxu0 %v554
      %901 = vmatmul.mubr.bf16.gmra.mrb[0].mxu0 %v553
      %v902 = vpop.f32.mrb[0].mxu0
      %v903 = vadd.f32 %v346, %v902
      %v904 = vpop.f32.mrb[0].mxu0
      %v905 = vpop.f32.mrb[0].mxu0
      %v906 = vadd.f32 %v346, %v905
      %v907 = vpop.f32.mrb[0].mxu0
      %908 = vdwg.mxu0
      %909 = vmatprep.subr.bf16.mxu0 0
      %910 = vmatpush1.bf16.msra.mxu0 %v716
      %911 = vmatprep.subr.bf16.mxu0 0
      %912 = vmatpush1.bf16.msra.mxu0 %v717
      %913 = vmatprep.subr.bf16.mxu0 0
      %914 = vmatpush1.bf16.msra.mxu0 %v718
      %915 = vmatprep.subr.bf16.mxu0 0
      %916 = vmatpush1.bf16.msra.mxu0 %v719
      %917 = vmatprep.subr.bf16.mxu0 0
      %918 = vmatpush1.bf16.msra.mxu0 %v720
      %919 = vmatprep.subr.bf16.mxu0 0
      %920 = vmatpush1.bf16.msra.mxu0 %v721
      %921 = vmatprep.subr.bf16.mxu0 0
      %922 = vmatpush1.bf16.msra.mxu0 %v722
      %923 = vmatprep.subr.bf16.mxu0 0
      %924 = vmatpush1.bf16.msra.mxu0 %v723
      %925 = vmatprep.subr.bf16.mxu0 0
      %926 = vmatpush1.bf16.msra.mxu0 0
      %927 = vmatprep.subr.bf16.mxu0 0
      %928 = vmatpush1.bf16.msra.mxu0 0
      %929 = vmatprep.subr.bf16.mxu0 0
      %930 = vmatpush1.bf16.msra.mxu0 0
      %931 = vmatprep.subr.bf16.mxu0 0
      %932 = vmatpush1.bf16.msra.mxu0 0
      %933 = vmatprep.subr.bf16.mxu0 0
      %934 = vmatpush1.bf16.msra.mxu0 0
      %935 = vmatprep.subr.bf16.mxu0 0
      %936 = vmatpush1.bf16.msra.mxu0 0
      %937 = vmatprep.subr.bf16.mxu0 0
      %938 = vmatpush1.bf16.msra.mxu0 0
      %939 = vmatprep.subr.bf16.mxu0 0
      %940 = vmatpush1.bf16.msra.mxu0 0
      %941 = vmatprep.mubr.bf16.mxu0 0
      %942 = vmatmul.mubr.bf16.gmra.mrb[0].mxu0 %v510
      %v943 = vpop.f32.mrb[0].mxu0
      %v944 = vadd.f32 %v783, %v943
      %v945 = vpop.f32.mrb[0].mxu0
      %v946 = vpop.f32.mrb[0].mxu0
      %v947 = vadd.f32 %v786, %v946
      %v948 = vpop.f32.mrb[0].mxu0
      %949 = vmatprep.mubr.bf16.mxu0 0
      %950 = vmatmul.mubr.bf16.gmra.mrb[0].mxu0 %v513
      %v951 = vpop.f32.mrb[0].mxu0
      %v952 = vadd.f32 %v791, %v951
      %v953 = vpop.f32.mrb[0].mxu0
      %v954 = vpop.f32.mrb[0].mxu0
      %v955 = vadd.f32 %v794, %v954
      %v956 = vpop.f32.mrb[0].mxu0
      %957 = vmatprep.mubr.bf16.mxu0 0
      %958 = vmatmul.mubr.bf16.gmra.mrb[0].mxu0 %v516
      %v959 = vpop.f32.mrb[0].mxu0
      %v960 = vadd.f32 %v799, %v959
      %v961 = vpop.f32.mrb[0].mxu0
      %v962 = vpop.f32.mrb[0].mxu0
      %v963 = vadd.f32 %v802, %v962
      %v964 = vpop.f32.mrb[0].mxu0
      %965 = vmatprep.mubr.bf16.mxu0 0
      %966 = vmatmul.mubr.bf16.gmra.mrb[0].mxu0 %v519
      %v967 = vpop.f32.mrb[0].mxu0
      %v968 = vadd.f32 %v807, %v967
      %v969 = vpop.f32.mrb[0].mxu0
      %v970 = vpop.f32.mrb[0].mxu0
      %v971 = vadd.f32 %v810, %v970
      %v972 = vpop.f32.mrb[0].mxu0
      %973 = vmatprep.mubr.bf16.mxu0 0
      %974 = vmatmul.mubr.bf16.gmra.mrb[0].mxu0 %v522
      %v975 = vpop.f32.mrb[0].mxu0
      %v976 = vadd.f32 %v815, %v975
      %v977 = vpop.f32.mrb[0].mxu0
      %v978 = vpop.f32.mrb[0].mxu0
      %v979 = vadd.f32 %v818, %v978
      %v980 = vpop.f32.mrb[0].mxu0
      %981 = vmatprep.mubr.bf16.mxu0 0
      %982 = vmatmul.mubr.bf16.gmra.mrb[0].mxu0 %v525
      %v983 = vpop.f32.mrb[0].mxu0
      %v984 = vadd.f32 %v823, %v983
      %v985 = vpop.f32.mrb[0].mxu0
      %v986 = vpop.f32.mrb[0].mxu0
      %v987 = vadd.f32 %v826, %v986
      %v988 = vpop.f32.mrb[0].mxu0
      %989 = vmatprep.mubr.bf16.mxu0 0
      %990 = vmatmul.mubr.bf16.gmra.mrb[0].mxu0 %v528
      %v991 = vpop.f32.mrb[0].mxu0
      %v992 = vadd.f32 %v831, %v991
      %v993 = vpop.f32.mrb[0].mxu0
      %v994 = vpop.f32.mrb[0].mxu0
      %v995 = vadd.f32 %v834, %v994
      %v996 = vpop.f32.mrb[0].mxu0
      %997 = vmatprep.mubr.bf16.mxu0 0
      %998 = vmatmul.mubr.bf16.gmra.mrb[0].mxu0 %v531
      %v999 = vpop.f32.mrb[0].mxu0
      %v1000 = vadd.f32 %v839, %v999
      %v1001 = vpop.f32.mrb[0].mxu0
      %v1002 = vpop.f32.mrb[0].mxu0
      %v1003 = vadd.f32 %v842, %v1002
      %v1004 = vpop.f32.mrb[0].mxu0
      %1005 = vmatprep.mubr.bf16.mxu0 0
      %1006 = vmatmul.mubr.bf16.gmra.mrb[0].mxu0 %v534
      %v1007 = vpop.f32.mrb[0].mxu0
      %v1008 = vadd.f32 %v847, %v1007
      %v1009 = vpop.f32.mrb[0].mxu0
      %v1010 = vpop.f32.mrb[0].mxu0
      %v1011 = vadd.f32 %v850, %v1010
      %v1012 = vpop.f32.mrb[0].mxu0
      %1013 = vmatprep.mubr.bf16.mxu0 0
      %1014 = vmatmul.mubr.bf16.gmra.mrb[0].mxu0 %v537
      %v1015 = vpop.f32.mrb[0].mxu0
      %v1016 = vadd.f32 %v855, %v1015
      %v1017 = vpop.f32.mrb[0].mxu0
      %v1018 = vpop.f32.mrb[0].mxu0
      %v1019 = vadd.f32 %v858, %v1018
      %v1020 = vpop.f32.mrb[0].mxu0
      %1021 = vmatprep.mubr.bf16.mxu0 0
      %1022 = vmatmul.mubr.bf16.gmra.mrb[0].mxu0 %v540
      %v1023 = vpop.f32.mrb[0].mxu0
      %v1024 = vadd.f32 %v863, %v1023
      %v1025 = vpop.f32.mrb[0].mxu0
      %v1026 = vpop.f32.mrb[0].mxu0
      %v1027 = vadd.f32 %v866, %v1026
      %v1028 = vpop.f32.mrb[0].mxu0
      %1029 = vmatprep.mubr.bf16.mxu0 0
      %1030 = vmatmul.mubr.bf16.gmra.mrb[0].mxu0 %v543
      %v1031 = vpop.f32.mrb[0].mxu0
      %v1032 = vadd.f32 %v871, %v1031
      %v1033 = vpop.f32.mrb[0].mxu0
      %v1034 = vpop.f32.mrb[0].mxu0
      %v1035 = vadd.f32 %v874, %v1034
      %v1036 = vpop.f32.mrb[0].mxu0
      %1037 = vmatprep.mubr.bf16.mxu0 0
      %1038 = vmatmul.mubr.bf16.gmra.mrb[0].mxu0 %v546
      %v1039 = vpop.f32.mrb[0].mxu0
      %v1040 = vadd.f32 %v879, %v1039
      %v1041 = vpop.f32.mrb[0].mxu0
      %v1042 = vpop.f32.mrb[0].mxu0
      %v1043 = vadd.f32 %v882, %v1042
      %v1044 = vpop.f32.mrb[0].mxu0
      %1045 = vmatprep.mubr.bf16.mxu0 0
      %1046 = vmatmul.mubr.bf16.gmra.mrb[0].mxu0 %v549
      %v1047 = vpop.f32.mrb[0].mxu0
      %v1048 = vadd.f32 %v887, %v1047
      %v1049 = vpop.f32.mrb[0].mxu0
      %v1050 = vpop.f32.mrb[0].mxu0
      %v1051 = vadd.f32 %v890, %v1050
      %v1052 = vpop.f32.mrb[0].mxu0
      %1053 = vmatprep.mubr.bf16.mxu0 0
      %1054 = vmatmul.mubr.bf16.gmra.mrb[0].mxu0 %v552
      %v1055 = vpop.f32.mrb[0].mxu0
      %v1056 = vadd.f32 %v895, %v1055
      %v1057 = vpop.f32.mrb[0].mxu0
      %v1058 = vpop.f32.mrb[0].mxu0
      %v1059 = vadd.f32 %v898, %v1058
      %v1060 = vpop.f32.mrb[0].mxu0
      %1061 = vmatprep.mubr.bf16.mxu0 0
      %1062 = vmatmul.mubr.bf16.gmra.mrb[0].mxu0 %v555
      %v1063 = vpop.f32.mrb[0].mxu0
      %v1064 = vadd.f32 %v903, %v1063
      %v1065 = vpop.f32.mrb[0].mxu0
      %v1066 = vpop.f32.mrb[0].mxu0
      %v1067 = vadd.f32 %v906, %v1066
      %v1068 = vpop.f32.mrb[0].mxu0
      %1069 = vdwg.mxu0
      %1070 = vst [vmem:[%s226] sm:$0xff] %v944
      %1071 = vst [vmem:[%s226 + $0x8] sm:$0xff] %v947
      %1072 = vst [vmem:[%s226 + $0x10] sm:$0xff] %v952
      %1073 = vst [vmem:[%s226 + $0x18] sm:$0xff] %v955
      %1074 = vst [vmem:[%s226 + $0x20] sm:$0xff] %v960
      %1075 = vst [vmem:[%s226 + $0x28] sm:$0xff] %v963
      %1076 = vst [vmem:[%s226 + $0x30] sm:$0xff] %v968
      %1077 = vst [vmem:[%s226 + $0x38] sm:$0xff] %v971
      %1078 = vst [vmem:[%s226 + $0x40] sm:$0xff] %v976
      %1079 = vst [vmem:[%s226 + $0x48] sm:$0xff] %v979
      %1080 = vst [vmem:[%s226 + $0x50] sm:$0xff] %v984
      %1081 = vst [vmem:[%s226 + $0x58] sm:$0xff] %v987
      %1082 = vst [vmem:[%s226 + $0x60] sm:$0xff] %v992
      %1083 = vst [vmem:[%s226 + $0x68] sm:$0xff] %v995
      %1084 = vst [vmem:[%s226 + $0x70] sm:$0xff] %v1000
      %1085 = vst [vmem:[%s226 + $0x78] sm:$0xff] %v1003
      %1086 = vst [vmem:[%s226 + $0x80] sm:$0xff] %v1008
      %1087 = vst [vmem:[%s226 + $0x88] sm:$0xff] %v1011
      %1088 = vst [vmem:[%s226 + $0x90] sm:$0xff] %v1016
      %1089 = vst [vmem:[%s226 + $0x98] sm:$0xff] %v1019
      %1090 = vst [vmem:[%s226 + $0xa0] sm:$0xff] %v1024
      %1091 = vst [vmem:[%s226 + $0xa8] sm:$0xff] %v1027
      %1092 = vst [vmem:[%s226 + $0xb0] sm:$0xff] %v1032
      %1093 = vst [vmem:[%s226 + $0xb8] sm:$0xff] %v1035
      %1094 = vst [vmem:[%s226 + $0xc0] sm:$0xff] %v1040
      %1095 = vst [vmem:[%s226 + $0xc8] sm:$0xff] %v1043
      %1096 = vst [vmem:[%s226 + $0xd0] sm:$0xff] %v1048
      %1097 = vst [vmem:[%s226 + $0xd8] sm:$0xff] %v1051
      %1098 = vst [vmem:[%s226 + $0xe0] sm:$0xff] %v1056
      %1099 = vst [vmem:[%s226 + $0xe8] sm:$0xff] %v1059
      %1100 = vst [vmem:[%s226 + $0xf0] sm:$0xff] %v1064
      %1101 = vst [vmem:[%s226 + $0xf8] sm:$0xff] %v1067
      %s1102 = smul.u32 32, %s18
      %p1103 = scmp.lt.s32.totalorder %s1102, 63
      %s1104 = scalar_select %p1103, %s1102, 63
      %p1105 = scmp.lt.s32.totalorder %s19, 0
      %s1106 = scalar_select %p1105, %s19, 0
      %s1107 = sadd.s32 %s1106, %s1104
      %s1108 = smul.addr %s1107, 8
      %s1109 = scalar_lea.vmem %s3, %s1108
      // Predicated region
      $region33: #{generator_forward.23} parent=31 // pred_check
        %p1110 = pneg %p124
      $region34: #{generator_forward.23} parent=31 // pred_check_branch
        %1112 = sbr.rel (%p1110) target = $region36
      $region35: #{generator_forward.23} parent=31 // pred_region
        %s1113 = smul.u32 32, %s18
      $region36: #{generator_forward.23} parent=31 // pred_fallthru
        _
    $region32: #{generator_forward.23} parent=5 // pred_fallthru
      _
    %p1114 = scmp.le.s32.totalorder 2, %s9
    // Predicated region
    $region37: #{generator_forward.23} parent=5 // pred_check
      %p1115 = pneg %p1114
    $region38: #{generator_forward.23} parent=5 // pred_check_branch
      %1117 = sbr.rel (%p1115) target = $region40
    $region39: #{generator_forward.23} parent=5 // pred_region
      %s1118 = ssub.s32 %s9, 2
      // Predicated region
      $region41: #{generator_forward.23} parent=39 // pred_check
        %p1119 = pneg %p130
      $region42: #{generator_forward.23} parent=39 // pred_check_branch
        %1121 = sbr.rel (%p1119) target = $region44
      $region43: #{generator_forward.23} parent=39 // pred_region
        %s1122 = smul.u32 32, %s20
        %p1123 = scmp.lt.s32.totalorder %s1122, 63
        %s1124 = scalar_select %p1123, %s1122, 63
        %p1125 = scmp.lt.s32.totalorder %s21, 0
        %s1126 = scalar_select %p1125, %s21, 0
        %s1127 = sadd.s32 %s1126, %s1124
        %s1128 = smul.addr %s1127, 8
        %s1129 = scalar_lea.vmem %s3, %s1128
      $region44: #{generator_forward.23} parent=39 // pred_fallthru
        _
    $region40: #{generator_forward.23} parent=5 // pred_fallthru
      _
  $region6: #{generator_forward.23} parent=0 // loop_footer
    %s13 = sadd.s32 1, %s9
  $region7: #{generator_forward.23} parent=0 // loop_footer_branch
    %8 = sbr.rel target = $region3
  $region8: #{generator_forward.23} parent=0 // loop_exit
    _

</llo_original>
